<compile_context>
chip_gen: v7x
topology: tpu7x:2x2x1
jax: 0.10.0
libtpu: 0.0.40
codegen_flags: <defaults>
</compile_context>

<pallas_src>
import functools

import numpy as np
import jax
import jax.numpy as jnp
from jax import lax
from jax.experimental import pallas as pl
from jax.experimental.pallas import tpu as pltpu

# ---------------------------------------------------------------------------
# Static geometry (28x28 single-channel input, as implied by Conv2d(1, ...)).
# Spatial sizes: 28 -> 10 -> 4 -> 2 (encoder) -> 3 -> 7 -> 19 (decoder).
#   encoder (Conv2d,  k=3, p=1): (name, stride, padded_size, out_size, Cin, Cout)
#   decoder (ConvT2d, k=3, p=1): (name, stride, in_size,     out_size, Cin, Cout)
# ---------------------------------------------------------------------------
_ENC = [("enc1", 3, 30, 10, 1, 16),
        ("enc2", 3, 12, 4, 16, 32),
        ("enc3", 2, 6, 2, 32, 64)]
_DEC = [("dec1", 2, 2, 3, 64, 32),
        ("dec2", 3, 3, 7, 32, 16),
        ("dec3", 3, 7, 19, 16, 1)]
_PP = 1  # ConvTranspose conv-equivalent padding: kernel - 1 - padding = 1


# ---------------------------------------------------------------------------
# The fused Pallas kernel
# ---------------------------------------------------------------------------
def _autoencoder_kernel(x_ref,
                        b1_ref, c1_ref, b2_ref, c2_ref, b3_ref, c3_ref,
                        b4_ref, c4_ref, b5_ref, c5_ref, b6_ref, c6_ref,
                        out_ref,
                        buf1, buf2, buf3, buf4, buf5, buf6,
                        *, batch):
    f32 = jnp.float32

    # Zero the scratch buffers once: the zero rows/cols ARE the conv padding
    # (encoder) and the stride zero-insertion (decoder).
    for buf in (buf1, buf2, buf3, buf4, buf5, buf6):
        buf[...] = jnp.zeros(buf.shape, f32)

    # Stage the NCHW (C=1) input into the padded layer-1 buffer.
    for n in range(batch):
        buf1[n * 30 + 1:n * 30 + 29, 1:29] = x_ref[n, 0, :, :]

    def row_select(oh, hp, stride, tap):
        # S[o, r] = 1  iff  r == stride * o + tap            (shape (OH, Hp))
        r = lax.broadcasted_iota(jnp.int32, (oh, hp), 0)
        c = lax.broadcasted_iota(jnp.int32, (oh, hp), 1)
        return (c == r * stride + tap).astype(f32)

    def conv(src, b_ref, bias_ref, n, hp, stride, oh):
        # Conv2d(k=3, p=1):  out = sum_i (S_i @ X) @ B_i + bias
        x = src[n * hp:(n + 1) * hp, :]                        # (Hp, Wp*Cin)
        acc = None
        for i in range(3):
            y = jnp.dot(row_select(oh, hp, stride, i), x,
                        preferred_element_type=f32)            # (OH, Wp*Cin)
            t = jnp.dot(y, b_ref[i], preferred_element_type=f32)
            acc = t if acc is None else acc + t
        return acc + bias_ref[...]

    def conv_t(src, b_ref, bias_ref, n, hbuf, oh):
        # ConvTranspose2d == stride-1 conv over zero-inserted rows (already
        # materialized in `src`); W zero-insertion/padding folded into B_i.
        acc = None
        for i in range(3):
            x = src[n * hbuf + i:n * hbuf + i + oh, :]         # (OH, Win*Cin)
            t = jnp.dot(x, b_ref[i], preferred_element_type=f32)
            acc = t if acc is None else acc + t
        return acc + bias_ref[...]

    for n in range(batch):
        # ------------------------------ encoder ----------------------------
        a = jnp.maximum(conv(buf1, b1_ref, c1_ref, n, 30, 3, 10), 0.0)  # (10,160)
        buf2[n * 12 + 1:n * 12 + 11, 16:176] = a

        a = jnp.maximum(conv(buf2, b2_ref, c2_ref, n, 12, 3, 4), 0.0)   # (4,128)
        buf3[n * 6 + 1:n * 6 + 5, 32:160] = a

        a = jnp.maximum(conv(buf3, b3_ref, c3_ref, n, 6, 2, 2), 0.0)    # (2,128)
        for h in range(2):                    # rows 1 + 2*h of dec1's input
            buf4[n * 5 + 1 + 2 * h:n * 5 + 2 + 2 * h, :] = a[h:h + 1, :]

        # ------------------------------ decoder ----------------------------
        a = jnp.maximum(conv_t(buf4, b4_ref, c4_ref, n, 5, 3), 0.0)     # (3,96)
        for h in range(3):                    # rows 1 + 3*h of dec2's input
            buf5[n * 9 + 1 + 3 * h:n * 9 + 2 + 3 * h, :] = a[h:h + 1, :]

        a = jnp.maximum(conv_t(buf5, b5_ref, c5_ref, n, 9, 7), 0.0)     # (7,112)
        for h in range(7):                    # rows 1 + 3*h of dec3's input
            buf6[n * 21 + 1 + 3 * h:n * 21 + 2 + 3 * h, :] = a[h:h + 1, :]

        a = jnp.tanh(conv_t(buf6, b6_ref, c6_ref, n, 21, 19))           # (19,19)
        out_ref[n, 0, :, :] = a


# ---------------------------------------------------------------------------
# pallas_call wrapper
# ---------------------------------------------------------------------------
def _fused_forward(x, kernel_params):
    batch = x.shape[0]
    scratch = [
        pltpu.VMEM((batch * 30, 30 * 1), jnp.float32),    # padded 28x28 input
        pltpu.VMEM((batch * 12, 12 * 16), jnp.float32),   # enc1 out (padded)
        pltpu.VMEM((batch * 6, 6 * 32), jnp.float32),     # enc2 out (padded)
        pltpu.VMEM((batch * 5, 2 * 64), jnp.float32),     # enc3 out (row zero-ins.)
        pltpu.VMEM((batch * 9, 3 * 32), jnp.float32),     # dec1 out (row zero-ins.)
        pltpu.VMEM((batch * 21, 7 * 16), jnp.float32),    # dec2 out (row zero-ins.)
    ]
    vmem_spec = pl.BlockSpec(memory_space=pltpu.MemorySpace.VMEM)
    return pl.pallas_call(
        functools.partial(_autoencoder_kernel, batch=batch),
        out_shape=jax.ShapeDtypeStruct((batch, 1, 19, 19), jnp.float32),
        in_specs=[vmem_spec] * (1 + len(kernel_params)),
        out_specs=vmem_spec,
        scratch_shapes=scratch,
    )(x, *kernel_params)


@jax.jit
def conv_autoencoder_forward(kernel_params, x):
    """ConvAutoEncoder.forward: x (N, 1, 28, 28) -> (N, 1, 19, 19)."""
    return _fused_forward(x, kernel_params)


# ---------------------------------------------------------------------------
# Parameters (PyTorch-like synthetic init) and one-time weight repacking
# ---------------------------------------------------------------------------
def init_params(key):
    def conv_p(k, oc, ic, kh, kw):
        k1, k2 = jax.random.split(k)
        bound = 1.0 / float(np.sqrt(ic * kh * kw))
        w = jax.random.uniform(k1, (oc, ic, kh, kw), jnp.float32, -bound, bound)
        b = jax.random.uniform(k2, (oc,), jnp.float32, -bound, bound)
        return w, b

    def conv_t_p(k, ic, oc, kh, kw):
        k1, k2 = jax.random.split(k)
        bound = 1.0 / float(np.sqrt(oc * kh * kw))
        w = jax.random.uniform(k1, (ic, oc, kh, kw), jnp.float32, -bound, bound)
        b = jax.random.uniform(k2, (oc,), jnp.float32, -bound, bound)
        return w, b

    ks = jax.random.split(key, 6)
    return {
        "enc1": conv_p(ks[0], 16, 1, 3, 3),
        "enc2": conv_p(ks[1], 32, 16, 3, 3),
        "enc3": conv_p(ks[2], 64, 32, 3, 3),
        "dec1": conv_t_p(ks[3], 64, 32, 3, 3),
        "dec2": conv_t_p(ks[4], 32, 16, 3, 3),
        "dec3": conv_t_p(ks[5], 16, 1, 3, 3),
    }


def prepare_params(params):
    """One-time repack of PyTorch-layout weights into the kernel's fused
    per-kernel-row matrices B_i (shape (W_in*C_in, W_out*C_out)) and tiled
    bias rows.  Pure numpy, runs once outside the jitted hot path."""
    ops = []
    # Encoder Conv2d:  B_i[(s*ow+j)*Cin + c, ow*Cout + oc] = w[oc, c, i, j]
    for name, s, wp, ow, ic, oc in _ENC:
        w = np.asarray(params[name][0], np.float32)             # (OC, IC, 3, 3)
        b = np.asarray(params[name][1], np.float32)             # (OC,)
        B = np.zeros((3, wp * ic, ow * oc), np.float32)
        for i in range(3):
            for o in range(ow):
                for j in range(3):
                    col = s * o + j                              # padded input col
                    B[i, col * ic:(col + 1) * ic, o * oc:(o + 1) * oc] = w[:, :, i, j].T
        ops += [jnp.asarray(B), jnp.asarray(np.tile(b, ow)[None, :])]
    # Decoder ConvTranspose2d (conv equivalence, flipped kernel, swapped chans):
    #   B_i[w*Cin + c, ow*Cout + oc] = wT[c, oc, 2-i, 2-j],  j = PP + s*w - ow
    for name, s, win, ow, ic, oc in _DEC:
        w = np.asarray(params[name][0], np.float32)             # (IC, OC, 3, 3)
        b = np.asarray(params[name][1], np.float32)             # (OC,)
        B = np.zeros((3, win * ic, ow * oc), np.float32)
        for i in range(3):
            for wi in range(win):
                for o in range(ow):
                    j = _PP + s * wi - o
                    if 0 <= j < 3:
                        B[i, wi * ic:(wi + 1) * ic, o * oc:(o + 1) * oc] = w[:, :, 2 - i, 2 - j]
        ops += [jnp.asarray(B), jnp.asarray(np.tile(b, ow)[None, :])]
    return tuple(ops)


# ---------------------------------------------------------------------------
# Loop-based numpy reference (exact PyTorch semantics) for verification
# ---------------------------------------------------------------------------
def _reference_forward_np(params, x):
    def conv2d(x, w, b, s, p):
        n, _, h, w_in = x.shape
        oc, ic, kh, kw = w.shape
        oh = (h + 2 * p - kh) // s + 1
        ow = (w_in + 2 * p - kw) // s + 1
        xp = np.zeros((n, ic, h + 2 * p, w_in + 2 * p), np.float32)
        xp[:, :, p:p + h, p:p + w_in] = x
        out = np.zeros((n, oc, oh, ow), np.float32)
        for i in range(kh):
            for j in range(kw):
                patch = xp[:, :, i:i + s * oh:s, j:j + s * ow:s]
                out += np.einsum("nchw,co->nohw", patch, w[:, :, i, j].T)
        return out + b[None, :, None, None]

    def conv_t2d(x, w, b, s, p):
        n, ic, h, w_in = x.shape
        _, oc, kh, kw = w.shape
        oh = (h - 1) * s - 2 * p + kh
        ow = (w_in - 1) * s - 2 * p + kw
        out = np.zeros((n, oc, oh, ow), np.float32)
        for hh in range(h):
            for ww in range(w_in):
                for i in range(kh):
                    for j in range(kw):
                        oi, oj = hh * s + i - p, ww * s + j - p
                        if 0 <= oi < oh and 0 <= oj < ow:
                            out[:, :, oi, oj] += x[:, :, hh, ww] @ w[:, :, i, j]
        return out + b[None, :, None, None]

    relu = lambda v: np.maximum(v, 0.0)
    p = {k: (np.asarray(v[0], np.float32), np.asarray(v[1], np.float32))
         for k, v in params.items()}
    y = np.asarray(x, np.float32)
    y = relu(conv2d(y, *p["enc1"], 3, 1))
    y = relu(conv2d(y, *p["enc2"], 3, 1))
    y = relu(conv2d(y, *p["enc3"], 2, 1))
    y = relu(conv_t2d(y, *p["dec1"], 2, 1))
    y = relu(conv_t2d(y, *p["dec2"], 3, 1))
    return np.tanh(conv_t2d(y, *p["dec3"], 3, 1))


if __name__ == "__main__":
    key = jax.random.PRNGKey(0)
    pkey, xkey = jax.random.split(key)
    params = init_params(pkey)
    kernel_params = prepare_params(params)       # one-time weight repack
    # MNIST-like input implied by Conv2d(1, ...): (batch=2, 1, 28, 28)
    x = jax.random.normal(xkey, (2, 1, 28, 28), dtype=jnp.float32)

    out = conv_autoencoder_forward(kernel_params, x)
    out = jax.block_until_ready(out)

    assert out.shape == (2, 1, 19, 19), out.shape       # 28->10->4->2->3->7->19
    assert bool(jnp.all(jnp.isfinite(out)))
    ref = _reference_forward_np(params, x)
    err = float(np.max(np.abs(np.asarray(out) - ref)))
    assert err < 5e-3, f"kernel/reference mismatch: max abs err = {err}"
    print("KERNEL_OK")
</pallas_src>

<mosaic_0001>
module attributes {stable_mosaic.version = 11 : i64} {
  func.func @_autoencoder_kernel(%arg0: memref<2x1x28x28xf32, #tpu.memory_space<vmem>>, %arg1: memref<3x30x160xf32, #tpu.memory_space<vmem>>, %arg2: memref<1x160xf32, #tpu.memory_space<vmem>>, %arg3: memref<3x192x128xf32, #tpu.memory_space<vmem>>, %arg4: memref<1x128xf32, #tpu.memory_space<vmem>>, %arg5: memref<3x192x128xf32, #tpu.memory_space<vmem>>, %arg6: memref<1x128xf32, #tpu.memory_space<vmem>>, %arg7: memref<3x128x96xf32, #tpu.memory_space<vmem>>, %arg8: memref<1x96xf32, #tpu.memory_space<vmem>>, %arg9: memref<3x96x112xf32, #tpu.memory_space<vmem>>, %arg10: memref<1x112xf32, #tpu.memory_space<vmem>>, %arg11: memref<3x112x19xf32, #tpu.memory_space<vmem>>, %arg12: memref<1x19xf32, #tpu.memory_space<vmem>>, %arg13: memref<2x1x19x19xf32, #tpu.memory_space<vmem>>, %arg14: memref<60x30xf32, #tpu.memory_space<vmem>>, %arg15: memref<24x192xf32, #tpu.memory_space<vmem>>, %arg16: memref<12x192xf32, #tpu.memory_space<vmem>>, %arg17: memref<10x128xf32, #tpu.memory_space<vmem>>, %arg18: memref<18x96xf32, #tpu.memory_space<vmem>>, %arg19: memref<42x112xf32, #tpu.memory_space<vmem>>) attributes {dimension_semantics = [], scalar_prefetch = 0 : i64, scratch_operands = 6 : i64, tpu.core_type = #tpu.core_type<tc>} {
    %cst = arith.constant 0.000000e+00 : f32
    %0 = vector.broadcast %cst : f32 to vector<60x30xf32>
    %c0 = arith.constant 0 : index
    %c0_0 = arith.constant 0 : index
    %1 = vector.load %arg14[%c0, %c0_0] : memref<60x30xf32, #tpu.memory_space<vmem>>, vector<60x30xf32>
    tpu.vector_store %arg14[%c0, %c0_0], %0 {strides = array<i32>} : memref<60x30xf32, #tpu.memory_space<vmem>>, vector<60x30xf32>,
    %cst_1 = arith.constant 0.000000e+00 : f32
    %2 = vector.broadcast %cst_1 : f32 to vector<24x192xf32>
    %c0_2 = arith.constant 0 : index
    %c0_3 = arith.constant 0 : index
    %3 = vector.load %arg15[%c0_2, %c0_3] : memref<24x192xf32, #tpu.memory_space<vmem>>, vector<24x192xf32>
    tpu.vector_store %arg15[%c0_2, %c0_3], %2 {strides = array<i32>} : memref<24x192xf32, #tpu.memory_space<vmem>>, vector<24x192xf32>,
    %cst_4 = arith.constant 0.000000e+00 : f32
    %4 = vector.broadcast %cst_4 : f32 to vector<12x192xf32>
    %c0_5 = arith.constant 0 : index
    %c0_6 = arith.constant 0 : index
    %5 = vector.load %arg16[%c0_5, %c0_6] : memref<12x192xf32, #tpu.memory_space<vmem>>, vector<12x192xf32>
    tpu.vector_store %arg16[%c0_5, %c0_6], %4 {strides = array<i32>} : memref<12x192xf32, #tpu.memory_space<vmem>>, vector<12x192xf32>,
    %cst_7 = arith.constant 0.000000e+00 : f32
    %6 = vector.broadcast %cst_7 : f32 to vector<10x128xf32>
    %c0_8 = arith.constant 0 : index
    %c0_9 = arith.constant 0 : index
    %7 = vector.load %arg17[%c0_8, %c0_9] : memref<10x128xf32, #tpu.memory_space<vmem>>, vector<10x128xf32>
    tpu.vector_store %arg17[%c0_8, %c0_9], %6 {strides = array<i32>} : memref<10x128xf32, #tpu.memory_space<vmem>>, vector<10x128xf32>,
    %cst_10 = arith.constant 0.000000e+00 : f32
    %8 = vector.broadcast %cst_10 : f32 to vector<18x96xf32>
    %c0_11 = arith.constant 0 : index
    %c0_12 = arith.constant 0 : index
    %9 = vector.load %arg18[%c0_11, %c0_12] : memref<18x96xf32, #tpu.memory_space<vmem>>, vector<18x96xf32>
    tpu.vector_store %arg18[%c0_11, %c0_12], %8 {strides = array<i32>} : memref<18x96xf32, #tpu.memory_space<vmem>>, vector<18x96xf32>,
    %cst_13 = arith.constant 0.000000e+00 : f32
    %10 = vector.broadcast %cst_13 : f32 to vector<42x112xf32>
    %c0_14 = arith.constant 0 : index
    %c0_15 = arith.constant 0 : index
    %11 = vector.load %arg19[%c0_14, %c0_15] : memref<42x112xf32, #tpu.memory_space<vmem>>, vector<42x112xf32>
    tpu.vector_store %arg19[%c0_14, %c0_15], %10 {strides = array<i32>} : memref<42x112xf32, #tpu.memory_space<vmem>>, vector<42x112xf32>,
    %c0_16 = arith.constant 0 : index
    %c0_17 = arith.constant 0 : index
    %c0_18 = arith.constant 0 : index
    %c0_19 = arith.constant 0 : index
    %12 = vector.load %arg0[%c0_16, %c0_17, %c0_18, %c0_19] : memref<2x1x28x28xf32, #tpu.memory_space<vmem>>, vector<1x1x28x28xf32>
    %13 = vector.shape_cast %12 : vector<1x1x28x28xf32> to vector<28x28xf32>
    %c1 = arith.constant 1 : index
    %c1_20 = arith.constant 1 : index
    %14 = vector.load %arg14[%c1, %c1_20] : memref<60x30xf32, #tpu.memory_space<vmem>>, vector<28x28xf32>
    tpu.vector_store %arg14[%c1, %c1_20], %13 {strides = array<i32>} : memref<60x30xf32, #tpu.memory_space<vmem>>, vector<28x28xf32>,
    %c1_21 = arith.constant 1 : index
    %c0_22 = arith.constant 0 : index
    %c0_23 = arith.constant 0 : index
    %c0_24 = arith.constant 0 : index
    %15 = vector.load %arg0[%c1_21, %c0_22, %c0_23, %c0_24] : memref<2x1x28x28xf32, #tpu.memory_space<vmem>>, vector<1x1x28x28xf32>
    %16 = vector.shape_cast %15 : vector<1x1x28x28xf32> to vector<28x28xf32>
    %c31 = arith.constant 31 : index
    %c1_25 = arith.constant 1 : index
    %17 = vector.load %arg14[%c31, %c1_25] : memref<60x30xf32, #tpu.memory_space<vmem>>, vector<28x28xf32>
    tpu.vector_store %arg14[%c31, %c1_25], %16 {strides = array<i32>} : memref<60x30xf32, #tpu.memory_space<vmem>>, vector<28x28xf32>,
    %c0_26 = arith.constant 0 : index
    %c0_27 = arith.constant 0 : index
    %18 = vector.load %arg14[%c0_26, %c0_27] : memref<60x30xf32, #tpu.memory_space<vmem>>, vector<30x30xf32>
    %19 = tpu.iota {dimensions = array<i32: 0>} : vector<10x30xi32>
    %20 = tpu.iota {dimensions = array<i32: 1>} : vector<10x30xi32>
    %c3_i32 = arith.constant 3 : i32
    %21 = vector.broadcast %c3_i32 : i32 to vector<10x30xi32>
    %22 = arith.muli %19, %21 : vector<10x30xi32>
    %c0_i32 = arith.constant 0 : i32
    %23 = vector.broadcast %c0_i32 : i32 to vector<10x30xi32>
    %24 = arith.addi %22, %23 : vector<10x30xi32>
    %25 = arith.cmpi eq, %20, %24 : vector<10x30xi32>
    %26 = arith.extui %25 : vector<10x30xi1> to vector<10x30xi32>
    %27 = arith.sitofp %26 : vector<10x30xi32> to vector<10x30xf32>
    %cst_28 = arith.constant dense<0.000000e+00> : vector<10x30xf32>
    %28 = tpu.matmul %27, %18, %cst_28 {dimension_numbers = #tpu.dot_dimension_numbers<[1], [0], [0], [1], [0, 0, 1, 1], [], []>} : vector<10x30xf32>, vector<30x30xf32>, vector<10x30xf32> -> vector<10x30xf32>
    %c0_29 = arith.constant 0 : index
    %c0_30 = arith.constant 0 : index
    %c0_31 = arith.constant 0 : index
    %29 = vector.load %arg1[%c0_29, %c0_30, %c0_31] : memref<3x30x160xf32, #tpu.memory_space<vmem>>, vector<1x30x160xf32>
    %30 = vector.shape_cast %29 : vector<1x30x160xf32> to vector<30x160xf32>
    %cst_32 = arith.constant dense<0.000000e+00> : vector<10x160xf32>
    %31 = tpu.matmul %28, %30, %cst_32 {dimension_numbers = #tpu.dot_dimension_numbers<[1], [0], [0], [1], [0, 0, 1, 1], [], []>} : vector<10x30xf32>, vector<30x160xf32>, vector<10x160xf32> -> vector<10x160xf32>
    %32 = tpu.iota {dimensions = array<i32: 0>} : vector<10x30xi32>
    %33 = tpu.iota {dimensions = array<i32: 1>} : vector<10x30xi32>
    %c3_i32_33 = arith.constant 3 : i32
    %34 = vector.broadcast %c3_i32_33 : i32 to vector<10x30xi32>
    %35 = arith.muli %32, %34 : vector<10x30xi32>
    %c1_i32 = arith.constant 1 : i32
    %36 = vector.broadcast %c1_i32 : i32 to vector<10x30xi32>
    %37 = arith.addi %35, %36 : vector<10x30xi32>
    %38 = arith.cmpi eq, %33, %37 : vector<10x30xi32>
    %39 = arith.extui %38 : vector<10x30xi1> to vector<10x30xi32>
    %40 = arith.sitofp %39 : vector<10x30xi32> to vector<10x30xf32>
    %cst_34 = arith.constant dense<0.000000e+00> : vector<10x30xf32>
    %41 = tpu.matmul %40, %18, %cst_34 {dimension_numbers = #tpu.dot_dimension_numbers<[1], [0], [0], [1], [0, 0, 1, 1], [], []>} : vector<10x30xf32>, vector<30x30xf32>, vector<10x30xf32> -> vector<10x30xf32>
    %c1_35 = arith.constant 1 : index
    %c0_36 = arith.constant 0 : index
    %c0_37 = arith.constant 0 : index
    %42 = vector.load %arg1[%c1_35, %c0_36, %c0_37] : memref<3x30x160xf32, #tpu.memory_space<vmem>>, vector<1x30x160xf32>
    %43 = vector.shape_cast %42 : vector<1x30x160xf32> to vector<30x160xf32>
    %cst_38 = arith.constant dense<0.000000e+00> : vector<10x160xf32>
    %44 = tpu.matmul %41, %43, %cst_38 {dimension_numbers = #tpu.dot_dimension_numbers<[1], [0], [0], [1], [0, 0, 1, 1], [], []>} : vector<10x30xf32>, vector<30x160xf32>, vector<10x160xf32> -> vector<10x160xf32>
    %45 = arith.addf %31, %44 : vector<10x160xf32>
    %46 = tpu.iota {dimensions = array<i32: 0>} : vector<10x30xi32>
    %47 = tpu.iota {dimensions = array<i32: 1>} : vector<10x30xi32>
    %c3_i32_39 = arith.constant 3 : i32
    %48 = vector.broadcast %c3_i32_39 : i32 to vector<10x30xi32>
    %49 = arith.muli %46, %48 : vector<10x30xi32>
    %c2_i32 = arith.constant 2 : i32
    %50 = vector.broadcast %c2_i32 : i32 to vector<10x30xi32>
    %51 = arith.addi %49, %50 : vector<10x30xi32>
    %52 = arith.cmpi eq, %47, %51 : vector<10x30xi32>
    %53 = arith.extui %52 : vector<10x30xi1> to vector<10x30xi32>
    %54 = arith.sitofp %53 : vector<10x30xi32> to vector<10x30xf32>
    %cst_40 = arith.constant dense<0.000000e+00> : vector<10x30xf32>
    %55 = tpu.matmul %54, %18, %cst_40 {dimension_numbers = #tpu.dot_dimension_numbers<[1], [0], [0], [1], [0, 0, 1, 1], [], []>} : vector<10x30xf32>, vector<30x30xf32>, vector<10x30xf32> -> vector<10x30xf32>
    %c2 = arith.constant 2 : index
    %c0_41 = arith.constant 0 : index
    %c0_42 = arith.constant 0 : index
    %56 = vector.load %arg1[%c2, %c0_41, %c0_42] : memref<3x30x160xf32, #tpu.memory_space<vmem>>, vector<1x30x160xf32>
    %57 = vector.shape_cast %56 : vector<1x30x160xf32> to vector<30x160xf32>
    %cst_43 = arith.constant dense<0.000000e+00> : vector<10x160xf32>
    %58 = tpu.matmul %55, %57, %cst_43 {dimension_numbers = #tpu.dot_dimension_numbers<[1], [0], [0], [1], [0, 0, 1, 1], [], []>} : vector<10x30xf32>, vector<30x160xf32>, vector<10x160xf32> -> vector<10x160xf32>
    %59 = arith.addf %45, %58 : vector<10x160xf32>
    %c0_44 = arith.constant 0 : index
    %c0_45 = arith.constant 0 : index
    %60 = vector.load %arg2[%c0_44, %c0_45] : memref<1x160xf32, #tpu.memory_space<vmem>>, vector<1x160xf32>
    %61 = vector.broadcast %60 : vector<1x160xf32> to vector<10x160xf32>
    %62 = arith.addf %59, %61 : vector<10x160xf32>
    %cst_46 = arith.constant 0.000000e+00 : f32
    %63 = vector.broadcast %cst_46 : f32 to vector<10x160xf32>
    %64 = arith.maximumf %62, %63 : vector<10x160xf32>
    %c1_47 = arith.constant 1 : index
    %c16 = arith.constant 16 : index
    %65 = vector.load %arg15[%c1_47, %c16] : memref<24x192xf32, #tpu.memory_space<vmem>>, vector<10x160xf32>
    tpu.vector_store %arg15[%c1_47, %c16], %64 {strides = array<i32>} : memref<24x192xf32, #tpu.memory_space<vmem>>, vector<10x160xf32>,
    %c0_48 = arith.constant 0 : index
    %c0_49 = arith.constant 0 : index
    %66 = vector.load %arg15[%c0_48, %c0_49] : memref<24x192xf32, #tpu.memory_space<vmem>>, vector<12x192xf32>
    %67 = tpu.iota {dimensions = array<i32: 0>} : vector<4x12xi32>
    %68 = tpu.iota {dimensions = array<i32: 1>} : vector<4x12xi32>
    %c3_i32_50 = arith.constant 3 : i32
    %69 = vector.broadcast %c3_i32_50 : i32 to vector<4x12xi32>
    %70 = arith.muli %67, %69 : vector<4x12xi32>
    %c0_i32_51 = arith.constant 0 : i32
    %71 = vector.broadcast %c0_i32_51 : i32 to vector<4x12xi32>
    %72 = arith.addi %70, %71 : vector<4x12xi32>
    %73 = arith.cmpi eq, %68, %72 : vector<4x12xi32>
    %74 = arith.extui %73 : vector<4x12xi1> to vector<4x12xi32>
    %75 = arith.sitofp %74 : vector<4x12xi32> to vector<4x12xf32>
    %cst_52 = arith.constant dense<0.000000e+00> : vector<4x192xf32>
    %76 = tpu.matmul %75, %66, %cst_52 {dimension_numbers = #tpu.dot_dimension_numbers<[1], [0], [0], [1], [0, 0, 1, 1], [], []>} : vector<4x12xf32>, vector<12x192xf32>, vector<4x192xf32> -> vector<4x192xf32>
    %c0_53 = arith.constant 0 : index
    %c0_54 = arith.constant 0 : index
    %c0_55 = arith.constant 0 : index
    %77 = vector.load %arg3[%c0_53, %c0_54, %c0_55] : memref<3x192x128xf32, #tpu.memory_space<vmem>>, vector<1x192x128xf32>
    %78 = vector.shape_cast %77 : vector<1x192x128xf32> to vector<192x128xf32>
    %cst_56 = arith.constant dense<0.000000e+00> : vector<4x128xf32>
    %79 = tpu.matmul %76, %78, %cst_56 {dimension_numbers = #tpu.dot_dimension_numbers<[1], [0], [0], [1], [0, 0, 1, 1], [], []>} : vector<4x192xf32>, vector<192x128xf32>, vector<4x128xf32> -> vector<4x128xf32>
    %80 = tpu.iota {dimensions = array<i32: 0>} : vector<4x12xi32>
    %81 = tpu.iota {dimensions = array<i32: 1>} : vector<4x12xi32>
    %c3_i32_57 = arith.constant 3 : i32
    %82 = vector.broadcast %c3_i32_57 : i32 to vector<4x12xi32>
    %83 = arith.muli %80, %82 : vector<4x12xi32>
    %c1_i32_58 = arith.constant 1 : i32
    %84 = vector.broadcast %c1_i32_58 : i32 to vector<4x12xi32>
    %85 = arith.addi %83, %84 : vector<4x12xi32>
    %86 = arith.cmpi eq, %81, %85 : vector<4x12xi32>
    %87 = arith.extui %86 : vector<4x12xi1> to vector<4x12xi32>
    %88 = arith.sitofp %87 : vector<4x12xi32> to vector<4x12xf32>
    %cst_59 = arith.constant dense<0.000000e+00> : vector<4x192xf32>
    %89 = tpu.matmul %88, %66, %cst_59 {dimension_numbers = #tpu.dot_dimension_numbers<[1], [0], [0], [1], [0, 0, 1, 1], [], []>} : vector<4x12xf32>, vector<12x192xf32>, vector<4x192xf32> -> vector<4x192xf32>
    %c1_60 = arith.constant 1 : index
    %c0_61 = arith.constant 0 : index
    %c0_62 = arith.constant 0 : index
    %90 = vector.load %arg3[%c1_60, %c0_61, %c0_62] : memref<3x192x128xf32, #tpu.memory_space<vmem>>, vector<1x192x128xf32>
    %91 = vector.shape_cast %90 : vector<1x192x128xf32> to vector<192x128xf32>
    %cst_63 = arith.constant dense<0.000000e+00> : vector<4x128xf32>
    %92 = tpu.matmul %89, %91, %cst_63 {dimension_numbers = #tpu.dot_dimension_numbers<[1], [0], [0], [1], [0, 0, 1, 1], [], []>} : vector<4x192xf32>, vector<192x128xf32>, vector<4x128xf32> -> vector<4x128xf32>
    %93 = arith.addf %79, %92 : vector<4x128xf32>
    %94 = tpu.iota {dimensions = array<i32: 0>} : vector<4x12xi32>
    %95 = tpu.iota {dimensions = array<i32: 1>} : vector<4x12xi32>
    %c3_i32_64 = arith.constant 3 : i32
    %96 = vector.broadcast %c3_i32_64 : i32 to vector<4x12xi32>
    %97 = arith.muli %94, %96 : vector<4x12xi32>
    %c2_i32_65 = arith.constant 2 : i32
    %98 = vector.broadcast %c2_i32_65 : i32 to vector<4x12xi32>
    %99 = arith.addi %97, %98 : vector<4x12xi32>
    %100 = arith.cmpi eq, %95, %99 : vector<4x12xi32>
    %101 = arith.extui %100 : vector<4x12xi1> to vector<4x12xi32>
    %102 = arith.sitofp %101 : vector<4x12xi32> to vector<4x12xf32>
    %cst_66 = arith.constant dense<0.000000e+00> : vector<4x192xf32>
    %103 = tpu.matmul %102, %66, %cst_66 {dimension_numbers = #tpu.dot_dimension_numbers<[1], [0], [0], [1], [0, 0, 1, 1], [], []>} : vector<4x12xf32>, vector<12x192xf32>, vector<4x192xf32> -> vector<4x192xf32>
    %c2_67 = arith.constant 2 : index
    %c0_68 = arith.constant 0 : index
    %c0_69 = arith.constant 0 : index
    %104 = vector.load %arg3[%c2_67, %c0_68, %c0_69] : memref<3x192x128xf32, #tpu.memory_space<vmem>>, vector<1x192x128xf32>
    %105 = vector.shape_cast %104 : vector<1x192x128xf32> to vector<192x128xf32>
    %cst_70 = arith.constant dense<0.000000e+00> : vector<4x128xf32>
    %106 = tpu.matmul %103, %105, %cst_70 {dimension_numbers = #tpu.dot_dimension_numbers<[1], [0], [0], [1], [0, 0, 1, 1], [], []>} : vector<4x192xf32>, vector<192x128xf32>, vector<4x128xf32> -> vector<4x128xf32>
    %107 = arith.addf %93, %106 : vector<4x128xf32>
    %c0_71 = arith.constant 0 : index
    %c0_72 = arith.constant 0 : index
    %108 = vector.load %arg4[%c0_71, %c0_72] : memref<1x128xf32, #tpu.memory_space<vmem>>, vector<1x128xf32>
    %109 = vector.broadcast %108 : vector<1x128xf32> to vector<4x128xf32>
    %110 = arith.addf %107, %109 : vector<4x128xf32>
    %cst_73 = arith.constant 0.000000e+00 : f32
    %111 = vector.broadcast %cst_73 : f32 to vector<4x128xf32>
    %112 = arith.maximumf %110, %111 : vector<4x128xf32>
    %c1_74 = arith.constant 1 : index
    %c32 = arith.constant 32 : index
    %113 = vector.load %arg16[%c1_74, %c32] : memref<12x192xf32, #tpu.memory_space<vmem>>, vector<4x128xf32>
    tpu.vector_store %arg16[%c1_74, %c32], %112 {strides = array<i32>} : memref<12x192xf32, #tpu.memory_space<vmem>>, vector<4x128xf32>,
    %c0_75 = arith.constant 0 : index
    %c0_76 = arith.constant 0 : index
    %114 = vector.load %arg16[%c0_75, %c0_76] : memref<12x192xf32, #tpu.memory_space<vmem>>, vector<6x192xf32>
    %115 = tpu.iota {dimensions = array<i32: 0>} : vector<2x6xi32>
    %116 = tpu.iota {dimensions = array<i32: 1>} : vector<2x6xi32>
    %c2_i32_77 = arith.constant 2 : i32
    %117 = vector.broadcast %c2_i32_77 : i32 to vector<2x6xi32>
    %118 = arith.muli %115, %117 : vector<2x6xi32>
    %c0_i32_78 = arith.constant 0 : i32
    %119 = vector.broadcast %c0_i32_78 : i32 to vector<2x6xi32>
    %120 = arith.addi %118, %119 : vector<2x6xi32>
    %121 = arith.cmpi eq, %116, %120 : vector<2x6xi32>
    %122 = arith.extui %121 : vector<2x6xi1> to vector<2x6xi32>
    %123 = arith.sitofp %122 : vector<2x6xi32> to vector<2x6xf32>
    %cst_79 = arith.constant dense<0.000000e+00> : vector<2x192xf32>
    %124 = tpu.matmul %123, %114, %cst_79 {dimension_numbers = #tpu.dot_dimension_numbers<[1], [0], [0], [1], [0, 0, 1, 1], [], []>} : vector<2x6xf32>, vector<6x192xf32>, vector<2x192xf32> -> vector<2x192xf32>
    %c0_80 = arith.constant 0 : index
    %c0_81 = arith.constant 0 : index
    %c0_82 = arith.constant 0 : index
    %125 = vector.load %arg5[%c0_80, %c0_81, %c0_82] : memref<3x192x128xf32, #tpu.memory_space<vmem>>, vector<1x192x128xf32>
    %126 = vector.shape_cast %125 : vector<1x192x128xf32> to vector<192x128xf32>
    %cst_83 = arith.constant dense<0.000000e+00> : vector<2x128xf32>
    %127 = tpu.matmul %124, %126, %cst_83 {dimension_numbers = #tpu.dot_dimension_numbers<[1], [0], [0], [1], [0, 0, 1, 1], [], []>} : vector<2x192xf32>, vector<192x128xf32>, vector<2x128xf32> -> vector<2x128xf32>
    %128 = tpu.iota {dimensions = array<i32: 0>} : vector<2x6xi32>
    %129 = tpu.iota {dimensions = array<i32: 1>} : vector<2x6xi32>
    %c2_i32_84 = arith.constant 2 : i32
    %130 = vector.broadcast %c2_i32_84 : i32 to vector<2x6xi32>
    %131 = arith.muli %128, %130 : vector<2x6xi32>
    %c1_i32_85 = arith.constant 1 : i32
    %132 = vector.broadcast %c1_i32_85 : i32 to vector<2x6xi32>
    %133 = arith.addi %131, %132 : vector<2x6xi32>
    %134 = arith.cmpi eq, %129, %133 : vector<2x6xi32>
    %135 = arith.extui %134 : vector<2x6xi1> to vector<2x6xi32>
    %136 = arith.sitofp %135 : vector<2x6xi32> to vector<2x6xf32>
    %cst_86 = arith.constant dense<0.000000e+00> : vector<2x192xf32>
    %137 = tpu.matmul %136, %114, %cst_86 {dimension_numbers = #tpu.dot_dimension_numbers<[1], [0], [0], [1], [0, 0, 1, 1], [], []>} : vector<2x6xf32>, vector<6x192xf32>, vector<2x192xf32> -> vector<2x192xf32>
    %c1_87 = arith.constant 1 : index
    %c0_88 = arith.constant 0 : index
    %c0_89 = arith.constant 0 : index
    %138 = vector.load %arg5[%c1_87, %c0_88, %c0_89] : memref<3x192x128xf32, #tpu.memory_space<vmem>>, vector<1x192x128xf32>
    %139 = vector.shape_cast %138 : vector<1x192x128xf32> to vector<192x128xf32>
    %cst_90 = arith.constant dense<0.000000e+00> : vector<2x128xf32>
    %140 = tpu.matmul %137, %139, %cst_90 {dimension_numbers = #tpu.dot_dimension_numbers<[1], [0], [0], [1], [0, 0, 1, 1], [], []>} : vector<2x192xf32>, vector<192x128xf32>, vector<2x128xf32> -> vector<2x128xf32>
    %141 = arith.addf %127, %140 : vector<2x128xf32>
    %142 = tpu.iota {dimensions = array<i32: 0>} : vector<2x6xi32>
    %143 = tpu.iota {dimensions = array<i32: 1>} : vector<2x6xi32>
    %c2_i32_91 = arith.constant 2 : i32
    %144 = vector.broadcast %c2_i32_91 : i32 to vector<2x6xi32>
    %145 = arith.muli %142, %144 : vector<2x6xi32>
    %c2_i32_92 = arith.constant 2 : i32
    %146 = vector.broadcast %c2_i32_92 : i32 to vector<2x6xi32>
    %147 = arith.addi %145, %146 : vector<2x6xi32>
    %148 = arith.cmpi eq, %143, %147 : vector<2x6xi32>
    %149 = arith.extui %148 : vector<2x6xi1> to vector<2x6xi32>
    %150 = arith.sitofp %149 : vector<2x6xi32> to vector<2x6xf32>
    %cst_93 = arith.constant dense<0.000000e+00> : vector<2x192xf32>
    %151 = tpu.matmul %150, %114, %cst_93 {dimension_numbers = #tpu.dot_dimension_numbers<[1], [0], [0], [1], [0, 0, 1, 1], [], []>} : vector<2x6xf32>, vector<6x192xf32>, vector<2x192xf32> -> vector<2x192xf32>
    %c2_94 = arith.constant 2 : index
    %c0_95 = arith.constant 0 : index
    %c0_96 = arith.constant 0 : index
    %152 = vector.load %arg5[%c2_94, %c0_95, %c0_96] : memref<3x192x128xf32, #tpu.memory_space<vmem>>, vector<1x192x128xf32>
    %153 = vector.shape_cast %152 : vector<1x192x128xf32> to vector<192x128xf32>
    %cst_97 = arith.constant dense<0.000000e+00> : vector<2x128xf32>
    %154 = tpu.matmul %151, %153, %cst_97 {dimension_numbers = #tpu.dot_dimension_numbers<[1], [0], [0], [1], [0, 0, 1, 1], [], []>} : vector<2x192xf32>, vector<192x128xf32>, vector<2x128xf32> -> vector<2x128xf32>
    %155 = arith.addf %141, %154 : vector<2x128xf32>
    %c0_98 = arith.constant 0 : index
    %c0_99 = arith.constant 0 : index
    %156 = vector.load %arg6[%c0_98, %c0_99] : memref<1x128xf32, #tpu.memory_space<vmem>>, vector<1x128xf32>
    %157 = vector.broadcast %156 : vector<1x128xf32> to vector<2x128xf32>
    %158 = arith.addf %155, %157 : vector<2x128xf32>
    %cst_100 = arith.constant 0.000000e+00 : f32
    %159 = vector.broadcast %cst_100 : f32 to vector<2x128xf32>
    %160 = arith.maximumf %158, %159 : vector<2x128xf32>
    %161 = vector.extract_strided_slice %160 {offsets = [0, 0], sizes = [1, 128], strides = [1, 1]} : vector<2x128xf32> to vector<1x128xf32>
    %c1_101 = arith.constant 1 : index
    %c0_102 = arith.constant 0 : index
    %162 = vector.load %arg17[%c1_101, %c0_102] : memref<10x128xf32, #tpu.memory_space<vmem>>, vector<1x128xf32>
    tpu.vector_store %arg17[%c1_101, %c0_102], %161 {strides = array<i32>} : memref<10x128xf32, #tpu.memory_space<vmem>>, vector<1x128xf32>,
    %163 = vector.extract_strided_slice %160 {offsets = [1, 0], sizes = [1, 128], strides = [1, 1]} : vector<2x128xf32> to vector<1x128xf32>
    %c3 = arith.constant 3 : index
    %c0_103 = arith.constant 0 : index
    %164 = vector.load %arg17[%c3, %c0_103] : memref<10x128xf32, #tpu.memory_space<vmem>>, vector<1x128xf32>
    tpu.vector_store %arg17[%c3, %c0_103], %163 {strides = array<i32>} : memref<10x128xf32, #tpu.memory_space<vmem>>, vector<1x128xf32>,
    %c0_104 = arith.constant 0 : index
    %c0_105 = arith.constant 0 : index
    %165 = vector.load %arg17[%c0_104, %c0_105] : memref<10x128xf32, #tpu.memory_space<vmem>>, vector<3x128xf32>
    %c0_106 = arith.constant 0 : index
    %c0_107 = arith.constant 0 : index
    %c0_108 = arith.constant 0 : index
    %166 = vector.load %arg7[%c0_106, %c0_107, %c0_108] : memref<3x128x96xf32, #tpu.memory_space<vmem>>, vector<1x128x96xf32>
    %167 = vector.shape_cast %166 : vector<1x128x96xf32> to vector<128x96xf32>
    %cst_109 = arith.constant dense<0.000000e+00> : vector<3x96xf32>
    %168 = tpu.matmul %165, %167, %cst_109 {dimension_numbers = #tpu.dot_dimension_numbers<[1], [0], [0], [1], [0, 0, 1, 1], [], []>} : vector<3x128xf32>, vector<128x96xf32>, vector<3x96xf32> -> vector<3x96xf32>
    %c1_110 = arith.constant 1 : index
    %c0_111 = arith.constant 0 : index
    %169 = vector.load %arg17[%c1_110, %c0_111] : memref<10x128xf32, #tpu.memory_space<vmem>>, vector<3x128xf32>
    %c1_112 = arith.constant 1 : index
    %c0_113 = arith.constant 0 : index
    %c0_114 = arith.constant 0 : index
    %170 = vector.load %arg7[%c1_112, %c0_113, %c0_114] : memref<3x128x96xf32, #tpu.memory_space<vmem>>, vector<1x128x96xf32>
    %171 = vector.shape_cast %170 : vector<1x128x96xf32> to vector<128x96xf32>
    %cst_115 = arith.constant dense<0.000000e+00> : vector<3x96xf32>
    %172 = tpu.matmul %169, %171, %cst_115 {dimension_numbers = #tpu.dot_dimension_numbers<[1], [0], [0], [1], [0, 0, 1, 1], [], []>} : vector<3x128xf32>, vector<128x96xf32>, vector<3x96xf32> -> vector<3x96xf32>
    %173 = arith.addf %168, %172 : vector<3x96xf32>
    %c2_116 = arith.constant 2 : index
    %c0_117 = arith.constant 0 : index
    %174 = vector.load %arg17[%c2_116, %c0_117] : memref<10x128xf32, #tpu.memory_space<vmem>>, vector<3x128xf32>
    %c2_118 = arith.constant 2 : index
    %c0_119 = arith.constant 0 : index
    %c0_120 = arith.constant 0 : index
    %175 = vector.load %arg7[%c2_118, %c0_119, %c0_120] : memref<3x128x96xf32, #tpu.memory_space<vmem>>, vector<1x128x96xf32>
    %176 = vector.shape_cast %175 : vector<1x128x96xf32> to vector<128x96xf32>
    %cst_121 = arith.constant dense<0.000000e+00> : vector<3x96xf32>
    %177 = tpu.matmul %174, %176, %cst_121 {dimension_numbers = #tpu.dot_dimension_numbers<[1], [0], [0], [1], [0, 0, 1, 1], [], []>} : vector<3x128xf32>, vector<128x96xf32>, vector<3x96xf32> -> vector<3x96xf32>
    %178 = arith.addf %173, %177 : vector<3x96xf32>
    %c0_122 = arith.constant 0 : index
    %c0_123 = arith.constant 0 : index
    %179 = vector.load %arg8[%c0_122, %c0_123] : memref<1x96xf32, #tpu.memory_space<vmem>>, vector<1x96xf32>
    %180 = vector.broadcast %179 : vector<1x96xf32> to vector<3x96xf32>
    %181 = arith.addf %178, %180 : vector<3x96xf32>
    %cst_124 = arith.constant 0.000000e+00 : f32
    %182 = vector.broadcast %cst_124 : f32 to vector<3x96xf32>
    %183 = arith.maximumf %181, %182 : vector<3x96xf32>
    %184 = vector.extract_strided_slice %183 {offsets = [0, 0], sizes = [1, 96], strides = [1, 1]} : vector<3x96xf32> to vector<1x96xf32>
    %c1_125 = arith.constant 1 : index
    %c0_126 = arith.constant 0 : index
    %185 = vector.load %arg18[%c1_125, %c0_126] : memref<18x96xf32, #tpu.memory_space<vmem>>, vector<1x96xf32>
    tpu.vector_store %arg18[%c1_125, %c0_126], %184 {strides = array<i32>} : memref<18x96xf32, #tpu.memory_space<vmem>>, vector<1x96xf32>,
    %186 = vector.extract_strided_slice %183 {offsets = [1, 0], sizes = [1, 96], strides = [1, 1]} : vector<3x96xf32> to vector<1x96xf32>
    %c4 = arith.constant 4 : index
    %c0_127 = arith.constant 0 : index
    %187 = vector.load %arg18[%c4, %c0_127] : memref<18x96xf32, #tpu.memory_space<vmem>>, vector<1x96xf32>
    tpu.vector_store %arg18[%c4, %c0_127], %186 {strides = array<i32>} : memref<18x96xf32, #tpu.memory_space<vmem>>, vector<1x96xf32>,
    %188 = vector.extract_strided_slice %183 {offsets = [2, 0], sizes = [1, 96], strides = [1, 1]} : vector<3x96xf32> to vector<1x96xf32>
    %c7 = arith.constant 7 : index
    %c0_128 = arith.constant 0 : index
    %189 = vector.load %arg18[%c7, %c0_128] : memref<18x96xf32, #tpu.memory_space<vmem>>, vector<1x96xf32>
    tpu.vector_store %arg18[%c7, %c0_128], %188 {strides = array<i32>} : memref<18x96xf32, #tpu.memory_space<vmem>>, vector<1x96xf32>,
    %c0_129 = arith.constant 0 : index
    %c0_130 = arith.constant 0 : index
    %190 = vector.load %arg18[%c0_129, %c0_130] : memref<18x96xf32, #tpu.memory_space<vmem>>, vector<7x96xf32>
    %c0_131 = arith.constant 0 : index
    %c0_132 = arith.constant 0 : index
    %c0_133 = arith.constant 0 : index
    %191 = vector.load %arg9[%c0_131, %c0_132, %c0_133] : memref<3x96x112xf32, #tpu.memory_space<vmem>>, vector<1x96x112xf32>
    %192 = vector.shape_cast %191 : vector<1x96x112xf32> to vector<96x112xf32>
    %cst_134 = arith.constant dense<0.000000e+00> : vector<7x112xf32>
    %193 = tpu.matmul %190, %192, %cst_134 {dimension_numbers = #tpu.dot_dimension_numbers<[1], [0], [0], [1], [0, 0, 1, 1], [], []>} : vector<7x96xf32>, vector<96x112xf32>, vector<7x112xf32> -> vector<7x112xf32>
    %c1_135 = arith.constant 1 : index
    %c0_136 = arith.constant 0 : index
    %194 = vector.load %arg18[%c1_135, %c0_136] : memref<18x96xf32, #tpu.memory_space<vmem>>, vector<7x96xf32>
    %c1_137 = arith.constant 1 : index
    %c0_138 = arith.constant 0 : index
    %c0_139 = arith.constant 0 : index
    %195 = vector.load %arg9[%c1_137, %c0_138, %c0_139] : memref<3x96x112xf32, #tpu.memory_space<vmem>>, vector<1x96x112xf32>
    %196 = vector.shape_cast %195 : vector<1x96x112xf32> to vector<96x112xf32>
    %cst_140 = arith.constant dense<0.000000e+00> : vector<7x112xf32>
    %197 = tpu.matmul %194, %196, %cst_140 {dimension_numbers = #tpu.dot_dimension_numbers<[1], [0], [0], [1], [0, 0, 1, 1], [], []>} : vector<7x96xf32>, vector<96x112xf32>, vector<7x112xf32> -> vector<7x112xf32>
    %198 = arith.addf %193, %197 : vector<7x112xf32>
    %c2_141 = arith.constant 2 : index
    %c0_142 = arith.constant 0 : index
    %199 = vector.load %arg18[%c2_141, %c0_142] : memref<18x96xf32, #tpu.memory_space<vmem>>, vector<7x96xf32>
    %c2_143 = arith.constant 2 : index
    %c0_144 = arith.constant 0 : index
    %c0_145 = arith.constant 0 : index
    %200 = vector.load %arg9[%c2_143, %c0_144, %c0_145] : memref<3x96x112xf32, #tpu.memory_space<vmem>>, vector<1x96x112xf32>
    %201 = vector.shape_cast %200 : vector<1x96x112xf32> to vector<96x112xf32>
    %cst_146 = arith.constant dense<0.000000e+00> : vector<7x112xf32>
    %202 = tpu.matmul %199, %201, %cst_146 {dimension_numbers = #tpu.dot_dimension_numbers<[1], [0], [0], [1], [0, 0, 1, 1], [], []>} : vector<7x96xf32>, vector<96x112xf32>, vector<7x112xf32> -> vector<7x112xf32>
    %203 = arith.addf %198, %202 : vector<7x112xf32>
    %c0_147 = arith.constant 0 : index
    %c0_148 = arith.constant 0 : index
    %204 = vector.load %arg10[%c0_147, %c0_148] : memref<1x112xf32, #tpu.memory_space<vmem>>, vector<1x112xf32>
    %205 = vector.broadcast %204 : vector<1x112xf32> to vector<7x112xf32>
    %206 = arith.addf %203, %205 : vector<7x112xf32>
    %cst_149 = arith.constant 0.000000e+00 : f32
    %207 = vector.broadcast %cst_149 : f32 to vector<7x112xf32>
    %208 = arith.maximumf %206, %207 : vector<7x112xf32>
    %209 = vector.extract_strided_slice %208 {offsets = [0, 0], sizes = [1, 112], strides = [1, 1]} : vector<7x112xf32> to vector<1x112xf32>
    %c1_150 = arith.constant 1 : index
    %c0_151 = arith.constant 0 : index
    %210 = vector.load %arg19[%c1_150, %c0_151] : memref<42x112xf32, #tpu.memory_space<vmem>>, vector<1x112xf32>
    tpu.vector_store %arg19[%c1_150, %c0_151], %209 {strides = array<i32>} : memref<42x112xf32, #tpu.memory_space<vmem>>, vector<1x112xf32>,
    %211 = vector.extract_strided_slice %208 {offsets = [1, 0], sizes = [1, 112], strides = [1, 1]} : vector<7x112xf32> to vector<1x112xf32>
    %c4_152 = arith.constant 4 : index
    %c0_153 = arith.constant 0 : index
    %212 = vector.load %arg19[%c4_152, %c0_153] : memref<42x112xf32, #tpu.memory_space<vmem>>, vector<1x112xf32>
    tpu.vector_store %arg19[%c4_152, %c0_153], %211 {strides = array<i32>} : memref<42x112xf32, #tpu.memory_space<vmem>>, vector<1x112xf32>,
    %213 = vector.extract_strided_slice %208 {offsets = [2, 0], sizes = [1, 112], strides = [1, 1]} : vector<7x112xf32> to vector<1x112xf32>
    %c7_154 = arith.constant 7 : index
    %c0_155 = arith.constant 0 : index
    %214 = vector.load %arg19[%c7_154, %c0_155] : memref<42x112xf32, #tpu.memory_space<vmem>>, vector<1x112xf32>
    tpu.vector_store %arg19[%c7_154, %c0_155], %213 {strides = array<i32>} : memref<42x112xf32, #tpu.memory_space<vmem>>, vector<1x112xf32>,
    %215 = vector.extract_strided_slice %208 {offsets = [3, 0], sizes = [1, 112], strides = [1, 1]} : vector<7x112xf32> to vector<1x112xf32>
    %c10 = arith.constant 10 : index
    %c0_156 = arith.constant 0 : index
    %216 = vector.load %arg19[%c10, %c0_156] : memref<42x112xf32, #tpu.memory_space<vmem>>, vector<1x112xf32>
    tpu.vector_store %arg19[%c10, %c0_156], %215 {strides = array<i32>} : memref<42x112xf32, #tpu.memory_space<vmem>>, vector<1x112xf32>,
    %217 = vector.extract_strided_slice %208 {offsets = [4, 0], sizes = [1, 112], strides = [1, 1]} : vector<7x112xf32> to vector<1x112xf32>
    %c13 = arith.constant 13 : index
    %c0_157 = arith.constant 0 : index
    %218 = vector.load %arg19[%c13, %c0_157] : memref<42x112xf32, #tpu.memory_space<vmem>>, vector<1x112xf32>
    tpu.vector_store %arg19[%c13, %c0_157], %217 {strides = array<i32>} : memref<42x112xf32, #tpu.memory_space<vmem>>, vector<1x112xf32>,
    %219 = vector.extract_strided_slice %208 {offsets = [5, 0], sizes = [1, 112], strides = [1, 1]} : vector<7x112xf32> to vector<1x112xf32>
    %c16_158 = arith.constant 16 : index
    %c0_159 = arith.constant 0 : index
    %220 = vector.load %arg19[%c16_158, %c0_159] : memref<42x112xf32, #tpu.memory_space<vmem>>, vector<1x112xf32>
    tpu.vector_store %arg19[%c16_158, %c0_159], %219 {strides = array<i32>} : memref<42x112xf32, #tpu.memory_space<vmem>>, vector<1x112xf32>,
    %221 = vector.extract_strided_slice %208 {offsets = [6, 0], sizes = [1, 112], strides = [1, 1]} : vector<7x112xf32> to vector<1x112xf32>
    %c19 = arith.constant 19 : index
    %c0_160 = arith.constant 0 : index
    %222 = vector.load %arg19[%c19, %c0_160] : memref<42x112xf32, #tpu.memory_space<vmem>>, vector<1x112xf32>
    tpu.vector_store %arg19[%c19, %c0_160], %221 {strides = array<i32>} : memref<42x112xf32, #tpu.memory_space<vmem>>, vector<1x112xf32>,
    %c0_161 = arith.constant 0 : index
    %c0_162 = arith.constant 0 : index
    %223 = vector.load %arg19[%c0_161, %c0_162] : memref<42x112xf32, #tpu.memory_space<vmem>>, vector<19x112xf32>
    %c0_163 = arith.constant 0 : index
    %c0_164 = arith.constant 0 : index
    %c0_165 = arith.constant 0 : index
    %224 = vector.load %arg11[%c0_163, %c0_164, %c0_165] : memref<3x112x19xf32, #tpu.memory_space<vmem>>, vector<1x112x19xf32>
    %225 = vector.shape_cast %224 : vector<1x112x19xf32> to vector<112x19xf32>
    %cst_166 = arith.constant dense<0.000000e+00> : vector<19x19xf32>
    %226 = tpu.matmul %223, %225, %cst_166 {dimension_numbers = #tpu.dot_dimension_numbers<[1], [0], [0], [1], [0, 0, 1, 1], [], []>} : vector<19x112xf32>, vector<112x19xf32>, vector<19x19xf32> -> vector<19x19xf32>
    %c1_167 = arith.constant 1 : index
    %c0_168 = arith.constant 0 : index
    %227 = vector.load %arg19[%c1_167, %c0_168] : memref<42x112xf32, #tpu.memory_space<vmem>>, vector<19x112xf32>
    %c1_169 = arith.constant 1 : index
    %c0_170 = arith.constant 0 : index
    %c0_171 = arith.constant 0 : index
    %228 = vector.load %arg11[%c1_169, %c0_170, %c0_171] : memref<3x112x19xf32, #tpu.memory_space<vmem>>, vector<1x112x19xf32>
    %229 = vector.shape_cast %228 : vector<1x112x19xf32> to vector<112x19xf32>
    %cst_172 = arith.constant dense<0.000000e+00> : vector<19x19xf32>
    %230 = tpu.matmul %227, %229, %cst_172 {dimension_numbers = #tpu.dot_dimension_numbers<[1], [0], [0], [1], [0, 0, 1, 1], [], []>} : vector<19x112xf32>, vector<112x19xf32>, vector<19x19xf32> -> vector<19x19xf32>
    %231 = arith.addf %226, %230 : vector<19x19xf32>
    %c2_173 = arith.constant 2 : index
    %c0_174 = arith.constant 0 : index
    %232 = vector.load %arg19[%c2_173, %c0_174] : memref<42x112xf32, #tpu.memory_space<vmem>>, vector<19x112xf32>
    %c2_175 = arith.constant 2 : index
    %c0_176 = arith.constant 0 : index
    %c0_177 = arith.constant 0 : index
    %233 = vector.load %arg11[%c2_175, %c0_176, %c0_177] : memref<3x112x19xf32, #tpu.memory_space<vmem>>, vector<1x112x19xf32>
    %234 = vector.shape_cast %233 : vector<1x112x19xf32> to vector<112x19xf32>
    %cst_178 = arith.constant dense<0.000000e+00> : vector<19x19xf32>
    %235 = tpu.matmul %232, %234, %cst_178 {dimension_numbers = #tpu.dot_dimension_numbers<[1], [0], [0], [1], [0, 0, 1, 1], [], []>} : vector<19x112xf32>, vector<112x19xf32>, vector<19x19xf32> -> vector<19x19xf32>
    %236 = arith.addf %231, %235 : vector<19x19xf32>
    %c0_179 = arith.constant 0 : index
    %c0_180 = arith.constant 0 : index
    %237 = vector.load %arg12[%c0_179, %c0_180] : memref<1x19xf32, #tpu.memory_space<vmem>>, vector<1x19xf32>
    %238 = vector.broadcast %237 : vector<1x19xf32> to vector<19x19xf32>
    %239 = arith.addf %236, %238 : vector<19x19xf32>
    %240 = math.tanh %239 : vector<19x19xf32>
    %c0_181 = arith.constant 0 : index
    %c0_182 = arith.constant 0 : index
    %c0_183 = arith.constant 0 : index
    %c0_184 = arith.constant 0 : index
    %241 = vector.load %arg13[%c0_181, %c0_182, %c0_183, %c0_184] : memref<2x1x19x19xf32, #tpu.memory_space<vmem>>, vector<1x1x19x19xf32>
    %242 = vector.shape_cast %241 : vector<1x1x19x19xf32> to vector<19x19xf32>
    %243 = vector.shape_cast %240 : vector<19x19xf32> to vector<1x1x19x19xf32>
    tpu.vector_store %arg13[%c0_181, %c0_182, %c0_183, %c0_184], %243 {strides = array<i32>} : memref<2x1x19x19xf32, #tpu.memory_space<vmem>>, vector<1x1x19x19xf32>,
    %c30 = arith.constant 30 : index
    %c0_185 = arith.constant 0 : index
    %244 = vector.load %arg14[%c30, %c0_185] : memref<60x30xf32, #tpu.memory_space<vmem>>, vector<30x30xf32>
    %245 = tpu.iota {dimensions = array<i32: 0>} : vector<10x30xi32>
    %246 = tpu.iota {dimensions = array<i32: 1>} : vector<10x30xi32>
    %c3_i32_186 = arith.constant 3 : i32
    %247 = vector.broadcast %c3_i32_186 : i32 to vector<10x30xi32>
    %248 = arith.muli %245, %247 : vector<10x30xi32>
    %c0_i32_187 = arith.constant 0 : i32
    %249 = vector.broadcast %c0_i32_187 : i32 to vector<10x30xi32>
    %250 = arith.addi %248, %249 : vector<10x30xi32>
    %251 = arith.cmpi eq, %246, %250 : vector<10x30xi32>
    %252 = arith.extui %251 : vector<10x30xi1> to vector<10x30xi32>
    %253 = arith.sitofp %252 : vector<10x30xi32> to vector<10x30xf32>
    %cst_188 = arith.constant dense<0.000000e+00> : vector<10x30xf32>
    %254 = tpu.matmul %253, %244, %cst_188 {dimension_numbers = #tpu.dot_dimension_numbers<[1], [0], [0], [1], [0, 0, 1, 1], [], []>} : vector<10x30xf32>, vector<30x30xf32>, vector<10x30xf32> -> vector<10x30xf32>
    %c0_189 = arith.constant 0 : index
    %c0_190 = arith.constant 0 : index
    %c0_191 = arith.constant 0 : index
    %255 = vector.load %arg1[%c0_189, %c0_190, %c0_191] : memref<3x30x160xf32, #tpu.memory_space<vmem>>, vector<1x30x160xf32>
    %256 = vector.shape_cast %255 : vector<1x30x160xf32> to vector<30x160xf32>
    %cst_192 = arith.constant dense<0.000000e+00> : vector<10x160xf32>
    %257 = tpu.matmul %254, %256, %cst_192 {dimension_numbers = #tpu.dot_dimension_numbers<[1], [0], [0], [1], [0, 0, 1, 1], [], []>} : vector<10x30xf32>, vector<30x160xf32>, vector<10x160xf32> -> vector<10x160xf32>
    %258 = tpu.iota {dimensions = array<i32: 0>} : vector<10x30xi32>
    %259 = tpu.iota {dimensions = array<i32: 1>} : vector<10x30xi32>
    %c3_i32_193 = arith.constant 3 : i32
    %260 = vector.broadcast %c3_i32_193 : i32 to vector<10x30xi32>
    %261 = arith.muli %258, %260 : vector<10x30xi32>
    %c1_i32_194 = arith.constant 1 : i32
    %262 = vector.broadcast %c1_i32_194 : i32 to vector<10x30xi32>
    %263 = arith.addi %261, %262 : vector<10x30xi32>
    %264 = arith.cmpi eq, %259, %263 : vector<10x30xi32>
    %265 = arith.extui %264 : vector<10x30xi1> to vector<10x30xi32>
    %266 = arith.sitofp %265 : vector<10x30xi32> to vector<10x30xf32>
    %cst_195 = arith.constant dense<0.000000e+00> : vector<10x30xf32>
    %267 = tpu.matmul %266, %244, %cst_195 {dimension_numbers = #tpu.dot_dimension_numbers<[1], [0], [0], [1], [0, 0, 1, 1], [], []>} : vector<10x30xf32>, vector<30x30xf32>, vector<10x30xf32> -> vector<10x30xf32>
    %c1_196 = arith.constant 1 : index
    %c0_197 = arith.constant 0 : index
    %c0_198 = arith.constant 0 : index
    %268 = vector.load %arg1[%c1_196, %c0_197, %c0_198] : memref<3x30x160xf32, #tpu.memory_space<vmem>>, vector<1x30x160xf32>
    %269 = vector.shape_cast %268 : vector<1x30x160xf32> to vector<30x160xf32>
    %cst_199 = arith.constant dense<0.000000e+00> : vector<10x160xf32>
    %270 = tpu.matmul %267, %269, %cst_199 {dimension_numbers = #tpu.dot_dimension_numbers<[1], [0], [0], [1], [0, 0, 1, 1], [], []>} : vector<10x30xf32>, vector<30x160xf32>, vector<10x160xf32> -> vector<10x160xf32>
    %271 = arith.addf %257, %270 : vector<10x160xf32>
    %272 = tpu.iota {dimensions = array<i32: 0>} : vector<10x30xi32>
    %273 = tpu.iota {dimensions = array<i32: 1>} : vector<10x30xi32>
    %c3_i32_200 = arith.constant 3 : i32
    %274 = vector.broadcast %c3_i32_200 : i32 to vector<10x30xi32>
    %275 = arith.muli %272, %274 : vector<10x30xi32>
    %c2_i32_201 = arith.constant 2 : i32
    %276 = vector.broadcast %c2_i32_201 : i32 to vector<10x30xi32>
    %277 = arith.addi %275, %276 : vector<10x30xi32>
    %278 = arith.cmpi eq, %273, %277 : vector<10x30xi32>
    %279 = arith.extui %278 : vector<10x30xi1> to vector<10x30xi32>
    %280 = arith.sitofp %279 : vector<10x30xi32> to vector<10x30xf32>
    %cst_202 = arith.constant dense<0.000000e+00> : vector<10x30xf32>
    %281 = tpu.matmul %280, %244, %cst_202 {dimension_numbers = #tpu.dot_dimension_numbers<[1], [0], [0], [1], [0, 0, 1, 1], [], []>} : vector<10x30xf32>, vector<30x30xf32>, vector<10x30xf32> -> vector<10x30xf32>
    %c2_203 = arith.constant 2 : index
    %c0_204 = arith.constant 0 : index
    %c0_205 = arith.constant 0 : index
    %282 = vector.load %arg1[%c2_203, %c0_204, %c0_205] : memref<3x30x160xf32, #tpu.memory_space<vmem>>, vector<1x30x160xf32>
    %283 = vector.shape_cast %282 : vector<1x30x160xf32> to vector<30x160xf32>
    %cst_206 = arith.constant dense<0.000000e+00> : vector<10x160xf32>
    %284 = tpu.matmul %281, %283, %cst_206 {dimension_numbers = #tpu.dot_dimension_numbers<[1], [0], [0], [1], [0, 0, 1, 1], [], []>} : vector<10x30xf32>, vector<30x160xf32>, vector<10x160xf32> -> vector<10x160xf32>
    %285 = arith.addf %271, %284 : vector<10x160xf32>
    %c0_207 = arith.constant 0 : index
    %c0_208 = arith.constant 0 : index
    %286 = vector.load %arg2[%c0_207, %c0_208] : memref<1x160xf32, #tpu.memory_space<vmem>>, vector<1x160xf32>
    %287 = vector.broadcast %286 : vector<1x160xf32> to vector<10x160xf32>
    %288 = arith.addf %285, %287 : vector<10x160xf32>
    %cst_209 = arith.constant 0.000000e+00 : f32
    %289 = vector.broadcast %cst_209 : f32 to vector<10x160xf32>
    %290 = arith.maximumf %288, %289 : vector<10x160xf32>
    %c13_210 = arith.constant 13 : index
    %c16_211 = arith.constant 16 : index
    %291 = vector.load %arg15[%c13_210, %c16_211] : memref<24x192xf32, #tpu.memory_space<vmem>>, vector<10x160xf32>
    tpu.vector_store %arg15[%c13_210, %c16_211], %290 {strides = array<i32>} : memref<24x192xf32, #tpu.memory_space<vmem>>, vector<10x160xf32>,
    %c12 = arith.constant 12 : index
    %c0_212 = arith.constant 0 : index
    %292 = vector.load %arg15[%c12, %c0_212] : memref<24x192xf32, #tpu.memory_space<vmem>>, vector<12x192xf32>
    %293 = tpu.iota {dimensions = array<i32: 0>} : vector<4x12xi32>
    %294 = tpu.iota {dimensions = array<i32: 1>} : vector<4x12xi32>
    %c3_i32_213 = arith.constant 3 : i32
    %295 = vector.broadcast %c3_i32_213 : i32 to vector<4x12xi32>
    %296 = arith.muli %293, %295 : vector<4x12xi32>
    %c0_i32_214 = arith.constant 0 : i32
    %297 = vector.broadcast %c0_i32_214 : i32 to vector<4x12xi32>
    %298 = arith.addi %296, %297 : vector<4x12xi32>
    %299 = arith.cmpi eq, %294, %298 : vector<4x12xi32>
    %300 = arith.extui %299 : vector<4x12xi1> to vector<4x12xi32>
    %301 = arith.sitofp %300 : vector<4x12xi32> to vector<4x12xf32>
    %cst_215 = arith.constant dense<0.000000e+00> : vector<4x192xf32>
    %302 = tpu.matmul %301, %292, %cst_215 {dimension_numbers = #tpu.dot_dimension_numbers<[1], [0], [0], [1], [0, 0, 1, 1], [], []>} : vector<4x12xf32>, vector<12x192xf32>, vector<4x192xf32> -> vector<4x192xf32>
    %c0_216 = arith.constant 0 : index
    %c0_217 = arith.constant 0 : index
    %c0_218 = arith.constant 0 : index
    %303 = vector.load %arg3[%c0_216, %c0_217, %c0_218] : memref<3x192x128xf32, #tpu.memory_space<vmem>>, vector<1x192x128xf32>
    %304 = vector.shape_cast %303 : vector<1x192x128xf32> to vector<192x128xf32>
    %cst_219 = arith.constant dense<0.000000e+00> : vector<4x128xf32>
    %305 = tpu.matmul %302, %304, %cst_219 {dimension_numbers = #tpu.dot_dimension_numbers<[1], [0], [0], [1], [0, 0, 1, 1], [], []>} : vector<4x192xf32>, vector<192x128xf32>, vector<4x128xf32> -> vector<4x128xf32>
    %306 = tpu.iota {dimensions = array<i32: 0>} : vector<4x12xi32>
    %307 = tpu.iota {dimensions = array<i32: 1>} : vector<4x12xi32>
    %c3_i32_220 = arith.constant 3 : i32
    %308 = vector.broadcast %c3_i32_220 : i32 to vector<4x12xi32>
    %309 = arith.muli %306, %308 : vector<4x12xi32>
    %c1_i32_221 = arith.constant 1 : i32
    %310 = vector.broadcast %c1_i32_221 : i32 to vector<4x12xi32>
    %311 = arith.addi %309, %310 : vector<4x12xi32>
    %312 = arith.cmpi eq, %307, %311 : vector<4x12xi32>
    %313 = arith.extui %312 : vector<4x12xi1> to vector<4x12xi32>
    %314 = arith.sitofp %313 : vector<4x12xi32> to vector<4x12xf32>
    %cst_222 = arith.constant dense<0.000000e+00> : vector<4x192xf32>
    %315 = tpu.matmul %314, %292, %cst_222 {dimension_numbers = #tpu.dot_dimension_numbers<[1], [0], [0], [1], [0, 0, 1, 1], [], []>} : vector<4x12xf32>, vector<12x192xf32>, vector<4x192xf32> -> vector<4x192xf32>
    %c1_223 = arith.constant 1 : index
    %c0_224 = arith.constant 0 : index
    %c0_225 = arith.constant 0 : index
    %316 = vector.load %arg3[%c1_223, %c0_224, %c0_225] : memref<3x192x128xf32, #tpu.memory_space<vmem>>, vector<1x192x128xf32>
    %317 = vector.shape_cast %316 : vector<1x192x128xf32> to vector<192x128xf32>
    %cst_226 = arith.constant dense<0.000000e+00> : vector<4x128xf32>
    %318 = tpu.matmul %315, %317, %cst_226 {dimension_numbers = #tpu.dot_dimension_numbers<[1], [0], [0], [1], [0, 0, 1, 1], [], []>} : vector<4x192xf32>, vector<192x128xf32>, vector<4x128xf32> -> vector<4x128xf32>
    %319 = arith.addf %305, %318 : vector<4x128xf32>
    %320 = tpu.iota {dimensions = array<i32: 0>} : vector<4x12xi32>
    %321 = tpu.iota {dimensions = array<i32: 1>} : vector<4x12xi32>
    %c3_i32_227 = arith.constant 3 : i32
    %322 = vector.broadcast %c3_i32_227 : i32 to vector<4x12xi32>
    %323 = arith.muli %320, %322 : vector<4x12xi32>
    %c2_i32_228 = arith.constant 2 : i32
    %324 = vector.broadcast %c2_i32_228 : i32 to vector<4x12xi32>
    %325 = arith.addi %323, %324 : vector<4x12xi32>
    %326 = arith.cmpi eq, %321, %325 : vector<4x12xi32>
    %327 = arith.extui %326 : vector<4x12xi1> to vector<4x12xi32>
    %328 = arith.sitofp %327 : vector<4x12xi32> to vector<4x12xf32>
    %cst_229 = arith.constant dense<0.000000e+00> : vector<4x192xf32>
    %329 = tpu.matmul %328, %292, %cst_229 {dimension_numbers = #tpu.dot_dimension_numbers<[1], [0], [0], [1], [0, 0, 1, 1], [], []>} : vector<4x12xf32>, vector<12x192xf32>, vector<4x192xf32> -> vector<4x192xf32>
    %c2_230 = arith.constant 2 : index
    %c0_231 = arith.constant 0 : index
    %c0_232 = arith.constant 0 : index
    %330 = vector.load %arg3[%c2_230, %c0_231, %c0_232] : memref<3x192x128xf32, #tpu.memory_space<vmem>>, vector<1x192x128xf32>
    %331 = vector.shape_cast %330 : vector<1x192x128xf32> to vector<192x128xf32>
    %cst_233 = arith.constant dense<0.000000e+00> : vector<4x128xf32>
    %332 = tpu.matmul %329, %331, %cst_233 {dimension_numbers = #tpu.dot_dimension_numbers<[1], [0], [0], [1], [0, 0, 1, 1], [], []>} : vector<4x192xf32>, vector<192x128xf32>, vector<4x128xf32> -> vector<4x128xf32>
    %333 = arith.addf %319, %332 : vector<4x128xf32>
    %c0_234 = arith.constant 0 : index
    %c0_235 = arith.constant 0 : index
    %334 = vector.load %arg4[%c0_234, %c0_235] : memref<1x128xf32, #tpu.memory_space<vmem>>, vector<1x128xf32>
    %335 = vector.broadcast %334 : vector<1x128xf32> to vector<4x128xf32>
    %336 = arith.addf %333, %335 : vector<4x128xf32>
    %cst_236 = arith.constant 0.000000e+00 : f32
    %337 = vector.broadcast %cst_236 : f32 to vector<4x128xf32>
    %338 = arith.maximumf %336, %337 : vector<4x128xf32>
    %c7_237 = arith.constant 7 : index
    %c32_238 = arith.constant 32 : index
    %339 = vector.load %arg16[%c7_237, %c32_238] : memref<12x192xf32, #tpu.memory_space<vmem>>, vector<4x128xf32>
    tpu.vector_store %arg16[%c7_237, %c32_238], %338 {strides = array<i32>} : memref<12x192xf32, #tpu.memory_space<vmem>>, vector<4x128xf32>,
    %c6 = arith.constant 6 : index
    %c0_239 = arith.constant 0 : index
    %340 = vector.load %arg16[%c6, %c0_239] : memref<12x192xf32, #tpu.memory_space<vmem>>, vector<6x192xf32>
    %341 = tpu.iota {dimensions = array<i32: 0>} : vector<2x6xi32>
    %342 = tpu.iota {dimensions = array<i32: 1>} : vector<2x6xi32>
    %c2_i32_240 = arith.constant 2 : i32
    %343 = vector.broadcast %c2_i32_240 : i32 to vector<2x6xi32>
    %344 = arith.muli %341, %343 : vector<2x6xi32>
    %c0_i32_241 = arith.constant 0 : i32
    %345 = vector.broadcast %c0_i32_241 : i32 to vector<2x6xi32>
    %346 = arith.addi %344, %345 : vector<2x6xi32>
    %347 = arith.cmpi eq, %342, %346 : vector<2x6xi32>
    %348 = arith.extui %347 : vector<2x6xi1> to vector<2x6xi32>
    %349 = arith.sitofp %348 : vector<2x6xi32> to vector<2x6xf32>
    %cst_242 = arith.constant dense<0.000000e+00> : vector<2x192xf32>
    %350 = tpu.matmul %349, %340, %cst_242 {dimension_numbers = #tpu.dot_dimension_numbers<[1], [0], [0], [1], [0, 0, 1, 1], [], []>} : vector<2x6xf32>, vector<6x192xf32>, vector<2x192xf32> -> vector<2x192xf32>
    %c0_243 = arith.constant 0 : index
    %c0_244 = arith.constant 0 : index
    %c0_245 = arith.constant 0 : index
    %351 = vector.load %arg5[%c0_243, %c0_244, %c0_245] : memref<3x192x128xf32, #tpu.memory_space<vmem>>, vector<1x192x128xf32>
    %352 = vector.shape_cast %351 : vector<1x192x128xf32> to vector<192x128xf32>
    %cst_246 = arith.constant dense<0.000000e+00> : vector<2x128xf32>
    %353 = tpu.matmul %350, %352, %cst_246 {dimension_numbers = #tpu.dot_dimension_numbers<[1], [0], [0], [1], [0, 0, 1, 1], [], []>} : vector<2x192xf32>, vector<192x128xf32>, vector<2x128xf32> -> vector<2x128xf32>
    %354 = tpu.iota {dimensions = array<i32: 0>} : vector<2x6xi32>
    %355 = tpu.iota {dimensions = array<i32: 1>} : vector<2x6xi32>
    %c2_i32_247 = arith.constant 2 : i32
    %356 = vector.broadcast %c2_i32_247 : i32 to vector<2x6xi32>
    %357 = arith.muli %354, %356 : vector<2x6xi32>
    %c1_i32_248 = arith.constant 1 : i32
    %358 = vector.broadcast %c1_i32_248 : i32 to vector<2x6xi32>
    %359 = arith.addi %357, %358 : vector<2x6xi32>
    %360 = arith.cmpi eq, %355, %359 : vector<2x6xi32>
    %361 = arith.extui %360 : vector<2x6xi1> to vector<2x6xi32>
    %362 = arith.sitofp %361 : vector<2x6xi32> to vector<2x6xf32>
    %cst_249 = arith.constant dense<0.000000e+00> : vector<2x192xf32>
    %363 = tpu.matmul %362, %340, %cst_249 {dimension_numbers = #tpu.dot_dimension_numbers<[1], [0], [0], [1], [0, 0, 1, 1], [], []>} : vector<2x6xf32>, vector<6x192xf32>, vector<2x192xf32> -> vector<2x192xf32>
    %c1_250 = arith.constant 1 : index
    %c0_251 = arith.constant 0 : index
    %c0_252 = arith.constant 0 : index
    %364 = vector.load %arg5[%c1_250, %c0_251, %c0_252] : memref<3x192x128xf32, #tpu.memory_space<vmem>>, vector<1x192x128xf32>
    %365 = vector.shape_cast %364 : vector<1x192x128xf32> to vector<192x128xf32>
    %cst_253 = arith.constant dense<0.000000e+00> : vector<2x128xf32>
    %366 = tpu.matmul %363, %365, %cst_253 {dimension_numbers = #tpu.dot_dimension_numbers<[1], [0], [0], [1], [0, 0, 1, 1], [], []>} : vector<2x192xf32>, vector<192x128xf32>, vector<2x128xf32> -> vector<2x128xf32>
    %367 = arith.addf %353, %366 : vector<2x128xf32>
    %368 = tpu.iota {dimensions = array<i32: 0>} : vector<2x6xi32>
    %369 = tpu.iota {dimensions = array<i32: 1>} : vector<2x6xi32>
    %c2_i32_254 = arith.constant 2 : i32
    %370 = vector.broadcast %c2_i32_254 : i32 to vector<2x6xi32>
    %371 = arith.muli %368, %370 : vector<2x6xi32>
    %c2_i32_255 = arith.constant 2 : i32
    %372 = vector.broadcast %c2_i32_255 : i32 to vector<2x6xi32>
    %373 = arith.addi %371, %372 : vector<2x6xi32>
    %374 = arith.cmpi eq, %369, %373 : vector<2x6xi32>
    %375 = arith.extui %374 : vector<2x6xi1> to vector<2x6xi32>
    %376 = arith.sitofp %375 : vector<2x6xi32> to vector<2x6xf32>
    %cst_256 = arith.constant dense<0.000000e+00> : vector<2x192xf32>
    %377 = tpu.matmul %376, %340, %cst_256 {dimension_numbers = #tpu.dot_dimension_numbers<[1], [0], [0], [1], [0, 0, 1, 1], [], []>} : vector<2x6xf32>, vector<6x192xf32>, vector<2x192xf32> -> vector<2x192xf32>
    %c2_257 = arith.constant 2 : index
    %c0_258 = arith.constant 0 : index
    %c0_259 = arith.constant 0 : index
    %378 = vector.load %arg5[%c2_257, %c0_258, %c0_259] : memref<3x192x128xf32, #tpu.memory_space<vmem>>, vector<1x192x128xf32>
    %379 = vector.shape_cast %378 : vector<1x192x128xf32> to vector<192x128xf32>
    %cst_260 = arith.constant dense<0.000000e+00> : vector<2x128xf32>
    %380 = tpu.matmul %377, %379, %cst_260 {dimension_numbers = #tpu.dot_dimension_numbers<[1], [0], [0], [1], [0, 0, 1, 1], [], []>} : vector<2x192xf32>, vector<192x128xf32>, vector<2x128xf32> -> vector<2x128xf32>
    %381 = arith.addf %367, %380 : vector<2x128xf32>
    %c0_261 = arith.constant 0 : index
    %c0_262 = arith.constant 0 : index
    %382 = vector.load %arg6[%c0_261, %c0_262] : memref<1x128xf32, #tpu.memory_space<vmem>>, vector<1x128xf32>
    %383 = vector.broadcast %382 : vector<1x128xf32> to vector<2x128xf32>
    %384 = arith.addf %381, %383 : vector<2x128xf32>
    %cst_263 = arith.constant 0.000000e+00 : f32
    %385 = vector.broadcast %cst_263 : f32 to vector<2x128xf32>
    %386 = arith.maximumf %384, %385 : vector<2x128xf32>
    %387 = vector.extract_strided_slice %386 {offsets = [0, 0], sizes = [1, 128], strides = [1, 1]} : vector<2x128xf32> to vector<1x128xf32>
    %c6_264 = arith.constant 6 : index
    %c0_265 = arith.constant 0 : index
    %388 = vector.load %arg17[%c6_264, %c0_265] : memref<10x128xf32, #tpu.memory_space<vmem>>, vector<1x128xf32>
    tpu.vector_store %arg17[%c6_264, %c0_265], %387 {strides = array<i32>} : memref<10x128xf32, #tpu.memory_space<vmem>>, vector<1x128xf32>,
    %389 = vector.extract_strided_slice %386 {offsets = [1, 0], sizes = [1, 128], strides = [1, 1]} : vector<2x128xf32> to vector<1x128xf32>
    %c8 = arith.constant 8 : index
    %c0_266 = arith.constant 0 : index
    %390 = vector.load %arg17[%c8, %c0_266] : memref<10x128xf32, #tpu.memory_space<vmem>>, vector<1x128xf32>
    tpu.vector_store %arg17[%c8, %c0_266], %389 {strides = array<i32>} : memref<10x128xf32, #tpu.memory_space<vmem>>, vector<1x128xf32>,
    %c5 = arith.constant 5 : index
    %c0_267 = arith.constant 0 : index
    %391 = vector.load %arg17[%c5, %c0_267] : memref<10x128xf32, #tpu.memory_space<vmem>>, vector<3x128xf32>
    %c0_268 = arith.constant 0 : index
    %c0_269 = arith.constant 0 : index
    %c0_270 = arith.constant 0 : index
    %392 = vector.load %arg7[%c0_268, %c0_269, %c0_270] : memref<3x128x96xf32, #tpu.memory_space<vmem>>, vector<1x128x96xf32>
    %393 = vector.shape_cast %392 : vector<1x128x96xf32> to vector<128x96xf32>
    %cst_271 = arith.constant dense<0.000000e+00> : vector<3x96xf32>
    %394 = tpu.matmul %391, %393, %cst_271 {dimension_numbers = #tpu.dot_dimension_numbers<[1], [0], [0], [1], [0, 0, 1, 1], [], []>} : vector<3x128xf32>, vector<128x96xf32>, vector<3x96xf32> -> vector<3x96xf32>
    %c6_272 = arith.constant 6 : index
    %c0_273 = arith.constant 0 : index
    %395 = vector.load %arg17[%c6_272, %c0_273] : memref<10x128xf32, #tpu.memory_space<vmem>>, vector<3x128xf32>
    %c1_274 = arith.constant 1 : index
    %c0_275 = arith.constant 0 : index
    %c0_276 = arith.constant 0 : index
    %396 = vector.load %arg7[%c1_274, %c0_275, %c0_276] : memref<3x128x96xf32, #tpu.memory_space<vmem>>, vector<1x128x96xf32>
    %397 = vector.shape_cast %396 : vector<1x128x96xf32> to vector<128x96xf32>
    %cst_277 = arith.constant dense<0.000000e+00> : vector<3x96xf32>
    %398 = tpu.matmul %395, %397, %cst_277 {dimension_numbers = #tpu.dot_dimension_numbers<[1], [0], [0], [1], [0, 0, 1, 1], [], []>} : vector<3x128xf32>, vector<128x96xf32>, vector<3x96xf32> -> vector<3x96xf32>
    %399 = arith.addf %394, %398 : vector<3x96xf32>
    %c7_278 = arith.constant 7 : index
    %c0_279 = arith.constant 0 : index
    %400 = vector.load %arg17[%c7_278, %c0_279] : memref<10x128xf32, #tpu.memory_space<vmem>>, vector<3x128xf32>
    %c2_280 = arith.constant 2 : index
    %c0_281 = arith.constant 0 : index
    %c0_282 = arith.constant 0 : index
    %401 = vector.load %arg7[%c2_280, %c0_281, %c0_282] : memref<3x128x96xf32, #tpu.memory_space<vmem>>, vector<1x128x96xf32>
    %402 = vector.shape_cast %401 : vector<1x128x96xf32> to vector<128x96xf32>
    %cst_283 = arith.constant dense<0.000000e+00> : vector<3x96xf32>
    %403 = tpu.matmul %400, %402, %cst_283 {dimension_numbers = #tpu.dot_dimension_numbers<[1], [0], [0], [1], [0, 0, 1, 1], [], []>} : vector<3x128xf32>, vector<128x96xf32>, vector<3x96xf32> -> vector<3x96xf32>
    %404 = arith.addf %399, %403 : vector<3x96xf32>
    %c0_284 = arith.constant 0 : index
    %c0_285 = arith.constant 0 : index
    %405 = vector.load %arg8[%c0_284, %c0_285] : memref<1x96xf32, #tpu.memory_space<vmem>>, vector<1x96xf32>
    %406 = vector.broadcast %405 : vector<1x96xf32> to vector<3x96xf32>
    %407 = arith.addf %404, %406 : vector<3x96xf32>
    %cst_286 = arith.constant 0.000000e+00 : f32
    %408 = vector.broadcast %cst_286 : f32 to vector<3x96xf32>
    %409 = arith.maximumf %407, %408 : vector<3x96xf32>
    %410 = vector.extract_strided_slice %409 {offsets = [0, 0], sizes = [1, 96], strides = [1, 1]} : vector<3x96xf32> to vector<1x96xf32>
    %c10_287 = arith.constant 10 : index
    %c0_288 = arith.constant 0 : index
    %411 = vector.load %arg18[%c10_287, %c0_288] : memref<18x96xf32, #tpu.memory_space<vmem>>, vector<1x96xf32>
    tpu.vector_store %arg18[%c10_287, %c0_288], %410 {strides = array<i32>} : memref<18x96xf32, #tpu.memory_space<vmem>>, vector<1x96xf32>,
    %412 = vector.extract_strided_slice %409 {offsets = [1, 0], sizes = [1, 96], strides = [1, 1]} : vector<3x96xf32> to vector<1x96xf32>
    %c13_289 = arith.constant 13 : index
    %c0_290 = arith.constant 0 : index
    %413 = vector.load %arg18[%c13_289, %c0_290] : memref<18x96xf32, #tpu.memory_space<vmem>>, vector<1x96xf32>
    tpu.vector_store %arg18[%c13_289, %c0_290], %412 {strides = array<i32>} : memref<18x96xf32, #tpu.memory_space<vmem>>, vector<1x96xf32>,
    %414 = vector.extract_strided_slice %409 {offsets = [2, 0], sizes = [1, 96], strides = [1, 1]} : vector<3x96xf32> to vector<1x96xf32>
    %c16_291 = arith.constant 16 : index
    %c0_292 = arith.constant 0 : index
    %415 = vector.load %arg18[%c16_291, %c0_292] : memref<18x96xf32, #tpu.memory_space<vmem>>, vector<1x96xf32>
    tpu.vector_store %arg18[%c16_291, %c0_292], %414 {strides = array<i32>} : memref<18x96xf32, #tpu.memory_space<vmem>>, vector<1x96xf32>,
    %c9 = arith.constant 9 : index
    %c0_293 = arith.constant 0 : index
    %416 = vector.load %arg18[%c9, %c0_293] : memref<18x96xf32, #tpu.memory_space<vmem>>, vector<7x96xf32>
    %c0_294 = arith.constant 0 : index
    %c0_295 = arith.constant 0 : index
    %c0_296 = arith.constant 0 : index
    %417 = vector.load %arg9[%c0_294, %c0_295, %c0_296] : memref<3x96x112xf32, #tpu.memory_space<vmem>>, vector<1x96x112xf32>
    %418 = vector.shape_cast %417 : vector<1x96x112xf32> to vector<96x112xf32>
    %cst_297 = arith.constant dense<0.000000e+00> : vector<7x112xf32>
    %419 = tpu.matmul %416, %418, %cst_297 {dimension_numbers = #tpu.dot_dimension_numbers<[1], [0], [0], [1], [0, 0, 1, 1], [], []>} : vector<7x96xf32>, vector<96x112xf32>, vector<7x112xf32> -> vector<7x112xf32>
    %c10_298 = arith.constant 10 : index
    %c0_299 = arith.constant 0 : index
    %420 = vector.load %arg18[%c10_298, %c0_299] : memref<18x96xf32, #tpu.memory_space<vmem>>, vector<7x96xf32>
    %c1_300 = arith.constant 1 : index
    %c0_301 = arith.constant 0 : index
    %c0_302 = arith.constant 0 : index
    %421 = vector.load %arg9[%c1_300, %c0_301, %c0_302] : memref<3x96x112xf32, #tpu.memory_space<vmem>>, vector<1x96x112xf32>
    %422 = vector.shape_cast %421 : vector<1x96x112xf32> to vector<96x112xf32>
    %cst_303 = arith.constant dense<0.000000e+00> : vector<7x112xf32>
    %423 = tpu.matmul %420, %422, %cst_303 {dimension_numbers = #tpu.dot_dimension_numbers<[1], [0], [0], [1], [0, 0, 1, 1], [], []>} : vector<7x96xf32>, vector<96x112xf32>, vector<7x112xf32> -> vector<7x112xf32>
    %424 = arith.addf %419, %423 : vector<7x112xf32>
    %c11 = arith.constant 11 : index
    %c0_304 = arith.constant 0 : index
    %425 = vector.load %arg18[%c11, %c0_304] : memref<18x96xf32, #tpu.memory_space<vmem>>, vector<7x96xf32>
    %c2_305 = arith.constant 2 : index
    %c0_306 = arith.constant 0 : index
    %c0_307 = arith.constant 0 : index
    %426 = vector.load %arg9[%c2_305, %c0_306, %c0_307] : memref<3x96x112xf32, #tpu.memory_space<vmem>>, vector<1x96x112xf32>
    %427 = vector.shape_cast %426 : vector<1x96x112xf32> to vector<96x112xf32>
    %cst_308 = arith.constant dense<0.000000e+00> : vector<7x112xf32>
    %428 = tpu.matmul %425, %427, %cst_308 {dimension_numbers = #tpu.dot_dimension_numbers<[1], [0], [0], [1], [0, 0, 1, 1], [], []>} : vector<7x96xf32>, vector<96x112xf32>, vector<7x112xf32> -> vector<7x112xf32>
    %429 = arith.addf %424, %428 : vector<7x112xf32>
    %c0_309 = arith.constant 0 : index
    %c0_310 = arith.constant 0 : index
    %430 = vector.load %arg10[%c0_309, %c0_310] : memref<1x112xf32, #tpu.memory_space<vmem>>, vector<1x112xf32>
    %431 = vector.broadcast %430 : vector<1x112xf32> to vector<7x112xf32>
    %432 = arith.addf %429, %431 : vector<7x112xf32>
    %cst_311 = arith.constant 0.000000e+00 : f32
    %433 = vector.broadcast %cst_311 : f32 to vector<7x112xf32>
    %434 = arith.maximumf %432, %433 : vector<7x112xf32>
    %435 = vector.extract_strided_slice %434 {offsets = [0, 0], sizes = [1, 112], strides = [1, 1]} : vector<7x112xf32> to vector<1x112xf32>
    %c22 = arith.constant 22 : index
    %c0_312 = arith.constant 0 : index
    %436 = vector.load %arg19[%c22, %c0_312] : memref<42x112xf32, #tpu.memory_space<vmem>>, vector<1x112xf32>
    tpu.vector_store %arg19[%c22, %c0_312], %435 {strides = array<i32>} : memref<42x112xf32, #tpu.memory_space<vmem>>, vector<1x112xf32>,
    %437 = vector.extract_strided_slice %434 {offsets = [1, 0], sizes = [1, 112], strides = [1, 1]} : vector<7x112xf32> to vector<1x112xf32>
    %c25 = arith.constant 25 : index
    %c0_313 = arith.constant 0 : index
    %438 = vector.load %arg19[%c25, %c0_313] : memref<42x112xf32, #tpu.memory_space<vmem>>, vector<1x112xf32>
    tpu.vector_store %arg19[%c25, %c0_313], %437 {strides = array<i32>} : memref<42x112xf32, #tpu.memory_space<vmem>>, vector<1x112xf32>,
    %439 = vector.extract_strided_slice %434 {offsets = [2, 0], sizes = [1, 112], strides = [1, 1]} : vector<7x112xf32> to vector<1x112xf32>
    %c28 = arith.constant 28 : index
    %c0_314 = arith.constant 0 : index
    %440 = vector.load %arg19[%c28, %c0_314] : memref<42x112xf32, #tpu.memory_space<vmem>>, vector<1x112xf32>
    tpu.vector_store %arg19[%c28, %c0_314], %439 {strides = array<i32>} : memref<42x112xf32, #tpu.memory_space<vmem>>, vector<1x112xf32>,
    %441 = vector.extract_strided_slice %434 {offsets = [3, 0], sizes = [1, 112], strides = [1, 1]} : vector<7x112xf32> to vector<1x112xf32>
    %c31_315 = arith.constant 31 : index
    %c0_316 = arith.constant 0 : index
    %442 = vector.load %arg19[%c31_315, %c0_316] : memref<42x112xf32, #tpu.memory_space<vmem>>, vector<1x112xf32>
    tpu.vector_store %arg19[%c31_315, %c0_316], %441 {strides = array<i32>} : memref<42x112xf32, #tpu.memory_space<vmem>>, vector<1x112xf32>,
    %443 = vector.extract_strided_slice %434 {offsets = [4, 0], sizes = [1, 112], strides = [1, 1]} : vector<7x112xf32> to vector<1x112xf32>
    %c34 = arith.constant 34 : index
    %c0_317 = arith.constant 0 : index
    %444 = vector.load %arg19[%c34, %c0_317] : memref<42x112xf32, #tpu.memory_space<vmem>>, vector<1x112xf32>
    tpu.vector_store %arg19[%c34, %c0_317], %443 {strides = array<i32>} : memref<42x112xf32, #tpu.memory_space<vmem>>, vector<1x112xf32>,
    %445 = vector.extract_strided_slice %434 {offsets = [5, 0], sizes = [1, 112], strides = [1, 1]} : vector<7x112xf32> to vector<1x112xf32>
    %c37 = arith.constant 37 : index
    %c0_318 = arith.constant 0 : index
    %446 = vector.load %arg19[%c37, %c0_318] : memref<42x112xf32, #tpu.memory_space<vmem>>, vector<1x112xf32>
    tpu.vector_store %arg19[%c37, %c0_318], %445 {strides = array<i32>} : memref<42x112xf32, #tpu.memory_space<vmem>>, vector<1x112xf32>,
    %447 = vector.extract_strided_slice %434 {offsets = [6, 0], sizes = [1, 112], strides = [1, 1]} : vector<7x112xf32> to vector<1x112xf32>
    %c40 = arith.constant 40 : index
    %c0_319 = arith.constant 0 : index
    %448 = vector.load %arg19[%c40, %c0_319] : memref<42x112xf32, #tpu.memory_space<vmem>>, vector<1x112xf32>
    tpu.vector_store %arg19[%c40, %c0_319], %447 {strides = array<i32>} : memref<42x112xf32, #tpu.memory_space<vmem>>, vector<1x112xf32>,
    %c21 = arith.constant 21 : index
    %c0_320 = arith.constant 0 : index
    %449 = vector.load %arg19[%c21, %c0_320] : memref<42x112xf32, #tpu.memory_space<vmem>>, vector<19x112xf32>
    %c0_321 = arith.constant 0 : index
    %c0_322 = arith.constant 0 : index
    %c0_323 = arith.constant 0 : index
    %450 = vector.load %arg11[%c0_321, %c0_322, %c0_323] : memref<3x112x19xf32, #tpu.memory_space<vmem>>, vector<1x112x19xf32>
    %451 = vector.shape_cast %450 : vector<1x112x19xf32> to vector<112x19xf32>
    %cst_324 = arith.constant dense<0.000000e+00> : vector<19x19xf32>
    %452 = tpu.matmul %449, %451, %cst_324 {dimension_numbers = #tpu.dot_dimension_numbers<[1], [0], [0], [1], [0, 0, 1, 1], [], []>} : vector<19x112xf32>, vector<112x19xf32>, vector<19x19xf32> -> vector<19x19xf32>
    %c22_325 = arith.constant 22 : index
    %c0_326 = arith.constant 0 : index
    %453 = vector.load %arg19[%c22_325, %c0_326] : memref<42x112xf32, #tpu.memory_space<vmem>>, vector<19x112xf32>
    %c1_327 = arith.constant 1 : index
    %c0_328 = arith.constant 0 : index
    %c0_329 = arith.constant 0 : index
    %454 = vector.load %arg11[%c1_327, %c0_328, %c0_329] : memref<3x112x19xf32, #tpu.memory_space<vmem>>, vector<1x112x19xf32>
    %455 = vector.shape_cast %454 : vector<1x112x19xf32> to vector<112x19xf32>
    %cst_330 = arith.constant dense<0.000000e+00> : vector<19x19xf32>
    %456 = tpu.matmul %453, %455, %cst_330 {dimension_numbers = #tpu.dot_dimension_numbers<[1], [0], [0], [1], [0, 0, 1, 1], [], []>} : vector<19x112xf32>, vector<112x19xf32>, vector<19x19xf32> -> vector<19x19xf32>
    %457 = arith.addf %452, %456 : vector<19x19xf32>
    %c23 = arith.constant 23 : index
    %c0_331 = arith.constant 0 : index
    %458 = vector.load %arg19[%c23, %c0_331] : memref<42x112xf32, #tpu.memory_space<vmem>>, vector<19x112xf32>
    %c2_332 = arith.constant 2 : index
    %c0_333 = arith.constant 0 : index
    %c0_334 = arith.constant 0 : index
    %459 = vector.load %arg11[%c2_332, %c0_333, %c0_334] : memref<3x112x19xf32, #tpu.memory_space<vmem>>, vector<1x112x19xf32>
    %460 = vector.shape_cast %459 : vector<1x112x19xf32> to vector<112x19xf32>
    %cst_335 = arith.constant dense<0.000000e+00> : vector<19x19xf32>
    %461 = tpu.matmul %458, %460, %cst_335 {dimension_numbers = #tpu.dot_dimension_numbers<[1], [0], [0], [1], [0, 0, 1, 1], [], []>} : vector<19x112xf32>, vector<112x19xf32>, vector<19x19xf32> -> vector<19x19xf32>
    %462 = arith.addf %457, %461 : vector<19x19xf32>
    %c0_336 = arith.constant 0 : index
    %c0_337 = arith.constant 0 : index
    %463 = vector.load %arg12[%c0_336, %c0_337] : memref<1x19xf32, #tpu.memory_space<vmem>>, vector<1x19xf32>
    %464 = vector.broadcast %463 : vector<1x19xf32> to vector<19x19xf32>
    %465 = arith.addf %462, %464 : vector<19x19xf32>
    %466 = math.tanh %465 : vector<19x19xf32>
    %c1_338 = arith.constant 1 : index
    %c0_339 = arith.constant 0 : index
    %c0_340 = arith.constant 0 : index
    %c0_341 = arith.constant 0 : index
    %467 = vector.load %arg13[%c1_338, %c0_339, %c0_340, %c0_341] : memref<2x1x19x19xf32, #tpu.memory_space<vmem>>, vector<1x1x19x19xf32>
    %468 = vector.shape_cast %467 : vector<1x1x19x19xf32> to vector<19x19xf32>
    %469 = vector.shape_cast %466 : vector<19x19xf32> to vector<1x1x19x19xf32>
    tpu.vector_store %arg13[%c1_338, %c0_339, %c0_340, %c0_341], %469 {strides = array<i32>} : memref<2x1x19x19xf32, #tpu.memory_space<vmem>>, vector<1x1x19x19xf32>,
    return
  }
}

</mosaic_0001>

<llo_original>
// kernel: conv_autoencoder_forward.1
$region0: #{conv_autoencoder_forward.1}
  #allocation0 [shape = 'u32[]', space=smem, size = 0x4, offset = 0x4, fixed_abs, tag = 'smem constant byte address 0x4 - core index']
  #allocation1 [shape = 'u32[144,128]{1,0:T(1,128)}', space=vmem, size = 0x12000, scoped, tag = 'internal scratch']
  #allocation2 [shape = 'f32[60,30]{1,0:T(8,128)}', space=vmem, size = 0x8000, scoped, tag = 'scratch operand']
  #allocation3 [shape = 'f32[24,192]{1,0:T(8,128)}', space=vmem, size = 0x6000, scoped, tag = 'scratch operand']
  #allocation4 [shape = 'f32[12,192]{1,0:T(8,128)}', space=vmem, size = 0x4000, scoped, tag = 'scratch operand']
  #allocation5 [shape = 'f32[10,128]{1,0:T(8,128)}', space=vmem, size = 0x2000, scoped, tag = 'scratch operand']
  #allocation6 [shape = 'f32[18,96]{1,0:T(8,128)}', space=vmem, size = 0x3000, scoped, tag = 'scratch operand']
  #allocation7 [shape = 'f32[42,112]{1,0:T(8,128)}', space=vmem, size = 0x6000, scoped, tag = 'scratch operand']
  %s0 = inlined_call_operand.vmem [shape: f32[2,1,28,28], index: 0, kind: input, shape index: {}]
  %s1 = inlined_call_operand.hbm [shape: f32[3,30,160], index: 1, kind: input, shape index: {}]
  %s2 = inlined_call_operand.vmem [shape: f32[1,160], index: 2, kind: input, shape index: {}]
  %s3 = inlined_call_operand.vmem [shape: f32[3,192,128], index: 3, kind: input, shape index: {}]
  %s4 = inlined_call_operand.hbm [shape: f32[1,128], index: 4, kind: input, shape index: {}]
  %s5 = inlined_call_operand.vmem [shape: f32[3,192,128], index: 5, kind: input, shape index: {}]
  %s6 = inlined_call_operand.hbm [shape: f32[1,128], index: 6, kind: input, shape index: {}]
  %s7 = inlined_call_operand.vmem [shape: f32[3,128,96], index: 7, kind: input, shape index: {}]
  %s8 = inlined_call_operand.hbm [shape: f32[1,96], index: 8, kind: input, shape index: {}]
  %s9 = inlined_call_operand.hbm [shape: f32[3,96,112], index: 9, kind: input, shape index: {}]
  %s10 = inlined_call_operand.vmem [shape: f32[1,112], index: 10, kind: input, shape index: {}]
  %s11 = inlined_call_operand.vmem [shape: f32[3,112,19], index: 11, kind: input, shape index: {}]
  %s12 = inlined_call_operand.vmem [shape: f32[1,19], index: 12, kind: input, shape index: {}]
  %s13 = inlined_call_operand.vmem [shape: f32[2,1,19,19], index: 13, kind: output, shape index: {}]
  %s14 = sld [smem:[#allocation0]]
  $region82: #{conv_autoencoder_forward.1} parent=0
    _
  %s16 = ssub.s32 1, %s14
  %s17 = scalar_select 0, %s16, %s14
  $region1: #{conv_autoencoder_forward.1} parent=0
    #allocation8 [shape = 'u8[98304]{0}', space=vmem, size = 0x18000, scoped, tag = 'input window, operand 1, single buffered']
    #allocation9 [shape = 's32[1]{0}', space=sflag, size = 0x4, scoped, tag = 'scoped memory for conv_autoencoder_forward.1']
    #allocation10 [shape = 'u8[512]{0}', space=vmem, size = 0x400, scoped, tag = 'input window, operand 4, single buffered']
    #allocation11 [shape = 's32[1]{0}', space=sflag, size = 0x4, scoped, tag = 'scoped memory for conv_autoencoder_forward.1']
    #allocation12 [shape = 'u8[512]{0}', space=vmem, size = 0x400, scoped, tag = 'input window, operand 6, single buffered']
    #allocation13 [shape = 'u8[512]{0}', space=vmem, size = 0x400, scoped, tag = 'input window, operand 8, single buffered']
    #allocation14 [shape = 's32[1]{0}', space=sflag, size = 0x4, scoped, tag = 'scoped memory for conv_autoencoder_forward.1']
    #allocation15 [shape = 'u8[147456]{0}', space=vmem, size = 0x24000, scoped, tag = 'input window, operand 9, single buffered']
    %18 = vsyncpa [#allocation9], 0
    %19 = vsyncpa [#allocation11], 0
    %20 = vsyncpa [#allocation14], 0
    // Predicated region
    $region2: #{conv_autoencoder_forward.1} parent=1 // pred_check
      _
    $region3: #{conv_autoencoder_forward.1} parent=1 // pred_check_branch
      %22 = sbr.rel (0) target = $region5
    $region4: #{conv_autoencoder_forward.1} parent=1 // pred_region
      _
    $region5: #{conv_autoencoder_forward.1} parent=1 // pred_fallthru
      _
    // Predicated region
    $region6: #{conv_autoencoder_forward.1} parent=1 // pred_check
      _
    $region7: #{conv_autoencoder_forward.1} parent=1 // pred_check_branch
      %24 = sbr.rel (0) target = $region9
    $region8: #{conv_autoencoder_forward.1} parent=1 // pred_region
      %s26 = ssub.s32 3072, 3072
      %27 = vsyncadd [#allocation9], %s26
      %s28 = sshll.u32 [#allocation8], 4
      %s29 = int_to_ptr.vmem [resolvable:$true] %s28
      %34 = dma.hbm_to_vmem [thread:$0]  %s1, 3072, %s29, [#allocation9], 256, 256, 16
    $region9: #{conv_autoencoder_forward.1} parent=1 // pred_fallthru
      _
    // Predicated region
    $region10: #{conv_autoencoder_forward.1} parent=1 // pred_check
      _
    $region11: #{conv_autoencoder_forward.1} parent=1 // pred_check_branch
      %36 = sbr.rel (0) target = $region13
    $region12: #{conv_autoencoder_forward.1} parent=1 // pred_region
      _
    $region13: #{conv_autoencoder_forward.1} parent=1 // pred_fallthru
      _
    // Predicated region
    $region14: #{conv_autoencoder_forward.1} parent=1 // pred_check
      _
    $region15: #{conv_autoencoder_forward.1} parent=1 // pred_check_branch
      %38 = sbr.rel (0) target = $region17
    $region16: #{conv_autoencoder_forward.1} parent=1 // pred_region
      _
    $region17: #{conv_autoencoder_forward.1} parent=1 // pred_fallthru
      _
    // Predicated region
    $region18: #{conv_autoencoder_forward.1} parent=1 // pred_check
      _
    $region19: #{conv_autoencoder_forward.1} parent=1 // pred_check_branch
      %40 = sbr.rel (0) target = $region21
    $region20: #{conv_autoencoder_forward.1} parent=1 // pred_region
      %s42 = ssub.s32 16, 16
      %43 = vsyncadd [#allocation11], %s42
      %s45 = sshll.u32 [#allocation10], 4
      %s46 = int_to_ptr.vmem [resolvable:$true] %s45
      %48 = dma.hbm_to_vmem [thread:$0]  %s4, 16, %s46, [#allocation11]
    $region21: #{conv_autoencoder_forward.1} parent=1 // pred_fallthru
      _
    // Predicated region
    $region22: #{conv_autoencoder_forward.1} parent=1 // pred_check
      _
    $region23: #{conv_autoencoder_forward.1} parent=1 // pred_check_branch
      %50 = sbr.rel (0) target = $region25
    $region24: #{conv_autoencoder_forward.1} parent=1 // pred_region
      _
    $region25: #{conv_autoencoder_forward.1} parent=1 // pred_fallthru
      _
    // Predicated region
    $region26: #{conv_autoencoder_forward.1} parent=1 // pred_check
      _
    $region27: #{conv_autoencoder_forward.1} parent=1 // pred_check_branch
      %52 = sbr.rel (0) target = $region29
    $region28: #{conv_autoencoder_forward.1} parent=1 // pred_region
      %s54 = ssub.s32 16, 16
      %55 = vsyncadd [#allocation11], %s54
      %s57 = sshll.u32 [#allocation12], 4
      %s58 = int_to_ptr.vmem [resolvable:$true] %s57
      %60 = dma.hbm_to_vmem [thread:$0]  %s6, 16, %s58, [#allocation11]
    $region29: #{conv_autoencoder_forward.1} parent=1 // pred_fallthru
      _
    // Predicated region
    $region30: #{conv_autoencoder_forward.1} parent=1 // pred_check
      _
    $region31: #{conv_autoencoder_forward.1} parent=1 // pred_check_branch
      %62 = sbr.rel (0) target = $region33
    $region32: #{conv_autoencoder_forward.1} parent=1 // pred_region
      _
    $region33: #{conv_autoencoder_forward.1} parent=1 // pred_fallthru
      _
    // Predicated region
    $region34: #{conv_autoencoder_forward.1} parent=1 // pred_check
      _
    $region35: #{conv_autoencoder_forward.1} parent=1 // pred_check_branch
      %64 = sbr.rel (0) target = $region37
    $region36: #{conv_autoencoder_forward.1} parent=1 // pred_region
      %s66 = ssub.s32 16, 16
      %67 = vsyncadd [#allocation14], %s66
      %s69 = sshll.u32 [#allocation13], 4
      %s70 = int_to_ptr.vmem [resolvable:$true] %s69
      %72 = dma.hbm_to_vmem [thread:$0]  %s8, 16, %s70, [#allocation14]
    $region37: #{conv_autoencoder_forward.1} parent=1 // pred_fallthru
      _
    // Predicated region
    $region38: #{conv_autoencoder_forward.1} parent=1 // pred_check
      _
    $region39: #{conv_autoencoder_forward.1} parent=1 // pred_check_branch
      %74 = sbr.rel (0) target = $region41
    $region40: #{conv_autoencoder_forward.1} parent=1 // pred_region
      %s76 = ssub.s32 4608, 4608
      %77 = vsyncadd [#allocation14], %s76
      %s78 = sshll.u32 [#allocation15], 4
      %s79 = int_to_ptr.vmem [resolvable:$true] %s78
      %84 = dma.hbm_to_vmem [thread:$0]  %s9, 4608, %s79, [#allocation14], 128, 128, 8
    $region41: #{conv_autoencoder_forward.1} parent=1 // pred_fallthru
      _
    // Predicated region
    $region42: #{conv_autoencoder_forward.1} parent=1 // pred_check
      _
    $region43: #{conv_autoencoder_forward.1} parent=1 // pred_check_branch
      %86 = sbr.rel (0) target = $region45
    $region44: #{conv_autoencoder_forward.1} parent=1 // pred_region
      _
    $region45: #{conv_autoencoder_forward.1} parent=1 // pred_fallthru
      _
    // Predicated region
    $region46: #{conv_autoencoder_forward.1} parent=1 // pred_check
      _
    $region47: #{conv_autoencoder_forward.1} parent=1 // pred_check_branch
      %88 = sbr.rel (0) target = $region49
    $region48: #{conv_autoencoder_forward.1} parent=1 // pred_region
      _
    $region49: #{conv_autoencoder_forward.1} parent=1 // pred_fallthru
      _
    // Predicated region
    $region50: #{conv_autoencoder_forward.1} parent=1 // pred_check
      _
    $region51: #{conv_autoencoder_forward.1} parent=1 // pred_check_branch
      %90 = sbr.rel (0) target = $region53
    $region52: #{conv_autoencoder_forward.1} parent=1 // pred_region
      _
    $region53: #{conv_autoencoder_forward.1} parent=1 // pred_fallthru
      _
    // Predicated region
    $region54: #{conv_autoencoder_forward.1} parent=1 // pred_check
      _
    $region55: #{conv_autoencoder_forward.1} parent=1 // pred_check_branch
      %92 = sbr.rel (0) target = $region57
    $region56: #{conv_autoencoder_forward.1} parent=1 // pred_region
      %93 = dma.done [#allocation9], 3072
    $region57: #{conv_autoencoder_forward.1} parent=1 // pred_fallthru
      _
    // Predicated region
    $region58: #{conv_autoencoder_forward.1} parent=1 // pred_check
      _
    $region59: #{conv_autoencoder_forward.1} parent=1 // pred_check_branch
      %95 = sbr.rel (0) target = $region61
    $region60: #{conv_autoencoder_forward.1} parent=1 // pred_region
      %96 = dma.done [#allocation11], 16
    $region61: #{conv_autoencoder_forward.1} parent=1 // pred_fallthru
      _
    // Predicated region
    $region62: #{conv_autoencoder_forward.1} parent=1 // pred_check
      _
    $region63: #{conv_autoencoder_forward.1} parent=1 // pred_check_branch
      %98 = sbr.rel (0) target = $region65
    $region64: #{conv_autoencoder_forward.1} parent=1 // pred_region
      %99 = dma.done [#allocation11], 16
    $region65: #{conv_autoencoder_forward.1} parent=1 // pred_fallthru
      _
    // Predicated region
    $region66: #{conv_autoencoder_forward.1} parent=1 // pred_check
      _
    $region67: #{conv_autoencoder_forward.1} parent=1 // pred_check_branch
      %101 = sbr.rel (0) target = $region69
    $region68: #{conv_autoencoder_forward.1} parent=1 // pred_region
      %102 = dma.done [#allocation14], 16
    $region69: #{conv_autoencoder_forward.1} parent=1 // pred_fallthru
      _
    // Predicated region
    $region70: #{conv_autoencoder_forward.1} parent=1 // pred_check
      _
    $region71: #{conv_autoencoder_forward.1} parent=1 // pred_check_branch
      %104 = sbr.rel (0) target = $region73
    $region72: #{conv_autoencoder_forward.1} parent=1 // pred_region
      %105 = dma.done [#allocation14], 4608
    $region73: #{conv_autoencoder_forward.1} parent=1 // pred_fallthru
      _
    %vm106 = vcmask 244736
    %107 = vst.msk [vmem:[#allocation2] sm:$0xff] %vm106, 0.0
    %108 = vst.msk [vmem:[#allocation2 + $0x8] sm:$0xff] %vm106, 0.0
    %109 = vst.msk [vmem:[#allocation2 + $0x10] sm:$0xff] %vm106, 0.0
    %110 = vst.msk [vmem:[#allocation2 + $0x18] sm:$0xff] %vm106, 0.0
    %111 = vst.msk [vmem:[#allocation2 + $0x20] sm:$0xff] %vm106, 0.0
    %112 = vst.msk [vmem:[#allocation2 + $0x28] sm:$0xff] %vm106, 0.0
    %113 = vst.msk [vmem:[#allocation2 + $0x30] sm:$0xff] %vm106, 0.0
    %vm114 = vcmask 240640
    %115 = vst.msk [vmem:[#allocation2 + $0x38] sm:$0xf] %vm114, 0.0
    %116 = vst [vmem:[#allocation3] sm:$0xff] 0.0
    %vm117 = vcmask 523264
    %118 = vst.msk [vmem:[#allocation3 + $0x8] sm:$0xff] %vm117, 0.0
    %119 = vst [vmem:[#allocation3 + $0x10] sm:$0xff] 0.0
    %120 = vst.msk [vmem:[#allocation3 + $0x18] sm:$0xff] %vm117, 0.0
    %121 = vst [vmem:[#allocation3 + $0x20] sm:$0xff] 0.0
    %122 = vst.msk [vmem:[#allocation3 + $0x28] sm:$0xff] %vm117, 0.0
    %123 = vst [vmem:[#allocation4] sm:$0xff] 0.0
    %124 = vst.msk [vmem:[#allocation4 + $0x8] sm:$0xff] %vm117, 0.0
    %125 = vst [vmem:[#allocation4 + $0x10] sm:$0xf] 0.0
    %vm126 = vcmask 519168
    %127 = vst.msk [vmem:[#allocation4 + $0x18] sm:$0xf] %vm126, 0.0
    %128 = vst [vmem:[#allocation5] sm:$0xff] 0.0
    %129 = vst [vmem:[#allocation5 + $0x8] sm:$0x3] 0.0
    %vm130 = vcmask 785408
    %131 = vst.msk [vmem:[#allocation6] sm:$0xff] %vm130, 0.0
    %132 = vst.msk [vmem:[#allocation6 + $0x8] sm:$0xff] %vm130, 0.0
    %vm133 = vcmask 779264
    %134 = vst.msk [vmem:[#allocation6 + $0x10] sm:$0x3] %vm133, 0.0
    %vm135 = vcmask 916480
    %136 = vst.msk [vmem:[#allocation7] sm:$0xff] %vm135, 0.0
    %137 = vst.msk [vmem:[#allocation7 + $0x8] sm:$0xff] %vm135, 0.0
    %138 = vst.msk [vmem:[#allocation7 + $0x10] sm:$0xff] %vm135, 0.0
    %139 = vst.msk [vmem:[#allocation7 + $0x18] sm:$0xff] %vm135, 0.0
    %140 = vst.msk [vmem:[#allocation7 + $0x20] sm:$0xff] %vm135, 0.0
    %vm141 = vcmask 910336
    %142 = vst.msk [vmem:[#allocation7 + $0x28] sm:$0x3] %vm141, 0.0
    %v143 = vld [vmem:[%s0] sm:$0xff]
    %v144 = vld [vmem:[%s0 + $0x8] sm:$0xff]
    %v145 = vld [vmem:[%s0 + $0x10] sm:$0xff]
    %v146 = vld [vmem:[%s0 + $0x18] sm:$0xf]
    %151 = vrot.lane.b32.xlu0 %v143, 1
    %v152 = vpop.permute.xlu0 %151
    %153 = vrot.lane.b32.xlu0 %v144, 1
    %v154 = vpop.permute.xlu0 %153
    %155 = vrot.lane.b32.xlu0 %v145, 1
    %v156 = vpop.permute.xlu0 %155
    %157 = vrot.lane.b32.xlu0 %v146, 1
    %v158 = vpop.permute.xlu0 %157
    %vm163 = vcmask 236552
    %164 = vst.msk [vmem:[#allocation2 + $0x1] sm:$0xff] %vm163, %v152
    %165 = vst.msk [vmem:[#allocation2 + $0x9] sm:$0xff] %vm163, %v154
    %166 = vst.msk [vmem:[#allocation2 + $0x11] sm:$0xff] %vm163, %v156
    %vm167 = vcmask 232456
    %168 = vst.msk [vmem:[#allocation2 + $0x19] sm:$0xf] %vm167, %v158
    %s169 = scalar_lea.vmem %s0, 32
    %v170 = vld [vmem:[%s169] sm:$0xff]
    %v171 = vld [vmem:[%s169 + $0x8] sm:$0xff]
    %v172 = vld [vmem:[%s169 + $0x10] sm:$0xff]
    %v173 = vld [vmem:[%s169 + $0x18] sm:$0xf]
    %178 = vrot.lane.b32.xlu0 %v170, 1
    %v179 = vpop.permute.xlu0 %178
    %180 = vrot.lane.b32.xlu0 %v171, 1
    %v181 = vpop.permute.xlu0 %180
    %182 = vrot.lane.b32.xlu0 %v172, 1
    %v183 = vpop.permute.xlu0 %182
    %184 = vrot.lane.b32.xlu0 %v173, 1
    %v185 = vpop.permute.xlu0 %184
    %190 = vst.msk [vmem:[#allocation2 + $0x1f] sm:$0xff] %vm163, %v179
    %191 = vst.msk [vmem:[#allocation2 + $0x27] sm:$0xff] %vm163, %v181
    %192 = vst.msk [vmem:[#allocation2 + $0x2f] sm:$0xff] %vm163, %v183
    %193 = vst.msk [vmem:[#allocation2 + $0x37] sm:$0xf] %vm167, %v185
    %v194 = vld [vmem:[#allocation2] sm:$0xff]
    %v195 = vld [vmem:[#allocation2 + $0x8] sm:$0xff]
    %v196 = vld [vmem:[#allocation2 + $0x10] sm:$0xff]
    %v197 = vld [vmem:[#allocation2 + $0x18] sm:$0x3f]
    %v198 = vlaneseq
    %v199 = vshrl.u32 %v198, 7
    %v200 = vadd.s32 %v199, 8
    %v201 = vlaneseq
    %v202 = vand.u32 %v201, 127
    %v203 = vmul.u32 %v199, 3
    %v204 = vmul.u32 %v200, 3
    %vm205 = vcmp.eq.s32.totalorder %v202, %v203
    %vm206 = vcmp.eq.s32.totalorder %v202, %v204
    %v207 = vsel %vm205, 1, 0
    %v208 = vsel %vm206, 1, 0
    %v209 = vcvt.s32.f32 %v207
    %v210 = vcvt.s32.f32 %v208
    %v212 = vsel %vm106, %v209, 0
    %v215 = vsel %vm106, %v210, 0
    %vm217 = vcmask 1045504
    %v219 = vsel %vm217, %v197, 0
    %221 = vmatprep.subr.mxu0 0.0
    %222 = vmatpush1.msra.mxu0 %v194
    %223 = vmatprep.subr.mxu0 0.0
    %224 = vmatpush1.msra.mxu0 %v195
    %225 = vmatprep.subr.mxu0 0.0
    %226 = vmatpush1.msra.mxu0 %v196
    %227 = vmatprep.subr.mxu0 0.0
    %228 = vmatpush1.msra.mxu0 %v219
    %229 = vmatprep.subr.mxu0 0.0
    %230 = vmatpush1.msra.mxu0 0.0
    %231 = vmatprep.subr.mxu0 0.0
    %232 = vmatpush1.msra.mxu0 0.0
    %233 = vmatprep.subr.mxu0 0.0
    %234 = vmatpush1.msra.mxu0 0.0
    %235 = vmatprep.subr.mxu0 0.0
    %236 = vmatpush1.msra.mxu0 0.0
    %237 = vmatprep.subr.mxu0 0.0
    %238 = vmatpush1.msra.mxu0 0.0
    %239 = vmatprep.subr.mxu0 0.0
    %240 = vmatpush1.msra.mxu0 0.0
    %241 = vmatprep.subr.mxu0 0.0
    %242 = vmatpush1.msra.mxu0 0.0
    %243 = vmatprep.subr.mxu0 0.0
    %244 = vmatpush1.msra.mxu0 0.0
    %245 = vmatprep.subr.mxu0 0.0
    %246 = vmatpush1.msra.mxu0 0.0
    %247 = vmatprep.subr.mxu0 0.0
    %248 = vmatpush1.msra.mxu0 0.0
    %249 = vmatprep.subr.mxu0 0.0
    %250 = vmatpush1.msra.mxu0 0.0
    %251 = vmatprep.subr.mxu0 0.0
    %252 = vmatpush1.msra.mxu0 0.0
    %253 = vmatprep.subr.mxu0 0.0
    %254 = vmatpush1.msra.mxu0 0.0
    %255 = vmatprep.subr.mxu0 0.0
    %256 = vmatpush1.msra.mxu0 0.0
    %257 = vmatprep.subr.mxu0 0.0
    %258 = vmatpush1.msra.mxu0 0.0
    %259 = vmatprep.subr.mxu0 0.0
    %260 = vmatpush1.msra.mxu0 0.0
    %261 = vmatprep.subr.mxu0 0.0
    %262 = vmatpush1.msra.mxu0 0.0
    %263 = vmatprep.subr.mxu0 0.0
    %264 = vmatpush1.msra.mxu0 0.0
    %265 = vmatprep.subr.mxu0 0.0
    %266 = vmatpush1.msra.mxu0 0.0
    %267 = vmatprep.subr.mxu0 0.0
    %268 = vmatpush1.msra.mxu0 0.0
    %269 = vmatprep.subr.mxu0 0.0
    %270 = vmatpush1.msra.mxu0 0.0
    %271 = vmatprep.subr.mxu0 0.0
    %272 = vmatpush1.msra.mxu0 0.0
    %273 = vmatprep.subr.mxu0 0.0
    %274 = vmatpush1.msra.mxu0 0.0
    %275 = vmatprep.subr.mxu0 0.0
    %276 = vmatpush1.msra.mxu0 0.0
    %277 = vmatprep.subr.mxu0 0.0
    %278 = vmatpush1.msra.mxu0 0.0
    %279 = vmatprep.subr.mxu0 0.0
    %280 = vmatpush1.msra.mxu0 0.0
    %281 = vmatprep.subr.mxu0 0.0
    %282 = vmatpush1.msra.mxu0 0.0
    %283 = vmatprep.subr.mxu0 0.0
    %284 = vmatpush1.msra.mxu0 0.0
    %285 = vmatprep.mubr.f32.mxu0 0.0
    %286 = vmatmul.mubr.f32.gmra.mrb[0].mxu0 %v212
    %v287 = vpop.f32.mrb[0].mxu0
    %v288 = vadd.f32 0.0, %v287
    %v289 = vpop.f32.mrb[0].mxu0
    %290 = vmatprep.mubr.f32.mxu0 0.0
    %291 = vmatmul.mubr.f32.gmra.mrb[0].mxu0 %v215
    %v292 = vpop.f32.mrb[0].mxu0
    %v293 = vadd.f32 0.0, %v292
    %v294 = vpop.f32.mrb[0].mxu0
    %295 = vdwg.mxu0
    %v296 = vld [vmem:[#allocation8] sm:$0xff]
    %v297 = vld [vmem:[#allocation8 + $0x8] sm:$0xff]
    %v298 = vld [vmem:[#allocation8 + $0x10] sm:$0xff]
    %v299 = vld [vmem:[#allocation8 + $0x18] sm:$0xff]
    %v300 = vld [vmem:[#allocation8 + $0x20] sm:$0xff]
    %v301 = vld [vmem:[#allocation8 + $0x28] sm:$0xff]
    %v302 = vld [vmem:[#allocation8 + $0x30] sm:$0x3f]
    %v303 = vld [vmem:[#allocation8 + $0x38] sm:$0x3f]
    %v304 = vadd.s32 %v203, 1
    %v305 = vadd.s32 %v204, 1
    %vm306 = vcmp.eq.s32.totalorder %v202, %v304
    %vm307 = vcmp.eq.s32.totalorder %v202, %v305
    %v308 = vsel %vm306, 1, 0
    %v309 = vsel %vm307, 1, 0
    %v310 = vcvt.s32.f32 %v308
    %v311 = vcvt.s32.f32 %v309
    %v313 = vsel %vm106, %v310, 0
    %v316 = vsel %vm106, %v311, 0
    %318 = vmatprep.subr.mxu0 0.0
    %319 = vmatpush1.msra.mxu0 %v194
    %320 = vmatprep.subr.mxu0 0.0
    %321 = vmatpush1.msra.mxu0 %v195
    %322 = vmatprep.subr.mxu0 0.0
    %323 = vmatpush1.msra.mxu0 %v196
    %324 = vmatprep.subr.mxu0 0.0
    %325 = vmatpush1.msra.mxu0 %v219
    %326 = vmatprep.subr.mxu0 0.0
    %327 = vmatpush1.msra.mxu0 0.0
    %328 = vmatprep.subr.mxu0 0.0
    %329 = vmatpush1.msra.mxu0 0.0
    %330 = vmatprep.subr.mxu0 0.0
    %331 = vmatpush1.msra.mxu0 0.0
    %332 = vmatprep.subr.mxu0 0.0
    %333 = vmatpush1.msra.mxu0 0.0
    %334 = vmatprep.subr.mxu0 0.0
    %335 = vmatpush1.msra.mxu0 0.0
    %336 = vmatprep.subr.mxu0 0.0
    %337 = vmatpush1.msra.mxu0 0.0
    %338 = vmatprep.subr.mxu0 0.0
    %339 = vmatpush1.msra.mxu0 0.0
    %340 = vmatprep.subr.mxu0 0.0
    %341 = vmatpush1.msra.mxu0 0.0
    %342 = vmatprep.subr.mxu0 0.0
    %343 = vmatpush1.msra.mxu0 0.0
    %344 = vmatprep.subr.mxu0 0.0
    %345 = vmatpush1.msra.mxu0 0.0
    %346 = vmatprep.subr.mxu0 0.0
    %347 = vmatpush1.msra.mxu0 0.0
    %348 = vmatprep.subr.mxu0 0.0
    %349 = vmatpush1.msra.mxu0 0.0
    %350 = vmatprep.subr.mxu0 0.0
    %351 = vmatpush1.msra.mxu0 0.0
    %352 = vmatprep.subr.mxu0 0.0
    %353 = vmatpush1.msra.mxu0 0.0
    %354 = vmatprep.subr.mxu0 0.0
    %355 = vmatpush1.msra.mxu0 0.0
    %356 = vmatprep.subr.mxu0 0.0
    %357 = vmatpush1.msra.mxu0 0.0
    %358 = vmatprep.subr.mxu0 0.0
    %359 = vmatpush1.msra.mxu0 0.0
    %360 = vmatprep.subr.mxu0 0.0
    %361 = vmatpush1.msra.mxu0 0.0
    %362 = vmatprep.subr.mxu0 0.0
    %363 = vmatpush1.msra.mxu0 0.0
    %364 = vmatprep.subr.mxu0 0.0
    %365 = vmatpush1.msra.mxu0 0.0
    %366 = vmatprep.subr.mxu0 0.0
    %367 = vmatpush1.msra.mxu0 0.0
    %368 = vmatprep.subr.mxu0 0.0
    %369 = vmatpush1.msra.mxu0 0.0
    %370 = vmatprep.subr.mxu0 0.0
    %371 = vmatpush1.msra.mxu0 0.0
    %372 = vmatprep.subr.mxu0 0.0
    %373 = vmatpush1.msra.mxu0 0.0
    %374 = vmatprep.subr.mxu0 0.0
    %375 = vmatpush1.msra.mxu0 0.0
    %376 = vmatprep.subr.mxu0 0.0
    %377 = vmatpush1.msra.mxu0 0.0
    %378 = vmatprep.subr.mxu0 0.0
    %379 = vmatpush1.msra.mxu0 0.0
    %380 = vmatprep.subr.mxu0 0.0
    %381 = vmatpush1.msra.mxu0 0.0
    %382 = vmatprep.mubr.f32.mxu0 0.0
    %383 = vmatmul.mubr.f32.gmra.mrb[0].mxu0 %v313
    %v384 = vpop.f32.mrb[0].mxu0
    %v385 = vadd.f32 0.0, %v384
    %v386 = vpop.f32.mrb[0].mxu0
    %387 = vmatprep.mubr.f32.mxu0 0.0
    %388 = vmatmul.mubr.f32.gmra.mrb[0].mxu0 %v316
    %v389 = vpop.f32.mrb[0].mxu0
    %v390 = vadd.f32 0.0, %v389
    %v391 = vpop.f32.mrb[0].mxu0
    %392 = vdwg.mxu0
    %s393 = scalar_lea.vmem [#allocation8], 64
    %v394 = vld [vmem:[%s393] sm:$0xff]
    %v395 = vld [vmem:[%s393 + $0x8] sm:$0xff]
    %v396 = vld [vmem:[%s393 + $0x10] sm:$0xff]
    %v397 = vld [vmem:[%s393 + $0x18] sm:$0xff]
    %v398 = vld [vmem:[%s393 + $0x20] sm:$0xff]
    %v399 = vld [vmem:[%s393 + $0x28] sm:$0xff]
    %v400 = vld [vmem:[%s393 + $0x30] sm:$0x3f]
    %v401 = vld [vmem:[%s393 + $0x38] sm:$0x3f]
    %v403 = vsel %vm106, %v385, 0
    %v406 = vsel %vm106, %v390, 0
    %v409 = vsel %vm217, %v400, 0
    %v412 = vsel %vm217, %v401, 0
    %414 = vmatprep.subr.mxu0 %v395
    %415 = vmatpush1.msra.mxu0 %v394
    %416 = vmatprep.subr.mxu0 %v397
    %417 = vmatpush1.msra.mxu0 %v396
    %418 = vmatprep.subr.mxu0 %v399
    %419 = vmatpush1.msra.mxu0 %v398
    %420 = vmatprep.subr.mxu0 %v412
    %421 = vmatpush1.msra.mxu0 %v409
    %422 = vmatprep.subr.mxu0 0.0
    %423 = vmatpush1.msra.mxu0 0.0
    %424 = vmatprep.subr.mxu0 0.0
    %425 = vmatpush1.msra.mxu0 0.0
    %426 = vmatprep.subr.mxu0 0.0
    %427 = vmatpush1.msra.mxu0 0.0
    %428 = vmatprep.subr.mxu0 0.0
    %429 = vmatpush1.msra.mxu0 0.0
    %430 = vmatprep.subr.mxu0 0.0
    %431 = vmatpush1.msra.mxu0 0.0
    %432 = vmatprep.subr.mxu0 0.0
    %433 = vmatpush1.msra.mxu0 0.0
    %434 = vmatprep.subr.mxu0 0.0
    %435 = vmatpush1.msra.mxu0 0.0
    %436 = vmatprep.subr.mxu0 0.0
    %437 = vmatpush1.msra.mxu0 0.0
    %438 = vmatprep.subr.mxu0 0.0
    %439 = vmatpush1.msra.mxu0 0.0
    %440 = vmatprep.subr.mxu0 0.0
    %441 = vmatpush1.msra.mxu0 0.0
    %442 = vmatprep.subr.mxu0 0.0
    %443 = vmatpush1.msra.mxu0 0.0
    %444 = vmatprep.subr.mxu0 0.0
    %445 = vmatpush1.msra.mxu0 0.0
    %446 = vmatprep.subr.mxu0 0.0
    %447 = vmatpush1.msra.mxu0 0.0
    %448 = vmatprep.subr.mxu0 0.0
    %449 = vmatpush1.msra.mxu0 0.0
    %450 = vmatprep.subr.mxu0 0.0
    %451 = vmatpush1.msra.mxu0 0.0
    %452 = vmatprep.subr.mxu0 0.0
    %453 = vmatpush1.msra.mxu0 0.0
    %454 = vmatprep.subr.mxu0 0.0
    %455 = vmatpush1.msra.mxu0 0.0
    %456 = vmatprep.subr.mxu0 0.0
    %457 = vmatpush1.msra.mxu0 0.0
    %458 = vmatprep.subr.mxu0 0.0
    %459 = vmatpush1.msra.mxu0 0.0
    %460 = vmatprep.subr.mxu0 0.0
    %461 = vmatpush1.msra.mxu0 0.0
    %462 = vmatprep.subr.mxu0 0.0
    %463 = vmatpush1.msra.mxu0 0.0
    %464 = vmatprep.subr.mxu0 0.0
    %465 = vmatpush1.msra.mxu0 0.0
    %466 = vmatprep.subr.mxu0 0.0
    %467 = vmatpush1.msra.mxu0 0.0
    %468 = vmatprep.subr.mxu0 0.0
    %469 = vmatpush1.msra.mxu0 0.0
    %470 = vmatprep.subr.mxu0 0.0
    %471 = vmatpush1.msra.mxu0 0.0
    %472 = vmatprep.subr.mxu0 0.0
    %473 = vmatpush1.msra.mxu0 0.0
    %474 = vmatprep.subr.mxu0 0.0
    %475 = vmatpush1.msra.mxu0 0.0
    %476 = vmatprep.subr.mxu0 0.0
    %477 = vmatpush1.msra.mxu0 0.0
    %478 = vmatprep.mubr.f32.mxu0 0.0
    %479 = vmatmul.mubr.f32.gmra.mrb[0].mxu0 %v403
    %v480 = vpop.f32.mrb[0].mxu0
    %v481 = vadd.f32 0.0, %v480
    %v482 = vpop.f32.mrb[0].mxu0
    %v483 = vadd.f32 0.0, %v482
    %484 = vmatprep.mubr.f32.mxu0 0.0
    %485 = vmatmul.mubr.f32.gmra.mrb[0].mxu0 %v406
    %v486 = vpop.f32.mrb[0].mxu0
    %v487 = vadd.f32 0.0, %v486
    %v488 = vpop.f32.mrb[0].mxu0
    %v489 = vadd.f32 0.0, %v488
    %490 = vdwg.mxu0
    %v492 = vsel %vm106, %v288, 0
    %v495 = vsel %vm106, %v293, 0
    %v498 = vsel %vm217, %v302, 0
    %v501 = vsel %vm217, %v303, 0
    %503 = vmatprep.subr.mxu0 %v297
    %504 = vmatpush1.msra.mxu0 %v296
    %505 = vmatprep.subr.mxu0 %v299
    %506 = vmatpush1.msra.mxu0 %v298
    %507 = vmatprep.subr.mxu0 %v301
    %508 = vmatpush1.msra.mxu0 %v300
    %509 = vmatprep.subr.mxu0 %v501
    %510 = vmatpush1.msra.mxu0 %v498
    %511 = vmatprep.subr.mxu0 0.0
    %512 = vmatpush1.msra.mxu0 0.0
    %513 = vmatprep.subr.mxu0 0.0
    %514 = vmatpush1.msra.mxu0 0.0
    %515 = vmatprep.subr.mxu0 0.0
    %516 = vmatpush1.msra.mxu0 0.0
    %517 = vmatprep.subr.mxu0 0.0
    %518 = vmatpush1.msra.mxu0 0.0
    %519 = vmatprep.subr.mxu0 0.0
    %520 = vmatpush1.msra.mxu0 0.0
    %521 = vmatprep.subr.mxu0 0.0
    %522 = vmatpush1.msra.mxu0 0.0
    %523 = vmatprep.subr.mxu0 0.0
    %524 = vmatpush1.msra.mxu0 0.0
    %525 = vmatprep.subr.mxu0 0.0
    %526 = vmatpush1.msra.mxu0 0.0
    %527 = vmatprep.subr.mxu0 0.0
    %528 = vmatpush1.msra.mxu0 0.0
    %529 = vmatprep.subr.mxu0 0.0
    %530 = vmatpush1.msra.mxu0 0.0
    %531 = vmatprep.subr.mxu0 0.0
    %532 = vmatpush1.msra.mxu0 0.0
    %533 = vmatprep.subr.mxu0 0.0
    %534 = vmatpush1.msra.mxu0 0.0
    %535 = vmatprep.subr.mxu0 0.0
    %536 = vmatpush1.msra.mxu0 0.0
    %537 = vmatprep.subr.mxu0 0.0
    %538 = vmatpush1.msra.mxu0 0.0
    %539 = vmatprep.subr.mxu0 0.0
    %540 = vmatpush1.msra.mxu0 0.0
    %541 = vmatprep.subr.mxu0 0.0
    %542 = vmatpush1.msra.mxu0 0.0
    %543 = vmatprep.subr.mxu0 0.0
    %544 = vmatpush1.msra.mxu0 0.0
    %545 = vmatprep.subr.mxu0 0.0
    %546 = vmatpush1.msra.mxu0 0.0
    %547 = vmatprep.subr.mxu0 0.0
    %548 = vmatpush1.msra.mxu0 0.0
    %549 = vmatprep.subr.mxu0 0.0
    %550 = vmatpush1.msra.mxu0 0.0
    %551 = vmatprep.subr.mxu0 0.0
    %552 = vmatpush1.msra.mxu0 0.0
    %553 = vmatprep.subr.mxu0 0.0
    %554 = vmatpush1.msra.mxu0 0.0
    %555 = vmatprep.subr.mxu0 0.0
    %556 = vmatpush1.msra.mxu0 0.0
    %557 = vmatprep.subr.mxu0 0.0
    %558 = vmatpush1.msra.mxu0 0.0
    %559 = vmatprep.subr.mxu0 0.0
    %560 = vmatpush1.msra.mxu0 0.0
    %561 = vmatprep.subr.mxu0 0.0
    %562 = vmatpush1.msra.mxu0 0.0
    %563 = vmatprep.subr.mxu0 0.0
    %564 = vmatpush1.msra.mxu0 0.0
    %565 = vmatprep.subr.mxu0 0.0
    %566 = vmatpush1.msra.mxu0 0.0
    %567 = vmatprep.mubr.f32.mxu0 0.0
    %568 = vmatmul.mubr.f32.gmra.mrb[0].mxu0 %v492
    %v569 = vpop.f32.mrb[0].mxu0
    %v570 = vadd.f32 %v481, %v569
    %v571 = vpop.f32.mrb[0].mxu0
    %v572 = vadd.f32 %v483, %v571
    %573 = vmatprep.mubr.f32.mxu0 0.0
    %574 = vmatmul.mubr.f32.gmra.mrb[0].mxu0 %v495
    %v575 = vpop.f32.mrb[0].mxu0
    %v576 = vadd.f32 %v487, %v575
    %v577 = vpop.f32.mrb[0].mxu0
    %v578 = vadd.f32 %v489, %v577
    %579 = vdwg.mxu0
    %v580 = vadd.s32 %v203, 2
    %v581 = vadd.s32 %v204, 2
    %vm582 = vcmp.eq.s32.totalorder %v202, %v580
    %vm583 = vcmp.eq.s32.totalorder %v202, %v581
    %v584 = vsel %vm582, 1, 0
    %v585 = vsel %vm583, 1, 0
    %v586 = vcvt.s32.f32 %v584
    %v587 = vcvt.s32.f32 %v585
    %v589 = vsel %vm106, %v586, 0
    %v592 = vsel %vm106, %v587, 0
    %594 = vmatprep.subr.mxu0 0.0
    %595 = vmatpush1.msra.mxu0 %v194
    %596 = vmatprep.subr.mxu0 0.0
    %597 = vmatpush1.msra.mxu0 %v195
    %598 = vmatprep.subr.mxu0 0.0
    %599 = vmatpush1.msra.mxu0 %v196
    %600 = vmatprep.subr.mxu0 0.0
    %601 = vmatpush1.msra.mxu0 %v219
    %602 = vmatprep.subr.mxu0 0.0
    %603 = vmatpush1.msra.mxu0 0.0
    %604 = vmatprep.subr.mxu0 0.0
    %605 = vmatpush1.msra.mxu0 0.0
    %606 = vmatprep.subr.mxu0 0.0
    %607 = vmatpush1.msra.mxu0 0.0
    %608 = vmatprep.subr.mxu0 0.0
    %609 = vmatpush1.msra.mxu0 0.0
    %610 = vmatprep.subr.mxu0 0.0
    %611 = vmatpush1.msra.mxu0 0.0
    %612 = vmatprep.subr.mxu0 0.0
    %613 = vmatpush1.msra.mxu0 0.0
    %614 = vmatprep.subr.mxu0 0.0
    %615 = vmatpush1.msra.mxu0 0.0
    %616 = vmatprep.subr.mxu0 0.0
    %617 = vmatpush1.msra.mxu0 0.0
    %618 = vmatprep.subr.mxu0 0.0
    %619 = vmatpush1.msra.mxu0 0.0
    %620 = vmatprep.subr.mxu0 0.0
    %621 = vmatpush1.msra.mxu0 0.0
    %622 = vmatprep.subr.mxu0 0.0
    %623 = vmatpush1.msra.mxu0 0.0
    %624 = vmatprep.subr.mxu0 0.0
    %625 = vmatpush1.msra.mxu0 0.0
    %626 = vmatprep.subr.mxu0 0.0
    %627 = vmatpush1.msra.mxu0 0.0
    %628 = vmatprep.subr.mxu0 0.0
    %629 = vmatpush1.msra.mxu0 0.0
    %630 = vmatprep.subr.mxu0 0.0
    %631 = vmatpush1.msra.mxu0 0.0
    %632 = vmatprep.subr.mxu0 0.0
    %633 = vmatpush1.msra.mxu0 0.0
    %634 = vmatprep.subr.mxu0 0.0
    %635 = vmatpush1.msra.mxu0 0.0
    %636 = vmatprep.subr.mxu0 0.0
    %637 = vmatpush1.msra.mxu0 0.0
    %638 = vmatprep.subr.mxu0 0.0
    %639 = vmatpush1.msra.mxu0 0.0
    %640 = vmatprep.subr.mxu0 0.0
    %641 = vmatpush1.msra.mxu0 0.0
    %642 = vmatprep.subr.mxu0 0.0
    %643 = vmatpush1.msra.mxu0 0.0
    %644 = vmatprep.subr.mxu0 0.0
    %645 = vmatpush1.msra.mxu0 0.0
    %646 = vmatprep.subr.mxu0 0.0
    %647 = vmatpush1.msra.mxu0 0.0
    %648 = vmatprep.subr.mxu0 0.0
    %649 = vmatpush1.msra.mxu0 0.0
    %650 = vmatprep.subr.mxu0 0.0
    %651 = vmatpush1.msra.mxu0 0.0
    %652 = vmatprep.subr.mxu0 0.0
    %653 = vmatpush1.msra.mxu0 0.0
    %654 = vmatprep.subr.mxu0 0.0
    %655 = vmatpush1.msra.mxu0 0.0
    %656 = vmatprep.subr.mxu0 0.0
    %657 = vmatpush1.msra.mxu0 0.0
    %658 = vmatprep.mubr.f32.mxu0 0.0
    %659 = vmatmul.mubr.f32.gmra.mrb[0].mxu0 %v589
    %v660 = vpop.f32.mrb[0].mxu0
    %v661 = vadd.f32 0.0, %v660
    %v662 = vpop.f32.mrb[0].mxu0
    %663 = vmatprep.mubr.f32.mxu0 0.0
    %664 = vmatmul.mubr.f32.gmra.mrb[0].mxu0 %v592
    %v665 = vpop.f32.mrb[0].mxu0
    %v666 = vadd.f32 0.0, %v665
    %v667 = vpop.f32.mrb[0].mxu0
    %668 = vdwg.mxu0
    %s669 = scalar_lea.vmem [#allocation8], 128
    %v670 = vld [vmem:[%s669] sm:$0xff]
    %v671 = vld [vmem:[%s669 + $0x8] sm:$0xff]
    %v672 = vld [vmem:[%s669 + $0x10] sm:$0xff]
    %v673 = vld [vmem:[%s669 + $0x18] sm:$0xff]
    %v674 = vld [vmem:[%s669 + $0x20] sm:$0xff]
    %v675 = vld [vmem:[%s669 + $0x28] sm:$0xff]
    %v676 = vld [vmem:[%s669 + $0x30] sm:$0x3f]
    %v677 = vld [vmem:[%s669 + $0x38] sm:$0x3f]
    %v679 = vsel %vm106, %v661, 0
    %v682 = vsel %vm106, %v666, 0
    %v685 = vsel %vm217, %v676, 0
    %v688 = vsel %vm217, %v677, 0
    %690 = vmatprep.subr.mxu0 %v671
    %691 = vmatpush1.msra.mxu0 %v670
    %692 = vmatprep.subr.mxu0 %v673
    %693 = vmatpush1.msra.mxu0 %v672
    %694 = vmatprep.subr.mxu0 %v675
    %695 = vmatpush1.msra.mxu0 %v674
    %696 = vmatprep.subr.mxu0 %v688
    %697 = vmatpush1.msra.mxu0 %v685
    %698 = vmatprep.subr.mxu0 0.0
    %699 = vmatpush1.msra.mxu0 0.0
    %700 = vmatprep.subr.mxu0 0.0
    %701 = vmatpush1.msra.mxu0 0.0
    %702 = vmatprep.subr.mxu0 0.0
    %703 = vmatpush1.msra.mxu0 0.0
    %704 = vmatprep.subr.mxu0 0.0
    %705 = vmatpush1.msra.mxu0 0.0
    %706 = vmatprep.subr.mxu0 0.0
    %707 = vmatpush1.msra.mxu0 0.0
    %708 = vmatprep.subr.mxu0 0.0
    %709 = vmatpush1.msra.mxu0 0.0
    %710 = vmatprep.subr.mxu0 0.0
    %711 = vmatpush1.msra.mxu0 0.0
    %712 = vmatprep.subr.mxu0 0.0
    %713 = vmatpush1.msra.mxu0 0.0
    %714 = vmatprep.subr.mxu0 0.0
    %715 = vmatpush1.msra.mxu0 0.0
    %716 = vmatprep.subr.mxu0 0.0
    %717 = vmatpush1.msra.mxu0 0.0
    %718 = vmatprep.subr.mxu0 0.0
    %719 = vmatpush1.msra.mxu0 0.0
    %720 = vmatprep.subr.mxu0 0.0
    %721 = vmatpush1.msra.mxu0 0.0
    %722 = vmatprep.subr.mxu0 0.0
    %723 = vmatpush1.msra.mxu0 0.0
    %724 = vmatprep.subr.mxu0 0.0
    %725 = vmatpush1.msra.mxu0 0.0
    %726 = vmatprep.subr.mxu0 0.0
    %727 = vmatpush1.msra.mxu0 0.0
    %728 = vmatprep.subr.mxu0 0.0
    %729 = vmatpush1.msra.mxu0 0.0
    %730 = vmatprep.subr.mxu0 0.0
    %731 = vmatpush1.msra.mxu0 0.0
    %732 = vmatprep.subr.mxu0 0.0
    %733 = vmatpush1.msra.mxu0 0.0
    %734 = vmatprep.subr.mxu0 0.0
    %735 = vmatpush1.msra.mxu0 0.0
    %736 = vmatprep.subr.mxu0 0.0
    %737 = vmatpush1.msra.mxu0 0.0
    %738 = vmatprep.subr.mxu0 0.0
    %739 = vmatpush1.msra.mxu0 0.0
    %740 = vmatprep.subr.mxu0 0.0
    %741 = vmatpush1.msra.mxu0 0.0
    %742 = vmatprep.subr.mxu0 0.0
    %743 = vmatpush1.msra.mxu0 0.0
    %744 = vmatprep.subr.mxu0 0.0
    %745 = vmatpush1.msra.mxu0 0.0
    %746 = vmatprep.subr.mxu0 0.0
    %747 = vmatpush1.msra.mxu0 0.0
    %748 = vmatprep.subr.mxu0 0.0
    %749 = vmatpush1.msra.mxu0 0.0
    %750 = vmatprep.subr.mxu0 0.0
    %751 = vmatpush1.msra.mxu0 0.0
    %752 = vmatprep.subr.mxu0 0.0
    %753 = vmatpush1.msra.mxu0 0.0
    %754 = vmatprep.mubr.f32.mxu0 0.0
    %755 = vmatmul.mubr.f32.gmra.mrb[0].mxu0 %v679
    %v756 = vpop.f32.mrb[0].mxu0
    %v757 = vadd.f32 0.0, %v756
    %v758 = vpop.f32.mrb[0].mxu0
    %v759 = vadd.f32 0.0, %v758
    %760 = vmatprep.mubr.f32.mxu0 0.0
    %761 = vmatmul.mubr.f32.gmra.mrb[0].mxu0 %v682
    %v762 = vpop.f32.mrb[0].mxu0
    %v763 = vadd.f32 0.0, %v762
    %v764 = vpop.f32.mrb[0].mxu0
    %v765 = vadd.f32 0.0, %v764
    %766 = vdwg.mxu0
    %v767 = vadd.f32 %v570, %v757
    %v768 = vadd.f32 %v572, %v759
    %v769 = vadd.f32 %v576, %v763
    %v770 = vadd.f32 %v578, %v765
    %v771 = vld [vmem:[%s2] sm:$0x3]
    %v773 = vlaneseq
    %v774 = vshrl.u32 %v773, 7
    %v775 = vsub.s32 0, %v774
    %v776 = vrot.slane %v771, %v775
    %v777 = vlaneseq
    %v778 = vshrl.u32 %v777, 7
    %v779 = vsub.s32 1, %v778
    %v780 = vrot.slane %v771, %v779
    %v783 = vadd.f32 %v767, %v776
    %v784 = vadd.f32 %v768, %v780
    %v785 = vadd.f32 %v769, %v776
    %v786 = vadd.f32 %v770, %v780
    %v787 = vmax.f32 %v783, 0.0
    %v788 = vmax.f32 %v784, 0.0
    %v789 = vmax.f32 %v785, 0.0
    %v790 = vmax.f32 %v786, 0.0
    %vm795 = vcmask 1040384
    %v796 = vrot.slane %v787, 7
    %v797 = vrot.slane %v788, 7
    %v798 = vrot.slane %v789, 7
    %v799 = vsel %vm795, %v796, %v798
    %v800 = vrot.slane %v790, 7
    %v801 = vsel %vm795, %v797, %v800
    %802 = vrot.lane.b32.xlu0 %v796, 16
    %v803 = vpop.permute.xlu0 %802
    %804 = vrot.lane.b32.xlu0 %v797, 16
    %v805 = vpop.permute.xlu0 %804
    %806 = vrot.lane.b32.xlu0 %v799, 16
    %v807 = vpop.permute.xlu0 %806
    %808 = vrot.lane.b32.xlu0 %v801, 16
    %v809 = vpop.permute.xlu0 %808
    %vm810 = vcmask 130048
    %v811 = vsel %vm810, %v803, %v805
    %v812 = vsel %vm810, %v807, %v809
    %vm817 = vcmask 1047681
    %818 = vst.msk [vmem:[#allocation3] sm:$0xfe] %vm817, %v803
    %vm819 = vcmask 392193
    %820 = vst.msk [vmem:[#allocation3 + $0x8] sm:$0xfe] %vm819, %v811
    %vm821 = vcmask 1042560
    %822 = vst.msk [vmem:[#allocation3 + $0x10] sm:$0x7] %vm821, %v807
    %vm823 = vcmask 387072
    %824 = vst.msk [vmem:[#allocation3 + $0x18] sm:$0x7] %vm823, %v812
    %v825 = vld [vmem:[#allocation3] sm:$0xff]
    %v826 = vld [vmem:[#allocation3 + $0x8] sm:$0xff]
    %v827 = vld [vmem:[#allocation3 + $0x10] sm:$0xf]
    %v828 = vld [vmem:[#allocation3 + $0x18] sm:$0xf]
    %vm829 = vcmask 97280
    %v830 = vsel %vm829, %v209, 0
    %vm832 = vcmask 1043456
    %v834 = vsel %vm832, %v827, 0
    %v837 = vsel %vm832, %v828, 0
    %839 = vmatprep.subr.mxu0 %v826
    %840 = vmatpush1.msra.mxu0 %v825
    %841 = vmatprep.subr.mxu0 %v837
    %842 = vmatpush1.msra.mxu0 %v834
    %843 = vmatprep.subr.mxu0 0.0
    %844 = vmatpush1.msra.mxu0 0.0
    %845 = vmatprep.subr.mxu0 0.0
    %846 = vmatpush1.msra.mxu0 0.0
    %847 = vmatprep.subr.mxu0 0.0
    %848 = vmatpush1.msra.mxu0 0.0
    %849 = vmatprep.subr.mxu0 0.0
    %850 = vmatpush1.msra.mxu0 0.0
    %851 = vmatprep.subr.mxu0 0.0
    %852 = vmatpush1.msra.mxu0 0.0
    %853 = vmatprep.subr.mxu0 0.0
    %854 = vmatpush1.msra.mxu0 0.0
    %855 = vmatprep.subr.mxu0 0.0
    %856 = vmatpush1.msra.mxu0 0.0
    %857 = vmatprep.subr.mxu0 0.0
    %858 = vmatpush1.msra.mxu0 0.0
    %859 = vmatprep.subr.mxu0 0.0
    %860 = vmatpush1.msra.mxu0 0.0
    %861 = vmatprep.subr.mxu0 0.0
    %862 = vmatpush1.msra.mxu0 0.0
    %863 = vmatprep.subr.mxu0 0.0
    %864 = vmatpush1.msra.mxu0 0.0
    %865 = vmatprep.subr.mxu0 0.0
    %866 = vmatpush1.msra.mxu0 0.0
    %867 = vmatprep.subr.mxu0 0.0
    %868 = vmatpush1.msra.mxu0 0.0
    %869 = vmatprep.subr.mxu0 0.0
    %870 = vmatpush1.msra.mxu0 0.0
    %871 = vmatprep.subr.mxu0 0.0
    %872 = vmatpush1.msra.mxu0 0.0
    %873 = vmatprep.subr.mxu0 0.0
    %874 = vmatpush1.msra.mxu0 0.0
    %875 = vmatprep.subr.mxu0 0.0
    %876 = vmatpush1.msra.mxu0 0.0
    %877 = vmatprep.subr.mxu0 0.0
    %878 = vmatpush1.msra.mxu0 0.0
    %879 = vmatprep.subr.mxu0 0.0
    %880 = vmatpush1.msra.mxu0 0.0
    %881 = vmatprep.subr.mxu0 0.0
    %882 = vmatpush1.msra.mxu0 0.0
    %883 = vmatprep.subr.mxu0 0.0
    %884 = vmatpush1.msra.mxu0 0.0
    %885 = vmatprep.subr.mxu0 0.0
    %886 = vmatpush1.msra.mxu0 0.0
    %887 = vmatprep.subr.mxu0 0.0
    %888 = vmatpush1.msra.mxu0 0.0
    %889 = vmatprep.subr.mxu0 0.0
    %890 = vmatpush1.msra.mxu0 0.0
    %891 = vmatprep.subr.mxu0 0.0
    %892 = vmatpush1.msra.mxu0 0.0
    %893 = vmatprep.subr.mxu0 0.0
    %894 = vmatpush1.msra.mxu0 0.0
    %895 = vmatprep.subr.mxu0 0.0
    %896 = vmatpush1.msra.mxu0 0.0
    %897 = vmatprep.subr.mxu0 0.0
    %898 = vmatpush1.msra.mxu0 0.0
    %899 = vmatprep.subr.mxu0 0.0
    %900 = vmatpush1.msra.mxu0 0.0
    %901 = vmatprep.subr.mxu0 0.0
    %902 = vmatpush1.msra.mxu0 0.0
    %903 = vmatprep.mubr.f32.mxu0 0.0
    %904 = vmatmul.mubr.f32.gmra.mrb[0].mxu0 %v830
    %v905 = vpop.f32.mrb[0].mxu0
    %v906 = vadd.f32 0.0, %v905
    %v907 = vpop.f32.mrb[0].mxu0
    %v908 = vadd.f32 0.0, %v907
    %909 = vdwg.mxu0
    %v910 = vld [vmem:[%s3] sm:$0xff]
    %v911 = vld [vmem:[%s3 + $0x8] sm:$0xff]
    %v912 = vld [vmem:[%s3 + $0x10] sm:$0xff]
    %v913 = vld [vmem:[%s3 + $0x18] sm:$0xff]
    %v914 = vld [vmem:[%s3 + $0x20] sm:$0xff]
    %v915 = vld [vmem:[%s3 + $0x28] sm:$0xff]
    %v916 = vld [vmem:[%s3 + $0x30] sm:$0xff]
    %v917 = vld [vmem:[%s3 + $0x38] sm:$0xff]
    %v918 = vld [vmem:[%s3 + $0x40] sm:$0xff]
    %v919 = vld [vmem:[%s3 + $0x48] sm:$0xff]
    %v920 = vld [vmem:[%s3 + $0x50] sm:$0xff]
    %v921 = vld [vmem:[%s3 + $0x58] sm:$0xff]
    %v922 = vld [vmem:[%s3 + $0x60] sm:$0xff]
    %v923 = vld [vmem:[%s3 + $0x68] sm:$0xff]
    %v924 = vld [vmem:[%s3 + $0x70] sm:$0xff]
    %v925 = vld [vmem:[%s3 + $0x78] sm:$0xff]
    %v926 = vld [vmem:[%s3 + $0x80] sm:$0xff]
    %v927 = vld [vmem:[%s3 + $0x88] sm:$0xff]
    %v928 = vld [vmem:[%s3 + $0x90] sm:$0xff]
    %v929 = vld [vmem:[%s3 + $0x98] sm:$0xff]
    %v930 = vld [vmem:[%s3 + $0xa0] sm:$0xff]
    %v931 = vld [vmem:[%s3 + $0xa8] sm:$0xff]
    %v932 = vld [vmem:[%s3 + $0xb0] sm:$0xff]
    %v933 = vld [vmem:[%s3 + $0xb8] sm:$0xff]
    %v934 = vsel %vm829, %v310, 0
    %936 = vmatprep.subr.mxu0 %v826
    %937 = vmatpush1.msra.mxu0 %v825
    %938 = vmatprep.subr.mxu0 %v837
    %939 = vmatpush1.msra.mxu0 %v834
    %940 = vmatprep.subr.mxu0 0.0
    %941 = vmatpush1.msra.mxu0 0.0
    %942 = vmatprep.subr.mxu0 0.0
    %943 = vmatpush1.msra.mxu0 0.0
    %944 = vmatprep.subr.mxu0 0.0
    %945 = vmatpush1.msra.mxu0 0.0
    %946 = vmatprep.subr.mxu0 0.0
    %947 = vmatpush1.msra.mxu0 0.0
    %948 = vmatprep.subr.mxu0 0.0
    %949 = vmatpush1.msra.mxu0 0.0
    %950 = vmatprep.subr.mxu0 0.0
    %951 = vmatpush1.msra.mxu0 0.0
    %952 = vmatprep.subr.mxu0 0.0
    %953 = vmatpush1.msra.mxu0 0.0
    %954 = vmatprep.subr.mxu0 0.0
    %955 = vmatpush1.msra.mxu0 0.0
    %956 = vmatprep.subr.mxu0 0.0
    %957 = vmatpush1.msra.mxu0 0.0
    %958 = vmatprep.subr.mxu0 0.0
    %959 = vmatpush1.msra.mxu0 0.0
    %960 = vmatprep.subr.mxu0 0.0
    %961 = vmatpush1.msra.mxu0 0.0
    %962 = vmatprep.subr.mxu0 0.0
    %963 = vmatpush1.msra.mxu0 0.0
    %964 = vmatprep.subr.mxu0 0.0
    %965 = vmatpush1.msra.mxu0 0.0
    %966 = vmatprep.subr.mxu0 0.0
    %967 = vmatpush1.msra.mxu0 0.0
    %968 = vmatprep.subr.mxu0 0.0
    %969 = vmatpush1.msra.mxu0 0.0
    %970 = vmatprep.subr.mxu0 0.0
    %971 = vmatpush1.msra.mxu0 0.0
    %972 = vmatprep.subr.mxu0 0.0
    %973 = vmatpush1.msra.mxu0 0.0
    %974 = vmatprep.subr.mxu0 0.0
    %975 = vmatpush1.msra.mxu0 0.0
    %976 = vmatprep.subr.mxu0 0.0
    %977 = vmatpush1.msra.mxu0 0.0
    %978 = vmatprep.subr.mxu0 0.0
    %979 = vmatpush1.msra.mxu0 0.0
    %980 = vmatprep.subr.mxu0 0.0
    %981 = vmatpush1.msra.mxu0 0.0
    %982 = vmatprep.subr.mxu0 0.0
    %983 = vmatpush1.msra.mxu0 0.0
    %984 = vmatprep.subr.mxu0 0.0
    %985 = vmatpush1.msra.mxu0 0.0
    %986 = vmatprep.subr.mxu0 0.0
    %987 = vmatpush1.msra.mxu0 0.0
    %988 = vmatprep.subr.mxu0 0.0
    %989 = vmatpush1.msra.mxu0 0.0
    %990 = vmatprep.subr.mxu0 0.0
    %991 = vmatpush1.msra.mxu0 0.0
    %992 = vmatprep.subr.mxu0 0.0
    %993 = vmatpush1.msra.mxu0 0.0
    %994 = vmatprep.subr.mxu0 0.0
    %995 = vmatpush1.msra.mxu0 0.0
    %996 = vmatprep.subr.mxu0 0.0
    %997 = vmatpush1.msra.mxu0 0.0
    %998 = vmatprep.subr.mxu0 0.0
    %999 = vmatpush1.msra.mxu0 0.0
    %1000 = vmatprep.mubr.f32.mxu0 0.0
    %1001 = vmatmul.mubr.f32.gmra.mrb[0].mxu0 %v934
    %v1002 = vpop.f32.mrb[0].mxu0
    %v1003 = vadd.f32 0.0, %v1002
    %v1004 = vpop.f32.mrb[0].mxu0
    %v1005 = vadd.f32 0.0, %v1004
    %1006 = vdwg.mxu0
    %s1007 = scalar_lea.vmem %s3, 192
    %v1008 = vld [vmem:[%s1007] sm:$0xff]
    %v1009 = vld [vmem:[%s1007 + $0x8] sm:$0xff]
    %v1010 = vld [vmem:[%s1007 + $0x10] sm:$0xff]
    %v1011 = vld [vmem:[%s1007 + $0x18] sm:$0xff]
    %v1012 = vld [vmem:[%s1007 + $0x20] sm:$0xff]
    %v1013 = vld [vmem:[%s1007 + $0x28] sm:$0xff]
    %v1014 = vld [vmem:[%s1007 + $0x30] sm:$0xff]
    %v1015 = vld [vmem:[%s1007 + $0x38] sm:$0xff]
    %v1016 = vld [vmem:[%s1007 + $0x40] sm:$0xff]
    %v1017 = vld [vmem:[%s1007 + $0x48] sm:$0xff]
    %v1018 = vld [vmem:[%s1007 + $0x50] sm:$0xff]
    %v1019 = vld [vmem:[%s1007 + $0x58] sm:$0xff]
    %v1020 = vld [vmem:[%s1007 + $0x60] sm:$0xff]
    %v1021 = vld [vmem:[%s1007 + $0x68] sm:$0xff]
    %v1022 = vld [vmem:[%s1007 + $0x70] sm:$0xff]
    %v1023 = vld [vmem:[%s1007 + $0x78] sm:$0xff]
    %v1024 = vld [vmem:[%s1007 + $0x80] sm:$0xff]
    %v1025 = vld [vmem:[%s1007 + $0x88] sm:$0xff]
    %v1026 = vld [vmem:[%s1007 + $0x90] sm:$0xff]
    %v1027 = vld [vmem:[%s1007 + $0x98] sm:$0xff]
    %v1028 = vld [vmem:[%s1007 + $0xa0] sm:$0xff]
    %v1029 = vld [vmem:[%s1007 + $0xa8] sm:$0xff]
    %v1030 = vld [vmem:[%s1007 + $0xb0] sm:$0xff]
    %v1031 = vld [vmem:[%s1007 + $0xb8] sm:$0xff]
    %v1033 = vsel %vm117, %v1005, 0
    %1035 = vmatprep.subr.mxu0 0.0
    %1036 = vmatpush1.msra.mxu0 %v1008
    %1037 = vmatprep.subr.mxu0 0.0
    %1038 = vmatpush1.msra.mxu0 %v1009
    %1039 = vmatprep.subr.mxu0 0.0
    %1040 = vmatpush1.msra.mxu0 %v1010
    %1041 = vmatprep.subr.mxu0 0.0
    %1042 = vmatpush1.msra.mxu0 %v1011
    %1043 = vmatprep.subr.mxu0 0.0
    %1044 = vmatpush1.msra.mxu0 %v1012
    %1045 = vmatprep.subr.mxu0 0.0
    %1046 = vmatpush1.msra.mxu0 %v1013
    %1047 = vmatprep.subr.mxu0 0.0
    %1048 = vmatpush1.msra.mxu0 %v1014
    %1049 = vmatprep.subr.mxu0 0.0
    %1050 = vmatpush1.msra.mxu0 %v1015
    %1051 = vmatprep.subr.mxu0 0.0
    %1052 = vmatpush1.msra.mxu0 %v1016
    %1053 = vmatprep.subr.mxu0 0.0
    %1054 = vmatpush1.msra.mxu0 %v1017
    %1055 = vmatprep.subr.mxu0 0.0
    %1056 = vmatpush1.msra.mxu0 %v1018
    %1057 = vmatprep.subr.mxu0 0.0
    %1058 = vmatpush1.msra.mxu0 %v1019
    %1059 = vmatprep.subr.mxu0 0.0
    %1060 = vmatpush1.msra.mxu0 %v1020
    %1061 = vmatprep.subr.mxu0 0.0
    %1062 = vmatpush1.msra.mxu0 %v1021
    %1063 = vmatprep.subr.mxu0 0.0
    %1064 = vmatpush1.msra.mxu0 %v1022
    %1065 = vmatprep.subr.mxu0 0.0
    %1066 = vmatpush1.msra.mxu0 %v1023
    %1067 = vmatprep.subr.mxu0 0.0
    %1068 = vmatpush1.msra.mxu0 %v1024
    %1069 = vmatprep.subr.mxu0 0.0
    %1070 = vmatpush1.msra.mxu0 %v1025
    %1071 = vmatprep.subr.mxu0 0.0
    %1072 = vmatpush1.msra.mxu0 %v1026
    %1073 = vmatprep.subr.mxu0 0.0
    %1074 = vmatpush1.msra.mxu0 %v1027
    %1075 = vmatprep.subr.mxu0 0.0
    %1076 = vmatpush1.msra.mxu0 %v1028
    %1077 = vmatprep.subr.mxu0 0.0
    %1078 = vmatpush1.msra.mxu0 %v1029
    %1079 = vmatprep.subr.mxu0 0.0
    %1080 = vmatpush1.msra.mxu0 %v1030
    %1081 = vmatprep.subr.mxu0 0.0
    %1082 = vmatpush1.msra.mxu0 %v1031
    %1083 = vmatprep.subr.mxu0 0.0
    %1084 = vmatpush1.msra.mxu0 0.0
    %1085 = vmatprep.subr.mxu0 0.0
    %1086 = vmatpush1.msra.mxu0 0.0
    %1087 = vmatprep.subr.mxu0 0.0
    %1088 = vmatpush1.msra.mxu0 0.0
    %1089 = vmatprep.subr.mxu0 0.0
    %1090 = vmatpush1.msra.mxu0 0.0
    %1091 = vmatprep.subr.mxu0 0.0
    %1092 = vmatpush1.msra.mxu0 0.0
    %1093 = vmatprep.subr.mxu0 0.0
    %1094 = vmatpush1.msra.mxu0 0.0
    %1095 = vmatprep.subr.mxu0 0.0
    %1096 = vmatpush1.msra.mxu0 0.0
    %1097 = vmatprep.subr.mxu0 0.0
    %1098 = vmatpush1.msra.mxu0 0.0
    %1099 = vmatprep.mubr.f32.mxu0 %v1033
    %1100 = vmatmul.mubr.f32.gmra.mrb[0].mxu0 %v1003
    %v1101 = vpop.f32.mrb[0].mxu0
    %v1102 = vadd.f32 0.0, %v1101
    %v1103 = vpop.f32.mrb[0].mxu0
    %1104 = vdwg.mxu0
    %v1106 = vsel %vm117, %v908, 0
    %1108 = vmatprep.subr.mxu0 0.0
    %1109 = vmatpush1.msra.mxu0 %v910
    %1110 = vmatprep.subr.mxu0 0.0
    %1111 = vmatpush1.msra.mxu0 %v911
    %1112 = vmatprep.subr.mxu0 0.0
    %1113 = vmatpush1.msra.mxu0 %v912
    %1114 = vmatprep.subr.mxu0 0.0
    %1115 = vmatpush1.msra.mxu0 %v913
    %1116 = vmatprep.subr.mxu0 0.0
    %1117 = vmatpush1.msra.mxu0 %v914
    %1118 = vmatprep.subr.mxu0 0.0
    %1119 = vmatpush1.msra.mxu0 %v915
    %1120 = vmatprep.subr.mxu0 0.0
    %1121 = vmatpush1.msra.mxu0 %v916
    %1122 = vmatprep.subr.mxu0 0.0
    %1123 = vmatpush1.msra.mxu0 %v917
    %1124 = vmatprep.subr.mxu0 0.0
    %1125 = vmatpush1.msra.mxu0 %v918
    %1126 = vmatprep.subr.mxu0 0.0
    %1127 = vmatpush1.msra.mxu0 %v919
    %1128 = vmatprep.subr.mxu0 0.0
    %1129 = vmatpush1.msra.mxu0 %v920
    %1130 = vmatprep.subr.mxu0 0.0
    %1131 = vmatpush1.msra.mxu0 %v921
    %1132 = vmatprep.subr.mxu0 0.0
    %1133 = vmatpush1.msra.mxu0 %v922
    %1134 = vmatprep.subr.mxu0 0.0
    %1135 = vmatpush1.msra.mxu0 %v923
    %1136 = vmatprep.subr.mxu0 0.0
    %1137 = vmatpush1.msra.mxu0 %v924
    %1138 = vmatprep.subr.mxu0 0.0
    %1139 = vmatpush1.msra.mxu0 %v925
    %1140 = vmatprep.subr.mxu0 0.0
    %1141 = vmatpush1.msra.mxu0 %v926
    %1142 = vmatprep.subr.mxu0 0.0
    %1143 = vmatpush1.msra.mxu0 %v927
    %1144 = vmatprep.subr.mxu0 0.0
    %1145 = vmatpush1.msra.mxu0 %v928
    %1146 = vmatprep.subr.mxu0 0.0
    %1147 = vmatpush1.msra.mxu0 %v929
    %1148 = vmatprep.subr.mxu0 0.0
    %1149 = vmatpush1.msra.mxu0 %v930
    %1150 = vmatprep.subr.mxu0 0.0
    %1151 = vmatpush1.msra.mxu0 %v931
    %1152 = vmatprep.subr.mxu0 0.0
    %1153 = vmatpush1.msra.mxu0 %v932
    %1154 = vmatprep.subr.mxu0 0.0
    %1155 = vmatpush1.msra.mxu0 %v933
    %1156 = vmatprep.subr.mxu0 0.0
    %1157 = vmatpush1.msra.mxu0 0.0
    %1158 = vmatprep.subr.mxu0 0.0
    %1159 = vmatpush1.msra.mxu0 0.0
    %1160 = vmatprep.subr.mxu0 0.0
    %1161 = vmatpush1.msra.mxu0 0.0
    %1162 = vmatprep.subr.mxu0 0.0
    %1163 = vmatpush1.msra.mxu0 0.0
    %1164 = vmatprep.subr.mxu0 0.0
    %1165 = vmatpush1.msra.mxu0 0.0
    %1166 = vmatprep.subr.mxu0 0.0
    %1167 = vmatpush1.msra.mxu0 0.0
    %1168 = vmatprep.subr.mxu0 0.0
    %1169 = vmatpush1.msra.mxu0 0.0
    %1170 = vmatprep.subr.mxu0 0.0
    %1171 = vmatpush1.msra.mxu0 0.0
    %1172 = vmatprep.mubr.f32.mxu0 %v1106
    %1173 = vmatmul.mubr.f32.gmra.mrb[0].mxu0 %v906
    %v1174 = vpop.f32.mrb[0].mxu0
    %v1175 = vadd.f32 %v1102, %v1174
    %v1176 = vpop.f32.mrb[0].mxu0
    %1177 = vdwg.mxu0
    %v1178 = vsel %vm829, %v586, 0
    %1180 = vmatprep.subr.mxu0 %v826
    %1181 = vmatpush1.msra.mxu0 %v825
    %1182 = vmatprep.subr.mxu0 %v837
    %1183 = vmatpush1.msra.mxu0 %v834
    %1184 = vmatprep.subr.mxu0 0.0
    %1185 = vmatpush1.msra.mxu0 0.0
    %1186 = vmatprep.subr.mxu0 0.0
    %1187 = vmatpush1.msra.mxu0 0.0
    %1188 = vmatprep.subr.mxu0 0.0
    %1189 = vmatpush1.msra.mxu0 0.0
    %1190 = vmatprep.subr.mxu0 0.0
    %1191 = vmatpush1.msra.mxu0 0.0
    %1192 = vmatprep.subr.mxu0 0.0
    %1193 = vmatpush1.msra.mxu0 0.0
    %1194 = vmatprep.subr.mxu0 0.0
    %1195 = vmatpush1.msra.mxu0 0.0
    %1196 = vmatprep.subr.mxu0 0.0
    %1197 = vmatpush1.msra.mxu0 0.0
    %1198 = vmatprep.subr.mxu0 0.0
    %1199 = vmatpush1.msra.mxu0 0.0
    %1200 = vmatprep.subr.mxu0 0.0
    %1201 = vmatpush1.msra.mxu0 0.0
    %1202 = vmatprep.subr.mxu0 0.0
    %1203 = vmatpush1.msra.mxu0 0.0
    %1204 = vmatprep.subr.mxu0 0.0
    %1205 = vmatpush1.msra.mxu0 0.0
    %1206 = vmatprep.subr.mxu0 0.0
    %1207 = vmatpush1.msra.mxu0 0.0
    %1208 = vmatprep.subr.mxu0 0.0
    %1209 = vmatpush1.msra.mxu0 0.0
    %1210 = vmatprep.subr.mxu0 0.0
    %1211 = vmatpush1.msra.mxu0 0.0
    %1212 = vmatprep.subr.mxu0 0.0
    %1213 = vmatpush1.msra.mxu0 0.0
    %1214 = vmatprep.subr.mxu0 0.0
    %1215 = vmatpush1.msra.mxu0 0.0
    %1216 = vmatprep.subr.mxu0 0.0
    %1217 = vmatpush1.msra.mxu0 0.0
    %1218 = vmatprep.subr.mxu0 0.0
    %1219 = vmatpush1.msra.mxu0 0.0
    %1220 = vmatprep.subr.mxu0 0.0
    %1221 = vmatpush1.msra.mxu0 0.0
    %1222 = vmatprep.subr.mxu0 0.0
    %1223 = vmatpush1.msra.mxu0 0.0
    %1224 = vmatprep.subr.mxu0 0.0
    %1225 = vmatpush1.msra.mxu0 0.0
    %1226 = vmatprep.subr.mxu0 0.0
    %1227 = vmatpush1.msra.mxu0 0.0
    %1228 = vmatprep.subr.mxu0 0.0
    %1229 = vmatpush1.msra.mxu0 0.0
    %1230 = vmatprep.subr.mxu0 0.0
    %1231 = vmatpush1.msra.mxu0 0.0
    %1232 = vmatprep.subr.mxu0 0.0
    %1233 = vmatpush1.msra.mxu0 0.0
    %1234 = vmatprep.subr.mxu0 0.0
    %1235 = vmatpush1.msra.mxu0 0.0
    %1236 = vmatprep.subr.mxu0 0.0
    %1237 = vmatpush1.msra.mxu0 0.0
    %1238 = vmatprep.subr.mxu0 0.0
    %1239 = vmatpush1.msra.mxu0 0.0
    %1240 = vmatprep.subr.mxu0 0.0
    %1241 = vmatpush1.msra.mxu0 0.0
    %1242 = vmatprep.subr.mxu0 0.0
    %1243 = vmatpush1.msra.mxu0 0.0
    %1244 = vmatprep.mubr.f32.mxu0 0.0
    %1245 = vmatmul.mubr.f32.gmra.mrb[0].mxu0 %v1178
    %v1246 = vpop.f32.mrb[0].mxu0
    %v1247 = vadd.f32 0.0, %v1246
    %v1248 = vpop.f32.mrb[0].mxu0
    %v1249 = vadd.f32 0.0, %v1248
    %1250 = vdwg.mxu0
    %s1251 = scalar_lea.vmem %s3, 384
    %v1252 = vld [vmem:[%s1251] sm:$0xff]
    %v1253 = vld [vmem:[%s1251 + $0x8] sm:$0xff]
    %v1254 = vld [vmem:[%s1251 + $0x10] sm:$0xff]
    %v1255 = vld [vmem:[%s1251 + $0x18] sm:$0xff]
    %v1256 = vld [vmem:[%s1251 + $0x20] sm:$0xff]
    %v1257 = vld [vmem:[%s1251 + $0x28] sm:$0xff]
    %v1258 = vld [vmem:[%s1251 + $0x30] sm:$0xff]
    %v1259 = vld [vmem:[%s1251 + $0x38] sm:$0xff]
    %v1260 = vld [vmem:[%s1251 + $0x40] sm:$0xff]
    %v1261 = vld [vmem:[%s1251 + $0x48] sm:$0xff]
    %v1262 = vld [vmem:[%s1251 + $0x50] sm:$0xff]
    %v1263 = vld [vmem:[%s1251 + $0x58] sm:$0xff]
    %v1264 = vld [vmem:[%s1251 + $0x60] sm:$0xff]
    %v1265 = vld [vmem:[%s1251 + $0x68] sm:$0xff]
    %v1266 = vld [vmem:[%s1251 + $0x70] sm:$0xff]
    %v1267 = vld [vmem:[%s1251 + $0x78] sm:$0xff]
    %v1268 = vld [vmem:[%s1251 + $0x80] sm:$0xff]
    %v1269 = vld [vmem:[%s1251 + $0x88] sm:$0xff]
    %v1270 = vld [vmem:[%s1251 + $0x90] sm:$0xff]
    %v1271 = vld [vmem:[%s1251 + $0x98] sm:$0xff]
    %v1272 = vld [vmem:[%s1251 + $0xa0] sm:$0xff]
    %v1273 = vld [vmem:[%s1251 + $0xa8] sm:$0xff]
    %v1274 = vld [vmem:[%s1251 + $0xb0] sm:$0xff]
    %v1275 = vld [vmem:[%s1251 + $0xb8] sm:$0xff]
    %v1277 = vsel %vm117, %v1249, 0
    %1279 = vmatprep.subr.mxu0 0.0
    %1280 = vmatpush1.msra.mxu0 %v1252
    %1281 = vmatprep.subr.mxu0 0.0
    %1282 = vmatpush1.msra.mxu0 %v1253
    %1283 = vmatprep.subr.mxu0 0.0
    %1284 = vmatpush1.msra.mxu0 %v1254
    %1285 = vmatprep.subr.mxu0 0.0
    %1286 = vmatpush1.msra.mxu0 %v1255
    %1287 = vmatprep.subr.mxu0 0.0
    %1288 = vmatpush1.msra.mxu0 %v1256
    %1289 = vmatprep.subr.mxu0 0.0
    %1290 = vmatpush1.msra.mxu0 %v1257
    %1291 = vmatprep.subr.mxu0 0.0
    %1292 = vmatpush1.msra.mxu0 %v1258
    %1293 = vmatprep.subr.mxu0 0.0
    %1294 = vmatpush1.msra.mxu0 %v1259
    %1295 = vmatprep.subr.mxu0 0.0
    %1296 = vmatpush1.msra.mxu0 %v1260
    %1297 = vmatprep.subr.mxu0 0.0
    %1298 = vmatpush1.msra.mxu0 %v1261
    %1299 = vmatprep.subr.mxu0 0.0
    %1300 = vmatpush1.msra.mxu0 %v1262
    %1301 = vmatprep.subr.mxu0 0.0
    %1302 = vmatpush1.msra.mxu0 %v1263
    %1303 = vmatprep.subr.mxu0 0.0
    %1304 = vmatpush1.msra.mxu0 %v1264
    %1305 = vmatprep.subr.mxu0 0.0
    %1306 = vmatpush1.msra.mxu0 %v1265
    %1307 = vmatprep.subr.mxu0 0.0
    %1308 = vmatpush1.msra.mxu0 %v1266
    %1309 = vmatprep.subr.mxu0 0.0
    %1310 = vmatpush1.msra.mxu0 %v1267
    %1311 = vmatprep.subr.mxu0 0.0
    %1312 = vmatpush1.msra.mxu0 %v1268
    %1313 = vmatprep.subr.mxu0 0.0
    %1314 = vmatpush1.msra.mxu0 %v1269
    %1315 = vmatprep.subr.mxu0 0.0
    %1316 = vmatpush1.msra.mxu0 %v1270
    %1317 = vmatprep.subr.mxu0 0.0
    %1318 = vmatpush1.msra.mxu0 %v1271
    %1319 = vmatprep.subr.mxu0 0.0
    %1320 = vmatpush1.msra.mxu0 %v1272
    %1321 = vmatprep.subr.mxu0 0.0
    %1322 = vmatpush1.msra.mxu0 %v1273
    %1323 = vmatprep.subr.mxu0 0.0
    %1324 = vmatpush1.msra.mxu0 %v1274
    %1325 = vmatprep.subr.mxu0 0.0
    %1326 = vmatpush1.msra.mxu0 %v1275
    %1327 = vmatprep.subr.mxu0 0.0
    %1328 = vmatpush1.msra.mxu0 0.0
    %1329 = vmatprep.subr.mxu0 0.0
    %1330 = vmatpush1.msra.mxu0 0.0
    %1331 = vmatprep.subr.mxu0 0.0
    %1332 = vmatpush1.msra.mxu0 0.0
    %1333 = vmatprep.subr.mxu0 0.0
    %1334 = vmatpush1.msra.mxu0 0.0
    %1335 = vmatprep.subr.mxu0 0.0
    %1336 = vmatpush1.msra.mxu0 0.0
    %1337 = vmatprep.subr.mxu0 0.0
    %1338 = vmatpush1.msra.mxu0 0.0
    %1339 = vmatprep.subr.mxu0 0.0
    %1340 = vmatpush1.msra.mxu0 0.0
    %1341 = vmatprep.subr.mxu0 0.0
    %1342 = vmatpush1.msra.mxu0 0.0
    %1343 = vmatprep.mubr.f32.mxu0 %v1277
    %1344 = vmatmul.mubr.f32.gmra.mrb[0].mxu0 %v1247
    %v1345 = vpop.f32.mrb[0].mxu0
    %v1346 = vadd.f32 0.0, %v1345
    %v1347 = vpop.f32.mrb[0].mxu0
    %1348 = vdwg.mxu0
    %v1349 = vadd.f32 %v1175, %v1346
    %v1350 = vld [vmem:[#allocation10] sm:$0x1]
    %v1352 = vlaneseq
    %v1353 = vshrl.u32 %v1352, 7
    %v1354 = vsub.s32 0, %v1353
    %v1355 = vrot.slane %v1350, %v1354
    %v1357 = vadd.f32 %v1349, %v1355
    %v1358 = vmax.f32 %v1357, 0.0
    %v1360 = vrot.slane %v1358, 7
    %1361 = vrot.lane.b32.xlu0 %v1360, 32
    %v1362 = vpop.permute.xlu0 %1361
    %vm1364 = vcmask 1044737
    %1365 = vst.msk [vmem:[#allocation4] sm:$0x1e] %vm1364, %v1362
    %vm1366 = vcmask 258049
    %1367 = vst.msk [vmem:[#allocation4 + $0x8] sm:$0x1e] %vm1366, %v1362
    %v1368 = vld [vmem:[#allocation4] sm:$0x3f]
    %v1369 = vld [vmem:[#allocation4 + $0x8] sm:$0x3f]
    %v1370 = vmul.u32 %v199, 2
    %vm1371 = vcmp.eq.s32.totalorder %v202, %v1370
    %v1372 = vsel %vm1371, 1, 0
    %v1373 = vcvt.s32.f32 %v1372
    %vm1374 = vcmask 48128
    %v1376 = vsel %vm1374, %v1373, 0
    %v1379 = vsel %vm217, %v1368, 0
    %v1382 = vsel %vm217, %v1369, 0
    %1384 = vmatprep.subr.mxu0 %v1382
    %1385 = vmatpush1.msra.mxu0 %v1379
    %1386 = vmatprep.subr.mxu0 0.0
    %1387 = vmatpush1.msra.mxu0 0.0
    %1388 = vmatprep.subr.mxu0 0.0
    %1389 = vmatpush1.msra.mxu0 0.0
    %1390 = vmatprep.subr.mxu0 0.0
    %1391 = vmatpush1.msra.mxu0 0.0
    %1392 = vmatprep.subr.mxu0 0.0
    %1393 = vmatpush1.msra.mxu0 0.0
    %1394 = vmatprep.subr.mxu0 0.0
    %1395 = vmatpush1.msra.mxu0 0.0
    %1396 = vmatprep.subr.mxu0 0.0
    %1397 = vmatpush1.msra.mxu0 0.0
    %1398 = vmatprep.subr.mxu0 0.0
    %1399 = vmatpush1.msra.mxu0 0.0
    %1400 = vmatprep.subr.mxu0 0.0
    %1401 = vmatpush1.msra.mxu0 0.0
    %1402 = vmatprep.subr.mxu0 0.0
    %1403 = vmatpush1.msra.mxu0 0.0
    %1404 = vmatprep.subr.mxu0 0.0
    %1405 = vmatpush1.msra.mxu0 0.0
    %1406 = vmatprep.subr.mxu0 0.0
    %1407 = vmatpush1.msra.mxu0 0.0
    %1408 = vmatprep.subr.mxu0 0.0
    %1409 = vmatpush1.msra.mxu0 0.0
    %1410 = vmatprep.subr.mxu0 0.0
    %1411 = vmatpush1.msra.mxu0 0.0
    %1412 = vmatprep.subr.mxu0 0.0
    %1413 = vmatpush1.msra.mxu0 0.0
    %1414 = vmatprep.subr.mxu0 0.0
    %1415 = vmatpush1.msra.mxu0 0.0
    %1416 = vmatprep.subr.mxu0 0.0
    %1417 = vmatpush1.msra.mxu0 0.0
    %1418 = vmatprep.subr.mxu0 0.0
    %1419 = vmatpush1.msra.mxu0 0.0
    %1420 = vmatprep.subr.mxu0 0.0
    %1421 = vmatpush1.msra.mxu0 0.0
    %1422 = vmatprep.subr.mxu0 0.0
    %1423 = vmatpush1.msra.mxu0 0.0
    %1424 = vmatprep.subr.mxu0 0.0
    %1425 = vmatpush1.msra.mxu0 0.0
    %1426 = vmatprep.subr.mxu0 0.0
    %1427 = vmatpush1.msra.mxu0 0.0
    %1428 = vmatprep.subr.mxu0 0.0
    %1429 = vmatpush1.msra.mxu0 0.0
    %1430 = vmatprep.subr.mxu0 0.0
    %1431 = vmatpush1.msra.mxu0 0.0
    %1432 = vmatprep.subr.mxu0 0.0
    %1433 = vmatpush1.msra.mxu0 0.0
    %1434 = vmatprep.subr.mxu0 0.0
    %1435 = vmatpush1.msra.mxu0 0.0
    %1436 = vmatprep.subr.mxu0 0.0
    %1437 = vmatpush1.msra.mxu0 0.0
    %1438 = vmatprep.subr.mxu0 0.0
    %1439 = vmatpush1.msra.mxu0 0.0
    %1440 = vmatprep.subr.mxu0 0.0
    %1441 = vmatpush1.msra.mxu0 0.0
    %1442 = vmatprep.subr.mxu0 0.0
    %1443 = vmatpush1.msra.mxu0 0.0
    %1444 = vmatprep.subr.mxu0 0.0
    %1445 = vmatpush1.msra.mxu0 0.0
    %1446 = vmatprep.subr.mxu0 0.0
    %1447 = vmatpush1.msra.mxu0 0.0
    %1448 = vmatprep.mubr.f32.mxu0 0.0
    %1449 = vmatmul.mubr.f32.gmra.mrb[0].mxu0 %v1376
    %v1450 = vpop.f32.mrb[0].mxu0
    %v1451 = vadd.f32 0.0, %v1450
    %v1452 = vpop.f32.mrb[0].mxu0
    %v1453 = vadd.f32 0.0, %v1452
    %1454 = vdwg.mxu0
    %v1455 = vld [vmem:[%s5] sm:$0xff]
    %v1456 = vld [vmem:[%s5 + $0x8] sm:$0xff]
    %v1457 = vld [vmem:[%s5 + $0x10] sm:$0xff]
    %v1458 = vld [vmem:[%s5 + $0x18] sm:$0xff]
    %v1459 = vld [vmem:[%s5 + $0x20] sm:$0xff]
    %v1460 = vld [vmem:[%s5 + $0x28] sm:$0xff]
    %v1461 = vld [vmem:[%s5 + $0x30] sm:$0xff]
    %v1462 = vld [vmem:[%s5 + $0x38] sm:$0xff]
    %v1463 = vld [vmem:[%s5 + $0x40] sm:$0xff]
    %v1464 = vld [vmem:[%s5 + $0x48] sm:$0xff]
    %v1465 = vld [vmem:[%s5 + $0x50] sm:$0xff]
    %v1466 = vld [vmem:[%s5 + $0x58] sm:$0xff]
    %v1467 = vld [vmem:[%s5 + $0x60] sm:$0xff]
    %v1468 = vld [vmem:[%s5 + $0x68] sm:$0xff]
    %v1469 = vld [vmem:[%s5 + $0x70] sm:$0xff]
    %v1470 = vld [vmem:[%s5 + $0x78] sm:$0xff]
    %v1471 = vld [vmem:[%s5 + $0x80] sm:$0xff]
    %v1472 = vld [vmem:[%s5 + $0x88] sm:$0xff]
    %v1473 = vld [vmem:[%s5 + $0x90] sm:$0xff]
    %v1474 = vld [vmem:[%s5 + $0x98] sm:$0xff]
    %v1475 = vld [vmem:[%s5 + $0xa0] sm:$0xff]
    %v1476 = vld [vmem:[%s5 + $0xa8] sm:$0xff]
    %v1477 = vld [vmem:[%s5 + $0xb0] sm:$0xff]
    %v1478 = vld [vmem:[%s5 + $0xb8] sm:$0xff]
    %v1479 = vadd.s32 %v1370, 1
    %vm1480 = vcmp.eq.s32.totalorder %v202, %v1479
    %v1481 = vsel %vm1480, 1, 0
    %v1482 = vcvt.s32.f32 %v1481
    %v1484 = vsel %vm1374, %v1482, 0
    %1486 = vmatprep.subr.mxu0 %v1382
    %1487 = vmatpush1.msra.mxu0 %v1379
    %1488 = vmatprep.subr.mxu0 0.0
    %1489 = vmatpush1.msra.mxu0 0.0
    %1490 = vmatprep.subr.mxu0 0.0
    %1491 = vmatpush1.msra.mxu0 0.0
    %1492 = vmatprep.subr.mxu0 0.0
    %1493 = vmatpush1.msra.mxu0 0.0
    %1494 = vmatprep.subr.mxu0 0.0
    %1495 = vmatpush1.msra.mxu0 0.0
    %1496 = vmatprep.subr.mxu0 0.0
    %1497 = vmatpush1.msra.mxu0 0.0
    %1498 = vmatprep.subr.mxu0 0.0
    %1499 = vmatpush1.msra.mxu0 0.0
    %1500 = vmatprep.subr.mxu0 0.0
    %1501 = vmatpush1.msra.mxu0 0.0
    %1502 = vmatprep.subr.mxu0 0.0
    %1503 = vmatpush1.msra.mxu0 0.0
    %1504 = vmatprep.subr.mxu0 0.0
    %1505 = vmatpush1.msra.mxu0 0.0
    %1506 = vmatprep.subr.mxu0 0.0
    %1507 = vmatpush1.msra.mxu0 0.0
    %1508 = vmatprep.subr.mxu0 0.0
    %1509 = vmatpush1.msra.mxu0 0.0
    %1510 = vmatprep.subr.mxu0 0.0
    %1511 = vmatpush1.msra.mxu0 0.0
    %1512 = vmatprep.subr.mxu0 0.0
    %1513 = vmatpush1.msra.mxu0 0.0
    %1514 = vmatprep.subr.mxu0 0.0
    %1515 = vmatpush1.msra.mxu0 0.0
    %1516 = vmatprep.subr.mxu0 0.0
    %1517 = vmatpush1.msra.mxu0 0.0
    %1518 = vmatprep.subr.mxu0 0.0
    %1519 = vmatpush1.msra.mxu0 0.0
    %1520 = vmatprep.subr.mxu0 0.0
    %1521 = vmatpush1.msra.mxu0 0.0
    %1522 = vmatprep.subr.mxu0 0.0
    %1523 = vmatpush1.msra.mxu0 0.0
    %1524 = vmatprep.subr.mxu0 0.0
    %1525 = vmatpush1.msra.mxu0 0.0
    %1526 = vmatprep.subr.mxu0 0.0
    %1527 = vmatpush1.msra.mxu0 0.0
    %1528 = vmatprep.subr.mxu0 0.0
    %1529 = vmatpush1.msra.mxu0 0.0
    %1530 = vmatprep.subr.mxu0 0.0
    %1531 = vmatpush1.msra.mxu0 0.0
    %1532 = vmatprep.subr.mxu0 0.0
    %1533 = vmatpush1.msra.mxu0 0.0
    %1534 = vmatprep.subr.mxu0 0.0
    %1535 = vmatpush1.msra.mxu0 0.0
    %1536 = vmatprep.subr.mxu0 0.0
    %1537 = vmatpush1.msra.mxu0 0.0
    %1538 = vmatprep.subr.mxu0 0.0
    %1539 = vmatpush1.msra.mxu0 0.0
    %1540 = vmatprep.subr.mxu0 0.0
    %1541 = vmatpush1.msra.mxu0 0.0
    %1542 = vmatprep.subr.mxu0 0.0
    %1543 = vmatpush1.msra.mxu0 0.0
    %1544 = vmatprep.subr.mxu0 0.0
    %1545 = vmatpush1.msra.mxu0 0.0
    %1546 = vmatprep.subr.mxu0 0.0
    %1547 = vmatpush1.msra.mxu0 0.0
    %1548 = vmatprep.subr.mxu0 0.0
    %1549 = vmatpush1.msra.mxu0 0.0
    %1550 = vmatprep.mubr.f32.mxu0 0.0
    %1551 = vmatmul.mubr.f32.gmra.mrb[0].mxu0 %v1484
    %v1552 = vpop.f32.mrb[0].mxu0
    %v1553 = vadd.f32 0.0, %v1552
    %v1554 = vpop.f32.mrb[0].mxu0
    %v1555 = vadd.f32 0.0, %v1554
    %1556 = vdwg.mxu0
    %s1557 = scalar_lea.vmem %s5, 192
    %v1558 = vld [vmem:[%s1557] sm:$0xff]
    %v1559 = vld [vmem:[%s1557 + $0x8] sm:$0xff]
    %v1560 = vld [vmem:[%s1557 + $0x10] sm:$0xff]
    %v1561 = vld [vmem:[%s1557 + $0x18] sm:$0xff]
    %v1562 = vld [vmem:[%s1557 + $0x20] sm:$0xff]
    %v1563 = vld [vmem:[%s1557 + $0x28] sm:$0xff]
    %v1564 = vld [vmem:[%s1557 + $0x30] sm:$0xff]
    %v1565 = vld [vmem:[%s1557 + $0x38] sm:$0xff]
    %v1566 = vld [vmem:[%s1557 + $0x40] sm:$0xff]
    %v1567 = vld [vmem:[%s1557 + $0x48] sm:$0xff]
    %v1568 = vld [vmem:[%s1557 + $0x50] sm:$0xff]
    %v1569 = vld [vmem:[%s1557 + $0x58] sm:$0xff]
    %v1570 = vld [vmem:[%s1557 + $0x60] sm:$0xff]
    %v1571 = vld [vmem:[%s1557 + $0x68] sm:$0xff]
    %v1572 = vld [vmem:[%s1557 + $0x70] sm:$0xff]
    %v1573 = vld [vmem:[%s1557 + $0x78] sm:$0xff]
    %v1574 = vld [vmem:[%s1557 + $0x80] sm:$0xff]
    %v1575 = vld [vmem:[%s1557 + $0x88] sm:$0xff]
    %v1576 = vld [vmem:[%s1557 + $0x90] sm:$0xff]
    %v1577 = vld [vmem:[%s1557 + $0x98] sm:$0xff]
    %v1578 = vld [vmem:[%s1557 + $0xa0] sm:$0xff]
    %v1579 = vld [vmem:[%s1557 + $0xa8] sm:$0xff]
    %v1580 = vld [vmem:[%s1557 + $0xb0] sm:$0xff]
    %v1581 = vld [vmem:[%s1557 + $0xb8] sm:$0xff]
    %v1583 = vsel %vm117, %v1555, 0
    %1585 = vmatprep.subr.mxu0 0.0
    %1586 = vmatpush1.msra.mxu0 %v1558
    %1587 = vmatprep.subr.mxu0 0.0
    %1588 = vmatpush1.msra.mxu0 %v1559
    %1589 = vmatprep.subr.mxu0 0.0
    %1590 = vmatpush1.msra.mxu0 %v1560
    %1591 = vmatprep.subr.mxu0 0.0
    %1592 = vmatpush1.msra.mxu0 %v1561
    %1593 = vmatprep.subr.mxu0 0.0
    %1594 = vmatpush1.msra.mxu0 %v1562
    %1595 = vmatprep.subr.mxu0 0.0
    %1596 = vmatpush1.msra.mxu0 %v1563
    %1597 = vmatprep.subr.mxu0 0.0
    %1598 = vmatpush1.msra.mxu0 %v1564
    %1599 = vmatprep.subr.mxu0 0.0
    %1600 = vmatpush1.msra.mxu0 %v1565
    %1601 = vmatprep.subr.mxu0 0.0
    %1602 = vmatpush1.msra.mxu0 %v1566
    %1603 = vmatprep.subr.mxu0 0.0
    %1604 = vmatpush1.msra.mxu0 %v1567
    %1605 = vmatprep.subr.mxu0 0.0
    %1606 = vmatpush1.msra.mxu0 %v1568
    %1607 = vmatprep.subr.mxu0 0.0
    %1608 = vmatpush1.msra.mxu0 %v1569
    %1609 = vmatprep.subr.mxu0 0.0
    %1610 = vmatpush1.msra.mxu0 %v1570
    %1611 = vmatprep.subr.mxu0 0.0
    %1612 = vmatpush1.msra.mxu0 %v1571
    %1613 = vmatprep.subr.mxu0 0.0
    %1614 = vmatpush1.msra.mxu0 %v1572
    %1615 = vmatprep.subr.mxu0 0.0
    %1616 = vmatpush1.msra.mxu0 %v1573
    %1617 = vmatprep.subr.mxu0 0.0
    %1618 = vmatpush1.msra.mxu0 %v1574
    %1619 = vmatprep.subr.mxu0 0.0
    %1620 = vmatpush1.msra.mxu0 %v1575
    %1621 = vmatprep.subr.mxu0 0.0
    %1622 = vmatpush1.msra.mxu0 %v1576
    %1623 = vmatprep.subr.mxu0 0.0
    %1624 = vmatpush1.msra.mxu0 %v1577
    %1625 = vmatprep.subr.mxu0 0.0
    %1626 = vmatpush1.msra.mxu0 %v1578
    %1627 = vmatprep.subr.mxu0 0.0
    %1628 = vmatpush1.msra.mxu0 %v1579
    %1629 = vmatprep.subr.mxu0 0.0
    %1630 = vmatpush1.msra.mxu0 %v1580
    %1631 = vmatprep.subr.mxu0 0.0
    %1632 = vmatpush1.msra.mxu0 %v1581
    %1633 = vmatprep.subr.mxu0 0.0
    %1634 = vmatpush1.msra.mxu0 0.0
    %1635 = vmatprep.subr.mxu0 0.0
    %1636 = vmatpush1.msra.mxu0 0.0
    %1637 = vmatprep.subr.mxu0 0.0
    %1638 = vmatpush1.msra.mxu0 0.0
    %1639 = vmatprep.subr.mxu0 0.0
    %1640 = vmatpush1.msra.mxu0 0.0
    %1641 = vmatprep.subr.mxu0 0.0
    %1642 = vmatpush1.msra.mxu0 0.0
    %1643 = vmatprep.subr.mxu0 0.0
    %1644 = vmatpush1.msra.mxu0 0.0
    %1645 = vmatprep.subr.mxu0 0.0
    %1646 = vmatpush1.msra.mxu0 0.0
    %1647 = vmatprep.subr.mxu0 0.0
    %1648 = vmatpush1.msra.mxu0 0.0
    %1649 = vmatprep.mubr.f32.mxu0 %v1583
    %1650 = vmatmul.mubr.f32.gmra.mrb[0].mxu0 %v1553
    %v1651 = vpop.f32.mrb[0].mxu0
    %v1652 = vadd.f32 0.0, %v1651
    %v1653 = vpop.f32.mrb[0].mxu0
    %1654 = vdwg.mxu0
    %v1656 = vsel %vm117, %v1453, 0
    %1658 = vmatprep.subr.mxu0 0.0
    %1659 = vmatpush1.msra.mxu0 %v1455
    %1660 = vmatprep.subr.mxu0 0.0
    %1661 = vmatpush1.msra.mxu0 %v1456
    %1662 = vmatprep.subr.mxu0 0.0
    %1663 = vmatpush1.msra.mxu0 %v1457
    %1664 = vmatprep.subr.mxu0 0.0
    %1665 = vmatpush1.msra.mxu0 %v1458
    %1666 = vmatprep.subr.mxu0 0.0
    %1667 = vmatpush1.msra.mxu0 %v1459
    %1668 = vmatprep.subr.mxu0 0.0
    %1669 = vmatpush1.msra.mxu0 %v1460
    %1670 = vmatprep.subr.mxu0 0.0
    %1671 = vmatpush1.msra.mxu0 %v1461
    %1672 = vmatprep.subr.mxu0 0.0
    %1673 = vmatpush1.msra.mxu0 %v1462
    %1674 = vmatprep.subr.mxu0 0.0
    %1675 = vmatpush1.msra.mxu0 %v1463
    %1676 = vmatprep.subr.mxu0 0.0
    %1677 = vmatpush1.msra.mxu0 %v1464
    %1678 = vmatprep.subr.mxu0 0.0
    %1679 = vmatpush1.msra.mxu0 %v1465
    %1680 = vmatprep.subr.mxu0 0.0
    %1681 = vmatpush1.msra.mxu0 %v1466
    %1682 = vmatprep.subr.mxu0 0.0
    %1683 = vmatpush1.msra.mxu0 %v1467
    %1684 = vmatprep.subr.mxu0 0.0
    %1685 = vmatpush1.msra.mxu0 %v1468
    %1686 = vmatprep.subr.mxu0 0.0
    %1687 = vmatpush1.msra.mxu0 %v1469
    %1688 = vmatprep.subr.mxu0 0.0
    %1689 = vmatpush1.msra.mxu0 %v1470
    %1690 = vmatprep.subr.mxu0 0.0
    %1691 = vmatpush1.msra.mxu0 %v1471
    %1692 = vmatprep.subr.mxu0 0.0
    %1693 = vmatpush1.msra.mxu0 %v1472
    %1694 = vmatprep.subr.mxu0 0.0
    %1695 = vmatpush1.msra.mxu0 %v1473
    %1696 = vmatprep.subr.mxu0 0.0
    %1697 = vmatpush1.msra.mxu0 %v1474
    %1698 = vmatprep.subr.mxu0 0.0
    %1699 = vmatpush1.msra.mxu0 %v1475
    %1700 = vmatprep.subr.mxu0 0.0
    %1701 = vmatpush1.msra.mxu0 %v1476
    %1702 = vmatprep.subr.mxu0 0.0
    %1703 = vmatpush1.msra.mxu0 %v1477
    %1704 = vmatprep.subr.mxu0 0.0
    %1705 = vmatpush1.msra.mxu0 %v1478
    %1706 = vmatprep.subr.mxu0 0.0
    %1707 = vmatpush1.msra.mxu0 0.0
    %1708 = vmatprep.subr.mxu0 0.0
    %1709 = vmatpush1.msra.mxu0 0.0
    %1710 = vmatprep.subr.mxu0 0.0
    %1711 = vmatpush1.msra.mxu0 0.0
    %1712 = vmatprep.subr.mxu0 0.0
    %1713 = vmatpush1.msra.mxu0 0.0
    %1714 = vmatprep.subr.mxu0 0.0
    %1715 = vmatpush1.msra.mxu0 0.0
    %1716 = vmatprep.subr.mxu0 0.0
    %1717 = vmatpush1.msra.mxu0 0.0
    %1718 = vmatprep.subr.mxu0 0.0
    %1719 = vmatpush1.msra.mxu0 0.0
    %1720 = vmatprep.subr.mxu0 0.0
    %1721 = vmatpush1.msra.mxu0 0.0
    %1722 = vmatprep.mubr.f32.mxu0 %v1656
    %1723 = vmatmul.mubr.f32.gmra.mrb[0].mxu0 %v1451
    %v1724 = vpop.f32.mrb[0].mxu0
    %v1725 = vadd.f32 %v1652, %v1724
    %v1726 = vpop.f32.mrb[0].mxu0
    %1727 = vdwg.mxu0
    %v1728 = vadd.s32 %v1370, 2
    %vm1729 = vcmp.eq.s32.totalorder %v202, %v1728
    %v1730 = vsel %vm1729, 1, 0
    %v1731 = vcvt.s32.f32 %v1730
    %v1733 = vsel %vm1374, %v1731, 0
    %1735 = vmatprep.subr.mxu0 %v1382
    %1736 = vmatpush1.msra.mxu0 %v1379
    %1737 = vmatprep.subr.mxu0 0.0
    %1738 = vmatpush1.msra.mxu0 0.0
    %1739 = vmatprep.subr.mxu0 0.0
    %1740 = vmatpush1.msra.mxu0 0.0
    %1741 = vmatprep.subr.mxu0 0.0
    %1742 = vmatpush1.msra.mxu0 0.0
    %1743 = vmatprep.subr.mxu0 0.0
    %1744 = vmatpush1.msra.mxu0 0.0
    %1745 = vmatprep.subr.mxu0 0.0
    %1746 = vmatpush1.msra.mxu0 0.0
    %1747 = vmatprep.subr.mxu0 0.0
    %1748 = vmatpush1.msra.mxu0 0.0
    %1749 = vmatprep.subr.mxu0 0.0
    %1750 = vmatpush1.msra.mxu0 0.0
    %1751 = vmatprep.subr.mxu0 0.0
    %1752 = vmatpush1.msra.mxu0 0.0
    %1753 = vmatprep.subr.mxu0 0.0
    %1754 = vmatpush1.msra.mxu0 0.0
    %1755 = vmatprep.subr.mxu0 0.0
    %1756 = vmatpush1.msra.mxu0 0.0
    %1757 = vmatprep.subr.mxu0 0.0
    %1758 = vmatpush1.msra.mxu0 0.0
    %1759 = vmatprep.subr.mxu0 0.0
    %1760 = vmatpush1.msra.mxu0 0.0
    %1761 = vmatprep.subr.mxu0 0.0
    %1762 = vmatpush1.msra.mxu0 0.0
    %1763 = vmatprep.subr.mxu0 0.0
    %1764 = vmatpush1.msra.mxu0 0.0
    %1765 = vmatprep.subr.mxu0 0.0
    %1766 = vmatpush1.msra.mxu0 0.0
    %1767 = vmatprep.subr.mxu0 0.0
    %1768 = vmatpush1.msra.mxu0 0.0
    %1769 = vmatprep.subr.mxu0 0.0
    %1770 = vmatpush1.msra.mxu0 0.0
    %1771 = vmatprep.subr.mxu0 0.0
    %1772 = vmatpush1.msra.mxu0 0.0
    %1773 = vmatprep.subr.mxu0 0.0
    %1774 = vmatpush1.msra.mxu0 0.0
    %1775 = vmatprep.subr.mxu0 0.0
    %1776 = vmatpush1.msra.mxu0 0.0
    %1777 = vmatprep.subr.mxu0 0.0
    %1778 = vmatpush1.msra.mxu0 0.0
    %1779 = vmatprep.subr.mxu0 0.0
    %1780 = vmatpush1.msra.mxu0 0.0
    %1781 = vmatprep.subr.mxu0 0.0
    %1782 = vmatpush1.msra.mxu0 0.0
    %1783 = vmatprep.subr.mxu0 0.0
    %1784 = vmatpush1.msra.mxu0 0.0
    %1785 = vmatprep.subr.mxu0 0.0
    %1786 = vmatpush1.msra.mxu0 0.0
    %1787 = vmatprep.subr.mxu0 0.0
    %1788 = vmatpush1.msra.mxu0 0.0
    %1789 = vmatprep.subr.mxu0 0.0
    %1790 = vmatpush1.msra.mxu0 0.0
    %1791 = vmatprep.subr.mxu0 0.0
    %1792 = vmatpush1.msra.mxu0 0.0
    %1793 = vmatprep.subr.mxu0 0.0
    %1794 = vmatpush1.msra.mxu0 0.0
    %1795 = vmatprep.subr.mxu0 0.0
    %1796 = vmatpush1.msra.mxu0 0.0
    %1797 = vmatprep.subr.mxu0 0.0
    %1798 = vmatpush1.msra.mxu0 0.0
    %1799 = vmatprep.mubr.f32.mxu0 0.0
    %1800 = vmatmul.mubr.f32.gmra.mrb[0].mxu0 %v1733
    %v1801 = vpop.f32.mrb[0].mxu0
    %v1802 = vadd.f32 0.0, %v1801
    %v1803 = vpop.f32.mrb[0].mxu0
    %v1804 = vadd.f32 0.0, %v1803
    %1805 = vdwg.mxu0
    %s1806 = scalar_lea.vmem %s5, 384
    %v1807 = vld [vmem:[%s1806] sm:$0xff]
    %v1808 = vld [vmem:[%s1806 + $0x8] sm:$0xff]
    %v1809 = vld [vmem:[%s1806 + $0x10] sm:$0xff]
    %v1810 = vld [vmem:[%s1806 + $0x18] sm:$0xff]
    %v1811 = vld [vmem:[%s1806 + $0x20] sm:$0xff]
    %v1812 = vld [vmem:[%s1806 + $0x28] sm:$0xff]
    %v1813 = vld [vmem:[%s1806 + $0x30] sm:$0xff]
    %v1814 = vld [vmem:[%s1806 + $0x38] sm:$0xff]
    %v1815 = vld [vmem:[%s1806 + $0x40] sm:$0xff]
    %v1816 = vld [vmem:[%s1806 + $0x48] sm:$0xff]
    %v1817 = vld [vmem:[%s1806 + $0x50] sm:$0xff]
    %v1818 = vld [vmem:[%s1806 + $0x58] sm:$0xff]
    %v1819 = vld [vmem:[%s1806 + $0x60] sm:$0xff]
    %v1820 = vld [vmem:[%s1806 + $0x68] sm:$0xff]
    %v1821 = vld [vmem:[%s1806 + $0x70] sm:$0xff]
    %v1822 = vld [vmem:[%s1806 + $0x78] sm:$0xff]
    %v1823 = vld [vmem:[%s1806 + $0x80] sm:$0xff]
    %v1824 = vld [vmem:[%s1806 + $0x88] sm:$0xff]
    %v1825 = vld [vmem:[%s1806 + $0x90] sm:$0xff]
    %v1826 = vld [vmem:[%s1806 + $0x98] sm:$0xff]
    %v1827 = vld [vmem:[%s1806 + $0xa0] sm:$0xff]
    %v1828 = vld [vmem:[%s1806 + $0xa8] sm:$0xff]
    %v1829 = vld [vmem:[%s1806 + $0xb0] sm:$0xff]
    %v1830 = vld [vmem:[%s1806 + $0xb8] sm:$0xff]
    %v1832 = vsel %vm117, %v1804, 0
    %1834 = vmatprep.subr.mxu0 0.0
    %1835 = vmatpush1.msra.mxu0 %v1807
    %1836 = vmatprep.subr.mxu0 0.0
    %1837 = vmatpush1.msra.mxu0 %v1808
    %1838 = vmatprep.subr.mxu0 0.0
    %1839 = vmatpush1.msra.mxu0 %v1809
    %1840 = vmatprep.subr.mxu0 0.0
    %1841 = vmatpush1.msra.mxu0 %v1810
    %1842 = vmatprep.subr.mxu0 0.0
    %1843 = vmatpush1.msra.mxu0 %v1811
    %1844 = vmatprep.subr.mxu0 0.0
    %1845 = vmatpush1.msra.mxu0 %v1812
    %1846 = vmatprep.subr.mxu0 0.0
    %1847 = vmatpush1.msra.mxu0 %v1813
    %1848 = vmatprep.subr.mxu0 0.0
    %1849 = vmatpush1.msra.mxu0 %v1814
    %1850 = vmatprep.subr.mxu0 0.0
    %1851 = vmatpush1.msra.mxu0 %v1815
    %1852 = vmatprep.subr.mxu0 0.0
    %1853 = vmatpush1.msra.mxu0 %v1816
    %1854 = vmatprep.subr.mxu0 0.0
    %1855 = vmatpush1.msra.mxu0 %v1817
    %1856 = vmatprep.subr.mxu0 0.0
    %1857 = vmatpush1.msra.mxu0 %v1818
    %1858 = vmatprep.subr.mxu0 0.0
    %1859 = vmatpush1.msra.mxu0 %v1819
    %1860 = vmatprep.subr.mxu0 0.0
    %1861 = vmatpush1.msra.mxu0 %v1820
    %1862 = vmatprep.subr.mxu0 0.0
    %1863 = vmatpush1.msra.mxu0 %v1821
    %1864 = vmatprep.subr.mxu0 0.0
    %1865 = vmatpush1.msra.mxu0 %v1822
    %1866 = vmatprep.subr.mxu0 0.0
    %1867 = vmatpush1.msra.mxu0 %v1823
    %1868 = vmatprep.subr.mxu0 0.0
    %1869 = vmatpush1.msra.mxu0 %v1824
    %1870 = vmatprep.subr.mxu0 0.0
    %1871 = vmatpush1.msra.mxu0 %v1825
    %1872 = vmatprep.subr.mxu0 0.0
    %1873 = vmatpush1.msra.mxu0 %v1826
    %1874 = vmatprep.subr.mxu0 0.0
    %1875 = vmatpush1.msra.mxu0 %v1827
    %1876 = vmatprep.subr.mxu0 0.0
    %1877 = vmatpush1.msra.mxu0 %v1828
    %1878 = vmatprep.subr.mxu0 0.0
    %1879 = vmatpush1.msra.mxu0 %v1829
    %1880 = vmatprep.subr.mxu0 0.0
    %1881 = vmatpush1.msra.mxu0 %v1830
    %1882 = vmatprep.subr.mxu0 0.0
    %1883 = vmatpush1.msra.mxu0 0.0
    %1884 = vmatprep.subr.mxu0 0.0
    %1885 = vmatpush1.msra.mxu0 0.0
    %1886 = vmatprep.subr.mxu0 0.0
    %1887 = vmatpush1.msra.mxu0 0.0
    %1888 = vmatprep.subr.mxu0 0.0
    %1889 = vmatpush1.msra.mxu0 0.0
    %1890 = vmatprep.subr.mxu0 0.0
    %1891 = vmatpush1.msra.mxu0 0.0
    %1892 = vmatprep.subr.mxu0 0.0
    %1893 = vmatpush1.msra.mxu0 0.0
    %1894 = vmatprep.subr.mxu0 0.0
    %1895 = vmatpush1.msra.mxu0 0.0
    %1896 = vmatprep.subr.mxu0 0.0
    %1897 = vmatpush1.msra.mxu0 0.0
    %1898 = vmatprep.mubr.f32.mxu0 %v1832
    %1899 = vmatmul.mubr.f32.gmra.mrb[0].mxu0 %v1802
    %v1900 = vpop.f32.mrb[0].mxu0
    %v1901 = vadd.f32 0.0, %v1900
    %v1902 = vpop.f32.mrb[0].mxu0
    %1903 = vdwg.mxu0
    %v1904 = vadd.f32 %v1725, %v1901
    %v1905 = vld [vmem:[#allocation12] sm:$0x1]
    %v1907 = vlaneseq
    %v1908 = vshrl.u32 %v1907, 7
    %v1909 = vsub.s32 0, %v1908
    %v1910 = vrot.slane %v1905, %v1909
    %v1912 = vadd.f32 %v1904, %v1910
    %v1913 = vmax.f32 %v1912, 0.0
    %1914 = vst [vmem:[#allocation5 + $0x1] sm:$0x1] %v1913
    %1915 = vst [vmem:[#allocation5 + $0x2] sm:$0x2] %v1913
    %v1916 = vld [vmem:[#allocation5] sm:$0x7]
    %v1917 = vld [vmem:[%s7] sm:$0xff]
    %v1918 = vld [vmem:[%s7 + $0x8] sm:$0xff]
    %v1919 = vld [vmem:[%s7 + $0x10] sm:$0xff]
    %v1920 = vld [vmem:[%s7 + $0x18] sm:$0xff]
    %v1921 = vld [vmem:[%s7 + $0x20] sm:$0xff]
    %v1922 = vld [vmem:[%s7 + $0x28] sm:$0xff]
    %v1923 = vld [vmem:[%s7 + $0x30] sm:$0xff]
    %v1924 = vld [vmem:[%s7 + $0x38] sm:$0xff]
    %v1925 = vld [vmem:[%s7 + $0x40] sm:$0xff]
    %v1926 = vld [vmem:[%s7 + $0x48] sm:$0xff]
    %v1927 = vld [vmem:[%s7 + $0x50] sm:$0xff]
    %v1928 = vld [vmem:[%s7 + $0x58] sm:$0xff]
    %v1929 = vld [vmem:[%s7 + $0x60] sm:$0xff]
    %v1930 = vld [vmem:[%s7 + $0x68] sm:$0xff]
    %v1931 = vld [vmem:[%s7 + $0x70] sm:$0xff]
    %v1932 = vld [vmem:[%s7 + $0x78] sm:$0xff]
    %v1933 = vld [vmem:[#allocation5 + $0x1] sm:$0x7]
    %s1934 = scalar_lea.vmem %s7, 128
    %v1935 = vld [vmem:[%s1934] sm:$0xff]
    %v1936 = vld [vmem:[%s1934 + $0x8] sm:$0xff]
    %v1937 = vld [vmem:[%s1934 + $0x10] sm:$0xff]
    %v1938 = vld [vmem:[%s1934 + $0x18] sm:$0xff]
    %v1939 = vld [vmem:[%s1934 + $0x20] sm:$0xff]
    %v1940 = vld [vmem:[%s1934 + $0x28] sm:$0xff]
    %v1941 = vld [vmem:[%s1934 + $0x30] sm:$0xff]
    %v1942 = vld [vmem:[%s1934 + $0x38] sm:$0xff]
    %v1943 = vld [vmem:[%s1934 + $0x40] sm:$0xff]
    %v1944 = vld [vmem:[%s1934 + $0x48] sm:$0xff]
    %v1945 = vld [vmem:[%s1934 + $0x50] sm:$0xff]
    %v1946 = vld [vmem:[%s1934 + $0x58] sm:$0xff]
    %v1947 = vld [vmem:[%s1934 + $0x60] sm:$0xff]
    %v1948 = vld [vmem:[%s1934 + $0x68] sm:$0xff]
    %v1949 = vld [vmem:[%s1934 + $0x70] sm:$0xff]
    %v1950 = vld [vmem:[%s1934 + $0x78] sm:$0xff]
    %1951 = vmatprep.subr.mxu0 0.0
    %1952 = vmatpush1.msra.mxu0 %v1935
    %1953 = vmatprep.subr.mxu0 0.0
    %1954 = vmatpush1.msra.mxu0 %v1936
    %1955 = vmatprep.subr.mxu0 0.0
    %1956 = vmatpush1.msra.mxu0 %v1937
    %1957 = vmatprep.subr.mxu0 0.0
    %1958 = vmatpush1.msra.mxu0 %v1938
    %1959 = vmatprep.subr.mxu0 0.0
    %1960 = vmatpush1.msra.mxu0 %v1939
    %1961 = vmatprep.subr.mxu0 0.0
    %1962 = vmatpush1.msra.mxu0 %v1940
    %1963 = vmatprep.subr.mxu0 0.0
    %1964 = vmatpush1.msra.mxu0 %v1941
    %1965 = vmatprep.subr.mxu0 0.0
    %1966 = vmatpush1.msra.mxu0 %v1942
    %1967 = vmatprep.subr.mxu0 0.0
    %1968 = vmatpush1.msra.mxu0 %v1943
    %1969 = vmatprep.subr.mxu0 0.0
    %1970 = vmatpush1.msra.mxu0 %v1944
    %1971 = vmatprep.subr.mxu0 0.0
    %1972 = vmatpush1.msra.mxu0 %v1945
    %1973 = vmatprep.subr.mxu0 0.0
    %1974 = vmatpush1.msra.mxu0 %v1946
    %1975 = vmatprep.subr.mxu0 0.0
    %1976 = vmatpush1.msra.mxu0 %v1947
    %1977 = vmatprep.subr.mxu0 0.0
    %1978 = vmatpush1.msra.mxu0 %v1948
    %1979 = vmatprep.subr.mxu0 0.0
    %1980 = vmatpush1.msra.mxu0 %v1949
    %1981 = vmatprep.subr.mxu0 0.0
    %1982 = vmatpush1.msra.mxu0 %v1950
    %1983 = vmatprep.subr.mxu0 0.0
    %1984 = vmatpush1.msra.mxu0 0.0
    %1985 = vmatprep.subr.mxu0 0.0
    %1986 = vmatpush1.msra.mxu0 0.0
    %1987 = vmatprep.subr.mxu0 0.0
    %1988 = vmatpush1.msra.mxu0 0.0
    %1989 = vmatprep.subr.mxu0 0.0
    %1990 = vmatpush1.msra.mxu0 0.0
    %1991 = vmatprep.subr.mxu0 0.0
    %1992 = vmatpush1.msra.mxu0 0.0
    %1993 = vmatprep.subr.mxu0 0.0
    %1994 = vmatpush1.msra.mxu0 0.0
    %1995 = vmatprep.subr.mxu0 0.0
    %1996 = vmatpush1.msra.mxu0 0.0
    %1997 = vmatprep.subr.mxu0 0.0
    %1998 = vmatpush1.msra.mxu0 0.0
    %1999 = vmatprep.subr.mxu0 0.0
    %2000 = vmatpush1.msra.mxu0 0.0
    %2001 = vmatprep.subr.mxu0 0.0
    %2002 = vmatpush1.msra.mxu0 0.0
    %2003 = vmatprep.subr.mxu0 0.0
    %2004 = vmatpush1.msra.mxu0 0.0
    %2005 = vmatprep.subr.mxu0 0.0
    %2006 = vmatpush1.msra.mxu0 0.0
    %2007 = vmatprep.subr.mxu0 0.0
    %2008 = vmatpush1.msra.mxu0 0.0
    %2009 = vmatprep.subr.mxu0 0.0
    %2010 = vmatpush1.msra.mxu0 0.0
    %2011 = vmatprep.subr.mxu0 0.0
    %2012 = vmatpush1.msra.mxu0 0.0
    %2013 = vmatprep.subr.mxu0 0.0
    %2014 = vmatpush1.msra.mxu0 0.0
    %2015 = vmatprep.mubr.f32.mxu0 0.0
    %2016 = vmatmul.mubr.f32.gmra.mrb[0].mxu0 %v1933
    %v2017 = vpop.f32.mrb[0].mxu0
    %v2018 = vadd.f32 0.0, %v2017
    %v2019 = vpop.f32.mrb[0].mxu0
    %2020 = vdwg.mxu0
    %2021 = vmatprep.subr.mxu0 0.0
    %2022 = vmatpush1.msra.mxu0 %v1917
    %2023 = vmatprep.subr.mxu0 0.0
    %2024 = vmatpush1.msra.mxu0 %v1918
    %2025 = vmatprep.subr.mxu0 0.0
    %2026 = vmatpush1.msra.mxu0 %v1919
    %2027 = vmatprep.subr.mxu0 0.0
    %2028 = vmatpush1.msra.mxu0 %v1920
    %2029 = vmatprep.subr.mxu0 0.0
    %2030 = vmatpush1.msra.mxu0 %v1921
    %2031 = vmatprep.subr.mxu0 0.0
    %2032 = vmatpush1.msra.mxu0 %v1922
    %2033 = vmatprep.subr.mxu0 0.0
    %2034 = vmatpush1.msra.mxu0 %v1923
    %2035 = vmatprep.subr.mxu0 0.0
    %2036 = vmatpush1.msra.mxu0 %v1924
    %2037 = vmatprep.subr.mxu0 0.0
    %2038 = vmatpush1.msra.mxu0 %v1925
    %2039 = vmatprep.subr.mxu0 0.0
    %2040 = vmatpush1.msra.mxu0 %v1926
    %2041 = vmatprep.subr.mxu0 0.0
    %2042 = vmatpush1.msra.mxu0 %v1927
    %2043 = vmatprep.subr.mxu0 0.0
    %2044 = vmatpush1.msra.mxu0 %v1928
    %2045 = vmatprep.subr.mxu0 0.0
    %2046 = vmatpush1.msra.mxu0 %v1929
    %2047 = vmatprep.subr.mxu0 0.0
    %2048 = vmatpush1.msra.mxu0 %v1930
    %2049 = vmatprep.subr.mxu0 0.0
    %2050 = vmatpush1.msra.mxu0 %v1931
    %2051 = vmatprep.subr.mxu0 0.0
    %2052 = vmatpush1.msra.mxu0 %v1932
    %2053 = vmatprep.subr.mxu0 0.0
    %2054 = vmatpush1.msra.mxu0 0.0
    %2055 = vmatprep.subr.mxu0 0.0
    %2056 = vmatpush1.msra.mxu0 0.0
    %2057 = vmatprep.subr.mxu0 0.0
    %2058 = vmatpush1.msra.mxu0 0.0
    %2059 = vmatprep.subr.mxu0 0.0
    %2060 = vmatpush1.msra.mxu0 0.0
    %2061 = vmatprep.subr.mxu0 0.0
    %2062 = vmatpush1.msra.mxu0 0.0
    %2063 = vmatprep.subr.mxu0 0.0
    %2064 = vmatpush1.msra.mxu0 0.0
    %2065 = vmatprep.subr.mxu0 0.0
    %2066 = vmatpush1.msra.mxu0 0.0
    %2067 = vmatprep.subr.mxu0 0.0
    %2068 = vmatpush1.msra.mxu0 0.0
    %2069 = vmatprep.subr.mxu0 0.0
    %2070 = vmatpush1.msra.mxu0 0.0
    %2071 = vmatprep.subr.mxu0 0.0
    %2072 = vmatpush1.msra.mxu0 0.0
    %2073 = vmatprep.subr.mxu0 0.0
    %2074 = vmatpush1.msra.mxu0 0.0
    %2075 = vmatprep.subr.mxu0 0.0
    %2076 = vmatpush1.msra.mxu0 0.0
    %2077 = vmatprep.subr.mxu0 0.0
    %2078 = vmatpush1.msra.mxu0 0.0
    %2079 = vmatprep.subr.mxu0 0.0
    %2080 = vmatpush1.msra.mxu0 0.0
    %2081 = vmatprep.subr.mxu0 0.0
    %2082 = vmatpush1.msra.mxu0 0.0
    %2083 = vmatprep.subr.mxu0 0.0
    %2084 = vmatpush1.msra.mxu0 0.0
    %2085 = vmatprep.mubr.f32.mxu0 0.0
    %2086 = vmatmul.mubr.f32.gmra.mrb[0].mxu0 %v1916
    %v2087 = vpop.f32.mrb[0].mxu0
    %v2088 = vadd.f32 %v2018, %v2087
    %v2089 = vpop.f32.mrb[0].mxu0
    %2090 = vdwg.mxu0
    %v2091 = vld [vmem:[#allocation5 + $0x2] sm:$0x7]
    %s2092 = scalar_lea.vmem %s7, 256
    %v2093 = vld [vmem:[%s2092] sm:$0xff]
    %v2094 = vld [vmem:[%s2092 + $0x8] sm:$0xff]
    %v2095 = vld [vmem:[%s2092 + $0x10] sm:$0xff]
    %v2096 = vld [vmem:[%s2092 + $0x18] sm:$0xff]
    %v2097 = vld [vmem:[%s2092 + $0x20] sm:$0xff]
    %v2098 = vld [vmem:[%s2092 + $0x28] sm:$0xff]
    %v2099 = vld [vmem:[%s2092 + $0x30] sm:$0xff]
    %v2100 = vld [vmem:[%s2092 + $0x38] sm:$0xff]
    %v2101 = vld [vmem:[%s2092 + $0x40] sm:$0xff]
    %v2102 = vld [vmem:[%s2092 + $0x48] sm:$0xff]
    %v2103 = vld [vmem:[%s2092 + $0x50] sm:$0xff]
    %v2104 = vld [vmem:[%s2092 + $0x58] sm:$0xff]
    %v2105 = vld [vmem:[%s2092 + $0x60] sm:$0xff]
    %v2106 = vld [vmem:[%s2092 + $0x68] sm:$0xff]
    %v2107 = vld [vmem:[%s2092 + $0x70] sm:$0xff]
    %v2108 = vld [vmem:[%s2092 + $0x78] sm:$0xff]
    %2109 = vmatprep.subr.mxu0 0.0
    %2110 = vmatpush1.msra.mxu0 %v2093
    %2111 = vmatprep.subr.mxu0 0.0
    %2112 = vmatpush1.msra.mxu0 %v2094
    %2113 = vmatprep.subr.mxu0 0.0
    %2114 = vmatpush1.msra.mxu0 %v2095
    %2115 = vmatprep.subr.mxu0 0.0
    %2116 = vmatpush1.msra.mxu0 %v2096
    %2117 = vmatprep.subr.mxu0 0.0
    %2118 = vmatpush1.msra.mxu0 %v2097
    %2119 = vmatprep.subr.mxu0 0.0
    %2120 = vmatpush1.msra.mxu0 %v2098
    %2121 = vmatprep.subr.mxu0 0.0
    %2122 = vmatpush1.msra.mxu0 %v2099
    %2123 = vmatprep.subr.mxu0 0.0
    %2124 = vmatpush1.msra.mxu0 %v2100
    %2125 = vmatprep.subr.mxu0 0.0
    %2126 = vmatpush1.msra.mxu0 %v2101
    %2127 = vmatprep.subr.mxu0 0.0
    %2128 = vmatpush1.msra.mxu0 %v2102
    %2129 = vmatprep.subr.mxu0 0.0
    %2130 = vmatpush1.msra.mxu0 %v2103
    %2131 = vmatprep.subr.mxu0 0.0
    %2132 = vmatpush1.msra.mxu0 %v2104
    %2133 = vmatprep.subr.mxu0 0.0
    %2134 = vmatpush1.msra.mxu0 %v2105
    %2135 = vmatprep.subr.mxu0 0.0
    %2136 = vmatpush1.msra.mxu0 %v2106
    %2137 = vmatprep.subr.mxu0 0.0
    %2138 = vmatpush1.msra.mxu0 %v2107
    %2139 = vmatprep.subr.mxu0 0.0
    %2140 = vmatpush1.msra.mxu0 %v2108
    %2141 = vmatprep.subr.mxu0 0.0
    %2142 = vmatpush1.msra.mxu0 0.0
    %2143 = vmatprep.subr.mxu0 0.0
    %2144 = vmatpush1.msra.mxu0 0.0
    %2145 = vmatprep.subr.mxu0 0.0
    %2146 = vmatpush1.msra.mxu0 0.0
    %2147 = vmatprep.subr.mxu0 0.0
    %2148 = vmatpush1.msra.mxu0 0.0
    %2149 = vmatprep.subr.mxu0 0.0
    %2150 = vmatpush1.msra.mxu0 0.0
    %2151 = vmatprep.subr.mxu0 0.0
    %2152 = vmatpush1.msra.mxu0 0.0
    %2153 = vmatprep.subr.mxu0 0.0
    %2154 = vmatpush1.msra.mxu0 0.0
    %2155 = vmatprep.subr.mxu0 0.0
    %2156 = vmatpush1.msra.mxu0 0.0
    %2157 = vmatprep.subr.mxu0 0.0
    %2158 = vmatpush1.msra.mxu0 0.0
    %2159 = vmatprep.subr.mxu0 0.0
    %2160 = vmatpush1.msra.mxu0 0.0
    %2161 = vmatprep.subr.mxu0 0.0
    %2162 = vmatpush1.msra.mxu0 0.0
    %2163 = vmatprep.subr.mxu0 0.0
    %2164 = vmatpush1.msra.mxu0 0.0
    %2165 = vmatprep.subr.mxu0 0.0
    %2166 = vmatpush1.msra.mxu0 0.0
    %2167 = vmatprep.subr.mxu0 0.0
    %2168 = vmatpush1.msra.mxu0 0.0
    %2169 = vmatprep.subr.mxu0 0.0
    %2170 = vmatpush1.msra.mxu0 0.0
    %2171 = vmatprep.subr.mxu0 0.0
    %2172 = vmatpush1.msra.mxu0 0.0
    %2173 = vmatprep.mubr.f32.mxu0 0.0
    %2174 = vmatmul.mubr.f32.gmra.mrb[0].mxu0 %v2091
    %v2175 = vpop.f32.mrb[0].mxu0
    %v2176 = vadd.f32 0.0, %v2175
    %v2177 = vpop.f32.mrb[0].mxu0
    %2178 = vdwg.mxu0
    %v2179 = vadd.f32 %v2088, %v2176
    %v2180 = vld [vmem:[#allocation13] sm:$0x1]
    %v2182 = vlaneseq
    %v2183 = vshrl.u32 %v2182, 7
    %v2184 = vsub.s32 0, %v2183
    %v2185 = vrot.slane %v2180, %v2184
    %v2187 = vadd.f32 %v2179, %v2185
    %v2188 = vmax.f32 %v2187, 0.0
    %vm2189 = vcmask 778240
    %2190 = vst.msk [vmem:[#allocation6 + $0x1] sm:$0x1] %vm2189, %v2188
    %vm2191 = vcmask 779265
    %2192 = vst.msk [vmem:[#allocation6 + $0x3] sm:$0x2] %vm2191, %v2188
    %vm2193 = vcmask 780290
    %2194 = vst.msk [vmem:[#allocation6 + $0x5] sm:$0x4] %vm2193, %v2188
    %v2195 = vld [vmem:[#allocation6] sm:$0x7f]
    %v2196 = vld [vmem:[#allocation15] sm:$0xff]
    %v2197 = vld [vmem:[#allocation15 + $0x8] sm:$0xff]
    %v2198 = vld [vmem:[#allocation15 + $0x10] sm:$0xff]
    %v2199 = vld [vmem:[#allocation15 + $0x18] sm:$0xff]
    %v2200 = vld [vmem:[#allocation15 + $0x20] sm:$0xff]
    %v2201 = vld [vmem:[#allocation15 + $0x28] sm:$0xff]
    %v2202 = vld [vmem:[#allocation15 + $0x30] sm:$0xff]
    %v2203 = vld [vmem:[#allocation15 + $0x38] sm:$0xff]
    %v2204 = vld [vmem:[#allocation15 + $0x40] sm:$0xff]
    %v2205 = vld [vmem:[#allocation15 + $0x48] sm:$0xff]
    %v2206 = vld [vmem:[#allocation15 + $0x50] sm:$0xff]
    %v2207 = vld [vmem:[#allocation15 + $0x58] sm:$0xff]
    %v2208 = vld [vmem:[#allocation6 + $0x1] sm:$0x7f]
    %s2209 = scalar_lea.vmem [#allocation15], 96
    %v2210 = vld [vmem:[%s2209] sm:$0xff]
    %v2211 = vld [vmem:[%s2209 + $0x8] sm:$0xff]
    %v2212 = vld [vmem:[%s2209 + $0x10] sm:$0xff]
    %v2213 = vld [vmem:[%s2209 + $0x18] sm:$0xff]
    %v2214 = vld [vmem:[%s2209 + $0x20] sm:$0xff]
    %v2215 = vld [vmem:[%s2209 + $0x28] sm:$0xff]
    %v2216 = vld [vmem:[%s2209 + $0x30] sm:$0xff]
    %v2217 = vld [vmem:[%s2209 + $0x38] sm:$0xff]
    %v2218 = vld [vmem:[%s2209 + $0x40] sm:$0xff]
    %v2219 = vld [vmem:[%s2209 + $0x48] sm:$0xff]
    %v2220 = vld [vmem:[%s2209 + $0x50] sm:$0xff]
    %v2221 = vld [vmem:[%s2209 + $0x58] sm:$0xff]
    %v2223 = vsel %vm130, %v2208, 0
    %2225 = vmatprep.subr.mxu0 0.0
    %2226 = vmatpush1.msra.mxu0 %v2210
    %2227 = vmatprep.subr.mxu0 0.0
    %2228 = vmatpush1.msra.mxu0 %v2211
    %2229 = vmatprep.subr.mxu0 0.0
    %2230 = vmatpush1.msra.mxu0 %v2212
    %2231 = vmatprep.subr.mxu0 0.0
    %2232 = vmatpush1.msra.mxu0 %v2213
    %2233 = vmatprep.subr.mxu0 0.0
    %2234 = vmatpush1.msra.mxu0 %v2214
    %2235 = vmatprep.subr.mxu0 0.0
    %2236 = vmatpush1.msra.mxu0 %v2215
    %2237 = vmatprep.subr.mxu0 0.0
    %2238 = vmatpush1.msra.mxu0 %v2216
    %2239 = vmatprep.subr.mxu0 0.0
    %2240 = vmatpush1.msra.mxu0 %v2217
    %2241 = vmatprep.subr.mxu0 0.0
    %2242 = vmatpush1.msra.mxu0 %v2218
    %2243 = vmatprep.subr.mxu0 0.0
    %2244 = vmatpush1.msra.mxu0 %v2219
    %2245 = vmatprep.subr.mxu0 0.0
    %2246 = vmatpush1.msra.mxu0 %v2220
    %2247 = vmatprep.subr.mxu0 0.0
    %2248 = vmatpush1.msra.mxu0 %v2221
    %2249 = vmatprep.subr.mxu0 0.0
    %2250 = vmatpush1.msra.mxu0 0.0
    %2251 = vmatprep.subr.mxu0 0.0
    %2252 = vmatpush1.msra.mxu0 0.0
    %2253 = vmatprep.subr.mxu0 0.0
    %2254 = vmatpush1.msra.mxu0 0.0
    %2255 = vmatprep.subr.mxu0 0.0
    %2256 = vmatpush1.msra.mxu0 0.0
    %2257 = vmatprep.subr.mxu0 0.0
    %2258 = vmatpush1.msra.mxu0 0.0
    %2259 = vmatprep.subr.mxu0 0.0
    %2260 = vmatpush1.msra.mxu0 0.0
    %2261 = vmatprep.subr.mxu0 0.0
    %2262 = vmatpush1.msra.mxu0 0.0
    %2263 = vmatprep.subr.mxu0 0.0
    %2264 = vmatpush1.msra.mxu0 0.0
    %2265 = vmatprep.subr.mxu0 0.0
    %2266 = vmatpush1.msra.mxu0 0.0
    %2267 = vmatprep.subr.mxu0 0.0
    %2268 = vmatpush1.msra.mxu0 0.0
    %2269 = vmatprep.subr.mxu0 0.0
    %2270 = vmatpush1.msra.mxu0 0.0
    %2271 = vmatprep.subr.mxu0 0.0
    %2272 = vmatpush1.msra.mxu0 0.0
    %2273 = vmatprep.subr.mxu0 0.0
    %2274 = vmatpush1.msra.mxu0 0.0
    %2275 = vmatprep.subr.mxu0 0.0
    %2276 = vmatpush1.msra.mxu0 0.0
    %2277 = vmatprep.subr.mxu0 0.0
    %2278 = vmatpush1.msra.mxu0 0.0
    %2279 = vmatprep.subr.mxu0 0.0
    %2280 = vmatpush1.msra.mxu0 0.0
    %2281 = vmatprep.subr.mxu0 0.0
    %2282 = vmatpush1.msra.mxu0 0.0
    %2283 = vmatprep.subr.mxu0 0.0
    %2284 = vmatpush1.msra.mxu0 0.0
    %2285 = vmatprep.subr.mxu0 0.0
    %2286 = vmatpush1.msra.mxu0 0.0
    %2287 = vmatprep.subr.mxu0 0.0
    %2288 = vmatpush1.msra.mxu0 0.0
    %2289 = vmatprep.mubr.f32.mxu0 0.0
    %2290 = vmatmul.mubr.f32.gmra.mrb[0].mxu0 %v2223
    %v2291 = vpop.f32.mrb[0].mxu0
    %v2292 = vadd.f32 0.0, %v2291
    %v2293 = vpop.f32.mrb[0].mxu0
    %2294 = vdwg.mxu0
    %v2296 = vsel %vm130, %v2195, 0
    %2298 = vmatprep.subr.mxu0 0.0
    %2299 = vmatpush1.msra.mxu0 %v2196
    %2300 = vmatprep.subr.mxu0 0.0
    %2301 = vmatpush1.msra.mxu0 %v2197
    %2302 = vmatprep.subr.mxu0 0.0
    %2303 = vmatpush1.msra.mxu0 %v2198
    %2304 = vmatprep.subr.mxu0 0.0
    %2305 = vmatpush1.msra.mxu0 %v2199
    %2306 = vmatprep.subr.mxu0 0.0
    %2307 = vmatpush1.msra.mxu0 %v2200
    %2308 = vmatprep.subr.mxu0 0.0
    %2309 = vmatpush1.msra.mxu0 %v2201
    %2310 = vmatprep.subr.mxu0 0.0
    %2311 = vmatpush1.msra.mxu0 %v2202
    %2312 = vmatprep.subr.mxu0 0.0
    %2313 = vmatpush1.msra.mxu0 %v2203
    %2314 = vmatprep.subr.mxu0 0.0
    %2315 = vmatpush1.msra.mxu0 %v2204
    %2316 = vmatprep.subr.mxu0 0.0
    %2317 = vmatpush1.msra.mxu0 %v2205
    %2318 = vmatprep.subr.mxu0 0.0
    %2319 = vmatpush1.msra.mxu0 %v2206
    %2320 = vmatprep.subr.mxu0 0.0
    %2321 = vmatpush1.msra.mxu0 %v2207
    %2322 = vmatprep.subr.mxu0 0.0
    %2323 = vmatpush1.msra.mxu0 0.0
    %2324 = vmatprep.subr.mxu0 0.0
    %2325 = vmatpush1.msra.mxu0 0.0
    %2326 = vmatprep.subr.mxu0 0.0
    %2327 = vmatpush1.msra.mxu0 0.0
    %2328 = vmatprep.subr.mxu0 0.0
    %2329 = vmatpush1.msra.mxu0 0.0
    %2330 = vmatprep.subr.mxu0 0.0
    %2331 = vmatpush1.msra.mxu0 0.0
    %2332 = vmatprep.subr.mxu0 0.0
    %2333 = vmatpush1.msra.mxu0 0.0
    %2334 = vmatprep.subr.mxu0 0.0
    %2335 = vmatpush1.msra.mxu0 0.0
    %2336 = vmatprep.subr.mxu0 0.0
    %2337 = vmatpush1.msra.mxu0 0.0
    %2338 = vmatprep.subr.mxu0 0.0
    %2339 = vmatpush1.msra.mxu0 0.0
    %2340 = vmatprep.subr.mxu0 0.0
    %2341 = vmatpush1.msra.mxu0 0.0
    %2342 = vmatprep.subr.mxu0 0.0
    %2343 = vmatpush1.msra.mxu0 0.0
    %2344 = vmatprep.subr.mxu0 0.0
    %2345 = vmatpush1.msra.mxu0 0.0
    %2346 = vmatprep.subr.mxu0 0.0
    %2347 = vmatpush1.msra.mxu0 0.0
    %2348 = vmatprep.subr.mxu0 0.0
    %2349 = vmatpush1.msra.mxu0 0.0
    %2350 = vmatprep.subr.mxu0 0.0
    %2351 = vmatpush1.msra.mxu0 0.0
    %2352 = vmatprep.subr.mxu0 0.0
    %2353 = vmatpush1.msra.mxu0 0.0
    %2354 = vmatprep.subr.mxu0 0.0
    %2355 = vmatpush1.msra.mxu0 0.0
    %2356 = vmatprep.subr.mxu0 0.0
    %2357 = vmatpush1.msra.mxu0 0.0
    %2358 = vmatprep.subr.mxu0 0.0
    %2359 = vmatpush1.msra.mxu0 0.0
    %2360 = vmatprep.subr.mxu0 0.0
    %2361 = vmatpush1.msra.mxu0 0.0
    %2362 = vmatprep.mubr.f32.mxu0 0.0
    %2363 = vmatmul.mubr.f32.gmra.mrb[0].mxu0 %v2296
    %v2364 = vpop.f32.mrb[0].mxu0
    %v2365 = vadd.f32 %v2292, %v2364
    %v2366 = vpop.f32.mrb[0].mxu0
    %2367 = vdwg.mxu0
    %v2368 = vld [vmem:[#allocation6 + $0x2] sm:$0x7f]
    %s2369 = scalar_lea.vmem [#allocation15], 192
    %v2370 = vld [vmem:[%s2369] sm:$0xff]
    %v2371 = vld [vmem:[%s2369 + $0x8] sm:$0xff]
    %v2372 = vld [vmem:[%s2369 + $0x10] sm:$0xff]
    %v2373 = vld [vmem:[%s2369 + $0x18] sm:$0xff]
    %v2374 = vld [vmem:[%s2369 + $0x20] sm:$0xff]
    %v2375 = vld [vmem:[%s2369 + $0x28] sm:$0xff]
    %v2376 = vld [vmem:[%s2369 + $0x30] sm:$0xff]
    %v2377 = vld [vmem:[%s2369 + $0x38] sm:$0xff]
    %v2378 = vld [vmem:[%s2369 + $0x40] sm:$0xff]
    %v2379 = vld [vmem:[%s2369 + $0x48] sm:$0xff]
    %v2380 = vld [vmem:[%s2369 + $0x50] sm:$0xff]
    %v2381 = vld [vmem:[%s2369 + $0x58] sm:$0xff]
    %v2383 = vsel %vm130, %v2368, 0
    %2385 = vmatprep.subr.mxu0 0.0
    %2386 = vmatpush1.msra.mxu0 %v2370
    %2387 = vmatprep.subr.mxu0 0.0
    %2388 = vmatpush1.msra.mxu0 %v2371
    %2389 = vmatprep.subr.mxu0 0.0
    %2390 = vmatpush1.msra.mxu0 %v2372
    %2391 = vmatprep.subr.mxu0 0.0
    %2392 = vmatpush1.msra.mxu0 %v2373
    %2393 = vmatprep.subr.mxu0 0.0
    %2394 = vmatpush1.msra.mxu0 %v2374
    %2395 = vmatprep.subr.mxu0 0.0
    %2396 = vmatpush1.msra.mxu0 %v2375
    %2397 = vmatprep.subr.mxu0 0.0
    %2398 = vmatpush1.msra.mxu0 %v2376
    %2399 = vmatprep.subr.mxu0 0.0
    %2400 = vmatpush1.msra.mxu0 %v2377
    %2401 = vmatprep.subr.mxu0 0.0
    %2402 = vmatpush1.msra.mxu0 %v2378
    %2403 = vmatprep.subr.mxu0 0.0
    %2404 = vmatpush1.msra.mxu0 %v2379
    %2405 = vmatprep.subr.mxu0 0.0
    %2406 = vmatpush1.msra.mxu0 %v2380
    %2407 = vmatprep.subr.mxu0 0.0
    %2408 = vmatpush1.msra.mxu0 %v2381
    %2409 = vmatprep.subr.mxu0 0.0
    %2410 = vmatpush1.msra.mxu0 0.0
    %2411 = vmatprep.subr.mxu0 0.0
    %2412 = vmatpush1.msra.mxu0 0.0
    %2413 = vmatprep.subr.mxu0 0.0
    %2414 = vmatpush1.msra.mxu0 0.0
    %2415 = vmatprep.subr.mxu0 0.0
    %2416 = vmatpush1.msra.mxu0 0.0
    %2417 = vmatprep.subr.mxu0 0.0
    %2418 = vmatpush1.msra.mxu0 0.0
    %2419 = vmatprep.subr.mxu0 0.0
    %2420 = vmatpush1.msra.mxu0 0.0
    %2421 = vmatprep.subr.mxu0 0.0
    %2422 = vmatpush1.msra.mxu0 0.0
    %2423 = vmatprep.subr.mxu0 0.0
    %2424 = vmatpush1.msra.mxu0 0.0
    %2425 = vmatprep.subr.mxu0 0.0
    %2426 = vmatpush1.msra.mxu0 0.0
    %2427 = vmatprep.subr.mxu0 0.0
    %2428 = vmatpush1.msra.mxu0 0.0
    %2429 = vmatprep.subr.mxu0 0.0
    %2430 = vmatpush1.msra.mxu0 0.0
    %2431 = vmatprep.subr.mxu0 0.0
    %2432 = vmatpush1.msra.mxu0 0.0
    %2433 = vmatprep.subr.mxu0 0.0
    %2434 = vmatpush1.msra.mxu0 0.0
    %2435 = vmatprep.subr.mxu0 0.0
    %2436 = vmatpush1.msra.mxu0 0.0
    %2437 = vmatprep.subr.mxu0 0.0
    %2438 = vmatpush1.msra.mxu0 0.0
    %2439 = vmatprep.subr.mxu0 0.0
    %2440 = vmatpush1.msra.mxu0 0.0
    %2441 = vmatprep.subr.mxu0 0.0
    %2442 = vmatpush1.msra.mxu0 0.0
    %2443 = vmatprep.subr.mxu0 0.0
    %2444 = vmatpush1.msra.mxu0 0.0
    %2445 = vmatprep.subr.mxu0 0.0
    %2446 = vmatpush1.msra.mxu0 0.0
    %2447 = vmatprep.subr.mxu0 0.0
    %2448 = vmatpush1.msra.mxu0 0.0
    %2449 = vmatprep.mubr.f32.mxu0 0.0
    %2450 = vmatmul.mubr.f32.gmra.mrb[0].mxu0 %v2383
    %v2451 = vpop.f32.mrb[0].mxu0
    %v2452 = vadd.f32 0.0, %v2451
    %v2453 = vpop.f32.mrb[0].mxu0
    %2454 = vdwg.mxu0
    %v2455 = vadd.f32 %v2365, %v2452
    %v2456 = vld [vmem:[%s10] sm:$0x1]
    %v2458 = vlaneseq
    %v2459 = vshrl.u32 %v2458, 7
    %v2460 = vsub.s32 0, %v2459
    %v2461 = vrot.slane %v2456, %v2460
    %v2463 = vadd.f32 %v2455, %v2461
    %v2464 = vmax.f32 %v2463, 0.0
    %vm2465 = vcmask 909312
    %2466 = vst.msk [vmem:[#allocation7 + $0x1] sm:$0x1] %vm2465, %v2464
    %vm2467 = vcmask 910337
    %2468 = vst.msk [vmem:[#allocation7 + $0x3] sm:$0x2] %vm2467, %v2464
    %vm2469 = vcmask 911362
    %2470 = vst.msk [vmem:[#allocation7 + $0x5] sm:$0x4] %vm2469, %v2464
    %vm2471 = vcmask 912387
    %2472 = vst.msk [vmem:[#allocation7 + $0x7] sm:$0x8] %vm2471, %v2464
    %vm2473 = vcmask 913412
    %2474 = vst.msk [vmem:[#allocation7 + $0x9] sm:$0x10] %vm2473, %v2464
    %vm2475 = vcmask 914437
    %2476 = vst.msk [vmem:[#allocation7 + $0xb] sm:$0x20] %vm2475, %v2464
    %vm2477 = vcmask 915462
    %2478 = vst.msk [vmem:[#allocation7 + $0xd] sm:$0x40] %vm2477, %v2464
    %v2479 = vld [vmem:[#allocation7] sm:$0xff]
    %v2480 = vld [vmem:[#allocation7 + $0x8] sm:$0xff]
    %v2481 = vld [vmem:[#allocation7 + $0x10] sm:$0x7]
    %v2482 = vld [vmem:[%s11] sm:$0xff]
    %v2483 = vld [vmem:[%s11 + $0x8] sm:$0xff]
    %v2484 = vld [vmem:[%s11 + $0x10] sm:$0xff]
    %v2485 = vld [vmem:[%s11 + $0x18] sm:$0xff]
    %v2486 = vld [vmem:[%s11 + $0x20] sm:$0xff]
    %v2487 = vld [vmem:[%s11 + $0x28] sm:$0xff]
    %v2488 = vld [vmem:[%s11 + $0x30] sm:$0xff]
    %v2489 = vld [vmem:[%s11 + $0x38] sm:$0xff]
    %v2490 = vld [vmem:[%s11 + $0x40] sm:$0xff]
    %v2491 = vld [vmem:[%s11 + $0x48] sm:$0xff]
    %v2492 = vld [vmem:[%s11 + $0x50] sm:$0xff]
    %v2493 = vld [vmem:[%s11 + $0x58] sm:$0xff]
    %v2494 = vld [vmem:[%s11 + $0x60] sm:$0xff]
    %v2495 = vld [vmem:[%s11 + $0x68] sm:$0xff]
    %v2496 = vld [vmem:[#allocation7 + $0x1] sm:$0xff]
    %v2497 = vld [vmem:[#allocation7 + $0x9] sm:$0xff]
    %v2498 = vld [vmem:[#allocation7 + $0x11] sm:$0x7]
    %s2499 = scalar_lea.vmem %s11, 112
    %v2500 = vld [vmem:[%s2499] sm:$0xff]
    %v2501 = vld [vmem:[%s2499 + $0x8] sm:$0xff]
    %v2502 = vld [vmem:[%s2499 + $0x10] sm:$0xff]
    %v2503 = vld [vmem:[%s2499 + $0x18] sm:$0xff]
    %v2504 = vld [vmem:[%s2499 + $0x20] sm:$0xff]
    %v2505 = vld [vmem:[%s2499 + $0x28] sm:$0xff]
    %v2506 = vld [vmem:[%s2499 + $0x30] sm:$0xff]
    %v2507 = vld [vmem:[%s2499 + $0x38] sm:$0xff]
    %v2508 = vld [vmem:[%s2499 + $0x40] sm:$0xff]
    %v2509 = vld [vmem:[%s2499 + $0x48] sm:$0xff]
    %v2510 = vld [vmem:[%s2499 + $0x50] sm:$0xff]
    %v2511 = vld [vmem:[%s2499 + $0x58] sm:$0xff]
    %v2512 = vld [vmem:[%s2499 + $0x60] sm:$0xff]
    %v2513 = vld [vmem:[%s2499 + $0x68] sm:$0xff]
    %v2515 = vsel %vm135, %v2496, 0
    %v2518 = vsel %vm135, %v2497, 0
    %v2521 = vsel %vm135, %v2498, 0
    %2523 = vmatprep.subr.mxu0 0.0
    %2524 = vmatpush1.msra.mxu0 %v2500
    %2525 = vmatprep.subr.mxu0 0.0
    %2526 = vmatpush1.msra.mxu0 %v2501
    %2527 = vmatprep.subr.mxu0 0.0
    %2528 = vmatpush1.msra.mxu0 %v2502
    %2529 = vmatprep.subr.mxu0 0.0
    %2530 = vmatpush1.msra.mxu0 %v2503
    %2531 = vmatprep.subr.mxu0 0.0
    %2532 = vmatpush1.msra.mxu0 %v2504
    %2533 = vmatprep.subr.mxu0 0.0
    %2534 = vmatpush1.msra.mxu0 %v2505
    %2535 = vmatprep.subr.mxu0 0.0
    %2536 = vmatpush1.msra.mxu0 %v2506
    %2537 = vmatprep.subr.mxu0 0.0
    %2538 = vmatpush1.msra.mxu0 %v2507
    %2539 = vmatprep.subr.mxu0 0.0
    %2540 = vmatpush1.msra.mxu0 %v2508
    %2541 = vmatprep.subr.mxu0 0.0
    %2542 = vmatpush1.msra.mxu0 %v2509
    %2543 = vmatprep.subr.mxu0 0.0
    %2544 = vmatpush1.msra.mxu0 %v2510
    %2545 = vmatprep.subr.mxu0 0.0
    %2546 = vmatpush1.msra.mxu0 %v2511
    %2547 = vmatprep.subr.mxu0 0.0
    %2548 = vmatpush1.msra.mxu0 %v2512
    %2549 = vmatprep.subr.mxu0 0.0
    %2550 = vmatpush1.msra.mxu0 %v2513
    %2551 = vmatprep.subr.mxu0 0.0
    %2552 = vmatpush1.msra.mxu0 0.0
    %2553 = vmatprep.subr.mxu0 0.0
    %2554 = vmatpush1.msra.mxu0 0.0
    %2555 = vmatprep.subr.mxu0 0.0
    %2556 = vmatpush1.msra.mxu0 0.0
    %2557 = vmatprep.subr.mxu0 0.0
    %2558 = vmatpush1.msra.mxu0 0.0
    %2559 = vmatprep.subr.mxu0 0.0
    %2560 = vmatpush1.msra.mxu0 0.0
    %2561 = vmatprep.subr.mxu0 0.0
    %2562 = vmatpush1.msra.mxu0 0.0
    %2563 = vmatprep.subr.mxu0 0.0
    %2564 = vmatpush1.msra.mxu0 0.0
    %2565 = vmatprep.subr.mxu0 0.0
    %2566 = vmatpush1.msra.mxu0 0.0
    %2567 = vmatprep.subr.mxu0 0.0
    %2568 = vmatpush1.msra.mxu0 0.0
    %2569 = vmatprep.subr.mxu0 0.0
    %2570 = vmatpush1.msra.mxu0 0.0
    %2571 = vmatprep.subr.mxu0 0.0
    %2572 = vmatpush1.msra.mxu0 0.0
    %2573 = vmatprep.subr.mxu0 0.0
    %2574 = vmatpush1.msra.mxu0 0.0
    %2575 = vmatprep.subr.mxu0 0.0
    %2576 = vmatpush1.msra.mxu0 0.0
    %2577 = vmatprep.subr.mxu0 0.0
    %2578 = vmatpush1.msra.mxu0 0.0
    %2579 = vmatprep.subr.mxu0 0.0
    %2580 = vmatpush1.msra.mxu0 0.0
    %2581 = vmatprep.subr.mxu0 0.0
    %2582 = vmatpush1.msra.mxu0 0.0
    %2583 = vmatprep.subr.mxu0 0.0
    %2584 = vmatpush1.msra.mxu0 0.0
    %2585 = vmatprep.subr.mxu0 0.0
    %2586 = vmatpush1.msra.mxu0 0.0
    %2587 = vmatprep.mubr.f32.mxu0 0.0
    %2588 = vmatmul.mubr.f32.gmra.mrb[0].mxu0 %v2515
    %v2589 = vpop.f32.mrb[0].mxu0
    %v2590 = vadd.f32 0.0, %v2589
    %v2591 = vpop.f32.mrb[0].mxu0
    %2592 = vmatprep.mubr.f32.mxu0 0.0
    %2593 = vmatmul.mubr.f32.gmra.mrb[0].mxu0 %v2518
    %v2594 = vpop.f32.mrb[0].mxu0
    %v2595 = vadd.f32 0.0, %v2594
    %v2596 = vpop.f32.mrb[0].mxu0
    %2597 = vmatprep.mubr.f32.mxu0 0.0
    %2598 = vmatmul.mubr.f32.gmra.mrb[0].mxu0 %v2521
    %v2599 = vpop.f32.mrb[0].mxu0
    %v2600 = vadd.f32 0.0, %v2599
    %v2601 = vpop.f32.mrb[0].mxu0
    %2602 = vdwg.mxu0
    %v2604 = vsel %vm135, %v2479, 0
    %v2607 = vsel %vm135, %v2480, 0
    %v2610 = vsel %vm135, %v2481, 0
    %2612 = vmatprep.subr.mxu0 0.0
    %2613 = vmatpush1.msra.mxu0 %v2482
    %2614 = vmatprep.subr.mxu0 0.0
    %2615 = vmatpush1.msra.mxu0 %v2483
    %2616 = vmatprep.subr.mxu0 0.0
    %2617 = vmatpush1.msra.mxu0 %v2484
    %2618 = vmatprep.subr.mxu0 0.0
    %2619 = vmatpush1.msra.mxu0 %v2485
    %2620 = vmatprep.subr.mxu0 0.0
    %2621 = vmatpush1.msra.mxu0 %v2486
    %2622 = vmatprep.subr.mxu0 0.0
    %2623 = vmatpush1.msra.mxu0 %v2487
    %2624 = vmatprep.subr.mxu0 0.0
    %2625 = vmatpush1.msra.mxu0 %v2488
    %2626 = vmatprep.subr.mxu0 0.0
    %2627 = vmatpush1.msra.mxu0 %v2489
    %2628 = vmatprep.subr.mxu0 0.0
    %2629 = vmatpush1.msra.mxu0 %v2490
    %2630 = vmatprep.subr.mxu0 0.0
    %2631 = vmatpush1.msra.mxu0 %v2491
    %2632 = vmatprep.subr.mxu0 0.0
    %2633 = vmatpush1.msra.mxu0 %v2492
    %2634 = vmatprep.subr.mxu0 0.0
    %2635 = vmatpush1.msra.mxu0 %v2493
    %2636 = vmatprep.subr.mxu0 0.0
    %2637 = vmatpush1.msra.mxu0 %v2494
    %2638 = vmatprep.subr.mxu0 0.0
    %2639 = vmatpush1.msra.mxu0 %v2495
    %2640 = vmatprep.subr.mxu0 0.0
    %2641 = vmatpush1.msra.mxu0 0.0
    %2642 = vmatprep.subr.mxu0 0.0
    %2643 = vmatpush1.msra.mxu0 0.0
    %2644 = vmatprep.subr.mxu0 0.0
    %2645 = vmatpush1.msra.mxu0 0.0
    %2646 = vmatprep.subr.mxu0 0.0
    %2647 = vmatpush1.msra.mxu0 0.0
    %2648 = vmatprep.subr.mxu0 0.0
    %2649 = vmatpush1.msra.mxu0 0.0
    %2650 = vmatprep.subr.mxu0 0.0
    %2651 = vmatpush1.msra.mxu0 0.0
    %2652 = vmatprep.subr.mxu0 0.0
    %2653 = vmatpush1.msra.mxu0 0.0
    %2654 = vmatprep.subr.mxu0 0.0
    %2655 = vmatpush1.msra.mxu0 0.0
    %2656 = vmatprep.subr.mxu0 0.0
    %2657 = vmatpush1.msra.mxu0 0.0
    %2658 = vmatprep.subr.mxu0 0.0
    %2659 = vmatpush1.msra.mxu0 0.0
    %2660 = vmatprep.subr.mxu0 0.0
    %2661 = vmatpush1.msra.mxu0 0.0
    %2662 = vmatprep.subr.mxu0 0.0
    %2663 = vmatpush1.msra.mxu0 0.0
    %2664 = vmatprep.subr.mxu0 0.0
    %2665 = vmatpush1.msra.mxu0 0.0
    %2666 = vmatprep.subr.mxu0 0.0
    %2667 = vmatpush1.msra.mxu0 0.0
    %2668 = vmatprep.subr.mxu0 0.0
    %2669 = vmatpush1.msra.mxu0 0.0
    %2670 = vmatprep.subr.mxu0 0.0
    %2671 = vmatpush1.msra.mxu0 0.0
    %2672 = vmatprep.subr.mxu0 0.0
    %2673 = vmatpush1.msra.mxu0 0.0
    %2674 = vmatprep.subr.mxu0 0.0
    %2675 = vmatpush1.msra.mxu0 0.0
    %2676 = vmatprep.mubr.f32.mxu0 0.0
    %2677 = vmatmul.mubr.f32.gmra.mrb[0].mxu0 %v2604
    %v2678 = vpop.f32.mrb[0].mxu0
    %v2679 = vadd.f32 %v2590, %v2678
    %v2680 = vpop.f32.mrb[0].mxu0
    %2681 = vmatprep.mubr.f32.mxu0 0.0
    %2682 = vmatmul.mubr.f32.gmra.mrb[0].mxu0 %v2607
    %v2683 = vpop.f32.mrb[0].mxu0
    %v2684 = vadd.f32 %v2595, %v2683
    %v2685 = vpop.f32.mrb[0].mxu0
    %2686 = vmatprep.mubr.f32.mxu0 0.0
    %2687 = vmatmul.mubr.f32.gmra.mrb[0].mxu0 %v2610
    %v2688 = vpop.f32.mrb[0].mxu0
    %v2689 = vadd.f32 %v2600, %v2688
    %v2690 = vpop.f32.mrb[0].mxu0
    %2691 = vdwg.mxu0
    %v2692 = vld [vmem:[#allocation7 + $0x2] sm:$0xff]
    %v2693 = vld [vmem:[#allocation7 + $0xa] sm:$0xff]
    %v2694 = vld [vmem:[#allocation7 + $0x12] sm:$0x7]
    %s2695 = scalar_lea.vmem %s11, 224
    %v2696 = vld [vmem:[%s2695] sm:$0xff]
    %v2697 = vld [vmem:[%s2695 + $0x8] sm:$0xff]
    %v2698 = vld [vmem:[%s2695 + $0x10] sm:$0xff]
    %v2699 = vld [vmem:[%s2695 + $0x18] sm:$0xff]
    %v2700 = vld [vmem:[%s2695 + $0x20] sm:$0xff]
    %v2701 = vld [vmem:[%s2695 + $0x28] sm:$0xff]
    %v2702 = vld [vmem:[%s2695 + $0x30] sm:$0xff]
    %v2703 = vld [vmem:[%s2695 + $0x38] sm:$0xff]
    %v2704 = vld [vmem:[%s2695 + $0x40] sm:$0xff]
    %v2705 = vld [vmem:[%s2695 + $0x48] sm:$0xff]
    %v2706 = vld [vmem:[%s2695 + $0x50] sm:$0xff]
    %v2707 = vld [vmem:[%s2695 + $0x58] sm:$0xff]
    %v2708 = vld [vmem:[%s2695 + $0x60] sm:$0xff]
    %v2709 = vld [vmem:[%s2695 + $0x68] sm:$0xff]
    %v2711 = vsel %vm135, %v2692, 0
    %v2714 = vsel %vm135, %v2693, 0
    %v2717 = vsel %vm135, %v2694, 0
    %2719 = vmatprep.subr.mxu0 0.0
    %2720 = vmatpush1.msra.mxu0 %v2696
    %2721 = vmatprep.subr.mxu0 0.0
    %2722 = vmatpush1.msra.mxu0 %v2697
    %2723 = vmatprep.subr.mxu0 0.0
    %2724 = vmatpush1.msra.mxu0 %v2698
    %2725 = vmatprep.subr.mxu0 0.0
    %2726 = vmatpush1.msra.mxu0 %v2699
    %2727 = vmatprep.subr.mxu0 0.0
    %2728 = vmatpush1.msra.mxu0 %v2700
    %2729 = vmatprep.subr.mxu0 0.0
    %2730 = vmatpush1.msra.mxu0 %v2701
    %2731 = vmatprep.subr.mxu0 0.0
    %2732 = vmatpush1.msra.mxu0 %v2702
    %2733 = vmatprep.subr.mxu0 0.0
    %2734 = vmatpush1.msra.mxu0 %v2703
    %2735 = vmatprep.subr.mxu0 0.0
    %2736 = vmatpush1.msra.mxu0 %v2704
    %2737 = vmatprep.subr.mxu0 0.0
    %2738 = vmatpush1.msra.mxu0 %v2705
    %2739 = vmatprep.subr.mxu0 0.0
    %2740 = vmatpush1.msra.mxu0 %v2706
    %2741 = vmatprep.subr.mxu0 0.0
    %2742 = vmatpush1.msra.mxu0 %v2707
    %2743 = vmatprep.subr.mxu0 0.0
    %2744 = vmatpush1.msra.mxu0 %v2708
    %2745 = vmatprep.subr.mxu0 0.0
    %2746 = vmatpush1.msra.mxu0 %v2709
    %2747 = vmatprep.subr.mxu0 0.0
    %2748 = vmatpush1.msra.mxu0 0.0
    %2749 = vmatprep.subr.mxu0 0.0
    %2750 = vmatpush1.msra.mxu0 0.0
    %2751 = vmatprep.subr.mxu0 0.0
    %2752 = vmatpush1.msra.mxu0 0.0
    %2753 = vmatprep.subr.mxu0 0.0
    %2754 = vmatpush1.msra.mxu0 0.0
    %2755 = vmatprep.subr.mxu0 0.0
    %2756 = vmatpush1.msra.mxu0 0.0
    %2757 = vmatprep.subr.mxu0 0.0
    %2758 = vmatpush1.msra.mxu0 0.0
    %2759 = vmatprep.subr.mxu0 0.0
    %2760 = vmatpush1.msra.mxu0 0.0
    %2761 = vmatprep.subr.mxu0 0.0
    %2762 = vmatpush1.msra.mxu0 0.0
    %2763 = vmatprep.subr.mxu0 0.0
    %2764 = vmatpush1.msra.mxu0 0.0
    %2765 = vmatprep.subr.mxu0 0.0
    %2766 = vmatpush1.msra.mxu0 0.0
    %2767 = vmatprep.subr.mxu0 0.0
    %2768 = vmatpush1.msra.mxu0 0.0
    %2769 = vmatprep.subr.mxu0 0.0
    %2770 = vmatpush1.msra.mxu0 0.0
    %2771 = vmatprep.subr.mxu0 0.0
    %2772 = vmatpush1.msra.mxu0 0.0
    %2773 = vmatprep.subr.mxu0 0.0
    %2774 = vmatpush1.msra.mxu0 0.0
    %2775 = vmatprep.subr.mxu0 0.0
    %2776 = vmatpush1.msra.mxu0 0.0
    %2777 = vmatprep.subr.mxu0 0.0
    %2778 = vmatpush1.msra.mxu0 0.0
    %2779 = vmatprep.subr.mxu0 0.0
    %2780 = vmatpush1.msra.mxu0 0.0
    %2781 = vmatprep.subr.mxu0 0.0
    %2782 = vmatpush1.msra.mxu0 0.0
    %2783 = vmatprep.mubr.f32.mxu0 0.0
    %2784 = vmatmul.mubr.f32.gmra.mrb[0].mxu0 %v2711
    %v2785 = vpop.f32.mrb[0].mxu0
    %v2786 = vadd.f32 0.0, %v2785
    %v2787 = vpop.f32.mrb[0].mxu0
    %2788 = vmatprep.mubr.f32.mxu0 0.0
    %2789 = vmatmul.mubr.f32.gmra.mrb[0].mxu0 %v2714
    %v2790 = vpop.f32.mrb[0].mxu0
    %v2791 = vadd.f32 0.0, %v2790
    %v2792 = vpop.f32.mrb[0].mxu0
    %2793 = vmatprep.mubr.f32.mxu0 0.0
    %2794 = vmatmul.mubr.f32.gmra.mrb[0].mxu0 %v2717
    %v2795 = vpop.f32.mrb[0].mxu0
    %v2796 = vadd.f32 0.0, %v2795
    %v2797 = vpop.f32.mrb[0].mxu0
    %2798 = vdwg.mxu0
    %v2799 = vadd.f32 %v2679, %v2786
    %v2800 = vadd.f32 %v2684, %v2791
    %v2801 = vadd.f32 %v2689, %v2796
    %v2802 = vld [vmem:[%s12] sm:$0x1]
    %v2804 = vlaneseq
    %v2805 = vshrl.u32 %v2804, 7
    %v2806 = vsub.s32 0, %v2805
    %v2807 = vrot.slane %v2802, %v2806
    %v2809 = vadd.f32 %v2799, %v2807
    %v2810 = vadd.f32 %v2800, %v2807
    %v2811 = vadd.f32 %v2801, %v2807
    %v2812 = vtanh.pop %v2809
    %v2813 = vtanh.pop %v2810
    %v2814 = vtanh.pop %v2811
    %vm2815 = vcmask 154624
    %2816 = vst.msk [vmem:[%s13] sm:$0xff] %vm2815, %v2812
    %2817 = vst.msk [vmem:[%s13 + $0x8] sm:$0xff] %vm2815, %v2813
    %vm2818 = vcmask 149504
    %2819 = vst.msk [vmem:[%s13 + $0x10] sm:$0x7] %vm2818, %v2814
    %v2820 = vld [vmem:[#allocation2 + $0x1e] sm:$0xff]
    %v2821 = vld [vmem:[#allocation2 + $0x26] sm:$0xff]
    %v2822 = vld [vmem:[#allocation2 + $0x2e] sm:$0xff]
    %v2823 = vld [vmem:[#allocation2 + $0x36] sm:$0x3f]
    %v2825 = vsel %vm217, %v2823, 0
    %2827 = vmatprep.subr.mxu0 0.0
    %2828 = vmatpush1.msra.mxu0 %v2820
    %2829 = vmatprep.subr.mxu0 0.0
    %2830 = vmatpush1.msra.mxu0 %v2821
    %2831 = vmatprep.subr.mxu0 0.0
    %2832 = vmatpush1.msra.mxu0 %v2822
    %2833 = vmatprep.subr.mxu0 0.0
    %2834 = vmatpush1.msra.mxu0 %v2825
    %2835 = vmatprep.subr.mxu0 0.0
    %2836 = vmatpush1.msra.mxu0 0.0
    %2837 = vmatprep.subr.mxu0 0.0
    %2838 = vmatpush1.msra.mxu0 0.0
    %2839 = vmatprep.subr.mxu0 0.0
    %2840 = vmatpush1.msra.mxu0 0.0
    %2841 = vmatprep.subr.mxu0 0.0
    %2842 = vmatpush1.msra.mxu0 0.0
    %2843 = vmatprep.subr.mxu0 0.0
    %2844 = vmatpush1.msra.mxu0 0.0
    %2845 = vmatprep.subr.mxu0 0.0
    %2846 = vmatpush1.msra.mxu0 0.0
    %2847 = vmatprep.subr.mxu0 0.0
    %2848 = vmatpush1.msra.mxu0 0.0
    %2849 = vmatprep.subr.mxu0 0.0
    %2850 = vmatpush1.msra.mxu0 0.0
    %2851 = vmatprep.subr.mxu0 0.0
    %2852 = vmatpush1.msra.mxu0 0.0
    %2853 = vmatprep.subr.mxu0 0.0
    %2854 = vmatpush1.msra.mxu0 0.0
    %2855 = vmatprep.subr.mxu0 0.0
    %2856 = vmatpush1.msra.mxu0 0.0
    %2857 = vmatprep.subr.mxu0 0.0
    %2858 = vmatpush1.msra.mxu0 0.0
    %2859 = vmatprep.subr.mxu0 0.0
    %2860 = vmatpush1.msra.mxu0 0.0
    %2861 = vmatprep.subr.mxu0 0.0
    %2862 = vmatpush1.msra.mxu0 0.0
    %2863 = vmatprep.subr.mxu0 0.0
    %2864 = vmatpush1.msra.mxu0 0.0
    %2865 = vmatprep.subr.mxu0 0.0
    %2866 = vmatpush1.msra.mxu0 0.0
    %2867 = vmatprep.subr.mxu0 0.0
    %2868 = vmatpush1.msra.mxu0 0.0
    %2869 = vmatprep.subr.mxu0 0.0
    %2870 = vmatpush1.msra.mxu0 0.0
    %2871 = vmatprep.subr.mxu0 0.0
    %2872 = vmatpush1.msra.mxu0 0.0
    %2873 = vmatprep.subr.mxu0 0.0
    %2874 = vmatpush1.msra.mxu0 0.0
    %2875 = vmatprep.subr.mxu0 0.0
    %2876 = vmatpush1.msra.mxu0 0.0
    %2877 = vmatprep.subr.mxu0 0.0
    %2878 = vmatpush1.msra.mxu0 0.0
    %2879 = vmatprep.subr.mxu0 0.0
    %2880 = vmatpush1.msra.mxu0 0.0
    %2881 = vmatprep.subr.mxu0 0.0
    %2882 = vmatpush1.msra.mxu0 0.0
    %2883 = vmatprep.subr.mxu0 0.0
    %2884 = vmatpush1.msra.mxu0 0.0
    %2885 = vmatprep.subr.mxu0 0.0
    %2886 = vmatpush1.msra.mxu0 0.0
    %2887 = vmatprep.subr.mxu0 0.0
    %2888 = vmatpush1.msra.mxu0 0.0
    %2889 = vmatprep.subr.mxu0 0.0
    %2890 = vmatpush1.msra.mxu0 0.0
    %2891 = vmatprep.mubr.f32.mxu0 0.0
    %2892 = vmatmul.mubr.f32.gmra.mrb[0].mxu0 %v212
    %v2893 = vpop.f32.mrb[0].mxu0
    %v2894 = vadd.f32 0.0, %v2893
    %v2895 = vpop.f32.mrb[0].mxu0
    %2896 = vmatprep.mubr.f32.mxu0 0.0
    %2897 = vmatmul.mubr.f32.gmra.mrb[0].mxu0 %v215
    %v2898 = vpop.f32.mrb[0].mxu0
    %v2899 = vadd.f32 0.0, %v2898
    %v2900 = vpop.f32.mrb[0].mxu0
    %2901 = vdwg.mxu0
    %v2902 = vld [vmem:[#allocation8] sm:$0xff]
    %v2903 = vld [vmem:[#allocation8 + $0x8] sm:$0xff]
    %v2904 = vld [vmem:[#allocation8 + $0x10] sm:$0xff]
    %v2905 = vld [vmem:[#allocation8 + $0x18] sm:$0xff]
    %v2906 = vld [vmem:[#allocation8 + $0x20] sm:$0xff]
    %v2907 = vld [vmem:[#allocation8 + $0x28] sm:$0xff]
    %v2908 = vld [vmem:[#allocation8 + $0x30] sm:$0x3f]
    %v2909 = vld [vmem:[#allocation8 + $0x38] sm:$0x3f]
    %2910 = vmatprep.subr.mxu0 0.0
    %2911 = vmatpush1.msra.mxu0 %v2820
    %2912 = vmatprep.subr.mxu0 0.0
    %2913 = vmatpush1.msra.mxu0 %v2821
    %2914 = vmatprep.subr.mxu0 0.0
    %2915 = vmatpush1.msra.mxu0 %v2822
    %2916 = vmatprep.subr.mxu0 0.0
    %2917 = vmatpush1.msra.mxu0 %v2825
    %2918 = vmatprep.subr.mxu0 0.0
    %2919 = vmatpush1.msra.mxu0 0.0
    %2920 = vmatprep.subr.mxu0 0.0
    %2921 = vmatpush1.msra.mxu0 0.0
    %2922 = vmatprep.subr.mxu0 0.0
    %2923 = vmatpush1.msra.mxu0 0.0
    %2924 = vmatprep.subr.mxu0 0.0
    %2925 = vmatpush1.msra.mxu0 0.0
    %2926 = vmatprep.subr.mxu0 0.0
    %2927 = vmatpush1.msra.mxu0 0.0
    %2928 = vmatprep.subr.mxu0 0.0
    %2929 = vmatpush1.msra.mxu0 0.0
    %2930 = vmatprep.subr.mxu0 0.0
    %2931 = vmatpush1.msra.mxu0 0.0
    %2932 = vmatprep.subr.mxu0 0.0
    %2933 = vmatpush1.msra.mxu0 0.0
    %2934 = vmatprep.subr.mxu0 0.0
    %2935 = vmatpush1.msra.mxu0 0.0
    %2936 = vmatprep.subr.mxu0 0.0
    %2937 = vmatpush1.msra.mxu0 0.0
    %2938 = vmatprep.subr.mxu0 0.0
    %2939 = vmatpush1.msra.mxu0 0.0
    %2940 = vmatprep.subr.mxu0 0.0
    %2941 = vmatpush1.msra.mxu0 0.0
    %2942 = vmatprep.subr.mxu0 0.0
    %2943 = vmatpush1.msra.mxu0 0.0
    %2944 = vmatprep.subr.mxu0 0.0
    %2945 = vmatpush1.msra.mxu0 0.0
    %2946 = vmatprep.subr.mxu0 0.0
    %2947 = vmatpush1.msra.mxu0 0.0
    %2948 = vmatprep.subr.mxu0 0.0
    %2949 = vmatpush1.msra.mxu0 0.0
    %2950 = vmatprep.subr.mxu0 0.0
    %2951 = vmatpush1.msra.mxu0 0.0
    %2952 = vmatprep.subr.mxu0 0.0
    %2953 = vmatpush1.msra.mxu0 0.0
    %2954 = vmatprep.subr.mxu0 0.0
    %2955 = vmatpush1.msra.mxu0 0.0
    %2956 = vmatprep.subr.mxu0 0.0
    %2957 = vmatpush1.msra.mxu0 0.0
    %2958 = vmatprep.subr.mxu0 0.0
    %2959 = vmatpush1.msra.mxu0 0.0
    %2960 = vmatprep.subr.mxu0 0.0
    %2961 = vmatpush1.msra.mxu0 0.0
    %2962 = vmatprep.subr.mxu0 0.0
    %2963 = vmatpush1.msra.mxu0 0.0
    %2964 = vmatprep.subr.mxu0 0.0
    %2965 = vmatpush1.msra.mxu0 0.0
    %2966 = vmatprep.subr.mxu0 0.0
    %2967 = vmatpush1.msra.mxu0 0.0
    %2968 = vmatprep.subr.mxu0 0.0
    %2969 = vmatpush1.msra.mxu0 0.0
    %2970 = vmatprep.subr.mxu0 0.0
    %2971 = vmatpush1.msra.mxu0 0.0
    %2972 = vmatprep.subr.mxu0 0.0
    %2973 = vmatpush1.msra.mxu0 0.0
    %2974 = vmatprep.mubr.f32.mxu0 0.0
    %2975 = vmatmul.mubr.f32.gmra.mrb[0].mxu0 %v313
    %v2976 = vpop.f32.mrb[0].mxu0
    %v2977 = vadd.f32 0.0, %v2976
    %v2978 = vpop.f32.mrb[0].mxu0
    %2979 = vmatprep.mubr.f32.mxu0 0.0
    %2980 = vmatmul.mubr.f32.gmra.mrb[0].mxu0 %v316
    %v2981 = vpop.f32.mrb[0].mxu0
    %v2982 = vadd.f32 0.0, %v2981
    %v2983 = vpop.f32.mrb[0].mxu0
    %2984 = vdwg.mxu0
    %v2985 = vld [vmem:[%s393] sm:$0xff]
    %v2986 = vld [vmem:[%s393 + $0x8] sm:$0xff]
    %v2987 = vld [vmem:[%s393 + $0x10] sm:$0xff]
    %v2988 = vld [vmem:[%s393 + $0x18] sm:$0xff]
    %v2989 = vld [vmem:[%s393 + $0x20] sm:$0xff]
    %v2990 = vld [vmem:[%s393 + $0x28] sm:$0xff]
    %v2991 = vld [vmem:[%s393 + $0x30] sm:$0x3f]
    %v2992 = vld [vmem:[%s393 + $0x38] sm:$0x3f]
    %v2994 = vsel %vm106, %v2977, 0
    %v2997 = vsel %vm106, %v2982, 0
    %v3000 = vsel %vm217, %v2991, 0
    %v3003 = vsel %vm217, %v2992, 0
    %3005 = vmatprep.subr.mxu0 %v2986
    %3006 = vmatpush1.msra.mxu0 %v2985
    %3007 = vmatprep.subr.mxu0 %v2988
    %3008 = vmatpush1.msra.mxu0 %v2987
    %3009 = vmatprep.subr.mxu0 %v2990
    %3010 = vmatpush1.msra.mxu0 %v2989
    %3011 = vmatprep.subr.mxu0 %v3003
    %3012 = vmatpush1.msra.mxu0 %v3000
    %3013 = vmatprep.subr.mxu0 0.0
    %3014 = vmatpush1.msra.mxu0 0.0
    %3015 = vmatprep.subr.mxu0 0.0
    %3016 = vmatpush1.msra.mxu0 0.0
    %3017 = vmatprep.subr.mxu0 0.0
    %3018 = vmatpush1.msra.mxu0 0.0
    %3019 = vmatprep.subr.mxu0 0.0
    %3020 = vmatpush1.msra.mxu0 0.0
    %3021 = vmatprep.subr.mxu0 0.0
    %3022 = vmatpush1.msra.mxu0 0.0
    %3023 = vmatprep.subr.mxu0 0.0
    %3024 = vmatpush1.msra.mxu0 0.0
    %3025 = vmatprep.subr.mxu0 0.0
    %3026 = vmatpush1.msra.mxu0 0.0
    %3027 = vmatprep.subr.mxu0 0.0
    %3028 = vmatpush1.msra.mxu0 0.0
    %3029 = vmatprep.subr.mxu0 0.0
    %3030 = vmatpush1.msra.mxu0 0.0
    %3031 = vmatprep.subr.mxu0 0.0
    %3032 = vmatpush1.msra.mxu0 0.0
    %3033 = vmatprep.subr.mxu0 0.0
    %3034 = vmatpush1.msra.mxu0 0.0
    %3035 = vmatprep.subr.mxu0 0.0
    %3036 = vmatpush1.msra.mxu0 0.0
    %3037 = vmatprep.subr.mxu0 0.0
    %3038 = vmatpush1.msra.mxu0 0.0
    %3039 = vmatprep.subr.mxu0 0.0
    %3040 = vmatpush1.msra.mxu0 0.0
    %3041 = vmatprep.subr.mxu0 0.0
    %3042 = vmatpush1.msra.mxu0 0.0
    %3043 = vmatprep.subr.mxu0 0.0
    %3044 = vmatpush1.msra.mxu0 0.0
    %3045 = vmatprep.subr.mxu0 0.0
    %3046 = vmatpush1.msra.mxu0 0.0
    %3047 = vmatprep.subr.mxu0 0.0
    %3048 = vmatpush1.msra.mxu0 0.0
    %3049 = vmatprep.subr.mxu0 0.0
    %3050 = vmatpush1.msra.mxu0 0.0
    %3051 = vmatprep.subr.mxu0 0.0
    %3052 = vmatpush1.msra.mxu0 0.0
    %3053 = vmatprep.subr.mxu0 0.0
    %3054 = vmatpush1.msra.mxu0 0.0
    %3055 = vmatprep.subr.mxu0 0.0
    %3056 = vmatpush1.msra.mxu0 0.0
    %3057 = vmatprep.subr.mxu0 0.0
    %3058 = vmatpush1.msra.mxu0 0.0
    %3059 = vmatprep.subr.mxu0 0.0
    %3060 = vmatpush1.msra.mxu0 0.0
    %3061 = vmatprep.subr.mxu0 0.0
    %3062 = vmatpush1.msra.mxu0 0.0
    %3063 = vmatprep.subr.mxu0 0.0
    %3064 = vmatpush1.msra.mxu0 0.0
    %3065 = vmatprep.subr.mxu0 0.0
    %3066 = vmatpush1.msra.mxu0 0.0
    %3067 = vmatprep.subr.mxu0 0.0
    %3068 = vmatpush1.msra.mxu0 0.0
    %3069 = vmatprep.mubr.f32.mxu0 0.0
    %3070 = vmatmul.mubr.f32.gmra.mrb[0].mxu0 %v2994
    %v3071 = vpop.f32.mrb[0].mxu0
    %v3072 = vadd.f32 0.0, %v3071
    %v3073 = vpop.f32.mrb[0].mxu0
    %v3074 = vadd.f32 0.0, %v3073
    %3075 = vmatprep.mubr.f32.mxu0 0.0
    %3076 = vmatmul.mubr.f32.gmra.mrb[0].mxu0 %v2997
    %v3077 = vpop.f32.mrb[0].mxu0
    %v3078 = vadd.f32 0.0, %v3077
    %v3079 = vpop.f32.mrb[0].mxu0
    %v3080 = vadd.f32 0.0, %v3079
    %3081 = vdwg.mxu0
    %v3083 = vsel %vm106, %v2894, 0
    %v3086 = vsel %vm106, %v2899, 0
    %v3089 = vsel %vm217, %v2908, 0
    %v3092 = vsel %vm217, %v2909, 0
    %3094 = vmatprep.subr.mxu0 %v2903
    %3095 = vmatpush1.msra.mxu0 %v2902
    %3096 = vmatprep.subr.mxu0 %v2905
    %3097 = vmatpush1.msra.mxu0 %v2904
    %3098 = vmatprep.subr.mxu0 %v2907
    %3099 = vmatpush1.msra.mxu0 %v2906
    %3100 = vmatprep.subr.mxu0 %v3092
    %3101 = vmatpush1.msra.mxu0 %v3089
    %3102 = vmatprep.subr.mxu0 0.0
    %3103 = vmatpush1.msra.mxu0 0.0
    %3104 = vmatprep.subr.mxu0 0.0
    %3105 = vmatpush1.msra.mxu0 0.0
    %3106 = vmatprep.subr.mxu0 0.0
    %3107 = vmatpush1.msra.mxu0 0.0
    %3108 = vmatprep.subr.mxu0 0.0
    %3109 = vmatpush1.msra.mxu0 0.0
    %3110 = vmatprep.subr.mxu0 0.0
    %3111 = vmatpush1.msra.mxu0 0.0
    %3112 = vmatprep.subr.mxu0 0.0
    %3113 = vmatpush1.msra.mxu0 0.0
    %3114 = vmatprep.subr.mxu0 0.0
    %3115 = vmatpush1.msra.mxu0 0.0
    %3116 = vmatprep.subr.mxu0 0.0
    %3117 = vmatpush1.msra.mxu0 0.0
    %3118 = vmatprep.subr.mxu0 0.0
    %3119 = vmatpush1.msra.mxu0 0.0
    %3120 = vmatprep.subr.mxu0 0.0
    %3121 = vmatpush1.msra.mxu0 0.0
    %3122 = vmatprep.subr.mxu0 0.0
    %3123 = vmatpush1.msra.mxu0 0.0
    %3124 = vmatprep.subr.mxu0 0.0
    %3125 = vmatpush1.msra.mxu0 0.0
    %3126 = vmatprep.subr.mxu0 0.0
    %3127 = vmatpush1.msra.mxu0 0.0
    %3128 = vmatprep.subr.mxu0 0.0
    %3129 = vmatpush1.msra.mxu0 0.0
    %3130 = vmatprep.subr.mxu0 0.0
    %3131 = vmatpush1.msra.mxu0 0.0
    %3132 = vmatprep.subr.mxu0 0.0
    %3133 = vmatpush1.msra.mxu0 0.0
    %3134 = vmatprep.subr.mxu0 0.0
    %3135 = vmatpush1.msra.mxu0 0.0
    %3136 = vmatprep.subr.mxu0 0.0
    %3137 = vmatpush1.msra.mxu0 0.0
    %3138 = vmatprep.subr.mxu0 0.0
    %3139 = vmatpush1.msra.mxu0 0.0
    %3140 = vmatprep.subr.mxu0 0.0
    %3141 = vmatpush1.msra.mxu0 0.0
    %3142 = vmatprep.subr.mxu0 0.0
    %3143 = vmatpush1.msra.mxu0 0.0
    %3144 = vmatprep.subr.mxu0 0.0
    %3145 = vmatpush1.msra.mxu0 0.0
    %3146 = vmatprep.subr.mxu0 0.0
    %3147 = vmatpush1.msra.mxu0 0.0
    %3148 = vmatprep.subr.mxu0 0.0
    %3149 = vmatpush1.msra.mxu0 0.0
    %3150 = vmatprep.subr.mxu0 0.0
    %3151 = vmatpush1.msra.mxu0 0.0
    %3152 = vmatprep.subr.mxu0 0.0
    %3153 = vmatpush1.msra.mxu0 0.0
    %3154 = vmatprep.subr.mxu0 0.0
    %3155 = vmatpush1.msra.mxu0 0.0
    %3156 = vmatprep.subr.mxu0 0.0
    %3157 = vmatpush1.msra.mxu0 0.0
    %3158 = vmatprep.mubr.f32.mxu0 0.0
    %3159 = vmatmul.mubr.f32.gmra.mrb[0].mxu0 %v3083
    %v3160 = vpop.f32.mrb[0].mxu0
    %v3161 = vadd.f32 %v3072, %v3160
    %v3162 = vpop.f32.mrb[0].mxu0
    %v3163 = vadd.f32 %v3074, %v3162
    %3164 = vmatprep.mubr.f32.mxu0 0.0
    %3165 = vmatmul.mubr.f32.gmra.mrb[0].mxu0 %v3086
    %v3166 = vpop.f32.mrb[0].mxu0
    %v3167 = vadd.f32 %v3078, %v3166
    %v3168 = vpop.f32.mrb[0].mxu0
    %v3169 = vadd.f32 %v3080, %v3168
    %3170 = vdwg.mxu0
    %3171 = vmatprep.subr.mxu0 0.0
    %3172 = vmatpush1.msra.mxu0 %v2820
    %3173 = vmatprep.subr.mxu0 0.0
    %3174 = vmatpush1.msra.mxu0 %v2821
    %3175 = vmatprep.subr.mxu0 0.0
    %3176 = vmatpush1.msra.mxu0 %v2822
    %3177 = vmatprep.subr.mxu0 0.0
    %3178 = vmatpush1.msra.mxu0 %v2825
    %3179 = vmatprep.subr.mxu0 0.0
    %3180 = vmatpush1.msra.mxu0 0.0
    %3181 = vmatprep.subr.mxu0 0.0
    %3182 = vmatpush1.msra.mxu0 0.0
    %3183 = vmatprep.subr.mxu0 0.0
    %3184 = vmatpush1.msra.mxu0 0.0
    %3185 = vmatprep.subr.mxu0 0.0
    %3186 = vmatpush1.msra.mxu0 0.0
    %3187 = vmatprep.subr.mxu0 0.0
    %3188 = vmatpush1.msra.mxu0 0.0
    %3189 = vmatprep.subr.mxu0 0.0
    %3190 = vmatpush1.msra.mxu0 0.0
    %3191 = vmatprep.subr.mxu0 0.0
    %3192 = vmatpush1.msra.mxu0 0.0
    %3193 = vmatprep.subr.mxu0 0.0
    %3194 = vmatpush1.msra.mxu0 0.0
    %3195 = vmatprep.subr.mxu0 0.0
    %3196 = vmatpush1.msra.mxu0 0.0
    %3197 = vmatprep.subr.mxu0 0.0
    %3198 = vmatpush1.msra.mxu0 0.0
    %3199 = vmatprep.subr.mxu0 0.0
    %3200 = vmatpush1.msra.mxu0 0.0
    %3201 = vmatprep.subr.mxu0 0.0
    %3202 = vmatpush1.msra.mxu0 0.0
    %3203 = vmatprep.subr.mxu0 0.0
    %3204 = vmatpush1.msra.mxu0 0.0
    %3205 = vmatprep.subr.mxu0 0.0
    %3206 = vmatpush1.msra.mxu0 0.0
    %3207 = vmatprep.subr.mxu0 0.0
    %3208 = vmatpush1.msra.mxu0 0.0
    %3209 = vmatprep.subr.mxu0 0.0
    %3210 = vmatpush1.msra.mxu0 0.0
    %3211 = vmatprep.subr.mxu0 0.0
    %3212 = vmatpush1.msra.mxu0 0.0
    %3213 = vmatprep.subr.mxu0 0.0
    %3214 = vmatpush1.msra.mxu0 0.0
    %3215 = vmatprep.subr.mxu0 0.0
    %3216 = vmatpush1.msra.mxu0 0.0
    %3217 = vmatprep.subr.mxu0 0.0
    %3218 = vmatpush1.msra.mxu0 0.0
    %3219 = vmatprep.subr.mxu0 0.0
    %3220 = vmatpush1.msra.mxu0 0.0
    %3221 = vmatprep.subr.mxu0 0.0
    %3222 = vmatpush1.msra.mxu0 0.0
    %3223 = vmatprep.subr.mxu0 0.0
    %3224 = vmatpush1.msra.mxu0 0.0
    %3225 = vmatprep.subr.mxu0 0.0
    %3226 = vmatpush1.msra.mxu0 0.0
    %3227 = vmatprep.subr.mxu0 0.0
    %3228 = vmatpush1.msra.mxu0 0.0
    %3229 = vmatprep.subr.mxu0 0.0
    %3230 = vmatpush1.msra.mxu0 0.0
    %3231 = vmatprep.subr.mxu0 0.0
    %3232 = vmatpush1.msra.mxu0 0.0
    %3233 = vmatprep.subr.mxu0 0.0
    %3234 = vmatpush1.msra.mxu0 0.0
    %3235 = vmatprep.mubr.f32.mxu0 0.0
    %3236 = vmatmul.mubr.f32.gmra.mrb[0].mxu0 %v589
    %v3237 = vpop.f32.mrb[0].mxu0
    %v3238 = vadd.f32 0.0, %v3237
    %v3239 = vpop.f32.mrb[0].mxu0
    %3240 = vmatprep.mubr.f32.mxu0 0.0
    %3241 = vmatmul.mubr.f32.gmra.mrb[0].mxu0 %v592
    %v3242 = vpop.f32.mrb[0].mxu0
    %v3243 = vadd.f32 0.0, %v3242
    %v3244 = vpop.f32.mrb[0].mxu0
    %3245 = vdwg.mxu0
    %v3246 = vld [vmem:[%s669] sm:$0xff]
    %v3247 = vld [vmem:[%s669 + $0x8] sm:$0xff]
    %v3248 = vld [vmem:[%s669 + $0x10] sm:$0xff]
    %v3249 = vld [vmem:[%s669 + $0x18] sm:$0xff]
    %v3250 = vld [vmem:[%s669 + $0x20] sm:$0xff]
    %v3251 = vld [vmem:[%s669 + $0x28] sm:$0xff]
    %v3252 = vld [vmem:[%s669 + $0x30] sm:$0x3f]
    %v3253 = vld [vmem:[%s669 + $0x38] sm:$0x3f]
    %v3255 = vsel %vm106, %v3238, 0
    %v3258 = vsel %vm106, %v3243, 0
    %v3261 = vsel %vm217, %v3252, 0
    %v3264 = vsel %vm217, %v3253, 0
    %3266 = vmatprep.subr.mxu0 %v3247
    %3267 = vmatpush1.msra.mxu0 %v3246
    %3268 = vmatprep.subr.mxu0 %v3249
    %3269 = vmatpush1.msra.mxu0 %v3248
    %3270 = vmatprep.subr.mxu0 %v3251
    %3271 = vmatpush1.msra.mxu0 %v3250
    %3272 = vmatprep.subr.mxu0 %v3264
    %3273 = vmatpush1.msra.mxu0 %v3261
    %3274 = vmatprep.subr.mxu0 0.0
    %3275 = vmatpush1.msra.mxu0 0.0
    %3276 = vmatprep.subr.mxu0 0.0
    %3277 = vmatpush1.msra.mxu0 0.0
    %3278 = vmatprep.subr.mxu0 0.0
    %3279 = vmatpush1.msra.mxu0 0.0
    %3280 = vmatprep.subr.mxu0 0.0
    %3281 = vmatpush1.msra.mxu0 0.0
    %3282 = vmatprep.subr.mxu0 0.0
    %3283 = vmatpush1.msra.mxu0 0.0
    %3284 = vmatprep.subr.mxu0 0.0
    %3285 = vmatpush1.msra.mxu0 0.0
    %3286 = vmatprep.subr.mxu0 0.0
    %3287 = vmatpush1.msra.mxu0 0.0
    %3288 = vmatprep.subr.mxu0 0.0
    %3289 = vmatpush1.msra.mxu0 0.0
    %3290 = vmatprep.subr.mxu0 0.0
    %3291 = vmatpush1.msra.mxu0 0.0
    %3292 = vmatprep.subr.mxu0 0.0
    %3293 = vmatpush1.msra.mxu0 0.0
    %3294 = vmatprep.subr.mxu0 0.0
    %3295 = vmatpush1.msra.mxu0 0.0
    %3296 = vmatprep.subr.mxu0 0.0
    %3297 = vmatpush1.msra.mxu0 0.0
    %3298 = vmatprep.subr.mxu0 0.0
    %3299 = vmatpush1.msra.mxu0 0.0
    %3300 = vmatprep.subr.mxu0 0.0
    %3301 = vmatpush1.msra.mxu0 0.0
    %3302 = vmatprep.subr.mxu0 0.0
    %3303 = vmatpush1.msra.mxu0 0.0
    %3304 = vmatprep.subr.mxu0 0.0
    %3305 = vmatpush1.msra.mxu0 0.0
    %3306 = vmatprep.subr.mxu0 0.0
    %3307 = vmatpush1.msra.mxu0 0.0
    %3308 = vmatprep.subr.mxu0 0.0
    %3309 = vmatpush1.msra.mxu0 0.0
    %3310 = vmatprep.subr.mxu0 0.0
    %3311 = vmatpush1.msra.mxu0 0.0
    %3312 = vmatprep.subr.mxu0 0.0
    %3313 = vmatpush1.msra.mxu0 0.0
    %3314 = vmatprep.subr.mxu0 0.0
    %3315 = vmatpush1.msra.mxu0 0.0
    %3316 = vmatprep.subr.mxu0 0.0
    %3317 = vmatpush1.msra.mxu0 0.0
    %3318 = vmatprep.subr.mxu0 0.0
    %3319 = vmatpush1.msra.mxu0 0.0
    %3320 = vmatprep.subr.mxu0 0.0
    %3321 = vmatpush1.msra.mxu0 0.0
    %3322 = vmatprep.subr.mxu0 0.0
    %3323 = vmatpush1.msra.mxu0 0.0
    %3324 = vmatprep.subr.mxu0 0.0
    %3325 = vmatpush1.msra.mxu0 0.0
    %3326 = vmatprep.subr.mxu0 0.0
    %3327 = vmatpush1.msra.mxu0 0.0
    %3328 = vmatprep.subr.mxu0 0.0
    %3329 = vmatpush1.msra.mxu0 0.0
    %3330 = vmatprep.mubr.f32.mxu0 0.0
    %3331 = vmatmul.mubr.f32.gmra.mrb[0].mxu0 %v3255
    %v3332 = vpop.f32.mrb[0].mxu0
    %v3333 = vadd.f32 0.0, %v3332
    %v3334 = vpop.f32.mrb[0].mxu0
    %v3335 = vadd.f32 0.0, %v3334
    %3336 = vmatprep.mubr.f32.mxu0 0.0
    %3337 = vmatmul.mubr.f32.gmra.mrb[0].mxu0 %v3258
    %v3338 = vpop.f32.mrb[0].mxu0
    %v3339 = vadd.f32 0.0, %v3338
    %v3340 = vpop.f32.mrb[0].mxu0
    %v3341 = vadd.f32 0.0, %v3340
    %3342 = vdwg.mxu0
    %v3343 = vadd.f32 %v3161, %v3333
    %v3344 = vadd.f32 %v3163, %v3335
    %v3345 = vadd.f32 %v3167, %v3339
    %v3346 = vadd.f32 %v3169, %v3341
    %v3347 = vld [vmem:[%s2] sm:$0x3]
    %v3349 = vlaneseq
    %v3350 = vshrl.u32 %v3349, 7
    %v3351 = vsub.s32 0, %v3350
    %v3352 = vrot.slane %v3347, %v3351
    %v3353 = vlaneseq
    %v3354 = vshrl.u32 %v3353, 7
    %v3355 = vsub.s32 1, %v3354
    %v3356 = vrot.slane %v3347, %v3355
    %v3359 = vadd.f32 %v3343, %v3352
    %v3360 = vadd.f32 %v3344, %v3356
    %v3361 = vadd.f32 %v3345, %v3352
    %v3362 = vadd.f32 %v3346, %v3356
    %v3363 = vmax.f32 %v3359, 0.0
    %v3364 = vmax.f32 %v3360, 0.0
    %v3365 = vmax.f32 %v3361, 0.0
    %v3366 = vmax.f32 %v3362, 0.0
    %vm3371 = vcmask 1044480
    %v3372 = vrot.slane %v3363, 3
    %v3373 = vrot.slane %v3364, 3
    %v3374 = vrot.slane %v3365, 3
    %v3375 = vsel %vm3371, %v3372, %v3374
    %v3376 = vrot.slane %v3366, 3
    %v3377 = vsel %vm3371, %v3373, %v3376
    %3378 = vrot.lane.b32.xlu0 %v3372, 16
    %v3379 = vpop.permute.xlu0 %3378
    %3380 = vrot.lane.b32.xlu0 %v3373, 16
    %v3381 = vpop.permute.xlu0 %3380
    %3382 = vrot.lane.b32.xlu0 %v3375, 16
    %v3383 = vpop.permute.xlu0 %3382
    %3384 = vrot.lane.b32.xlu0 %v3377, 16
    %v3385 = vpop.permute.xlu0 %3384
    %v3386 = vsel %vm810, %v3379, %v3381
    %v3387 = vsel %vm810, %v3383, %v3385
    %vm3392 = vcmask 1047685
    %3393 = vst.msk [vmem:[#allocation3 + $0x10] sm:$0xe0] %vm3392, %v3379
    %vm3394 = vcmask 392197
    %3395 = vst.msk [vmem:[#allocation3 + $0x18] sm:$0xe0] %vm3394, %v3386
    %vm3396 = vcmask 1046656
    %3397 = vst.msk [vmem:[#allocation3 + $0x20] sm:$0x7f] %vm3396, %v3383
    %vm3398 = vcmask 391168
    %3399 = vst.msk [vmem:[#allocation3 + $0x28] sm:$0x7f] %vm3398, %v3387
    %v3400 = vld [vmem:[#allocation3 + $0x10] sm:$0xf0]
    %v3401 = vld [vmem:[#allocation3 + $0x18] sm:$0xf0]
    %v3402 = vld [vmem:[#allocation3 + $0x20] sm:$0xff]
    %v3403 = vld [vmem:[#allocation3 + $0x28] sm:$0xff]
    %v3408 = vrot.slane %v3400, 4
    %v3409 = vrot.slane %v3402, 4
    %v3410 = vsel %vm832, %v3408, %v3409
    %v3411 = vrot.slane %v3401, 4
    %v3412 = vrot.slane %v3403, 4
    %v3413 = vsel %vm832, %v3411, %v3412
    %v3416 = vsel %vm832, %v3409, 0
    %v3418 = vsel %vm832, %v3412, 0
    %3420 = vmatprep.subr.mxu0 %v3413
    %3421 = vmatpush1.msra.mxu0 %v3410
    %3422 = vmatprep.subr.mxu0 %v3418
    %3423 = vmatpush1.msra.mxu0 %v3416
    %3424 = vmatprep.subr.mxu0 0.0
    %3425 = vmatpush1.msra.mxu0 0.0
    %3426 = vmatprep.subr.mxu0 0.0
    %3427 = vmatpush1.msra.mxu0 0.0
    %3428 = vmatprep.subr.mxu0 0.0
    %3429 = vmatpush1.msra.mxu0 0.0
    %3430 = vmatprep.subr.mxu0 0.0
    %3431 = vmatpush1.msra.mxu0 0.0
    %3432 = vmatprep.subr.mxu0 0.0
    %3433 = vmatpush1.msra.mxu0 0.0
    %3434 = vmatprep.subr.mxu0 0.0
    %3435 = vmatpush1.msra.mxu0 0.0
    %3436 = vmatprep.subr.mxu0 0.0
    %3437 = vmatpush1.msra.mxu0 0.0
    %3438 = vmatprep.subr.mxu0 0.0
    %3439 = vmatpush1.msra.mxu0 0.0
    %3440 = vmatprep.subr.mxu0 0.0
    %3441 = vmatpush1.msra.mxu0 0.0
    %3442 = vmatprep.subr.mxu0 0.0
    %3443 = vmatpush1.msra.mxu0 0.0
    %3444 = vmatprep.subr.mxu0 0.0
    %3445 = vmatpush1.msra.mxu0 0.0
    %3446 = vmatprep.subr.mxu0 0.0
    %3447 = vmatpush1.msra.mxu0 0.0
    %3448 = vmatprep.subr.mxu0 0.0
    %3449 = vmatpush1.msra.mxu0 0.0
    %3450 = vmatprep.subr.mxu0 0.0
    %3451 = vmatpush1.msra.mxu0 0.0
    %3452 = vmatprep.subr.mxu0 0.0
    %3453 = vmatpush1.msra.mxu0 0.0
    %3454 = vmatprep.subr.mxu0 0.0
    %3455 = vmatpush1.msra.mxu0 0.0
    %3456 = vmatprep.subr.mxu0 0.0
    %3457 = vmatpush1.msra.mxu0 0.0
    %3458 = vmatprep.subr.mxu0 0.0
    %3459 = vmatpush1.msra.mxu0 0.0
    %3460 = vmatprep.subr.mxu0 0.0
    %3461 = vmatpush1.msra.mxu0 0.0
    %3462 = vmatprep.subr.mxu0 0.0
    %3463 = vmatpush1.msra.mxu0 0.0
    %3464 = vmatprep.subr.mxu0 0.0
    %3465 = vmatpush1.msra.mxu0 0.0
    %3466 = vmatprep.subr.mxu0 0.0
    %3467 = vmatpush1.msra.mxu0 0.0
    %3468 = vmatprep.subr.mxu0 0.0
    %3469 = vmatpush1.msra.mxu0 0.0
    %3470 = vmatprep.subr.mxu0 0.0
    %3471 = vmatpush1.msra.mxu0 0.0
    %3472 = vmatprep.subr.mxu0 0.0
    %3473 = vmatpush1.msra.mxu0 0.0
    %3474 = vmatprep.subr.mxu0 0.0
    %3475 = vmatpush1.msra.mxu0 0.0
    %3476 = vmatprep.subr.mxu0 0.0
    %3477 = vmatpush1.msra.mxu0 0.0
    %3478 = vmatprep.subr.mxu0 0.0
    %3479 = vmatpush1.msra.mxu0 0.0
    %3480 = vmatprep.subr.mxu0 0.0
    %3481 = vmatpush1.msra.mxu0 0.0
    %3482 = vmatprep.subr.mxu0 0.0
    %3483 = vmatpush1.msra.mxu0 0.0
    %3484 = vmatprep.mubr.f32.mxu0 0.0
    %3485 = vmatmul.mubr.f32.gmra.mrb[0].mxu0 %v830
    %v3486 = vpop.f32.mrb[0].mxu0
    %v3487 = vadd.f32 0.0, %v3486
    %v3488 = vpop.f32.mrb[0].mxu0
    %v3489 = vadd.f32 0.0, %v3488
    %3490 = vdwg.mxu0
    %v3491 = vld [vmem:[%s3] sm:$0xff]
    %v3492 = vld [vmem:[%s3 + $0x8] sm:$0xff]
    %v3493 = vld [vmem:[%s3 + $0x10] sm:$0xff]
    %v3494 = vld [vmem:[%s3 + $0x18] sm:$0xff]
    %v3495 = vld [vmem:[%s3 + $0x20] sm:$0xff]
    %v3496 = vld [vmem:[%s3 + $0x28] sm:$0xff]
    %v3497 = vld [vmem:[%s3 + $0x30] sm:$0xff]
    %v3498 = vld [vmem:[%s3 + $0x38] sm:$0xff]
    %v3499 = vld [vmem:[%s3 + $0x40] sm:$0xff]
    %v3500 = vld [vmem:[%s3 + $0x48] sm:$0xff]
    %v3501 = vld [vmem:[%s3 + $0x50] sm:$0xff]
    %v3502 = vld [vmem:[%s3 + $0x58] sm:$0xff]
    %v3503 = vld [vmem:[%s3 + $0x60] sm:$0xff]
    %v3504 = vld [vmem:[%s3 + $0x68] sm:$0xff]
    %v3505 = vld [vmem:[%s3 + $0x70] sm:$0xff]
    %v3506 = vld [vmem:[%s3 + $0x78] sm:$0xff]
    %v3507 = vld [vmem:[%s3 + $0x80] sm:$0xff]
    %v3508 = vld [vmem:[%s3 + $0x88] sm:$0xff]
    %v3509 = vld [vmem:[%s3 + $0x90] sm:$0xff]
    %v3510 = vld [vmem:[%s3 + $0x98] sm:$0xff]
    %v3511 = vld [vmem:[%s3 + $0xa0] sm:$0xff]
    %v3512 = vld [vmem:[%s3 + $0xa8] sm:$0xff]
    %v3513 = vld [vmem:[%s3 + $0xb0] sm:$0xff]
    %v3514 = vld [vmem:[%s3 + $0xb8] sm:$0xff]
    %3515 = vmatprep.subr.mxu0 %v3413
    %3516 = vmatpush1.msra.mxu0 %v3410
    %3517 = vmatprep.subr.mxu0 %v3418
    %3518 = vmatpush1.msra.mxu0 %v3416
    %3519 = vmatprep.subr.mxu0 0.0
    %3520 = vmatpush1.msra.mxu0 0.0
    %3521 = vmatprep.subr.mxu0 0.0
    %3522 = vmatpush1.msra.mxu0 0.0
    %3523 = vmatprep.subr.mxu0 0.0
    %3524 = vmatpush1.msra.mxu0 0.0
    %3525 = vmatprep.subr.mxu0 0.0
    %3526 = vmatpush1.msra.mxu0 0.0
    %3527 = vmatprep.subr.mxu0 0.0
    %3528 = vmatpush1.msra.mxu0 0.0
    %3529 = vmatprep.subr.mxu0 0.0
    %3530 = vmatpush1.msra.mxu0 0.0
    %3531 = vmatprep.subr.mxu0 0.0
    %3532 = vmatpush1.msra.mxu0 0.0
    %3533 = vmatprep.subr.mxu0 0.0
    %3534 = vmatpush1.msra.mxu0 0.0
    %3535 = vmatprep.subr.mxu0 0.0
    %3536 = vmatpush1.msra.mxu0 0.0
    %3537 = vmatprep.subr.mxu0 0.0
    %3538 = vmatpush1.msra.mxu0 0.0
    %3539 = vmatprep.subr.mxu0 0.0
    %3540 = vmatpush1.msra.mxu0 0.0
    %3541 = vmatprep.subr.mxu0 0.0
    %3542 = vmatpush1.msra.mxu0 0.0
    %3543 = vmatprep.subr.mxu0 0.0
    %3544 = vmatpush1.msra.mxu0 0.0
    %3545 = vmatprep.subr.mxu0 0.0
    %3546 = vmatpush1.msra.mxu0 0.0
    %3547 = vmatprep.subr.mxu0 0.0
    %3548 = vmatpush1.msra.mxu0 0.0
    %3549 = vmatprep.subr.mxu0 0.0
    %3550 = vmatpush1.msra.mxu0 0.0
    %3551 = vmatprep.subr.mxu0 0.0
    %3552 = vmatpush1.msra.mxu0 0.0
    %3553 = vmatprep.subr.mxu0 0.0
    %3554 = vmatpush1.msra.mxu0 0.0
    %3555 = vmatprep.subr.mxu0 0.0
    %3556 = vmatpush1.msra.mxu0 0.0
    %3557 = vmatprep.subr.mxu0 0.0
    %3558 = vmatpush1.msra.mxu0 0.0
    %3559 = vmatprep.subr.mxu0 0.0
    %3560 = vmatpush1.msra.mxu0 0.0
    %3561 = vmatprep.subr.mxu0 0.0
    %3562 = vmatpush1.msra.mxu0 0.0
    %3563 = vmatprep.subr.mxu0 0.0
    %3564 = vmatpush1.msra.mxu0 0.0
    %3565 = vmatprep.subr.mxu0 0.0
    %3566 = vmatpush1.msra.mxu0 0.0
    %3567 = vmatprep.subr.mxu0 0.0
    %3568 = vmatpush1.msra.mxu0 0.0
    %3569 = vmatprep.subr.mxu0 0.0
    %3570 = vmatpush1.msra.mxu0 0.0
    %3571 = vmatprep.subr.mxu0 0.0
    %3572 = vmatpush1.msra.mxu0 0.0
    %3573 = vmatprep.subr.mxu0 0.0
    %3574 = vmatpush1.msra.mxu0 0.0
    %3575 = vmatprep.subr.mxu0 0.0
    %3576 = vmatpush1.msra.mxu0 0.0
    %3577 = vmatprep.subr.mxu0 0.0
    %3578 = vmatpush1.msra.mxu0 0.0
    %3579 = vmatprep.mubr.f32.mxu0 0.0
    %3580 = vmatmul.mubr.f32.gmra.mrb[0].mxu0 %v934
    %v3581 = vpop.f32.mrb[0].mxu0
    %v3582 = vadd.f32 0.0, %v3581
    %v3583 = vpop.f32.mrb[0].mxu0
    %v3584 = vadd.f32 0.0, %v3583
    %3585 = vdwg.mxu0
    %v3586 = vld [vmem:[%s1007] sm:$0xff]
    %v3587 = vld [vmem:[%s1007 + $0x8] sm:$0xff]
    %v3588 = vld [vmem:[%s1007 + $0x10] sm:$0xff]
    %v3589 = vld [vmem:[%s1007 + $0x18] sm:$0xff]
    %v3590 = vld [vmem:[%s1007 + $0x20] sm:$0xff]
    %v3591 = vld [vmem:[%s1007 + $0x28] sm:$0xff]
    %v3592 = vld [vmem:[%s1007 + $0x30] sm:$0xff]
    %v3593 = vld [vmem:[%s1007 + $0x38] sm:$0xff]
    %v3594 = vld [vmem:[%s1007 + $0x40] sm:$0xff]
    %v3595 = vld [vmem:[%s1007 + $0x48] sm:$0xff]
    %v3596 = vld [vmem:[%s1007 + $0x50] sm:$0xff]
    %v3597 = vld [vmem:[%s1007 + $0x58] sm:$0xff]
    %v3598 = vld [vmem:[%s1007 + $0x60] sm:$0xff]
    %v3599 = vld [vmem:[%s1007 + $0x68] sm:$0xff]
    %v3600 = vld [vmem:[%s1007 + $0x70] sm:$0xff]
    %v3601 = vld [vmem:[%s1007 + $0x78] sm:$0xff]
    %v3602 = vld [vmem:[%s1007 + $0x80] sm:$0xff]
    %v3603 = vld [vmem:[%s1007 + $0x88] sm:$0xff]
    %v3604 = vld [vmem:[%s1007 + $0x90] sm:$0xff]
    %v3605 = vld [vmem:[%s1007 + $0x98] sm:$0xff]
    %v3606 = vld [vmem:[%s1007 + $0xa0] sm:$0xff]
    %v3607 = vld [vmem:[%s1007 + $0xa8] sm:$0xff]
    %v3608 = vld [vmem:[%s1007 + $0xb0] sm:$0xff]
    %v3609 = vld [vmem:[%s1007 + $0xb8] sm:$0xff]
    %v3611 = vsel %vm117, %v3584, 0
    %3613 = vmatprep.subr.mxu0 0.0
    %3614 = vmatpush1.msra.mxu0 %v3586
    %3615 = vmatprep.subr.mxu0 0.0
    %3616 = vmatpush1.msra.mxu0 %v3587
    %3617 = vmatprep.subr.mxu0 0.0
    %3618 = vmatpush1.msra.mxu0 %v3588
    %3619 = vmatprep.subr.mxu0 0.0
    %3620 = vmatpush1.msra.mxu0 %v3589
    %3621 = vmatprep.subr.mxu0 0.0
    %3622 = vmatpush1.msra.mxu0 %v3590
    %3623 = vmatprep.subr.mxu0 0.0
    %3624 = vmatpush1.msra.mxu0 %v3591
    %3625 = vmatprep.subr.mxu0 0.0
    %3626 = vmatpush1.msra.mxu0 %v3592
    %3627 = vmatprep.subr.mxu0 0.0
    %3628 = vmatpush1.msra.mxu0 %v3593
    %3629 = vmatprep.subr.mxu0 0.0
    %3630 = vmatpush1.msra.mxu0 %v3594
    %3631 = vmatprep.subr.mxu0 0.0
    %3632 = vmatpush1.msra.mxu0 %v3595
    %3633 = vmatprep.subr.mxu0 0.0
    %3634 = vmatpush1.msra.mxu0 %v3596
    %3635 = vmatprep.subr.mxu0 0.0
    %3636 = vmatpush1.msra.mxu0 %v3597
    %3637 = vmatprep.subr.mxu0 0.0
    %3638 = vmatpush1.msra.mxu0 %v3598
    %3639 = vmatprep.subr.mxu0 0.0
    %3640 = vmatpush1.msra.mxu0 %v3599
    %3641 = vmatprep.subr.mxu0 0.0
    %3642 = vmatpush1.msra.mxu0 %v3600
    %3643 = vmatprep.subr.mxu0 0.0
    %3644 = vmatpush1.msra.mxu0 %v3601
    %3645 = vmatprep.subr.mxu0 0.0
    %3646 = vmatpush1.msra.mxu0 %v3602
    %3647 = vmatprep.subr.mxu0 0.0
    %3648 = vmatpush1.msra.mxu0 %v3603
    %3649 = vmatprep.subr.mxu0 0.0
    %3650 = vmatpush1.msra.mxu0 %v3604
    %3651 = vmatprep.subr.mxu0 0.0
    %3652 = vmatpush1.msra.mxu0 %v3605
    %3653 = vmatprep.subr.mxu0 0.0
    %3654 = vmatpush1.msra.mxu0 %v3606
    %3655 = vmatprep.subr.mxu0 0.0
    %3656 = vmatpush1.msra.mxu0 %v3607
    %3657 = vmatprep.subr.mxu0 0.0
    %3658 = vmatpush1.msra.mxu0 %v3608
    %3659 = vmatprep.subr.mxu0 0.0
    %3660 = vmatpush1.msra.mxu0 %v3609
    %3661 = vmatprep.subr.mxu0 0.0
    %3662 = vmatpush1.msra.mxu0 0.0
    %3663 = vmatprep.subr.mxu0 0.0
    %3664 = vmatpush1.msra.mxu0 0.0
    %3665 = vmatprep.subr.mxu0 0.0
    %3666 = vmatpush1.msra.mxu0 0.0
    %3667 = vmatprep.subr.mxu0 0.0
    %3668 = vmatpush1.msra.mxu0 0.0
    %3669 = vmatprep.subr.mxu0 0.0
    %3670 = vmatpush1.msra.mxu0 0.0
    %3671 = vmatprep.subr.mxu0 0.0
    %3672 = vmatpush1.msra.mxu0 0.0
    %3673 = vmatprep.subr.mxu0 0.0
    %3674 = vmatpush1.msra.mxu0 0.0
    %3675 = vmatprep.subr.mxu0 0.0
    %3676 = vmatpush1.msra.mxu0 0.0
    %3677 = vmatprep.mubr.f32.mxu0 %v3611
    %3678 = vmatmul.mubr.f32.gmra.mrb[0].mxu0 %v3582
    %v3679 = vpop.f32.mrb[0].mxu0
    %v3680 = vadd.f32 0.0, %v3679
    %v3681 = vpop.f32.mrb[0].mxu0
    %3682 = vdwg.mxu0
    %v3684 = vsel %vm117, %v3489, 0
    %3686 = vmatprep.subr.mxu0 0.0
    %3687 = vmatpush1.msra.mxu0 %v3491
    %3688 = vmatprep.subr.mxu0 0.0
    %3689 = vmatpush1.msra.mxu0 %v3492
    %3690 = vmatprep.subr.mxu0 0.0
    %3691 = vmatpush1.msra.mxu0 %v3493
    %3692 = vmatprep.subr.mxu0 0.0
    %3693 = vmatpush1.msra.mxu0 %v3494
    %3694 = vmatprep.subr.mxu0 0.0
    %3695 = vmatpush1.msra.mxu0 %v3495
    %3696 = vmatprep.subr.mxu0 0.0
    %3697 = vmatpush1.msra.mxu0 %v3496
    %3698 = vmatprep.subr.mxu0 0.0
    %3699 = vmatpush1.msra.mxu0 %v3497
    %3700 = vmatprep.subr.mxu0 0.0
    %3701 = vmatpush1.msra.mxu0 %v3498
    %3702 = vmatprep.subr.mxu0 0.0
    %3703 = vmatpush1.msra.mxu0 %v3499
    %3704 = vmatprep.subr.mxu0 0.0
    %3705 = vmatpush1.msra.mxu0 %v3500
    %3706 = vmatprep.subr.mxu0 0.0
    %3707 = vmatpush1.msra.mxu0 %v3501
    %3708 = vmatprep.subr.mxu0 0.0
    %3709 = vmatpush1.msra.mxu0 %v3502
    %3710 = vmatprep.subr.mxu0 0.0
    %3711 = vmatpush1.msra.mxu0 %v3503
    %3712 = vmatprep.subr.mxu0 0.0
    %3713 = vmatpush1.msra.mxu0 %v3504
    %3714 = vmatprep.subr.mxu0 0.0
    %3715 = vmatpush1.msra.mxu0 %v3505
    %3716 = vmatprep.subr.mxu0 0.0
    %3717 = vmatpush1.msra.mxu0 %v3506
    %3718 = vmatprep.subr.mxu0 0.0
    %3719 = vmatpush1.msra.mxu0 %v3507
    %3720 = vmatprep.subr.mxu0 0.0
    %3721 = vmatpush1.msra.mxu0 %v3508
    %3722 = vmatprep.subr.mxu0 0.0
    %3723 = vmatpush1.msra.mxu0 %v3509
    %3724 = vmatprep.subr.mxu0 0.0
    %3725 = vmatpush1.msra.mxu0 %v3510
    %3726 = vmatprep.subr.mxu0 0.0
    %3727 = vmatpush1.msra.mxu0 %v3511
    %3728 = vmatprep.subr.mxu0 0.0
    %3729 = vmatpush1.msra.mxu0 %v3512
    %3730 = vmatprep.subr.mxu0 0.0
    %3731 = vmatpush1.msra.mxu0 %v3513
    %3732 = vmatprep.subr.mxu0 0.0
    %3733 = vmatpush1.msra.mxu0 %v3514
    %3734 = vmatprep.subr.mxu0 0.0
    %3735 = vmatpush1.msra.mxu0 0.0
    %3736 = vmatprep.subr.mxu0 0.0
    %3737 = vmatpush1.msra.mxu0 0.0
    %3738 = vmatprep.subr.mxu0 0.0
    %3739 = vmatpush1.msra.mxu0 0.0
    %3740 = vmatprep.subr.mxu0 0.0
    %3741 = vmatpush1.msra.mxu0 0.0
    %3742 = vmatprep.subr.mxu0 0.0
    %3743 = vmatpush1.msra.mxu0 0.0
    %3744 = vmatprep.subr.mxu0 0.0
    %3745 = vmatpush1.msra.mxu0 0.0
    %3746 = vmatprep.subr.mxu0 0.0
    %3747 = vmatpush1.msra.mxu0 0.0
    %3748 = vmatprep.subr.mxu0 0.0
    %3749 = vmatpush1.msra.mxu0 0.0
    %3750 = vmatprep.mubr.f32.mxu0 %v3684
    %3751 = vmatmul.mubr.f32.gmra.mrb[0].mxu0 %v3487
    %v3752 = vpop.f32.mrb[0].mxu0
    %v3753 = vadd.f32 %v3680, %v3752
    %v3754 = vpop.f32.mrb[0].mxu0
    %3755 = vdwg.mxu0
    %3756 = vmatprep.subr.mxu0 %v3413
    %3757 = vmatpush1.msra.mxu0 %v3410
    %3758 = vmatprep.subr.mxu0 %v3418
    %3759 = vmatpush1.msra.mxu0 %v3416
    %3760 = vmatprep.subr.mxu0 0.0
    %3761 = vmatpush1.msra.mxu0 0.0
    %3762 = vmatprep.subr.mxu0 0.0
    %3763 = vmatpush1.msra.mxu0 0.0
    %3764 = vmatprep.subr.mxu0 0.0
    %3765 = vmatpush1.msra.mxu0 0.0
    %3766 = vmatprep.subr.mxu0 0.0
    %3767 = vmatpush1.msra.mxu0 0.0
    %3768 = vmatprep.subr.mxu0 0.0
    %3769 = vmatpush1.msra.mxu0 0.0
    %3770 = vmatprep.subr.mxu0 0.0
    %3771 = vmatpush1.msra.mxu0 0.0
    %3772 = vmatprep.subr.mxu0 0.0
    %3773 = vmatpush1.msra.mxu0 0.0
    %3774 = vmatprep.subr.mxu0 0.0
    %3775 = vmatpush1.msra.mxu0 0.0
    %3776 = vmatprep.subr.mxu0 0.0
    %3777 = vmatpush1.msra.mxu0 0.0
    %3778 = vmatprep.subr.mxu0 0.0
    %3779 = vmatpush1.msra.mxu0 0.0
    %3780 = vmatprep.subr.mxu0 0.0
    %3781 = vmatpush1.msra.mxu0 0.0
    %3782 = vmatprep.subr.mxu0 0.0
    %3783 = vmatpush1.msra.mxu0 0.0
    %3784 = vmatprep.subr.mxu0 0.0
    %3785 = vmatpush1.msra.mxu0 0.0
    %3786 = vmatprep.subr.mxu0 0.0
    %3787 = vmatpush1.msra.mxu0 0.0
    %3788 = vmatprep.subr.mxu0 0.0
    %3789 = vmatpush1.msra.mxu0 0.0
    %3790 = vmatprep.subr.mxu0 0.0
    %3791 = vmatpush1.msra.mxu0 0.0
    %3792 = vmatprep.subr.mxu0 0.0
    %3793 = vmatpush1.msra.mxu0 0.0
    %3794 = vmatprep.subr.mxu0 0.0
    %3795 = vmatpush1.msra.mxu0 0.0
    %3796 = vmatprep.subr.mxu0 0.0
    %3797 = vmatpush1.msra.mxu0 0.0
    %3798 = vmatprep.subr.mxu0 0.0
    %3799 = vmatpush1.msra.mxu0 0.0
    %3800 = vmatprep.subr.mxu0 0.0
    %3801 = vmatpush1.msra.mxu0 0.0
    %3802 = vmatprep.subr.mxu0 0.0
    %3803 = vmatpush1.msra.mxu0 0.0
    %3804 = vmatprep.subr.mxu0 0.0
    %3805 = vmatpush1.msra.mxu0 0.0
    %3806 = vmatprep.subr.mxu0 0.0
    %3807 = vmatpush1.msra.mxu0 0.0
    %3808 = vmatprep.subr.mxu0 0.0
    %3809 = vmatpush1.msra.mxu0 0.0
    %3810 = vmatprep.subr.mxu0 0.0
    %3811 = vmatpush1.msra.mxu0 0.0
    %3812 = vmatprep.subr.mxu0 0.0
    %3813 = vmatpush1.msra.mxu0 0.0
    %3814 = vmatprep.subr.mxu0 0.0
    %3815 = vmatpush1.msra.mxu0 0.0
    %3816 = vmatprep.subr.mxu0 0.0
    %3817 = vmatpush1.msra.mxu0 0.0
    %3818 = vmatprep.subr.mxu0 0.0
    %3819 = vmatpush1.msra.mxu0 0.0
    %3820 = vmatprep.mubr.f32.mxu0 0.0
    %3821 = vmatmul.mubr.f32.gmra.mrb[0].mxu0 %v1178
    %v3822 = vpop.f32.mrb[0].mxu0
    %v3823 = vadd.f32 0.0, %v3822
    %v3824 = vpop.f32.mrb[0].mxu0
    %v3825 = vadd.f32 0.0, %v3824
    %3826 = vdwg.mxu0
    %v3827 = vld [vmem:[%s1251] sm:$0xff]
    %v3828 = vld [vmem:[%s1251 + $0x8] sm:$0xff]
    %v3829 = vld [vmem:[%s1251 + $0x10] sm:$0xff]
    %v3830 = vld [vmem:[%s1251 + $0x18] sm:$0xff]
    %v3831 = vld [vmem:[%s1251 + $0x20] sm:$0xff]
    %v3832 = vld [vmem:[%s1251 + $0x28] sm:$0xff]
    %v3833 = vld [vmem:[%s1251 + $0x30] sm:$0xff]
    %v3834 = vld [vmem:[%s1251 + $0x38] sm:$0xff]
    %v3835 = vld [vmem:[%s1251 + $0x40] sm:$0xff]
    %v3836 = vld [vmem:[%s1251 + $0x48] sm:$0xff]
    %v3837 = vld [vmem:[%s1251 + $0x50] sm:$0xff]
    %v3838 = vld [vmem:[%s1251 + $0x58] sm:$0xff]
    %v3839 = vld [vmem:[%s1251 + $0x60] sm:$0xff]
    %v3840 = vld [vmem:[%s1251 + $0x68] sm:$0xff]
    %v3841 = vld [vmem:[%s1251 + $0x70] sm:$0xff]
    %v3842 = vld [vmem:[%s1251 + $0x78] sm:$0xff]
    %v3843 = vld [vmem:[%s1251 + $0x80] sm:$0xff]
    %v3844 = vld [vmem:[%s1251 + $0x88] sm:$0xff]
    %v3845 = vld [vmem:[%s1251 + $0x90] sm:$0xff]
    %v3846 = vld [vmem:[%s1251 + $0x98] sm:$0xff]
    %v3847 = vld [vmem:[%s1251 + $0xa0] sm:$0xff]
    %v3848 = vld [vmem:[%s1251 + $0xa8] sm:$0xff]
    %v3849 = vld [vmem:[%s1251 + $0xb0] sm:$0xff]
    %v3850 = vld [vmem:[%s1251 + $0xb8] sm:$0xff]
    %v3852 = vsel %vm117, %v3825, 0
    %3854 = vmatprep.subr.mxu0 0.0
    %3855 = vmatpush1.msra.mxu0 %v3827
    %3856 = vmatprep.subr.mxu0 0.0
    %3857 = vmatpush1.msra.mxu0 %v3828
    %3858 = vmatprep.subr.mxu0 0.0
    %3859 = vmatpush1.msra.mxu0 %v3829
    %3860 = vmatprep.subr.mxu0 0.0
    %3861 = vmatpush1.msra.mxu0 %v3830
    %3862 = vmatprep.subr.mxu0 0.0
    %3863 = vmatpush1.msra.mxu0 %v3831
    %3864 = vmatprep.subr.mxu0 0.0
    %3865 = vmatpush1.msra.mxu0 %v3832
    %3866 = vmatprep.subr.mxu0 0.0
    %3867 = vmatpush1.msra.mxu0 %v3833
    %3868 = vmatprep.subr.mxu0 0.0
    %3869 = vmatpush1.msra.mxu0 %v3834
    %3870 = vmatprep.subr.mxu0 0.0
    %3871 = vmatpush1.msra.mxu0 %v3835
    %3872 = vmatprep.subr.mxu0 0.0
    %3873 = vmatpush1.msra.mxu0 %v3836
    %3874 = vmatprep.subr.mxu0 0.0
    %3875 = vmatpush1.msra.mxu0 %v3837
    %3876 = vmatprep.subr.mxu0 0.0
    %3877 = vmatpush1.msra.mxu0 %v3838
    %3878 = vmatprep.subr.mxu0 0.0
    %3879 = vmatpush1.msra.mxu0 %v3839
    %3880 = vmatprep.subr.mxu0 0.0
    %3881 = vmatpush1.msra.mxu0 %v3840
    %3882 = vmatprep.subr.mxu0 0.0
    %3883 = vmatpush1.msra.mxu0 %v3841
    %3884 = vmatprep.subr.mxu0 0.0
    %3885 = vmatpush1.msra.mxu0 %v3842
    %3886 = vmatprep.subr.mxu0 0.0
    %3887 = vmatpush1.msra.mxu0 %v3843
    %3888 = vmatprep.subr.mxu0 0.0
    %3889 = vmatpush1.msra.mxu0 %v3844
    %3890 = vmatprep.subr.mxu0 0.0
    %3891 = vmatpush1.msra.mxu0 %v3845
    %3892 = vmatprep.subr.mxu0 0.0
    %3893 = vmatpush1.msra.mxu0 %v3846
    %3894 = vmatprep.subr.mxu0 0.0
    %3895 = vmatpush1.msra.mxu0 %v3847
    %3896 = vmatprep.subr.mxu0 0.0
    %3897 = vmatpush1.msra.mxu0 %v3848
    %3898 = vmatprep.subr.mxu0 0.0
    %3899 = vmatpush1.msra.mxu0 %v3849
    %3900 = vmatprep.subr.mxu0 0.0
    %3901 = vmatpush1.msra.mxu0 %v3850
    %3902 = vmatprep.subr.mxu0 0.0
    %3903 = vmatpush1.msra.mxu0 0.0
    %3904 = vmatprep.subr.mxu0 0.0
    %3905 = vmatpush1.msra.mxu0 0.0
    %3906 = vmatprep.subr.mxu0 0.0
    %3907 = vmatpush1.msra.mxu0 0.0
    %3908 = vmatprep.subr.mxu0 0.0
    %3909 = vmatpush1.msra.mxu0 0.0
    %3910 = vmatprep.subr.mxu0 0.0
    %3911 = vmatpush1.msra.mxu0 0.0
    %3912 = vmatprep.subr.mxu0 0.0
    %3913 = vmatpush1.msra.mxu0 0.0
    %3914 = vmatprep.subr.mxu0 0.0
    %3915 = vmatpush1.msra.mxu0 0.0
    %3916 = vmatprep.subr.mxu0 0.0
    %3917 = vmatpush1.msra.mxu0 0.0
    %3918 = vmatprep.mubr.f32.mxu0 %v3852
    %3919 = vmatmul.mubr.f32.gmra.mrb[0].mxu0 %v3823
    %v3920 = vpop.f32.mrb[0].mxu0
    %v3921 = vadd.f32 0.0, %v3920
    %v3922 = vpop.f32.mrb[0].mxu0
    %3923 = vdwg.mxu0
    %v3924 = vadd.f32 %v3753, %v3921
    %v3925 = vld [vmem:[#allocation10] sm:$0x1]
    %v3927 = vlaneseq
    %v3928 = vshrl.u32 %v3927, 7
    %v3929 = vsub.s32 0, %v3928
    %v3930 = vrot.slane %v3925, %v3929
    %v3932 = vadd.f32 %v3924, %v3930
    %v3933 = vmax.f32 %v3932, 0.0
    %v3935 = vrot.slane %v3933, 1
    %3936 = vrot.lane.b32.xlu0 %v3935, 32
    %v3937 = vpop.permute.xlu0 %3936
    %vm3939 = vcmask 1047815
    %3940 = vst.msk [vmem:[#allocation4] sm:$0x80] %vm3939, %v3937
    %vm3941 = vcmask 261127
    %3942 = vst.msk [vmem:[#allocation4 + $0x8] sm:$0x80] %vm3941, %v3937
    %vm3943 = vcmask 1042688
    %3944 = vst.msk [vmem:[#allocation4 + $0x10] sm:$0x7] %vm3943, %v3937
    %vm3945 = vcmask 256000
    %3946 = vst.msk [vmem:[#allocation4 + $0x18] sm:$0x7] %vm3945, %v3937
    %v3947 = vld [vmem:[#allocation4] sm:$0xc0]
    %v3948 = vld [vmem:[#allocation4 + $0x8] sm:$0xc0]
    %v3949 = vld [vmem:[#allocation4 + $0x10] sm:$0xf]
    %v3950 = vld [vmem:[#allocation4 + $0x18] sm:$0xf]
    %vm3955 = vcmask 1041408
    %v3956 = vrot.slane %v3947, 6
    %v3957 = vrot.slane %v3949, 6
    %v3958 = vsel %vm3955, %v3956, %v3957
    %v3959 = vrot.slane %v3948, 6
    %v3960 = vrot.slane %v3950, 6
    %v3961 = vsel %vm3955, %v3959, %v3960
    %v3962 = vsel %vm217, %v3958, 0
    %v3964 = vsel %vm217, %v3961, 0
    %3966 = vmatprep.subr.mxu0 %v3964
    %3967 = vmatpush1.msra.mxu0 %v3962
    %3968 = vmatprep.subr.mxu0 0.0
    %3969 = vmatpush1.msra.mxu0 0.0
    %3970 = vmatprep.subr.mxu0 0.0
    %3971 = vmatpush1.msra.mxu0 0.0
    %3972 = vmatprep.subr.mxu0 0.0
    %3973 = vmatpush1.msra.mxu0 0.0
    %3974 = vmatprep.subr.mxu0 0.0
    %3975 = vmatpush1.msra.mxu0 0.0
    %3976 = vmatprep.subr.mxu0 0.0
    %3977 = vmatpush1.msra.mxu0 0.0
    %3978 = vmatprep.subr.mxu0 0.0
    %3979 = vmatpush1.msra.mxu0 0.0
    %3980 = vmatprep.subr.mxu0 0.0
    %3981 = vmatpush1.msra.mxu0 0.0
    %3982 = vmatprep.subr.mxu0 0.0
    %3983 = vmatpush1.msra.mxu0 0.0
    %3984 = vmatprep.subr.mxu0 0.0
    %3985 = vmatpush1.msra.mxu0 0.0
    %3986 = vmatprep.subr.mxu0 0.0
    %3987 = vmatpush1.msra.mxu0 0.0
    %3988 = vmatprep.subr.mxu0 0.0
    %3989 = vmatpush1.msra.mxu0 0.0
    %3990 = vmatprep.subr.mxu0 0.0
    %3991 = vmatpush1.msra.mxu0 0.0
    %3992 = vmatprep.subr.mxu0 0.0
    %3993 = vmatpush1.msra.mxu0 0.0
    %3994 = vmatprep.subr.mxu0 0.0
    %3995 = vmatpush1.msra.mxu0 0.0
    %3996 = vmatprep.subr.mxu0 0.0
    %3997 = vmatpush1.msra.mxu0 0.0
    %3998 = vmatprep.subr.mxu0 0.0
    %3999 = vmatpush1.msra.mxu0 0.0
    %4000 = vmatprep.subr.mxu0 0.0
    %4001 = vmatpush1.msra.mxu0 0.0
    %4002 = vmatprep.subr.mxu0 0.0
    %4003 = vmatpush1.msra.mxu0 0.0
    %4004 = vmatprep.subr.mxu0 0.0
    %4005 = vmatpush1.msra.mxu0 0.0
    %4006 = vmatprep.subr.mxu0 0.0
    %4007 = vmatpush1.msra.mxu0 0.0
    %4008 = vmatprep.subr.mxu0 0.0
    %4009 = vmatpush1.msra.mxu0 0.0
    %4010 = vmatprep.subr.mxu0 0.0
    %4011 = vmatpush1.msra.mxu0 0.0
    %4012 = vmatprep.subr.mxu0 0.0
    %4013 = vmatpush1.msra.mxu0 0.0
    %4014 = vmatprep.subr.mxu0 0.0
    %4015 = vmatpush1.msra.mxu0 0.0
    %4016 = vmatprep.subr.mxu0 0.0
    %4017 = vmatpush1.msra.mxu0 0.0
    %4018 = vmatprep.subr.mxu0 0.0
    %4019 = vmatpush1.msra.mxu0 0.0
    %4020 = vmatprep.subr.mxu0 0.0
    %4021 = vmatpush1.msra.mxu0 0.0
    %4022 = vmatprep.subr.mxu0 0.0
    %4023 = vmatpush1.msra.mxu0 0.0
    %4024 = vmatprep.subr.mxu0 0.0
    %4025 = vmatpush1.msra.mxu0 0.0
    %4026 = vmatprep.subr.mxu0 0.0
    %4027 = vmatpush1.msra.mxu0 0.0
    %4028 = vmatprep.subr.mxu0 0.0
    %4029 = vmatpush1.msra.mxu0 0.0
    %4030 = vmatprep.mubr.f32.mxu0 0.0
    %4031 = vmatmul.mubr.f32.gmra.mrb[0].mxu0 %v1376
    %v4032 = vpop.f32.mrb[0].mxu0
    %v4033 = vadd.f32 0.0, %v4032
    %v4034 = vpop.f32.mrb[0].mxu0
    %v4035 = vadd.f32 0.0, %v4034
    %4036 = vdwg.mxu0
    %v4037 = vld [vmem:[%s5] sm:$0xff]
    %v4038 = vld [vmem:[%s5 + $0x8] sm:$0xff]
    %v4039 = vld [vmem:[%s5 + $0x10] sm:$0xff]
    %v4040 = vld [vmem:[%s5 + $0x18] sm:$0xff]
    %v4041 = vld [vmem:[%s5 + $0x20] sm:$0xff]
    %v4042 = vld [vmem:[%s5 + $0x28] sm:$0xff]
    %v4043 = vld [vmem:[%s5 + $0x30] sm:$0xff]
    %v4044 = vld [vmem:[%s5 + $0x38] sm:$0xff]
    %v4045 = vld [vmem:[%s5 + $0x40] sm:$0xff]
    %v4046 = vld [vmem:[%s5 + $0x48] sm:$0xff]
    %v4047 = vld [vmem:[%s5 + $0x50] sm:$0xff]
    %v4048 = vld [vmem:[%s5 + $0x58] sm:$0xff]
    %v4049 = vld [vmem:[%s5 + $0x60] sm:$0xff]
    %v4050 = vld [vmem:[%s5 + $0x68] sm:$0xff]
    %v4051 = vld [vmem:[%s5 + $0x70] sm:$0xff]
    %v4052 = vld [vmem:[%s5 + $0x78] sm:$0xff]
    %v4053 = vld [vmem:[%s5 + $0x80] sm:$0xff]
    %v4054 = vld [vmem:[%s5 + $0x88] sm:$0xff]
    %v4055 = vld [vmem:[%s5 + $0x90] sm:$0xff]
    %v4056 = vld [vmem:[%s5 + $0x98] sm:$0xff]
    %v4057 = vld [vmem:[%s5 + $0xa0] sm:$0xff]
    %v4058 = vld [vmem:[%s5 + $0xa8] sm:$0xff]
    %v4059 = vld [vmem:[%s5 + $0xb0] sm:$0xff]
    %v4060 = vld [vmem:[%s5 + $0xb8] sm:$0xff]
    %4061 = vmatprep.subr.mxu0 %v3964
    %4062 = vmatpush1.msra.mxu0 %v3962
    %4063 = vmatprep.subr.mxu0 0.0
    %4064 = vmatpush1.msra.mxu0 0.0
    %4065 = vmatprep.subr.mxu0 0.0
    %4066 = vmatpush1.msra.mxu0 0.0
    %4067 = vmatprep.subr.mxu0 0.0
    %4068 = vmatpush1.msra.mxu0 0.0
    %4069 = vmatprep.subr.mxu0 0.0
    %4070 = vmatpush1.msra.mxu0 0.0
    %4071 = vmatprep.subr.mxu0 0.0
    %4072 = vmatpush1.msra.mxu0 0.0
    %4073 = vmatprep.subr.mxu0 0.0
    %4074 = vmatpush1.msra.mxu0 0.0
    %4075 = vmatprep.subr.mxu0 0.0
    %4076 = vmatpush1.msra.mxu0 0.0
    %4077 = vmatprep.subr.mxu0 0.0
    %4078 = vmatpush1.msra.mxu0 0.0
    %4079 = vmatprep.subr.mxu0 0.0
    %4080 = vmatpush1.msra.mxu0 0.0
    %4081 = vmatprep.subr.mxu0 0.0
    %4082 = vmatpush1.msra.mxu0 0.0
    %4083 = vmatprep.subr.mxu0 0.0
    %4084 = vmatpush1.msra.mxu0 0.0
    %4085 = vmatprep.subr.mxu0 0.0
    %4086 = vmatpush1.msra.mxu0 0.0
    %4087 = vmatprep.subr.mxu0 0.0
    %4088 = vmatpush1.msra.mxu0 0.0
    %4089 = vmatprep.subr.mxu0 0.0
    %4090 = vmatpush1.msra.mxu0 0.0
    %4091 = vmatprep.subr.mxu0 0.0
    %4092 = vmatpush1.msra.mxu0 0.0
    %4093 = vmatprep.subr.mxu0 0.0
    %4094 = vmatpush1.msra.mxu0 0.0
    %4095 = vmatprep.subr.mxu0 0.0
    %4096 = vmatpush1.msra.mxu0 0.0
    %4097 = vmatprep.subr.mxu0 0.0
    %4098 = vmatpush1.msra.mxu0 0.0
    %4099 = vmatprep.subr.mxu0 0.0
    %4100 = vmatpush1.msra.mxu0 0.0
    %4101 = vmatprep.subr.mxu0 0.0
    %4102 = vmatpush1.msra.mxu0 0.0
    %4103 = vmatprep.subr.mxu0 0.0
    %4104 = vmatpush1.msra.mxu0 0.0
    %4105 = vmatprep.subr.mxu0 0.0
    %4106 = vmatpush1.msra.mxu0 0.0
    %4107 = vmatprep.subr.mxu0 0.0
    %4108 = vmatpush1.msra.mxu0 0.0
    %4109 = vmatprep.subr.mxu0 0.0
    %4110 = vmatpush1.msra.mxu0 0.0
    %4111 = vmatprep.subr.mxu0 0.0
    %4112 = vmatpush1.msra.mxu0 0.0
    %4113 = vmatprep.subr.mxu0 0.0
    %4114 = vmatpush1.msra.mxu0 0.0
    %4115 = vmatprep.subr.mxu0 0.0
    %4116 = vmatpush1.msra.mxu0 0.0
    %4117 = vmatprep.subr.mxu0 0.0
    %4118 = vmatpush1.msra.mxu0 0.0
    %4119 = vmatprep.subr.mxu0 0.0
    %4120 = vmatpush1.msra.mxu0 0.0
    %4121 = vmatprep.subr.mxu0 0.0
    %4122 = vmatpush1.msra.mxu0 0.0
    %4123 = vmatprep.subr.mxu0 0.0
    %4124 = vmatpush1.msra.mxu0 0.0
    %4125 = vmatprep.mubr.f32.mxu0 0.0
    %4126 = vmatmul.mubr.f32.gmra.mrb[0].mxu0 %v1484
    %v4127 = vpop.f32.mrb[0].mxu0
    %v4128 = vadd.f32 0.0, %v4127
    %v4129 = vpop.f32.mrb[0].mxu0
    %v4130 = vadd.f32 0.0, %v4129
    %4131 = vdwg.mxu0
    %v4132 = vld [vmem:[%s1557] sm:$0xff]
    %v4133 = vld [vmem:[%s1557 + $0x8] sm:$0xff]
    %v4134 = vld [vmem:[%s1557 + $0x10] sm:$0xff]
    %v4135 = vld [vmem:[%s1557 + $0x18] sm:$0xff]
    %v4136 = vld [vmem:[%s1557 + $0x20] sm:$0xff]
    %v4137 = vld [vmem:[%s1557 + $0x28] sm:$0xff]
    %v4138 = vld [vmem:[%s1557 + $0x30] sm:$0xff]
    %v4139 = vld [vmem:[%s1557 + $0x38] sm:$0xff]
    %v4140 = vld [vmem:[%s1557 + $0x40] sm:$0xff]
    %v4141 = vld [vmem:[%s1557 + $0x48] sm:$0xff]
    %v4142 = vld [vmem:[%s1557 + $0x50] sm:$0xff]
    %v4143 = vld [vmem:[%s1557 + $0x58] sm:$0xff]
    %v4144 = vld [vmem:[%s1557 + $0x60] sm:$0xff]
    %v4145 = vld [vmem:[%s1557 + $0x68] sm:$0xff]
    %v4146 = vld [vmem:[%s1557 + $0x70] sm:$0xff]
    %v4147 = vld [vmem:[%s1557 + $0x78] sm:$0xff]
    %v4148 = vld [vmem:[%s1557 + $0x80] sm:$0xff]
    %v4149 = vld [vmem:[%s1557 + $0x88] sm:$0xff]
    %v4150 = vld [vmem:[%s1557 + $0x90] sm:$0xff]
    %v4151 = vld [vmem:[%s1557 + $0x98] sm:$0xff]
    %v4152 = vld [vmem:[%s1557 + $0xa0] sm:$0xff]
    %v4153 = vld [vmem:[%s1557 + $0xa8] sm:$0xff]
    %v4154 = vld [vmem:[%s1557 + $0xb0] sm:$0xff]
    %v4155 = vld [vmem:[%s1557 + $0xb8] sm:$0xff]
    %v4157 = vsel %vm117, %v4130, 0
    %4159 = vmatprep.subr.mxu0 0.0
    %4160 = vmatpush1.msra.mxu0 %v4132
    %4161 = vmatprep.subr.mxu0 0.0
    %4162 = vmatpush1.msra.mxu0 %v4133
    %4163 = vmatprep.subr.mxu0 0.0
    %4164 = vmatpush1.msra.mxu0 %v4134
    %4165 = vmatprep.subr.mxu0 0.0
    %4166 = vmatpush1.msra.mxu0 %v4135
    %4167 = vmatprep.subr.mxu0 0.0
    %4168 = vmatpush1.msra.mxu0 %v4136
    %4169 = vmatprep.subr.mxu0 0.0
    %4170 = vmatpush1.msra.mxu0 %v4137
    %4171 = vmatprep.subr.mxu0 0.0
    %4172 = vmatpush1.msra.mxu0 %v4138
    %4173 = vmatprep.subr.mxu0 0.0
    %4174 = vmatpush1.msra.mxu0 %v4139
    %4175 = vmatprep.subr.mxu0 0.0
    %4176 = vmatpush1.msra.mxu0 %v4140
    %4177 = vmatprep.subr.mxu0 0.0
    %4178 = vmatpush1.msra.mxu0 %v4141
    %4179 = vmatprep.subr.mxu0 0.0
    %4180 = vmatpush1.msra.mxu0 %v4142
    %4181 = vmatprep.subr.mxu0 0.0
    %4182 = vmatpush1.msra.mxu0 %v4143
    %4183 = vmatprep.subr.mxu0 0.0
    %4184 = vmatpush1.msra.mxu0 %v4144
    %4185 = vmatprep.subr.mxu0 0.0
    %4186 = vmatpush1.msra.mxu0 %v4145
    %4187 = vmatprep.subr.mxu0 0.0
    %4188 = vmatpush1.msra.mxu0 %v4146
    %4189 = vmatprep.subr.mxu0 0.0
    %4190 = vmatpush1.msra.mxu0 %v4147
    %4191 = vmatprep.subr.mxu0 0.0
    %4192 = vmatpush1.msra.mxu0 %v4148
    %4193 = vmatprep.subr.mxu0 0.0
    %4194 = vmatpush1.msra.mxu0 %v4149
    %4195 = vmatprep.subr.mxu0 0.0
    %4196 = vmatpush1.msra.mxu0 %v4150
    %4197 = vmatprep.subr.mxu0 0.0
    %4198 = vmatpush1.msra.mxu0 %v4151
    %4199 = vmatprep.subr.mxu0 0.0
    %4200 = vmatpush1.msra.mxu0 %v4152
    %4201 = vmatprep.subr.mxu0 0.0
    %4202 = vmatpush1.msra.mxu0 %v4153
    %4203 = vmatprep.subr.mxu0 0.0
    %4204 = vmatpush1.msra.mxu0 %v4154
    %4205 = vmatprep.subr.mxu0 0.0
    %4206 = vmatpush1.msra.mxu0 %v4155
    %4207 = vmatprep.subr.mxu0 0.0
    %4208 = vmatpush1.msra.mxu0 0.0
    %4209 = vmatprep.subr.mxu0 0.0
    %4210 = vmatpush1.msra.mxu0 0.0
    %4211 = vmatprep.subr.mxu0 0.0
    %4212 = vmatpush1.msra.mxu0 0.0
    %4213 = vmatprep.subr.mxu0 0.0
    %4214 = vmatpush1.msra.mxu0 0.0
    %4215 = vmatprep.subr.mxu0 0.0
    %4216 = vmatpush1.msra.mxu0 0.0
    %4217 = vmatprep.subr.mxu0 0.0
    %4218 = vmatpush1.msra.mxu0 0.0
    %4219 = vmatprep.subr.mxu0 0.0
    %4220 = vmatpush1.msra.mxu0 0.0
    %4221 = vmatprep.subr.mxu0 0.0
    %4222 = vmatpush1.msra.mxu0 0.0
    %4223 = vmatprep.mubr.f32.mxu0 %v4157
    %4224 = vmatmul.mubr.f32.gmra.mrb[0].mxu0 %v4128
    %v4225 = vpop.f32.mrb[0].mxu0
    %v4226 = vadd.f32 0.0, %v4225
    %v4227 = vpop.f32.mrb[0].mxu0
    %4228 = vdwg.mxu0
    %v4230 = vsel %vm117, %v4035, 0
    %4232 = vmatprep.subr.mxu0 0.0
    %4233 = vmatpush1.msra.mxu0 %v4037
    %4234 = vmatprep.subr.mxu0 0.0
    %4235 = vmatpush1.msra.mxu0 %v4038
    %4236 = vmatprep.subr.mxu0 0.0
    %4237 = vmatpush1.msra.mxu0 %v4039
    %4238 = vmatprep.subr.mxu0 0.0
    %4239 = vmatpush1.msra.mxu0 %v4040
    %4240 = vmatprep.subr.mxu0 0.0
    %4241 = vmatpush1.msra.mxu0 %v4041
    %4242 = vmatprep.subr.mxu0 0.0
    %4243 = vmatpush1.msra.mxu0 %v4042
    %4244 = vmatprep.subr.mxu0 0.0
    %4245 = vmatpush1.msra.mxu0 %v4043
    %4246 = vmatprep.subr.mxu0 0.0
    %4247 = vmatpush1.msra.mxu0 %v4044
    %4248 = vmatprep.subr.mxu0 0.0
    %4249 = vmatpush1.msra.mxu0 %v4045
    %4250 = vmatprep.subr.mxu0 0.0
    %4251 = vmatpush1.msra.mxu0 %v4046
    %4252 = vmatprep.subr.mxu0 0.0
    %4253 = vmatpush1.msra.mxu0 %v4047
    %4254 = vmatprep.subr.mxu0 0.0
    %4255 = vmatpush1.msra.mxu0 %v4048
    %4256 = vmatprep.subr.mxu0 0.0
    %4257 = vmatpush1.msra.mxu0 %v4049
    %4258 = vmatprep.subr.mxu0 0.0
    %4259 = vmatpush1.msra.mxu0 %v4050
    %4260 = vmatprep.subr.mxu0 0.0
    %4261 = vmatpush1.msra.mxu0 %v4051
    %4262 = vmatprep.subr.mxu0 0.0
    %4263 = vmatpush1.msra.mxu0 %v4052
    %4264 = vmatprep.subr.mxu0 0.0
    %4265 = vmatpush1.msra.mxu0 %v4053
    %4266 = vmatprep.subr.mxu0 0.0
    %4267 = vmatpush1.msra.mxu0 %v4054
    %4268 = vmatprep.subr.mxu0 0.0
    %4269 = vmatpush1.msra.mxu0 %v4055
    %4270 = vmatprep.subr.mxu0 0.0
    %4271 = vmatpush1.msra.mxu0 %v4056
    %4272 = vmatprep.subr.mxu0 0.0
    %4273 = vmatpush1.msra.mxu0 %v4057
    %4274 = vmatprep.subr.mxu0 0.0
    %4275 = vmatpush1.msra.mxu0 %v4058
    %4276 = vmatprep.subr.mxu0 0.0
    %4277 = vmatpush1.msra.mxu0 %v4059
    %4278 = vmatprep.subr.mxu0 0.0
    %4279 = vmatpush1.msra.mxu0 %v4060
    %4280 = vmatprep.subr.mxu0 0.0
    %4281 = vmatpush1.msra.mxu0 0.0
    %4282 = vmatprep.subr.mxu0 0.0
    %4283 = vmatpush1.msra.mxu0 0.0
    %4284 = vmatprep.subr.mxu0 0.0
    %4285 = vmatpush1.msra.mxu0 0.0
    %4286 = vmatprep.subr.mxu0 0.0
    %4287 = vmatpush1.msra.mxu0 0.0
    %4288 = vmatprep.subr.mxu0 0.0
    %4289 = vmatpush1.msra.mxu0 0.0
    %4290 = vmatprep.subr.mxu0 0.0
    %4291 = vmatpush1.msra.mxu0 0.0
    %4292 = vmatprep.subr.mxu0 0.0
    %4293 = vmatpush1.msra.mxu0 0.0
    %4294 = vmatprep.subr.mxu0 0.0
    %4295 = vmatpush1.msra.mxu0 0.0
    %4296 = vmatprep.mubr.f32.mxu0 %v4230
    %4297 = vmatmul.mubr.f32.gmra.mrb[0].mxu0 %v4033
    %v4298 = vpop.f32.mrb[0].mxu0
    %v4299 = vadd.f32 %v4226, %v4298
    %v4300 = vpop.f32.mrb[0].mxu0
    %4301 = vdwg.mxu0
    %4302 = vmatprep.subr.mxu0 %v3964
    %4303 = vmatpush1.msra.mxu0 %v3962
    %4304 = vmatprep.subr.mxu0 0.0
    %4305 = vmatpush1.msra.mxu0 0.0
    %4306 = vmatprep.subr.mxu0 0.0
    %4307 = vmatpush1.msra.mxu0 0.0
    %4308 = vmatprep.subr.mxu0 0.0
    %4309 = vmatpush1.msra.mxu0 0.0
    %4310 = vmatprep.subr.mxu0 0.0
    %4311 = vmatpush1.msra.mxu0 0.0
    %4312 = vmatprep.subr.mxu0 0.0
    %4313 = vmatpush1.msra.mxu0 0.0
    %4314 = vmatprep.subr.mxu0 0.0
    %4315 = vmatpush1.msra.mxu0 0.0
    %4316 = vmatprep.subr.mxu0 0.0
    %4317 = vmatpush1.msra.mxu0 0.0
    %4318 = vmatprep.subr.mxu0 0.0
    %4319 = vmatpush1.msra.mxu0 0.0
    %4320 = vmatprep.subr.mxu0 0.0
    %4321 = vmatpush1.msra.mxu0 0.0
    %4322 = vmatprep.subr.mxu0 0.0
    %4323 = vmatpush1.msra.mxu0 0.0
    %4324 = vmatprep.subr.mxu0 0.0
    %4325 = vmatpush1.msra.mxu0 0.0
    %4326 = vmatprep.subr.mxu0 0.0
    %4327 = vmatpush1.msra.mxu0 0.0
    %4328 = vmatprep.subr.mxu0 0.0
    %4329 = vmatpush1.msra.mxu0 0.0
    %4330 = vmatprep.subr.mxu0 0.0
    %4331 = vmatpush1.msra.mxu0 0.0
    %4332 = vmatprep.subr.mxu0 0.0
    %4333 = vmatpush1.msra.mxu0 0.0
    %4334 = vmatprep.subr.mxu0 0.0
    %4335 = vmatpush1.msra.mxu0 0.0
    %4336 = vmatprep.subr.mxu0 0.0
    %4337 = vmatpush1.msra.mxu0 0.0
    %4338 = vmatprep.subr.mxu0 0.0
    %4339 = vmatpush1.msra.mxu0 0.0
    %4340 = vmatprep.subr.mxu0 0.0
    %4341 = vmatpush1.msra.mxu0 0.0
    %4342 = vmatprep.subr.mxu0 0.0
    %4343 = vmatpush1.msra.mxu0 0.0
    %4344 = vmatprep.subr.mxu0 0.0
    %4345 = vmatpush1.msra.mxu0 0.0
    %4346 = vmatprep.subr.mxu0 0.0
    %4347 = vmatpush1.msra.mxu0 0.0
    %4348 = vmatprep.subr.mxu0 0.0
    %4349 = vmatpush1.msra.mxu0 0.0
    %4350 = vmatprep.subr.mxu0 0.0
    %4351 = vmatpush1.msra.mxu0 0.0
    %4352 = vmatprep.subr.mxu0 0.0
    %4353 = vmatpush1.msra.mxu0 0.0
    %4354 = vmatprep.subr.mxu0 0.0
    %4355 = vmatpush1.msra.mxu0 0.0
    %4356 = vmatprep.subr.mxu0 0.0
    %4357 = vmatpush1.msra.mxu0 0.0
    %4358 = vmatprep.subr.mxu0 0.0
    %4359 = vmatpush1.msra.mxu0 0.0
    %4360 = vmatprep.subr.mxu0 0.0
    %4361 = vmatpush1.msra.mxu0 0.0
    %4362 = vmatprep.subr.mxu0 0.0
    %4363 = vmatpush1.msra.mxu0 0.0
    %4364 = vmatprep.subr.mxu0 0.0
    %4365 = vmatpush1.msra.mxu0 0.0
    %4366 = vmatprep.mubr.f32.mxu0 0.0
    %4367 = vmatmul.mubr.f32.gmra.mrb[0].mxu0 %v1733
    %v4368 = vpop.f32.mrb[0].mxu0
    %v4369 = vadd.f32 0.0, %v4368
    %v4370 = vpop.f32.mrb[0].mxu0
    %v4371 = vadd.f32 0.0, %v4370
    %4372 = vdwg.mxu0
    %v4373 = vld [vmem:[%s1806] sm:$0xff]
    %v4374 = vld [vmem:[%s1806 + $0x8] sm:$0xff]
    %v4375 = vld [vmem:[%s1806 + $0x10] sm:$0xff]
    %v4376 = vld [vmem:[%s1806 + $0x18] sm:$0xff]
    %v4377 = vld [vmem:[%s1806 + $0x20] sm:$0xff]
    %v4378 = vld [vmem:[%s1806 + $0x28] sm:$0xff]
    %v4379 = vld [vmem:[%s1806 + $0x30] sm:$0xff]
    %v4380 = vld [vmem:[%s1806 + $0x38] sm:$0xff]
    %v4381 = vld [vmem:[%s1806 + $0x40] sm:$0xff]
    %v4382 = vld [vmem:[%s1806 + $0x48] sm:$0xff]
    %v4383 = vld [vmem:[%s1806 + $0x50] sm:$0xff]
    %v4384 = vld [vmem:[%s1806 + $0x58] sm:$0xff]
    %v4385 = vld [vmem:[%s1806 + $0x60] sm:$0xff]
    %v4386 = vld [vmem:[%s1806 + $0x68] sm:$0xff]
    %v4387 = vld [vmem:[%s1806 + $0x70] sm:$0xff]
    %v4388 = vld [vmem:[%s1806 + $0x78] sm:$0xff]
    %v4389 = vld [vmem:[%s1806 + $0x80] sm:$0xff]
    %v4390 = vld [vmem:[%s1806 + $0x88] sm:$0xff]
    %v4391 = vld [vmem:[%s1806 + $0x90] sm:$0xff]
    %v4392 = vld [vmem:[%s1806 + $0x98] sm:$0xff]
    %v4393 = vld [vmem:[%s1806 + $0xa0] sm:$0xff]
    %v4394 = vld [vmem:[%s1806 + $0xa8] sm:$0xff]
    %v4395 = vld [vmem:[%s1806 + $0xb0] sm:$0xff]
    %v4396 = vld [vmem:[%s1806 + $0xb8] sm:$0xff]
    %v4398 = vsel %vm117, %v4371, 0
    %4400 = vmatprep.subr.mxu0 0.0
    %4401 = vmatpush1.msra.mxu0 %v4373
    %4402 = vmatprep.subr.mxu0 0.0
    %4403 = vmatpush1.msra.mxu0 %v4374
    %4404 = vmatprep.subr.mxu0 0.0
    %4405 = vmatpush1.msra.mxu0 %v4375
    %4406 = vmatprep.subr.mxu0 0.0
    %4407 = vmatpush1.msra.mxu0 %v4376
    %4408 = vmatprep.subr.mxu0 0.0
    %4409 = vmatpush1.msra.mxu0 %v4377
    %4410 = vmatprep.subr.mxu0 0.0
    %4411 = vmatpush1.msra.mxu0 %v4378
    %4412 = vmatprep.subr.mxu0 0.0
    %4413 = vmatpush1.msra.mxu0 %v4379
    %4414 = vmatprep.subr.mxu0 0.0
    %4415 = vmatpush1.msra.mxu0 %v4380
    %4416 = vmatprep.subr.mxu0 0.0
    %4417 = vmatpush1.msra.mxu0 %v4381
    %4418 = vmatprep.subr.mxu0 0.0
    %4419 = vmatpush1.msra.mxu0 %v4382
    %4420 = vmatprep.subr.mxu0 0.0
    %4421 = vmatpush1.msra.mxu0 %v4383
    %4422 = vmatprep.subr.mxu0 0.0
    %4423 = vmatpush1.msra.mxu0 %v4384
    %4424 = vmatprep.subr.mxu0 0.0
    %4425 = vmatpush1.msra.mxu0 %v4385
    %4426 = vmatprep.subr.mxu0 0.0
    %4427 = vmatpush1.msra.mxu0 %v4386
    %4428 = vmatprep.subr.mxu0 0.0
    %4429 = vmatpush1.msra.mxu0 %v4387
    %4430 = vmatprep.subr.mxu0 0.0
    %4431 = vmatpush1.msra.mxu0 %v4388
    %4432 = vmatprep.subr.mxu0 0.0
    %4433 = vmatpush1.msra.mxu0 %v4389
    %4434 = vmatprep.subr.mxu0 0.0
    %4435 = vmatpush1.msra.mxu0 %v4390
    %4436 = vmatprep.subr.mxu0 0.0
    %4437 = vmatpush1.msra.mxu0 %v4391
    %4438 = vmatprep.subr.mxu0 0.0
    %4439 = vmatpush1.msra.mxu0 %v4392
    %4440 = vmatprep.subr.mxu0 0.0
    %4441 = vmatpush1.msra.mxu0 %v4393
    %4442 = vmatprep.subr.mxu0 0.0
    %4443 = vmatpush1.msra.mxu0 %v4394
    %4444 = vmatprep.subr.mxu0 0.0
    %4445 = vmatpush1.msra.mxu0 %v4395
    %4446 = vmatprep.subr.mxu0 0.0
    %4447 = vmatpush1.msra.mxu0 %v4396
    %4448 = vmatprep.subr.mxu0 0.0
    %4449 = vmatpush1.msra.mxu0 0.0
    %4450 = vmatprep.subr.mxu0 0.0
    %4451 = vmatpush1.msra.mxu0 0.0
    %4452 = vmatprep.subr.mxu0 0.0
    %4453 = vmatpush1.msra.mxu0 0.0
    %4454 = vmatprep.subr.mxu0 0.0
    %4455 = vmatpush1.msra.mxu0 0.0
    %4456 = vmatprep.subr.mxu0 0.0
    %4457 = vmatpush1.msra.mxu0 0.0
    %4458 = vmatprep.subr.mxu0 0.0
    %4459 = vmatpush1.msra.mxu0 0.0
    %4460 = vmatprep.subr.mxu0 0.0
    %4461 = vmatpush1.msra.mxu0 0.0
    %4462 = vmatprep.subr.mxu0 0.0
    %4463 = vmatpush1.msra.mxu0 0.0
    %4464 = vmatprep.mubr.f32.mxu0 %v4398
    %4465 = vmatmul.mubr.f32.gmra.mrb[0].mxu0 %v4369
    %v4466 = vpop.f32.mrb[0].mxu0
    %v4467 = vadd.f32 0.0, %v4466
    %v4468 = vpop.f32.mrb[0].mxu0
    %4469 = vdwg.mxu0
    %v4470 = vadd.f32 %v4299, %v4467
    %v4471 = vld [vmem:[#allocation12] sm:$0x1]
    %v4473 = vlaneseq
    %v4474 = vshrl.u32 %v4473, 7
    %v4475 = vsub.s32 0, %v4474
    %v4476 = vrot.slane %v4471, %v4475
    %v4478 = vadd.f32 %v4470, %v4476
    %v4479 = vmax.f32 %v4478, 0.0
    %4480 = vst [vmem:[#allocation5 + $0x6] sm:$0x1] %v4479
    %4481 = vst [vmem:[#allocation5 + $0x7] sm:$0x2] %v4479
    %v4482 = vld [vmem:[#allocation5 + $0x5] sm:$0x7]
    %v4483 = vld [vmem:[%s7] sm:$0xff]
    %v4484 = vld [vmem:[%s7 + $0x8] sm:$0xff]
    %v4485 = vld [vmem:[%s7 + $0x10] sm:$0xff]
    %v4486 = vld [vmem:[%s7 + $0x18] sm:$0xff]
    %v4487 = vld [vmem:[%s7 + $0x20] sm:$0xff]
    %v4488 = vld [vmem:[%s7 + $0x28] sm:$0xff]
    %v4489 = vld [vmem:[%s7 + $0x30] sm:$0xff]
    %v4490 = vld [vmem:[%s7 + $0x38] sm:$0xff]
    %v4491 = vld [vmem:[%s7 + $0x40] sm:$0xff]
    %v4492 = vld [vmem:[%s7 + $0x48] sm:$0xff]
    %v4493 = vld [vmem:[%s7 + $0x50] sm:$0xff]
    %v4494 = vld [vmem:[%s7 + $0x58] sm:$0xff]
    %v4495 = vld [vmem:[%s7 + $0x60] sm:$0xff]
    %v4496 = vld [vmem:[%s7 + $0x68] sm:$0xff]
    %v4497 = vld [vmem:[%s7 + $0x70] sm:$0xff]
    %v4498 = vld [vmem:[%s7 + $0x78] sm:$0xff]
    %v4499 = vld [vmem:[#allocation5 + $0x6] sm:$0x7]
    %v4500 = vld [vmem:[%s1934] sm:$0xff]
    %v4501 = vld [vmem:[%s1934 + $0x8] sm:$0xff]
    %v4502 = vld [vmem:[%s1934 + $0x10] sm:$0xff]
    %v4503 = vld [vmem:[%s1934 + $0x18] sm:$0xff]
    %v4504 = vld [vmem:[%s1934 + $0x20] sm:$0xff]
    %v4505 = vld [vmem:[%s1934 + $0x28] sm:$0xff]
    %v4506 = vld [vmem:[%s1934 + $0x30] sm:$0xff]
    %v4507 = vld [vmem:[%s1934 + $0x38] sm:$0xff]
    %v4508 = vld [vmem:[%s1934 + $0x40] sm:$0xff]
    %v4509 = vld [vmem:[%s1934 + $0x48] sm:$0xff]
    %v4510 = vld [vmem:[%s1934 + $0x50] sm:$0xff]
    %v4511 = vld [vmem:[%s1934 + $0x58] sm:$0xff]
    %v4512 = vld [vmem:[%s1934 + $0x60] sm:$0xff]
    %v4513 = vld [vmem:[%s1934 + $0x68] sm:$0xff]
    %v4514 = vld [vmem:[%s1934 + $0x70] sm:$0xff]
    %v4515 = vld [vmem:[%s1934 + $0x78] sm:$0xff]
    %4516 = vmatprep.subr.mxu0 0.0
    %4517 = vmatpush1.msra.mxu0 %v4500
    %4518 = vmatprep.subr.mxu0 0.0
    %4519 = vmatpush1.msra.mxu0 %v4501
    %4520 = vmatprep.subr.mxu0 0.0
    %4521 = vmatpush1.msra.mxu0 %v4502
    %4522 = vmatprep.subr.mxu0 0.0
    %4523 = vmatpush1.msra.mxu0 %v4503
    %4524 = vmatprep.subr.mxu0 0.0
    %4525 = vmatpush1.msra.mxu0 %v4504
    %4526 = vmatprep.subr.mxu0 0.0
    %4527 = vmatpush1.msra.mxu0 %v4505
    %4528 = vmatprep.subr.mxu0 0.0
    %4529 = vmatpush1.msra.mxu0 %v4506
    %4530 = vmatprep.subr.mxu0 0.0
    %4531 = vmatpush1.msra.mxu0 %v4507
    %4532 = vmatprep.subr.mxu0 0.0
    %4533 = vmatpush1.msra.mxu0 %v4508
    %4534 = vmatprep.subr.mxu0 0.0
    %4535 = vmatpush1.msra.mxu0 %v4509
    %4536 = vmatprep.subr.mxu0 0.0
    %4537 = vmatpush1.msra.mxu0 %v4510
    %4538 = vmatprep.subr.mxu0 0.0
    %4539 = vmatpush1.msra.mxu0 %v4511
    %4540 = vmatprep.subr.mxu0 0.0
    %4541 = vmatpush1.msra.mxu0 %v4512
    %4542 = vmatprep.subr.mxu0 0.0
    %4543 = vmatpush1.msra.mxu0 %v4513
    %4544 = vmatprep.subr.mxu0 0.0
    %4545 = vmatpush1.msra.mxu0 %v4514
    %4546 = vmatprep.subr.mxu0 0.0
    %4547 = vmatpush1.msra.mxu0 %v4515
    %4548 = vmatprep.subr.mxu0 0.0
    %4549 = vmatpush1.msra.mxu0 0.0
    %4550 = vmatprep.subr.mxu0 0.0
    %4551 = vmatpush1.msra.mxu0 0.0
    %4552 = vmatprep.subr.mxu0 0.0
    %4553 = vmatpush1.msra.mxu0 0.0
    %4554 = vmatprep.subr.mxu0 0.0
    %4555 = vmatpush1.msra.mxu0 0.0
    %4556 = vmatprep.subr.mxu0 0.0
    %4557 = vmatpush1.msra.mxu0 0.0
    %4558 = vmatprep.subr.mxu0 0.0
    %4559 = vmatpush1.msra.mxu0 0.0
    %4560 = vmatprep.subr.mxu0 0.0
    %4561 = vmatpush1.msra.mxu0 0.0
    %4562 = vmatprep.subr.mxu0 0.0
    %4563 = vmatpush1.msra.mxu0 0.0
    %4564 = vmatprep.subr.mxu0 0.0
    %4565 = vmatpush1.msra.mxu0 0.0
    %4566 = vmatprep.subr.mxu0 0.0
    %4567 = vmatpush1.msra.mxu0 0.0
    %4568 = vmatprep.subr.mxu0 0.0
    %4569 = vmatpush1.msra.mxu0 0.0
    %4570 = vmatprep.subr.mxu0 0.0
    %4571 = vmatpush1.msra.mxu0 0.0
    %4572 = vmatprep.subr.mxu0 0.0
    %4573 = vmatpush1.msra.mxu0 0.0
    %4574 = vmatprep.subr.mxu0 0.0
    %4575 = vmatpush1.msra.mxu0 0.0
    %4576 = vmatprep.subr.mxu0 0.0
    %4577 = vmatpush1.msra.mxu0 0.0
    %4578 = vmatprep.subr.mxu0 0.0
    %4579 = vmatpush1.msra.mxu0 0.0
    %4580 = vmatprep.mubr.f32.mxu0 0.0
    %4581 = vmatmul.mubr.f32.gmra.mrb[0].mxu0 %v4499
    %v4582 = vpop.f32.mrb[0].mxu0
    %v4583 = vadd.f32 0.0, %v4582
    %v4584 = vpop.f32.mrb[0].mxu0
    %4585 = vdwg.mxu0
    %4586 = vmatprep.subr.mxu0 0.0
    %4587 = vmatpush1.msra.mxu0 %v4483
    %4588 = vmatprep.subr.mxu0 0.0
    %4589 = vmatpush1.msra.mxu0 %v4484
    %4590 = vmatprep.subr.mxu0 0.0
    %4591 = vmatpush1.msra.mxu0 %v4485
    %4592 = vmatprep.subr.mxu0 0.0
    %4593 = vmatpush1.msra.mxu0 %v4486
    %4594 = vmatprep.subr.mxu0 0.0
    %4595 = vmatpush1.msra.mxu0 %v4487
    %4596 = vmatprep.subr.mxu0 0.0
    %4597 = vmatpush1.msra.mxu0 %v4488
    %4598 = vmatprep.subr.mxu0 0.0
    %4599 = vmatpush1.msra.mxu0 %v4489
    %4600 = vmatprep.subr.mxu0 0.0
    %4601 = vmatpush1.msra.mxu0 %v4490
    %4602 = vmatprep.subr.mxu0 0.0
    %4603 = vmatpush1.msra.mxu0 %v4491
    %4604 = vmatprep.subr.mxu0 0.0
    %4605 = vmatpush1.msra.mxu0 %v4492
    %4606 = vmatprep.subr.mxu0 0.0
    %4607 = vmatpush1.msra.mxu0 %v4493
    %4608 = vmatprep.subr.mxu0 0.0
    %4609 = vmatpush1.msra.mxu0 %v4494
    %4610 = vmatprep.subr.mxu0 0.0
    %4611 = vmatpush1.msra.mxu0 %v4495
    %4612 = vmatprep.subr.mxu0 0.0
    %4613 = vmatpush1.msra.mxu0 %v4496
    %4614 = vmatprep.subr.mxu0 0.0
    %4615 = vmatpush1.msra.mxu0 %v4497
    %4616 = vmatprep.subr.mxu0 0.0
    %4617 = vmatpush1.msra.mxu0 %v4498
    %4618 = vmatprep.subr.mxu0 0.0
    %4619 = vmatpush1.msra.mxu0 0.0
    %4620 = vmatprep.subr.mxu0 0.0
    %4621 = vmatpush1.msra.mxu0 0.0
    %4622 = vmatprep.subr.mxu0 0.0
    %4623 = vmatpush1.msra.mxu0 0.0
    %4624 = vmatprep.subr.mxu0 0.0
    %4625 = vmatpush1.msra.mxu0 0.0
    %4626 = vmatprep.subr.mxu0 0.0
    %4627 = vmatpush1.msra.mxu0 0.0
    %4628 = vmatprep.subr.mxu0 0.0
    %4629 = vmatpush1.msra.mxu0 0.0
    %4630 = vmatprep.subr.mxu0 0.0
    %4631 = vmatpush1.msra.mxu0 0.0
    %4632 = vmatprep.subr.mxu0 0.0
    %4633 = vmatpush1.msra.mxu0 0.0
    %4634 = vmatprep.subr.mxu0 0.0
    %4635 = vmatpush1.msra.mxu0 0.0
    %4636 = vmatprep.subr.mxu0 0.0
    %4637 = vmatpush1.msra.mxu0 0.0
    %4638 = vmatprep.subr.mxu0 0.0
    %4639 = vmatpush1.msra.mxu0 0.0
    %4640 = vmatprep.subr.mxu0 0.0
    %4641 = vmatpush1.msra.mxu0 0.0
    %4642 = vmatprep.subr.mxu0 0.0
    %4643 = vmatpush1.msra.mxu0 0.0
    %4644 = vmatprep.subr.mxu0 0.0
    %4645 = vmatpush1.msra.mxu0 0.0
    %4646 = vmatprep.subr.mxu0 0.0
    %4647 = vmatpush1.msra.mxu0 0.0
    %4648 = vmatprep.subr.mxu0 0.0
    %4649 = vmatpush1.msra.mxu0 0.0
    %4650 = vmatprep.mubr.f32.mxu0 0.0
    %4651 = vmatmul.mubr.f32.gmra.mrb[0].mxu0 %v4482
    %v4652 = vpop.f32.mrb[0].mxu0
    %v4653 = vadd.f32 %v4583, %v4652
    %v4654 = vpop.f32.mrb[0].mxu0
    %4655 = vdwg.mxu0
    %v4656 = vld [vmem:[#allocation5 + $0x7] sm:$0x7]
    %v4657 = vld [vmem:[%s2092] sm:$0xff]
    %v4658 = vld [vmem:[%s2092 + $0x8] sm:$0xff]
    %v4659 = vld [vmem:[%s2092 + $0x10] sm:$0xff]
    %v4660 = vld [vmem:[%s2092 + $0x18] sm:$0xff]
    %v4661 = vld [vmem:[%s2092 + $0x20] sm:$0xff]
    %v4662 = vld [vmem:[%s2092 + $0x28] sm:$0xff]
    %v4663 = vld [vmem:[%s2092 + $0x30] sm:$0xff]
    %v4664 = vld [vmem:[%s2092 + $0x38] sm:$0xff]
    %v4665 = vld [vmem:[%s2092 + $0x40] sm:$0xff]
    %v4666 = vld [vmem:[%s2092 + $0x48] sm:$0xff]
    %v4667 = vld [vmem:[%s2092 + $0x50] sm:$0xff]
    %v4668 = vld [vmem:[%s2092 + $0x58] sm:$0xff]
    %v4669 = vld [vmem:[%s2092 + $0x60] sm:$0xff]
    %v4670 = vld [vmem:[%s2092 + $0x68] sm:$0xff]
    %v4671 = vld [vmem:[%s2092 + $0x70] sm:$0xff]
    %v4672 = vld [vmem:[%s2092 + $0x78] sm:$0xff]
    %4673 = vmatprep.subr.mxu0 0.0
    %4674 = vmatpush1.msra.mxu0 %v4657
    %4675 = vmatprep.subr.mxu0 0.0
    %4676 = vmatpush1.msra.mxu0 %v4658
    %4677 = vmatprep.subr.mxu0 0.0
    %4678 = vmatpush1.msra.mxu0 %v4659
    %4679 = vmatprep.subr.mxu0 0.0
    %4680 = vmatpush1.msra.mxu0 %v4660
    %4681 = vmatprep.subr.mxu0 0.0
    %4682 = vmatpush1.msra.mxu0 %v4661
    %4683 = vmatprep.subr.mxu0 0.0
    %4684 = vmatpush1.msra.mxu0 %v4662
    %4685 = vmatprep.subr.mxu0 0.0
    %4686 = vmatpush1.msra.mxu0 %v4663
    %4687 = vmatprep.subr.mxu0 0.0
    %4688 = vmatpush1.msra.mxu0 %v4664
    %4689 = vmatprep.subr.mxu0 0.0
    %4690 = vmatpush1.msra.mxu0 %v4665
    %4691 = vmatprep.subr.mxu0 0.0
    %4692 = vmatpush1.msra.mxu0 %v4666
    %4693 = vmatprep.subr.mxu0 0.0
    %4694 = vmatpush1.msra.mxu0 %v4667
    %4695 = vmatprep.subr.mxu0 0.0
    %4696 = vmatpush1.msra.mxu0 %v4668
    %4697 = vmatprep.subr.mxu0 0.0
    %4698 = vmatpush1.msra.mxu0 %v4669
    %4699 = vmatprep.subr.mxu0 0.0
    %4700 = vmatpush1.msra.mxu0 %v4670
    %4701 = vmatprep.subr.mxu0 0.0
    %4702 = vmatpush1.msra.mxu0 %v4671
    %4703 = vmatprep.subr.mxu0 0.0
    %4704 = vmatpush1.msra.mxu0 %v4672
    %4705 = vmatprep.subr.mxu0 0.0
    %4706 = vmatpush1.msra.mxu0 0.0
    %4707 = vmatprep.subr.mxu0 0.0
    %4708 = vmatpush1.msra.mxu0 0.0
    %4709 = vmatprep.subr.mxu0 0.0
    %4710 = vmatpush1.msra.mxu0 0.0
    %4711 = vmatprep.subr.mxu0 0.0
    %4712 = vmatpush1.msra.mxu0 0.0
    %4713 = vmatprep.subr.mxu0 0.0
    %4714 = vmatpush1.msra.mxu0 0.0
    %4715 = vmatprep.subr.mxu0 0.0
    %4716 = vmatpush1.msra.mxu0 0.0
    %4717 = vmatprep.subr.mxu0 0.0
    %4718 = vmatpush1.msra.mxu0 0.0
    %4719 = vmatprep.subr.mxu0 0.0
    %4720 = vmatpush1.msra.mxu0 0.0
    %4721 = vmatprep.subr.mxu0 0.0
    %4722 = vmatpush1.msra.mxu0 0.0
    %4723 = vmatprep.subr.mxu0 0.0
    %4724 = vmatpush1.msra.mxu0 0.0
    %4725 = vmatprep.subr.mxu0 0.0
    %4726 = vmatpush1.msra.mxu0 0.0
    %4727 = vmatprep.subr.mxu0 0.0
    %4728 = vmatpush1.msra.mxu0 0.0
    %4729 = vmatprep.subr.mxu0 0.0
    %4730 = vmatpush1.msra.mxu0 0.0
    %4731 = vmatprep.subr.mxu0 0.0
    %4732 = vmatpush1.msra.mxu0 0.0
    %4733 = vmatprep.subr.mxu0 0.0
    %4734 = vmatpush1.msra.mxu0 0.0
    %4735 = vmatprep.subr.mxu0 0.0
    %4736 = vmatpush1.msra.mxu0 0.0
    %4737 = vmatprep.mubr.f32.mxu0 0.0
    %4738 = vmatmul.mubr.f32.gmra.mrb[0].mxu0 %v4656
    %v4739 = vpop.f32.mrb[0].mxu0
    %v4740 = vadd.f32 0.0, %v4739
    %v4741 = vpop.f32.mrb[0].mxu0
    %4742 = vdwg.mxu0
    %v4743 = vadd.f32 %v4653, %v4740
    %v4744 = vld [vmem:[#allocation13] sm:$0x1]
    %v4746 = vlaneseq
    %v4747 = vshrl.u32 %v4746, 7
    %v4748 = vsub.s32 0, %v4747
    %v4749 = vrot.slane %v4744, %v4748
    %v4751 = vadd.f32 %v4743, %v4749
    %v4752 = vmax.f32 %v4751, 0.0
    %4753 = vst.msk [vmem:[#allocation6 + $0xa] sm:$0x1] %vm2189, %v4752
    %4754 = vst.msk [vmem:[#allocation6 + $0xc] sm:$0x2] %vm2191, %v4752
    %4755 = vst.msk [vmem:[#allocation6 + $0xe] sm:$0x4] %vm2193, %v4752
    %v4756 = vld [vmem:[#allocation6 + $0x9] sm:$0x7f]
    %v4757 = vld [vmem:[#allocation15] sm:$0xff]
    %v4758 = vld [vmem:[#allocation15 + $0x8] sm:$0xff]
    %v4759 = vld [vmem:[#allocation15 + $0x10] sm:$0xff]
    %v4760 = vld [vmem:[#allocation15 + $0x18] sm:$0xff]
    %v4761 = vld [vmem:[#allocation15 + $0x20] sm:$0xff]
    %v4762 = vld [vmem:[#allocation15 + $0x28] sm:$0xff]
    %v4763 = vld [vmem:[#allocation15 + $0x30] sm:$0xff]
    %v4764 = vld [vmem:[#allocation15 + $0x38] sm:$0xff]
    %v4765 = vld [vmem:[#allocation15 + $0x40] sm:$0xff]
    %v4766 = vld [vmem:[#allocation15 + $0x48] sm:$0xff]
    %v4767 = vld [vmem:[#allocation15 + $0x50] sm:$0xff]
    %v4768 = vld [vmem:[#allocation15 + $0x58] sm:$0xff]
    %v4769 = vld [vmem:[#allocation6 + $0xa] sm:$0x7f]
    %v4770 = vld [vmem:[%s2209] sm:$0xff]
    %v4771 = vld [vmem:[%s2209 + $0x8] sm:$0xff]
    %v4772 = vld [vmem:[%s2209 + $0x10] sm:$0xff]
    %v4773 = vld [vmem:[%s2209 + $0x18] sm:$0xff]
    %v4774 = vld [vmem:[%s2209 + $0x20] sm:$0xff]
    %v4775 = vld [vmem:[%s2209 + $0x28] sm:$0xff]
    %v4776 = vld [vmem:[%s2209 + $0x30] sm:$0xff]
    %v4777 = vld [vmem:[%s2209 + $0x38] sm:$0xff]
    %v4778 = vld [vmem:[%s2209 + $0x40] sm:$0xff]
    %v4779 = vld [vmem:[%s2209 + $0x48] sm:$0xff]
    %v4780 = vld [vmem:[%s2209 + $0x50] sm:$0xff]
    %v4781 = vld [vmem:[%s2209 + $0x58] sm:$0xff]
    %v4783 = vsel %vm130, %v4769, 0
    %4785 = vmatprep.subr.mxu0 0.0
    %4786 = vmatpush1.msra.mxu0 %v4770
    %4787 = vmatprep.subr.mxu0 0.0
    %4788 = vmatpush1.msra.mxu0 %v4771
    %4789 = vmatprep.subr.mxu0 0.0
    %4790 = vmatpush1.msra.mxu0 %v4772
    %4791 = vmatprep.subr.mxu0 0.0
    %4792 = vmatpush1.msra.mxu0 %v4773
    %4793 = vmatprep.subr.mxu0 0.0
    %4794 = vmatpush1.msra.mxu0 %v4774
    %4795 = vmatprep.subr.mxu0 0.0
    %4796 = vmatpush1.msra.mxu0 %v4775
    %4797 = vmatprep.subr.mxu0 0.0
    %4798 = vmatpush1.msra.mxu0 %v4776
    %4799 = vmatprep.subr.mxu0 0.0
    %4800 = vmatpush1.msra.mxu0 %v4777
    %4801 = vmatprep.subr.mxu0 0.0
    %4802 = vmatpush1.msra.mxu0 %v4778
    %4803 = vmatprep.subr.mxu0 0.0
    %4804 = vmatpush1.msra.mxu0 %v4779
    %4805 = vmatprep.subr.mxu0 0.0
    %4806 = vmatpush1.msra.mxu0 %v4780
    %4807 = vmatprep.subr.mxu0 0.0
    %4808 = vmatpush1.msra.mxu0 %v4781
    %4809 = vmatprep.subr.mxu0 0.0
    %4810 = vmatpush1.msra.mxu0 0.0
    %4811 = vmatprep.subr.mxu0 0.0
    %4812 = vmatpush1.msra.mxu0 0.0
    %4813 = vmatprep.subr.mxu0 0.0
    %4814 = vmatpush1.msra.mxu0 0.0
    %4815 = vmatprep.subr.mxu0 0.0
    %4816 = vmatpush1.msra.mxu0 0.0
    %4817 = vmatprep.subr.mxu0 0.0
    %4818 = vmatpush1.msra.mxu0 0.0
    %4819 = vmatprep.subr.mxu0 0.0
    %4820 = vmatpush1.msra.mxu0 0.0
    %4821 = vmatprep.subr.mxu0 0.0
    %4822 = vmatpush1.msra.mxu0 0.0
    %4823 = vmatprep.subr.mxu0 0.0
    %4824 = vmatpush1.msra.mxu0 0.0
    %4825 = vmatprep.subr.mxu0 0.0
    %4826 = vmatpush1.msra.mxu0 0.0
    %4827 = vmatprep.subr.mxu0 0.0
    %4828 = vmatpush1.msra.mxu0 0.0
    %4829 = vmatprep.subr.mxu0 0.0
    %4830 = vmatpush1.msra.mxu0 0.0
    %4831 = vmatprep.subr.mxu0 0.0
    %4832 = vmatpush1.msra.mxu0 0.0
    %4833 = vmatprep.subr.mxu0 0.0
    %4834 = vmatpush1.msra.mxu0 0.0
    %4835 = vmatprep.subr.mxu0 0.0
    %4836 = vmatpush1.msra.mxu0 0.0
    %4837 = vmatprep.subr.mxu0 0.0
    %4838 = vmatpush1.msra.mxu0 0.0
    %4839 = vmatprep.subr.mxu0 0.0
    %4840 = vmatpush1.msra.mxu0 0.0
    %4841 = vmatprep.subr.mxu0 0.0
    %4842 = vmatpush1.msra.mxu0 0.0
    %4843 = vmatprep.subr.mxu0 0.0
    %4844 = vmatpush1.msra.mxu0 0.0
    %4845 = vmatprep.subr.mxu0 0.0
    %4846 = vmatpush1.msra.mxu0 0.0
    %4847 = vmatprep.subr.mxu0 0.0
    %4848 = vmatpush1.msra.mxu0 0.0
    %4849 = vmatprep.mubr.f32.mxu0 0.0
    %4850 = vmatmul.mubr.f32.gmra.mrb[0].mxu0 %v4783
    %v4851 = vpop.f32.mrb[0].mxu0
    %v4852 = vadd.f32 0.0, %v4851
    %v4853 = vpop.f32.mrb[0].mxu0
    %4854 = vdwg.mxu0
    %v4856 = vsel %vm130, %v4756, 0
    %4858 = vmatprep.subr.mxu0 0.0
    %4859 = vmatpush1.msra.mxu0 %v4757
    %4860 = vmatprep.subr.mxu0 0.0
    %4861 = vmatpush1.msra.mxu0 %v4758
    %4862 = vmatprep.subr.mxu0 0.0
    %4863 = vmatpush1.msra.mxu0 %v4759
    %4864 = vmatprep.subr.mxu0 0.0
    %4865 = vmatpush1.msra.mxu0 %v4760
    %4866 = vmatprep.subr.mxu0 0.0
    %4867 = vmatpush1.msra.mxu0 %v4761
    %4868 = vmatprep.subr.mxu0 0.0
    %4869 = vmatpush1.msra.mxu0 %v4762
    %4870 = vmatprep.subr.mxu0 0.0
    %4871 = vmatpush1.msra.mxu0 %v4763
    %4872 = vmatprep.subr.mxu0 0.0
    %4873 = vmatpush1.msra.mxu0 %v4764
    %4874 = vmatprep.subr.mxu0 0.0
    %4875 = vmatpush1.msra.mxu0 %v4765
    %4876 = vmatprep.subr.mxu0 0.0
    %4877 = vmatpush1.msra.mxu0 %v4766
    %4878 = vmatprep.subr.mxu0 0.0
    %4879 = vmatpush1.msra.mxu0 %v4767
    %4880 = vmatprep.subr.mxu0 0.0
    %4881 = vmatpush1.msra.mxu0 %v4768
    %4882 = vmatprep.subr.mxu0 0.0
    %4883 = vmatpush1.msra.mxu0 0.0
    %4884 = vmatprep.subr.mxu0 0.0
    %4885 = vmatpush1.msra.mxu0 0.0
    %4886 = vmatprep.subr.mxu0 0.0
    %4887 = vmatpush1.msra.mxu0 0.0
    %4888 = vmatprep.subr.mxu0 0.0
    %4889 = vmatpush1.msra.mxu0 0.0
    %4890 = vmatprep.subr.mxu0 0.0
    %4891 = vmatpush1.msra.mxu0 0.0
    %4892 = vmatprep.subr.mxu0 0.0
    %4893 = vmatpush1.msra.mxu0 0.0
    %4894 = vmatprep.subr.mxu0 0.0
    %4895 = vmatpush1.msra.mxu0 0.0
    %4896 = vmatprep.subr.mxu0 0.0
    %4897 = vmatpush1.msra.mxu0 0.0
    %4898 = vmatprep.subr.mxu0 0.0
    %4899 = vmatpush1.msra.mxu0 0.0
    %4900 = vmatprep.subr.mxu0 0.0
    %4901 = vmatpush1.msra.mxu0 0.0
    %4902 = vmatprep.subr.mxu0 0.0
    %4903 = vmatpush1.msra.mxu0 0.0
    %4904 = vmatprep.subr.mxu0 0.0
    %4905 = vmatpush1.msra.mxu0 0.0
    %4906 = vmatprep.subr.mxu0 0.0
    %4907 = vmatpush1.msra.mxu0 0.0
    %4908 = vmatprep.subr.mxu0 0.0
    %4909 = vmatpush1.msra.mxu0 0.0
    %4910 = vmatprep.subr.mxu0 0.0
    %4911 = vmatpush1.msra.mxu0 0.0
    %4912 = vmatprep.subr.mxu0 0.0
    %4913 = vmatpush1.msra.mxu0 0.0
    %4914 = vmatprep.subr.mxu0 0.0
    %4915 = vmatpush1.msra.mxu0 0.0
    %4916 = vmatprep.subr.mxu0 0.0
    %4917 = vmatpush1.msra.mxu0 0.0
    %4918 = vmatprep.subr.mxu0 0.0
    %4919 = vmatpush1.msra.mxu0 0.0
    %4920 = vmatprep.subr.mxu0 0.0
    %4921 = vmatpush1.msra.mxu0 0.0
    %4922 = vmatprep.mubr.f32.mxu0 0.0
    %4923 = vmatmul.mubr.f32.gmra.mrb[0].mxu0 %v4856
    %v4924 = vpop.f32.mrb[0].mxu0
    %v4925 = vadd.f32 %v4852, %v4924
    %v4926 = vpop.f32.mrb[0].mxu0
    %4927 = vdwg.mxu0
    %v4928 = vld [vmem:[#allocation6 + $0xb] sm:$0x7f]
    %v4929 = vld [vmem:[%s2369] sm:$0xff]
    %v4930 = vld [vmem:[%s2369 + $0x8] sm:$0xff]
    %v4931 = vld [vmem:[%s2369 + $0x10] sm:$0xff]
    %v4932 = vld [vmem:[%s2369 + $0x18] sm:$0xff]
    %v4933 = vld [vmem:[%s2369 + $0x20] sm:$0xff]
    %v4934 = vld [vmem:[%s2369 + $0x28] sm:$0xff]
    %v4935 = vld [vmem:[%s2369 + $0x30] sm:$0xff]
    %v4936 = vld [vmem:[%s2369 + $0x38] sm:$0xff]
    %v4937 = vld [vmem:[%s2369 + $0x40] sm:$0xff]
    %v4938 = vld [vmem:[%s2369 + $0x48] sm:$0xff]
    %v4939 = vld [vmem:[%s2369 + $0x50] sm:$0xff]
    %v4940 = vld [vmem:[%s2369 + $0x58] sm:$0xff]
    %v4942 = vsel %vm130, %v4928, 0
    %4944 = vmatprep.subr.mxu0 0.0
    %4945 = vmatpush1.msra.mxu0 %v4929
    %4946 = vmatprep.subr.mxu0 0.0
    %4947 = vmatpush1.msra.mxu0 %v4930
    %4948 = vmatprep.subr.mxu0 0.0
    %4949 = vmatpush1.msra.mxu0 %v4931
    %4950 = vmatprep.subr.mxu0 0.0
    %4951 = vmatpush1.msra.mxu0 %v4932
    %4952 = vmatprep.subr.mxu0 0.0
    %4953 = vmatpush1.msra.mxu0 %v4933
    %4954 = vmatprep.subr.mxu0 0.0
    %4955 = vmatpush1.msra.mxu0 %v4934
    %4956 = vmatprep.subr.mxu0 0.0
    %4957 = vmatpush1.msra.mxu0 %v4935
    %4958 = vmatprep.subr.mxu0 0.0
    %4959 = vmatpush1.msra.mxu0 %v4936
    %4960 = vmatprep.subr.mxu0 0.0
    %4961 = vmatpush1.msra.mxu0 %v4937
    %4962 = vmatprep.subr.mxu0 0.0
    %4963 = vmatpush1.msra.mxu0 %v4938
    %4964 = vmatprep.subr.mxu0 0.0
    %4965 = vmatpush1.msra.mxu0 %v4939
    %4966 = vmatprep.subr.mxu0 0.0
    %4967 = vmatpush1.msra.mxu0 %v4940
    %4968 = vmatprep.subr.mxu0 0.0
    %4969 = vmatpush1.msra.mxu0 0.0
    %4970 = vmatprep.subr.mxu0 0.0
    %4971 = vmatpush1.msra.mxu0 0.0
    %4972 = vmatprep.subr.mxu0 0.0
    %4973 = vmatpush1.msra.mxu0 0.0
    %4974 = vmatprep.subr.mxu0 0.0
    %4975 = vmatpush1.msra.mxu0 0.0
    %4976 = vmatprep.subr.mxu0 0.0
    %4977 = vmatpush1.msra.mxu0 0.0
    %4978 = vmatprep.subr.mxu0 0.0
    %4979 = vmatpush1.msra.mxu0 0.0
    %4980 = vmatprep.subr.mxu0 0.0
    %4981 = vmatpush1.msra.mxu0 0.0
    %4982 = vmatprep.subr.mxu0 0.0
    %4983 = vmatpush1.msra.mxu0 0.0
    %4984 = vmatprep.subr.mxu0 0.0
    %4985 = vmatpush1.msra.mxu0 0.0
    %4986 = vmatprep.subr.mxu0 0.0
    %4987 = vmatpush1.msra.mxu0 0.0
    %4988 = vmatprep.subr.mxu0 0.0
    %4989 = vmatpush1.msra.mxu0 0.0
    %4990 = vmatprep.subr.mxu0 0.0
    %4991 = vmatpush1.msra.mxu0 0.0
    %4992 = vmatprep.subr.mxu0 0.0
    %4993 = vmatpush1.msra.mxu0 0.0
    %4994 = vmatprep.subr.mxu0 0.0
    %4995 = vmatpush1.msra.mxu0 0.0
    %4996 = vmatprep.subr.mxu0 0.0
    %4997 = vmatpush1.msra.mxu0 0.0
    %4998 = vmatprep.subr.mxu0 0.0
    %4999 = vmatpush1.msra.mxu0 0.0
    %5000 = vmatprep.subr.mxu0 0.0
    %5001 = vmatpush1.msra.mxu0 0.0
    %5002 = vmatprep.subr.mxu0 0.0
    %5003 = vmatpush1.msra.mxu0 0.0
    %5004 = vmatprep.subr.mxu0 0.0
    %5005 = vmatpush1.msra.mxu0 0.0
    %5006 = vmatprep.subr.mxu0 0.0
    %5007 = vmatpush1.msra.mxu0 0.0
    %5008 = vmatprep.mubr.f32.mxu0 0.0
    %5009 = vmatmul.mubr.f32.gmra.mrb[0].mxu0 %v4942
    %v5010 = vpop.f32.mrb[0].mxu0
    %v5011 = vadd.f32 0.0, %v5010
    %v5012 = vpop.f32.mrb[0].mxu0
    %5013 = vdwg.mxu0
    %v5014 = vadd.f32 %v4925, %v5011
    %v5015 = vld [vmem:[%s10] sm:$0x1]
    %v5017 = vlaneseq
    %v5018 = vshrl.u32 %v5017, 7
    %v5019 = vsub.s32 0, %v5018
    %v5020 = vrot.slane %v5015, %v5019
    %v5022 = vadd.f32 %v5014, %v5020
    %v5023 = vmax.f32 %v5022, 0.0
    %5024 = vst.msk [vmem:[#allocation7 + $0x16] sm:$0x1] %vm2465, %v5023
    %5025 = vst.msk [vmem:[#allocation7 + $0x18] sm:$0x2] %vm2467, %v5023
    %5026 = vst.msk [vmem:[#allocation7 + $0x1a] sm:$0x4] %vm2469, %v5023
    %5027 = vst.msk [vmem:[#allocation7 + $0x1c] sm:$0x8] %vm2471, %v5023
    %5028 = vst.msk [vmem:[#allocation7 + $0x1e] sm:$0x10] %vm2473, %v5023
    %5029 = vst.msk [vmem:[#allocation7 + $0x20] sm:$0x20] %vm2475, %v5023
    %5030 = vst.msk [vmem:[#allocation7 + $0x22] sm:$0x40] %vm2477, %v5023
    %v5031 = vld [vmem:[#allocation7 + $0x15] sm:$0xff]
    %v5032 = vld [vmem:[#allocation7 + $0x1d] sm:$0xff]
    %v5033 = vld [vmem:[#allocation7 + $0x25] sm:$0x7]
    %v5034 = vld [vmem:[%s11] sm:$0xff]
    %v5035 = vld [vmem:[%s11 + $0x8] sm:$0xff]
    %v5036 = vld [vmem:[%s11 + $0x10] sm:$0xff]
    %v5037 = vld [vmem:[%s11 + $0x18] sm:$0xff]
    %v5038 = vld [vmem:[%s11 + $0x20] sm:$0xff]
    %v5039 = vld [vmem:[%s11 + $0x28] sm:$0xff]
    %v5040 = vld [vmem:[%s11 + $0x30] sm:$0xff]
    %v5041 = vld [vmem:[%s11 + $0x38] sm:$0xff]
    %v5042 = vld [vmem:[%s11 + $0x40] sm:$0xff]
    %v5043 = vld [vmem:[%s11 + $0x48] sm:$0xff]
    %v5044 = vld [vmem:[%s11 + $0x50] sm:$0xff]
    %v5045 = vld [vmem:[%s11 + $0x58] sm:$0xff]
    %v5046 = vld [vmem:[%s11 + $0x60] sm:$0xff]
    %v5047 = vld [vmem:[%s11 + $0x68] sm:$0xff]
    %v5048 = vld [vmem:[#allocation7 + $0x16] sm:$0xff]
    %v5049 = vld [vmem:[#allocation7 + $0x1e] sm:$0xff]
    %v5050 = vld [vmem:[#allocation7 + $0x26] sm:$0x7]
    %v5051 = vld [vmem:[%s2499] sm:$0xff]
    %v5052 = vld [vmem:[%s2499 + $0x8] sm:$0xff]
    %v5053 = vld [vmem:[%s2499 + $0x10] sm:$0xff]
    %v5054 = vld [vmem:[%s2499 + $0x18] sm:$0xff]
    %v5055 = vld [vmem:[%s2499 + $0x20] sm:$0xff]
    %v5056 = vld [vmem:[%s2499 + $0x28] sm:$0xff]
    %v5057 = vld [vmem:[%s2499 + $0x30] sm:$0xff]
    %v5058 = vld [vmem:[%s2499 + $0x38] sm:$0xff]
    %v5059 = vld [vmem:[%s2499 + $0x40] sm:$0xff]
    %v5060 = vld [vmem:[%s2499 + $0x48] sm:$0xff]
    %v5061 = vld [vmem:[%s2499 + $0x50] sm:$0xff]
    %v5062 = vld [vmem:[%s2499 + $0x58] sm:$0xff]
    %v5063 = vld [vmem:[%s2499 + $0x60] sm:$0xff]
    %v5064 = vld [vmem:[%s2499 + $0x68] sm:$0xff]
    %v5066 = vsel %vm135, %v5048, 0
    %v5069 = vsel %vm135, %v5049, 0
    %v5072 = vsel %vm135, %v5050, 0
    %5074 = vmatprep.subr.mxu0 0.0
    %5075 = vmatpush1.msra.mxu0 %v5051
    %5076 = vmatprep.subr.mxu0 0.0
    %5077 = vmatpush1.msra.mxu0 %v5052
    %5078 = vmatprep.subr.mxu0 0.0
    %5079 = vmatpush1.msra.mxu0 %v5053
    %5080 = vmatprep.subr.mxu0 0.0
    %5081 = vmatpush1.msra.mxu0 %v5054
    %5082 = vmatprep.subr.mxu0 0.0
    %5083 = vmatpush1.msra.mxu0 %v5055
    %5084 = vmatprep.subr.mxu0 0.0
    %5085 = vmatpush1.msra.mxu0 %v5056
    %5086 = vmatprep.subr.mxu0 0.0
    %5087 = vmatpush1.msra.mxu0 %v5057
    %5088 = vmatprep.subr.mxu0 0.0
    %5089 = vmatpush1.msra.mxu0 %v5058
    %5090 = vmatprep.subr.mxu0 0.0
    %5091 = vmatpush1.msra.mxu0 %v5059
    %5092 = vmatprep.subr.mxu0 0.0
    %5093 = vmatpush1.msra.mxu0 %v5060
    %5094 = vmatprep.subr.mxu0 0.0
    %5095 = vmatpush1.msra.mxu0 %v5061
    %5096 = vmatprep.subr.mxu0 0.0
    %5097 = vmatpush1.msra.mxu0 %v5062
    %5098 = vmatprep.subr.mxu0 0.0
    %5099 = vmatpush1.msra.mxu0 %v5063
    %5100 = vmatprep.subr.mxu0 0.0
    %5101 = vmatpush1.msra.mxu0 %v5064
    %5102 = vmatprep.subr.mxu0 0.0
    %5103 = vmatpush1.msra.mxu0 0.0
    %5104 = vmatprep.subr.mxu0 0.0
    %5105 = vmatpush1.msra.mxu0 0.0
    %5106 = vmatprep.subr.mxu0 0.0
    %5107 = vmatpush1.msra.mxu0 0.0
    %5108 = vmatprep.subr.mxu0 0.0
    %5109 = vmatpush1.msra.mxu0 0.0
    %5110 = vmatprep.subr.mxu0 0.0
    %5111 = vmatpush1.msra.mxu0 0.0
    %5112 = vmatprep.subr.mxu0 0.0
    %5113 = vmatpush1.msra.mxu0 0.0
    %5114 = vmatprep.subr.mxu0 0.0
    %5115 = vmatpush1.msra.mxu0 0.0
    %5116 = vmatprep.subr.mxu0 0.0
    %5117 = vmatpush1.msra.mxu0 0.0
    %5118 = vmatprep.subr.mxu0 0.0
    %5119 = vmatpush1.msra.mxu0 0.0
    %5120 = vmatprep.subr.mxu0 0.0
    %5121 = vmatpush1.msra.mxu0 0.0
    %5122 = vmatprep.subr.mxu0 0.0
    %5123 = vmatpush1.msra.mxu0 0.0
    %5124 = vmatprep.subr.mxu0 0.0
    %5125 = vmatpush1.msra.mxu0 0.0
    %5126 = vmatprep.subr.mxu0 0.0
    %5127 = vmatpush1.msra.mxu0 0.0
    %5128 = vmatprep.subr.mxu0 0.0
    %5129 = vmatpush1.msra.mxu0 0.0
    %5130 = vmatprep.subr.mxu0 0.0
    %5131 = vmatpush1.msra.mxu0 0.0
    %5132 = vmatprep.subr.mxu0 0.0
    %5133 = vmatpush1.msra.mxu0 0.0
    %5134 = vmatprep.subr.mxu0 0.0
    %5135 = vmatpush1.msra.mxu0 0.0
    %5136 = vmatprep.subr.mxu0 0.0
    %5137 = vmatpush1.msra.mxu0 0.0
    %5138 = vmatprep.mubr.f32.mxu0 0.0
    %5139 = vmatmul.mubr.f32.gmra.mrb[0].mxu0 %v5066
    %v5140 = vpop.f32.mrb[0].mxu0
    %v5141 = vadd.f32 0.0, %v5140
    %v5142 = vpop.f32.mrb[0].mxu0
    %5143 = vmatprep.mubr.f32.mxu0 0.0
    %5144 = vmatmul.mubr.f32.gmra.mrb[0].mxu0 %v5069
    %v5145 = vpop.f32.mrb[0].mxu0
    %v5146 = vadd.f32 0.0, %v5145
    %v5147 = vpop.f32.mrb[0].mxu0
    %5148 = vmatprep.mubr.f32.mxu0 0.0
    %5149 = vmatmul.mubr.f32.gmra.mrb[0].mxu0 %v5072
    %v5150 = vpop.f32.mrb[0].mxu0
    %v5151 = vadd.f32 0.0, %v5150
    %v5152 = vpop.f32.mrb[0].mxu0
    %5153 = vdwg.mxu0
    %v5155 = vsel %vm135, %v5031, 0
    %v5158 = vsel %vm135, %v5032, 0
    %v5161 = vsel %vm135, %v5033, 0
    %5163 = vmatprep.subr.mxu0 0.0
    %5164 = vmatpush1.msra.mxu0 %v5034
    %5165 = vmatprep.subr.mxu0 0.0
    %5166 = vmatpush1.msra.mxu0 %v5035
    %5167 = vmatprep.subr.mxu0 0.0
    %5168 = vmatpush1.msra.mxu0 %v5036
    %5169 = vmatprep.subr.mxu0 0.0
    %5170 = vmatpush1.msra.mxu0 %v5037
    %5171 = vmatprep.subr.mxu0 0.0
    %5172 = vmatpush1.msra.mxu0 %v5038
    %5173 = vmatprep.subr.mxu0 0.0
    %5174 = vmatpush1.msra.mxu0 %v5039
    %5175 = vmatprep.subr.mxu0 0.0
    %5176 = vmatpush1.msra.mxu0 %v5040
    %5177 = vmatprep.subr.mxu0 0.0
    %5178 = vmatpush1.msra.mxu0 %v5041
    %5179 = vmatprep.subr.mxu0 0.0
    %5180 = vmatpush1.msra.mxu0 %v5042
    %5181 = vmatprep.subr.mxu0 0.0
    %5182 = vmatpush1.msra.mxu0 %v5043
    %5183 = vmatprep.subr.mxu0 0.0
    %5184 = vmatpush1.msra.mxu0 %v5044
    %5185 = vmatprep.subr.mxu0 0.0
    %5186 = vmatpush1.msra.mxu0 %v5045
    %5187 = vmatprep.subr.mxu0 0.0
    %5188 = vmatpush1.msra.mxu0 %v5046
    %5189 = vmatprep.subr.mxu0 0.0
    %5190 = vmatpush1.msra.mxu0 %v5047
    %5191 = vmatprep.subr.mxu0 0.0
    %5192 = vmatpush1.msra.mxu0 0.0
    %5193 = vmatprep.subr.mxu0 0.0
    %5194 = vmatpush1.msra.mxu0 0.0
    %5195 = vmatprep.subr.mxu0 0.0
    %5196 = vmatpush1.msra.mxu0 0.0
    %5197 = vmatprep.subr.mxu0 0.0
    %5198 = vmatpush1.msra.mxu0 0.0
    %5199 = vmatprep.subr.mxu0 0.0
    %5200 = vmatpush1.msra.mxu0 0.0
    %5201 = vmatprep.subr.mxu0 0.0
    %5202 = vmatpush1.msra.mxu0 0.0
    %5203 = vmatprep.subr.mxu0 0.0
    %5204 = vmatpush1.msra.mxu0 0.0
    %5205 = vmatprep.subr.mxu0 0.0
    %5206 = vmatpush1.msra.mxu0 0.0
    %5207 = vmatprep.subr.mxu0 0.0
    %5208 = vmatpush1.msra.mxu0 0.0
    %5209 = vmatprep.subr.mxu0 0.0
    %5210 = vmatpush1.msra.mxu0 0.0
    %5211 = vmatprep.subr.mxu0 0.0
    %5212 = vmatpush1.msra.mxu0 0.0
    %5213 = vmatprep.subr.mxu0 0.0
    %5214 = vmatpush1.msra.mxu0 0.0
    %5215 = vmatprep.subr.mxu0 0.0
    %5216 = vmatpush1.msra.mxu0 0.0
    %5217 = vmatprep.subr.mxu0 0.0
    %5218 = vmatpush1.msra.mxu0 0.0
    %5219 = vmatprep.subr.mxu0 0.0
    %5220 = vmatpush1.msra.mxu0 0.0
    %5221 = vmatprep.subr.mxu0 0.0
    %5222 = vmatpush1.msra.mxu0 0.0
    %5223 = vmatprep.subr.mxu0 0.0
    %5224 = vmatpush1.msra.mxu0 0.0
    %5225 = vmatprep.subr.mxu0 0.0
    %5226 = vmatpush1.msra.mxu0 0.0
    %5227 = vmatprep.mubr.f32.mxu0 0.0
    %5228 = vmatmul.mubr.f32.gmra.mrb[0].mxu0 %v5155
    %v5229 = vpop.f32.mrb[0].mxu0
    %v5230 = vadd.f32 %v5141, %v5229
    %v5231 = vpop.f32.mrb[0].mxu0
    %5232 = vmatprep.mubr.f32.mxu0 0.0
    %5233 = vmatmul.mubr.f32.gmra.mrb[0].mxu0 %v5158
    %v5234 = vpop.f32.mrb[0].mxu0
    %v5235 = vadd.f32 %v5146, %v5234
    %v5236 = vpop.f32.mrb[0].mxu0
    %5237 = vmatprep.mubr.f32.mxu0 0.0
    %5238 = vmatmul.mubr.f32.gmra.mrb[0].mxu0 %v5161
    %v5239 = vpop.f32.mrb[0].mxu0
    %v5240 = vadd.f32 %v5151, %v5239
    %v5241 = vpop.f32.mrb[0].mxu0
    %5242 = vdwg.mxu0
    %v5243 = vld [vmem:[#allocation7 + $0x17] sm:$0xff]
    %v5244 = vld [vmem:[#allocation7 + $0x1f] sm:$0xff]
    %v5245 = vld [vmem:[#allocation7 + $0x27] sm:$0x7]
    %v5246 = vld [vmem:[%s2695] sm:$0xff]
    %v5247 = vld [vmem:[%s2695 + $0x8] sm:$0xff]
    %v5248 = vld [vmem:[%s2695 + $0x10] sm:$0xff]
    %v5249 = vld [vmem:[%s2695 + $0x18] sm:$0xff]
    %v5250 = vld [vmem:[%s2695 + $0x20] sm:$0xff]
    %v5251 = vld [vmem:[%s2695 + $0x28] sm:$0xff]
    %v5252 = vld [vmem:[%s2695 + $0x30] sm:$0xff]
    %v5253 = vld [vmem:[%s2695 + $0x38] sm:$0xff]
    %v5254 = vld [vmem:[%s2695 + $0x40] sm:$0xff]
    %v5255 = vld [vmem:[%s2695 + $0x48] sm:$0xff]
    %v5256 = vld [vmem:[%s2695 + $0x50] sm:$0xff]
    %v5257 = vld [vmem:[%s2695 + $0x58] sm:$0xff]
    %v5258 = vld [vmem:[%s2695 + $0x60] sm:$0xff]
    %v5259 = vld [vmem:[%s2695 + $0x68] sm:$0xff]
    %v5261 = vsel %vm135, %v5243, 0
    %v5264 = vsel %vm135, %v5244, 0
    %v5267 = vsel %vm135, %v5245, 0
    %5269 = vmatprep.subr.mxu0 0.0
    %5270 = vmatpush1.msra.mxu0 %v5246
    %5271 = vmatprep.subr.mxu0 0.0
    %5272 = vmatpush1.msra.mxu0 %v5247
    %5273 = vmatprep.subr.mxu0 0.0
    %5274 = vmatpush1.msra.mxu0 %v5248
    %5275 = vmatprep.subr.mxu0 0.0
    %5276 = vmatpush1.msra.mxu0 %v5249
    %5277 = vmatprep.subr.mxu0 0.0
    %5278 = vmatpush1.msra.mxu0 %v5250
    %5279 = vmatprep.subr.mxu0 0.0
    %5280 = vmatpush1.msra.mxu0 %v5251
    %5281 = vmatprep.subr.mxu0 0.0
    %5282 = vmatpush1.msra.mxu0 %v5252
    %5283 = vmatprep.subr.mxu0 0.0
    %5284 = vmatpush1.msra.mxu0 %v5253
    %5285 = vmatprep.subr.mxu0 0.0
    %5286 = vmatpush1.msra.mxu0 %v5254
    %5287 = vmatprep.subr.mxu0 0.0
    %5288 = vmatpush1.msra.mxu0 %v5255
    %5289 = vmatprep.subr.mxu0 0.0
    %5290 = vmatpush1.msra.mxu0 %v5256
    %5291 = vmatprep.subr.mxu0 0.0
    %5292 = vmatpush1.msra.mxu0 %v5257
    %5293 = vmatprep.subr.mxu0 0.0
    %5294 = vmatpush1.msra.mxu0 %v5258
    %5295 = vmatprep.subr.mxu0 0.0
    %5296 = vmatpush1.msra.mxu0 %v5259
    %5297 = vmatprep.subr.mxu0 0.0
    %5298 = vmatpush1.msra.mxu0 0.0
    %5299 = vmatprep.subr.mxu0 0.0
    %5300 = vmatpush1.msra.mxu0 0.0
    %5301 = vmatprep.subr.mxu0 0.0
    %5302 = vmatpush1.msra.mxu0 0.0
    %5303 = vmatprep.subr.mxu0 0.0
    %5304 = vmatpush1.msra.mxu0 0.0
    %5305 = vmatprep.subr.mxu0 0.0
    %5306 = vmatpush1.msra.mxu0 0.0
    %5307 = vmatprep.subr.mxu0 0.0
    %5308 = vmatpush1.msra.mxu0 0.0
    %5309 = vmatprep.subr.mxu0 0.0
    %5310 = vmatpush1.msra.mxu0 0.0
    %5311 = vmatprep.subr.mxu0 0.0
    %5312 = vmatpush1.msra.mxu0 0.0
    %5313 = vmatprep.subr.mxu0 0.0
    %5314 = vmatpush1.msra.mxu0 0.0
    %5315 = vmatprep.subr.mxu0 0.0
    %5316 = vmatpush1.msra.mxu0 0.0
    %5317 = vmatprep.subr.mxu0 0.0
    %5318 = vmatpush1.msra.mxu0 0.0
    %5319 = vmatprep.subr.mxu0 0.0
    %5320 = vmatpush1.msra.mxu0 0.0
    %5321 = vmatprep.subr.mxu0 0.0
    %5322 = vmatpush1.msra.mxu0 0.0
    %5323 = vmatprep.subr.mxu0 0.0
    %5324 = vmatpush1.msra.mxu0 0.0
    %5325 = vmatprep.subr.mxu0 0.0
    %5326 = vmatpush1.msra.mxu0 0.0
    %5327 = vmatprep.subr.mxu0 0.0
    %5328 = vmatpush1.msra.mxu0 0.0
    %5329 = vmatprep.subr.mxu0 0.0
    %5330 = vmatpush1.msra.mxu0 0.0
    %5331 = vmatprep.subr.mxu0 0.0
    %5332 = vmatpush1.msra.mxu0 0.0
    %5333 = vmatprep.mubr.f32.mxu0 0.0
    %5334 = vmatmul.mubr.f32.gmra.mrb[0].mxu0 %v5261
    %v5335 = vpop.f32.mrb[0].mxu0
    %v5336 = vadd.f32 0.0, %v5335
    %v5337 = vpop.f32.mrb[0].mxu0
    %5338 = vmatprep.mubr.f32.mxu0 0.0
    %5339 = vmatmul.mubr.f32.gmra.mrb[0].mxu0 %v5264
    %v5340 = vpop.f32.mrb[0].mxu0
    %v5341 = vadd.f32 0.0, %v5340
    %v5342 = vpop.f32.mrb[0].mxu0
    %5343 = vmatprep.mubr.f32.mxu0 0.0
    %5344 = vmatmul.mubr.f32.gmra.mrb[0].mxu0 %v5267
    %v5345 = vpop.f32.mrb[0].mxu0
    %v5346 = vadd.f32 0.0, %v5345
    %v5347 = vpop.f32.mrb[0].mxu0
    %5348 = vdwg.mxu0
    %v5349 = vadd.f32 %v5230, %v5336
    %v5350 = vadd.f32 %v5235, %v5341
    %v5351 = vadd.f32 %v5240, %v5346
    %v5352 = vld [vmem:[%s12] sm:$0x1]
    %v5354 = vlaneseq
    %v5355 = vshrl.u32 %v5354, 7
    %v5356 = vsub.s32 0, %v5355
    %v5357 = vrot.slane %v5352, %v5356
    %v5359 = vadd.f32 %v5349, %v5357
    %v5360 = vadd.f32 %v5350, %v5357
    %v5361 = vadd.f32 %v5351, %v5357
    %v5362 = vtanh.pop %v5359
    %v5363 = vtanh.pop %v5360
    %v5364 = vtanh.pop %v5361
    %s5365 = scalar_lea.vmem %s13, 24
    %5366 = vst.msk [vmem:[%s5365] sm:$0xff] %vm2815, %v5362
    %5367 = vst.msk [vmem:[%s5365 + $0x8] sm:$0xff] %vm2815, %v5363
    %5368 = vst.msk [vmem:[%s5365 + $0x10] sm:$0x7] %vm2818, %v5364
    // Predicated region
    $region74: #{conv_autoencoder_forward.1} parent=1 // pred_check
      _
    $region75: #{conv_autoencoder_forward.1} parent=1 // pred_check_branch
      %5370 = sbr.rel (0) target = $region77
    $region76: #{conv_autoencoder_forward.1} parent=1 // pred_region
      _
    $region77: #{conv_autoencoder_forward.1} parent=1 // pred_fallthru
      _
    // Predicated region
    $region78: #{conv_autoencoder_forward.1} parent=1 // pred_check
      _
    $region79: #{conv_autoencoder_forward.1} parent=1 // pred_check_branch
      %5372 = sbr.rel (0) target = $region81
    $region80: #{conv_autoencoder_forward.1} parent=1 // pred_region
      _
    $region81: #{conv_autoencoder_forward.1} parent=1 // pred_fallthru
      _
    %5373 = vsyncpa [#allocation9], 1
    %5374 = vsyncpa [#allocation11], 1
    %5375 = vsyncpa [#allocation14], 1

</llo_original>
